<compile_context>
chip_gen: v5e
topology: v5e:2x2
jax: 0.10.0
libtpu: 0.0.40
codegen_flags: <defaults>
</compile_context>

<pallas_src>
import math

import jax
import jax.numpy as jnp
from jax import lax
from jax.experimental import pallas as pl
from jax.experimental.pallas import tpu as pltpu


# ---------------------------------------------------------------------------
# Generation-aware tiling constants
# ---------------------------------------------------------------------------
def _round_up(x, m):
    return ((x + m - 1) // m) * m


def _vmem_capacity_bytes():
    # v5e / v6e: 128 MiB VMEM per TensorCore, v7x: 64 MiB.
    try:
        return int(pltpu.get_tpu_info().vmem_capacity_bytes)
    except Exception:
        return 64 << 20          # conservative default (v7x-sized)


_VMEM_BYTES = _vmem_capacity_bytes()
_SMALL_VMEM = _VMEM_BYTES <= (64 << 20)
_TM_CAP = 256 if _SMALL_VMEM else 512                         # max rows per matmul block
_MAX_BLOCK_BYTES = (2 << 20) if _SMALL_VMEM else (8 << 20)    # reduce-kernel block budget
_VMEM_LIMIT = int(min(96 << 20, (_VMEM_BYTES * 3) // 4))

_PALLAS_MIN_M = 128     # matmuls with fewer rows go to XLA (sub-MXU scale)
_PALLAS_MIN_G = 64      # reductions with fewer output rows go to XLA


# ---------------------------------------------------------------------------
# Pallas kernels
# ---------------------------------------------------------------------------
def _matmul_bias_kernel(a_ref, w_ref, b_ref, o_ref):
    # bf16 x bf16 -> f32 accumulation on the MXU, bias fused in the epilogue.
    o_ref[...] = (jnp.dot(a_ref[...], w_ref[...],
                          preferred_element_type=jnp.float32)
                  + b_ref[...]).astype(o_ref.dtype)


def matmul_bias(a, w, b):
    """y = a @ w + b.  a: [M, K], w: [K, N] (bf16 ok), b: [N].  Returns f32 [M, N]."""
    M, K = a.shape
    K2, N = w.shape
    assert K == K2
    a16 = a.astype(jnp.bfloat16)
    w16 = w.astype(jnp.bfloat16)
    b32 = b.astype(jnp.float32).reshape(1, N)

    if M < _PALLAS_MIN_M:
        # tiny channel-mix: let XLA fuse it with its elementwise neighbours
        return jnp.dot(a16, w16, preferred_element_type=jnp.float32) + b32

    # Tile only M; K and N are full-extent blocks (no padding / 128-divisibility issue).
    Mp = _round_up(M, 8)
    if Mp >= 256:
        # >= 2 row blocks so a 2-TensorCore chip (v7x) can split the 'parallel' grid
        tm = min(_TM_CAP, _round_up(-(-Mp // 2), 8))
    else:
        tm = Mp
    grid_m = pl.cdiv(M, tm)

    # TODO(synk): single-buffer the constant (K,N)/(1,N) blocks via
    # pipeline_mode=pl.Buffered(1) once validated on the target jax build.
    out = pl.pallas_call(
        _matmul_bias_kernel,
        out_shape=jax.ShapeDtypeStruct((M, N), jnp.float32),
        grid=(grid_m,),
        in_specs=[pl.BlockSpec((tm, K), lambda i: (i, 0)),
                  pl.BlockSpec((K, N), lambda i: (0, 0)),
                  pl.BlockSpec((1, N), lambda i: (0, 0))],
        out_specs=pl.BlockSpec((tm, N), lambda i: (i, 0)),
        compiler_params=pltpu.CompilerParams(
            dimension_semantics=("parallel",),
            vmem_limit_bytes=_VMEM_LIMIT),
        cost_estimate=pl.CostEstimate(
            flops=2 * M * K * N, transcendentals=0,
            bytes_accessed=2 * (M * K + K * N) + 4 * (M * N + N)),
    )(a16, w16, b32)
    return out


def _max_sublane_kernel(x_ref, o_ref):
    # Reduce over the sublane (second-to-last) axis; channels stay lane-dense.
    o_ref[...] = jnp.max(x_ref[...], axis=-2)


def max_over_axis2(x):
    """Max over the second-to-last axis: x [..., L, C] -> [..., C] (lane-dense C)."""
    *lead, L, C = x.shape
    G = 1
    for d in lead:
        G *= d
    if L < 2 or G < _PALLAS_MIN_G or C < 8:
        return jnp.max(x, axis=-2)           # tiny reduction: let XLA fuse it
    x3 = x.reshape(G, L, C)                  # native dtype, no f32 upcast
    row_bytes = L * C * x3.dtype.itemsize
    tg = max(8, (_MAX_BLOCK_BYTES // max(row_bytes, 1)) // 8 * 8)
    tg = min(tg, _round_up(G, 8))
    out = pl.pallas_call(
        _max_sublane_kernel,
        out_shape=jax.ShapeDtypeStruct((G, C), x3.dtype),
        grid=(pl.cdiv(G, tg),),
        in_specs=[pl.BlockSpec((tg, L, C), lambda i: (i, 0, 0))],
        out_specs=pl.BlockSpec((tg, C), lambda i: (i, 0)),
        compiler_params=pltpu.CompilerParams(
            dimension_semantics=("parallel",),
            vmem_limit_bytes=_VMEM_LIMIT),
    )(x3)
    return out.reshape(*lead, C)


# ---------------------------------------------------------------------------
# Basic ops (channel-last glue around the Pallas kernels)
# ---------------------------------------------------------------------------
def act(x):
    # TODO(synk): eu.activate_func assumed to be nn.GELU (exact erf form).
    return jax.nn.gelu(x, approximate=False)


def sequence_extend(x, m):
    # x: [B, L, C]
    # TODO(synk): eu.sequence_extend assumed to replicate-pad m samples at each end.
    return jnp.pad(x, ((0, 0), (m, m), (0, 0)), mode="edge")


def batchnorm(p, x, eps=1e-5):
    # channel-last BatchNorm, training-mode batch statistics
    # TODO(synk): matches a freshly built nn.BatchNorm (no running stats).
    axes = tuple(range(x.ndim - 1))
    mean = jnp.mean(x, axis=axes, keepdims=True)
    var = jnp.mean(jnp.square(x - mean), axis=axes, keepdims=True)
    return (x - mean) * lax.rsqrt(var + eps) * p["gamma"] + p["beta"]


def rmsnorm(p, x):
    # F.normalize(x, dim=channel) * g * sqrt(dim); channel is the last axis here.
    norm = jnp.sqrt(jnp.sum(x * x, axis=-1, keepdims=True))
    xn = x / jnp.maximum(norm, 1e-12)
    return xn * p["g"] * p["scale"]


def channel_mix(p, x):
    """Linear / Conv1d(k=1) / Conv2d(1x1) in channel-last layout: [..., C] -> [..., Cout]."""
    sh = x.shape
    y = matmul_bias(x.reshape(-1, sh[-1]), p["w"], p["b"])
    return y.reshape(sh[:-1] + (p["w"].shape[1],))


def conv1d(p, x, stride=1):
    """Conv1d via channel-last im2col (no transpose) + Pallas matmul.  x: [B, L, C]."""
    # TODO(synk): tap accumulation (no im2col materialisation) would save ~ksize HBM passes.
    B, L, C = x.shape
    S = p["ksize"]
    L_out = (L - S) // stride + 1
    cols = [lax.slice(x, (0, j, 0), (B, j + stride * (L_out - 1) + 1, C),
                      (1, stride, 1)) for j in range(S)]
    patches = jnp.concatenate(cols, axis=-1)                   # [B, L_out, C*S]
    y = matmul_bias(patches.reshape(B * L_out, C * S), p["w"], p["b"])
    return y.reshape(B, L_out, -1)


def conv_transpose1d(p, x, stride=2, padding=3):
    """ConvTranspose1d(k=4, s=2, p=3) as zero-insertion + conv.  x: [B, L, C]."""
    # TODO(synk): weight is used un-flipped (random init); flip taps / swap channels
    # when loading a real nn.ConvTranspose1d checkpoint.
    B, L, C = x.shape
    K = p["ksize"]
    Lz = (L - 1) * stride + 1
    z = jnp.zeros((B, Lz, C), x.dtype).at[:, ::stride, :].set(x)
    extra = K - 1 - padding
    if extra > 0:
        z = jnp.pad(z, ((0, 0), (extra, extra), (0, 0)))
    elif extra < 0:
        z = z[:, -extra:Lz + extra, :]
    return conv1d(p, z, stride=1)


def mlp_apply(p, x):
    # eu.MLP: conv/linear [+ BatchNorm + activation] per layer (final layer iff final_proc)
    for lp in p["layers"]:
        x = channel_mix(lp, x)
        if "bn" in lp:
            x = act(batchnorm(lp["bn"], x))
    return x


# ---------------------------------------------------------------------------
# DGCNN / GCNEncoder (channel-last: points are [B, N, C])
# ---------------------------------------------------------------------------
def knn_indices(pts, k):
    # TODO(synk): exact top_k kept for parity; lax.approx_max_k is the faster TPU path at scale.
    sq = jnp.sum(pts * pts, axis=-1)
    inner = jnp.einsum("bnc,bmc->bnm", pts, pts)
    dist = sq[:, :, None] - 2.0 * inner + sq[:, None, :]
    _, idx = lax.top_k(-dist, k)
    return idx                                               # [B, N, k]


def get_graph_feature(x, k):
    # x: [B, N, C]  ->  [B, N, k, 2C]
    idx = knn_indices(x, k)
    neighbors = jnp.take_along_axis(x[:, None, :, :], idx[..., None], axis=2)
    center = x[:, :, None, :]
    return jnp.concatenate(
        [neighbors - center, jnp.broadcast_to(center, neighbors.shape)], axis=-1)


def gcn_apply(p, x):
    # x: [B, N, C] -> [B, N, emb_out]
    k = p["n_near"]
    f = mlp_apply(p["conv1"], get_graph_feature(x, k))        # [B, N, k, C1]
    x1 = max_over_axis2(f)                                    # max over neighbors (sublane)
    f = mlp_apply(p["conv2"], get_graph_feature(x1, k))
    x2 = max_over_axis2(f)
    return mlp_apply(p["conv3"], jnp.concatenate([x1, x2], axis=-1))


# ---------------------------------------------------------------------------
# Time embedding / TimeMerge / Block
# ---------------------------------------------------------------------------
def block_apply(p, x, scale_shift=None):
    x = channel_mix(p["conv"], x)
    x = rmsnorm(p["norm"], x)
    if scale_shift is not None:
        scale, shift = scale_shift
        x = x * (scale + 1.0) + shift
    return jax.nn.silu(x)


def time_merge_apply(p, x, time_emb):
    four_d = x.ndim == 4
    if four_d:
        B, S, SP, C = x.shape
        x = x.reshape(B, S * SP, C)
    t = matmul_bias(act(time_emb), p["mlp_w"], p["mlp_b"])[:, None, :]    # [B, 1, 2C]
    scale, shift = jnp.split(t, 2, axis=-1)
    h = block_apply(p["block1"], x, (scale, shift))
    h = block_apply(p["block2"], h)
    out = h + x                  # res_conv is Identity (dim_in == dim_out everywhere)
    if four_d:
        out = out.reshape(B, S, SP, out.shape[-1])
    return out


def time_encode_apply(p, t):
    half = p["sin_dim"] // 2
    emb = math.log(10000.0) / (half - 1)
    freqs = jnp.exp(jnp.arange(half, dtype=jnp.float32) * -emb)
    e = t[:, None] * freqs[None, :]
    e = jnp.concatenate([jnp.sin(e), jnp.cos(e)], axis=-1)
    e = act(matmul_bias(e, p["w1"], p["b1"]))
    return matmul_bias(e, p["w2"], p["b2"])


# ---------------------------------------------------------------------------
# Graph constructors / transfer modules (channel-last)
#   sparse: [B, S, C]    dense: [B, S, SP, C]
# ---------------------------------------------------------------------------
def point_to_sparse_apply(p, xy, time_emb):
    B, S, SP, C = xy.shape
    x = xy.reshape(B, S * SP, C)
    x = sequence_extend(x, 2)
    x = act(batchnorm(p["bn1"], conv1d(p["conv1"], x)))
    x = act(batchnorm(p["bn2"], conv1d(p["conv2"], x)))
    x = x.reshape(B, S, SP, x.shape[-1])
    x = max_over_axis2(x)                                     # [B, S, sparse_l0]
    return time_merge_apply(p["time_merge"], x, time_emb)


def point_to_dense_apply(p, xy, time_emb):
    B, S, SP, C = xy.shape
    d = gcn_apply(p["encoder"], xy.reshape(B, S * SP, C))     # [B, S*SP, emb]
    d = time_merge_apply(p["time_merge"], d, time_emb)
    return d.reshape(B, S, SP, d.shape[-1])


def dense_to_sparse_apply(p, sparse_fea, dense_fea):
    B, S, SP, Cd = dense_fea.shape
    d = sequence_extend(dense_fea.reshape(B, S * SP, Cd), 2)
    d = act(batchnorm(p["tbn"], conv1d(p["tconv"], d)))
    d = d.reshape(B, S, SP, Cd)
    sp_from_dense = max_over_axis2(d)                         # [B, S, Cd]
    union = jnp.concatenate([sparse_fea, sp_from_dense], axis=-1)
    return mlp_apply(p["encoder"], union)


def sparse_to_dense_apply(p, sparse_fea, dense_fea):
    B, S, SP, Cd = dense_fea.shape
    rep = jnp.broadcast_to(sparse_fea[:, :, None, :],
                           (B, S, SP, sparse_fea.shape[-1]))
    union = jnp.concatenate([dense_fea, rep], axis=-1)
    return mlp_apply(p["encoder"], union)


def downsample_apply(p, dense_fea):
    B, S, SP, C = dense_fea.shape
    x = sequence_extend(dense_fea.reshape(B, S * SP, C), 2)
    x = act(batchnorm(p["bn"], conv1d(p["conv"], x, stride=2)))
    return x.reshape(B, S, SP // 2, x.shape[-1])


def upsample_apply(p, dense_fea):
    B, S, SP, C = dense_fea.shape
    x = sequence_extend(dense_fea.reshape(B, S * SP, C), 1)
    x = act(batchnorm(p["bn"], conv_transpose1d(p["conv"], x)))
    return x.reshape(B, S, SP * 2, x.shape[-1])


def sd_encoder_apply(p, sparse_fea, dense_fea, time_emb):
    union_sparse = dense_to_sparse_apply(p["dense_to_sparse"], sparse_fea, dense_fea)
    union_dense = sparse_to_dense_apply(p["sparse_to_dense"], sparse_fea, dense_fea)
    union_sparse = gcn_apply(p["sparse_update"], union_sparse)
    B, S, SP, C = union_dense.shape
    ud = gcn_apply(p["dense_update"], union_dense.reshape(B, S * SP, C))
    union_dense = ud.reshape(B, S, SP, ud.shape[-1])
    if p["sample_type"] == "down":
        union_dense = downsample_apply(p["sample"], union_dense)
    elif p["sample_type"] == "up":
        union_dense = upsample_apply(p["sample"], union_dense)
    union_sparse = time_merge_apply(p["time_sp"], union_sparse, time_emb)
    union_dense = time_merge_apply(p["time_dn"], union_dense, time_emb)
    return union_sparse, union_dense


# ---------------------------------------------------------------------------
# SDGraphUNet forward
# ---------------------------------------------------------------------------
def sdgraph_unet_apply(p, xy, time):
    B, S, SP, Cin = xy.shape
    time_emb = time_encode_apply(p["time_encode"], time)

    sparse_up0 = point_to_sparse_apply(p["point_to_sparse"], xy, time_emb)   # [B,S,sl0]
    dense_up0 = point_to_dense_apply(p["point_to_dense"], xy, time_emb)      # [B,S,SP,dl0]

    sparse_up1, dense_up1 = sd_encoder_apply(p["sd_down1"], sparse_up0, dense_up0, time_emb)
    sparse_up2, dense_up2 = sd_encoder_apply(p["sd_down2"], sparse_up1, dense_up1, time_emb)

    sp_glo = jnp.max(sparse_up2, axis=1)                                       # [B, sl2]
    dn_glo = jnp.max(dense_up2.reshape(B, -1, dense_up2.shape[-1]), axis=1)    # [B, dl2]
    fea_global = mlp_apply(p["global_linear"],
                           jnp.concatenate([sp_glo, dn_glo], axis=-1))         # [B, gd]

    sparse_fit = jnp.broadcast_to(fea_global[:, None, :],
                                  (B, S, fea_global.shape[-1]))
    sparse_down2 = jnp.concatenate([sparse_up2, sparse_fit], axis=-1)
    S2, SP2 = dense_up2.shape[1], dense_up2.shape[2]
    dense_fit = jnp.broadcast_to(fea_global[:, None, None, :],
                                 (B, S2, SP2, fea_global.shape[-1]))
    dense_down2 = jnp.concatenate([dense_up2, dense_fit], axis=-1)

    sparse_down1, dense_down1 = sd_encoder_apply(p["sd_up2"], sparse_down2, dense_down2, time_emb)
    sparse_down1 = jnp.concatenate([sparse_down1, sparse_up1], axis=-1)
    dense_down1 = jnp.concatenate([dense_down1, dense_up1], axis=-1)

    sparse_down0, dense_down0 = sd_encoder_apply(p["sd_up1"], sparse_down1, dense_down1, time_emb)
    sparse_graph = jnp.concatenate([sparse_down0, sparse_up0], axis=-1)
    dense_graph = jnp.concatenate([dense_down0, dense_up0], axis=-1)

    sparse_rep = jnp.broadcast_to(sparse_graph[:, :, None, :],
                                  (B, S, SP, sparse_graph.shape[-1]))
    dense_graph = jnp.concatenate([dense_graph, sparse_rep, xy], axis=-1)      # channel-last
    dense_graph = dense_graph.reshape(B, S * SP, -1)

    noise = mlp_apply(p["final_linear"], dense_graph)                          # [B, S*SP, Cout]
    return noise.reshape(B, S, SP, -1)                                         # [B, S, SP, Cout]


# ---------------------------------------------------------------------------
# Deterministic parameter initialization (mirrors the PyTorch constructors)
# Weights are stored in bf16 (MXU-native); biases / norm params stay f32.
# ---------------------------------------------------------------------------
class KeyGen:
    def __init__(self, key):
        self._key = key

    def __call__(self):
        self._key, k = jax.random.split(self._key)
        return k


def init_dense(kg, fan_in, fan_out, extra=None):
    w = jax.random.normal(kg(), (fan_in, fan_out), jnp.float32) / math.sqrt(fan_in)
    p = {"w": w.astype(jnp.bfloat16), "b": jnp.zeros((fan_out,), jnp.float32)}
    if extra:
        p.update(extra)
    return p


def init_bn(c):
    return {"gamma": jnp.ones((c,), jnp.float32), "beta": jnp.zeros((c,), jnp.float32)}


def init_conv1d(kg, cin, cout, ksize):
    return init_dense(kg, cin * ksize, cout, {"ksize": ksize})


def init_mlp(kg, channels, final_proc):
    layers = []
    n = len(channels) - 1
    for i in range(n):
        lp = init_dense(kg, channels[i], channels[i + 1])
        if i < n - 1 or final_proc:
            lp["bn"] = init_bn(channels[i + 1])
        layers.append(lp)
    return {"layers": layers}


def init_gcn(kg, emb_in, emb_out, n_near):
    emb_inc = (emb_out / (4 * emb_in)) ** 0.25
    l1_0 = emb_in * 2
    l1_1 = int(l1_0 * emb_inc)
    l1_2 = int(l1_0 * emb_inc ** 2)
    l2_0 = l1_2 * 2
    l2_1 = int(l2_0 * emb_inc)
    l2_2 = emb_out
    l3_0 = l2_2 + l1_2
    l3_1 = int((emb_out / l3_0) ** 0.5 * l3_0)
    l3_2 = emb_out
    return {"n_near": n_near,
            "conv1": init_mlp(kg, (l1_0, l1_1, l1_2), True),
            "conv2": init_mlp(kg, (l2_0, l2_1, l2_2), True),
            "conv3": init_mlp(kg, (l3_0, l3_1, l3_2), True)}


def init_rmsnorm(dim):
    return {"g": jnp.ones((dim,), jnp.float32), "scale": float(dim) ** 0.5}


def init_block(kg, dim, dim_out):
    return {"conv": init_dense(kg, dim, dim_out), "norm": init_rmsnorm(dim_out)}


def init_time_merge(kg, dim_in, dim_out, time_dim):
    assert dim_in == dim_out  # res_conv is always Identity in SDGraphUNet
    lin = init_dense(kg, time_dim, dim_out * 2)
    return {"mlp_w": lin["w"], "mlp_b": lin["b"],
            "block1": init_block(kg, dim_in, dim_out),
            "block2": init_block(kg, dim_out, dim_out)}


def init_time_encode(kg, channel_time):
    l1 = init_dense(kg, channel_time // 4, channel_time // 2)
    l2 = init_dense(kg, channel_time // 2, channel_time)
    return {"sin_dim": channel_time // 4,
            "w1": l1["w"], "b1": l1["b"], "w2": l2["w"], "b2": l2["b"]}


def init_point_to_sparse(kg, point_dim, sparse_out, time_dim):
    mid = int((point_dim * sparse_out) ** 0.5)
    return {"conv1": init_conv1d(kg, point_dim, mid, 3), "bn1": init_bn(mid),
            "conv2": init_conv1d(kg, mid, sparse_out, 3), "bn2": init_bn(sparse_out),
            "time_merge": init_time_merge(kg, sparse_out, sparse_out, time_dim)}


def init_point_to_dense(kg, point_dim, emb_dim, time_dim, n_near):
    return {"encoder": init_gcn(kg, point_dim, emb_dim, n_near),
            "time_merge": init_time_merge(kg, emb_dim, emb_dim, time_dim)}


def init_dense_to_sparse(kg, sparse_in, dense_in):
    return {"tconv": init_conv1d(kg, dense_in, dense_in, 5), "tbn": init_bn(dense_in),
            "encoder": init_mlp(kg, (sparse_in + dense_in, sparse_in + dense_in), True)}


def init_sparse_to_dense(kg, sparse_in, dense_in):
    return {"encoder": init_mlp(kg, (sparse_in + dense_in, sparse_in + dense_in), True)}


def init_sd_encoder(kg, sparse_in, sparse_out, dense_in, dense_out,
                    sp_near, dn_near, sample_type, time_dim):
    p = {"dense_to_sparse": init_dense_to_sparse(kg, sparse_in, dense_in),
         "sparse_to_dense": init_sparse_to_dense(kg, sparse_in, dense_in),
         "sparse_update": init_gcn(kg, sparse_in + dense_in, sparse_out, sp_near),
         "dense_update": init_gcn(kg, dense_in + sparse_in, dense_out, dn_near),
         "sample_type": sample_type,
         "time_sp": init_time_merge(kg, sparse_out, sparse_out, time_dim),
         "time_dn": init_time_merge(kg, dense_out, dense_out, time_dim)}
    if sample_type == "down":
        p["sample"] = {"conv": init_conv1d(kg, dense_out, dense_out, 6),
                       "bn": init_bn(dense_out)}
    elif sample_type == "up":
        p["sample"] = {"conv": init_conv1d(kg, dense_out, dense_out, 4),
                       "bn": init_bn(dense_out)}
    return p


def init_sdgraph_unet(key, channel_in, channel_out,
                      sparse_l=(32, 128, 512), dense_l=(16, 64, 256),
                      global_dim=1024, time_emb_dim=256,
                      dn_near_down=50, dn_near_up=10, pt_dense_near=10):
    kg = KeyGen(key)
    sl0, sl1, sl2 = sparse_l
    dl0, dl1, dl2 = dense_l
    p = {"time_encode": init_time_encode(kg, time_emb_dim),
         "point_to_sparse": init_point_to_sparse(kg, channel_in, sl0, time_emb_dim),
         "point_to_dense": init_point_to_dense(kg, channel_in, dl0, time_emb_dim,
                                               pt_dense_near),
         "sd_down1": init_sd_encoder(kg, sl0, sl1, dl0, dl1, 1, dn_near_down,
                                     "down", time_emb_dim),
         "sd_down2": init_sd_encoder(kg, sl1, sl2, dl1, dl2, 1, dn_near_down,
                                     "down", time_emb_dim)}
    global_in = sl2 + dl2
    p["global_linear"] = init_mlp(
        kg, (global_in, int((global_in * global_dim) ** 0.5), global_dim), True)
    p["sd_up2"] = init_sd_encoder(kg, global_dim + sl2, sl2, global_dim + dl2, dl2,
                                  2, dn_near_up, "up", time_emb_dim)
    p["sd_up1"] = init_sd_encoder(kg, sl1 + sl2, sl1, dl1 + dl2, dl1,
                                  2, dn_near_up, "up", time_emb_dim)
    final_in = dl0 + sl0 + dl1 + sl1 + channel_in
    p["final_linear"] = init_mlp(
        kg, (final_in, int((channel_out * final_in) ** 0.5), channel_out), False)
    return p


# ---------------------------------------------------------------------------
if __name__ == "__main__":
    B, n_stk, n_stk_pnt = 2, 4, 8
    channel_in, channel_out = 2, 2

    # Small-but-consistent configuration (same structure / channel ratios as the original
    # 32/128/512, 16/64/256, 1024, 256 sizes, scaled down so the example stays tiny).
    params = init_sdgraph_unet(
        jax.random.PRNGKey(0), channel_in, channel_out,
        sparse_l=(8, 16, 32), dense_l=(4, 8, 16),
        global_dim=32, time_emb_dim=16,
        dn_near_down=8, dn_near_up=4, pt_dense_near=10)

    kx, kt = jax.random.split(jax.random.PRNGKey(0))
    xy = jax.random.normal(kx, (B, n_stk, n_stk_pnt, channel_in), jnp.float32)
    time = jax.random.uniform(kt, (B,), jnp.float32, minval=0.0, maxval=100.0)

    # One jit for the whole forward: every pallas_call is traced/compiled exactly once.
    fwd = jax.jit(lambda xy_, t_: sdgraph_unet_apply(params, xy_, t_))
    out = jax.block_until_ready(fwd(xy, time))

    assert out.shape == (B, n_stk, n_stk_pnt, channel_out), out.shape
    assert bool(jnp.all(jnp.isfinite(out)))
    print("KERNEL_OK")
</pallas_src>

<mosaic_0001>
module attributes {stable_mosaic.version = 11 : i64} {
  func.func @_matmul_bias_kernel(%arg0: i32, %arg1: memref<256x4xbf16, #tpu.memory_space<vmem>>, %arg2: memref<4x3xbf16, #tpu.memory_space<vmem>>, %arg3: memref<1x3xf32, #tpu.memory_space<vmem>>, %arg4: memref<256x3xf32, #tpu.memory_space<vmem>>) attributes {dimension_semantics = [#tpu.dimension_semantics<parallel>], iteration_bounds = array<i64: 3>, scalar_prefetch = 0 : i64, scratch_operands = 0 : i64, tpu.core_type = #tpu.core_type<tc>, window_params = [{transform_indices = @transform_0, window_bounds = array<i64: 256, 4>}, {pipeline_mode = #tpu.pipeline_mode<synchronous>, transform_indices = @transform_1, window_bounds = array<i64: 4, 3>}, {pipeline_mode = #tpu.pipeline_mode<synchronous>, transform_indices = @transform_2, window_bounds = array<i64: 1, 3>}, {transform_indices = @transform_3, window_bounds = array<i64: 256, 3>}]} {
    %c0 = arith.constant 0 : index
    %c0_0 = arith.constant 0 : index
    %0 = vector.load %arg1[%c0, %c0_0] : memref<256x4xbf16, #tpu.memory_space<vmem>>, vector<256x4xbf16>
    %c0_1 = arith.constant 0 : index
    %c0_2 = arith.constant 0 : index
    %1 = vector.load %arg2[%c0_1, %c0_2] : memref<4x3xbf16, #tpu.memory_space<vmem>>, vector<4x3xbf16>
    %cst = arith.constant dense<0.000000e+00> : vector<256x3xf32>
    %2 = tpu.matmul %0, %1, %cst {dimension_numbers = #tpu.dot_dimension_numbers<[1], [0], [0], [1], [0, 0, 1, 1], [], []>} : vector<256x4xbf16>, vector<4x3xbf16>, vector<256x3xf32> -> vector<256x3xf32>
    %c0_3 = arith.constant 0 : index
    %c0_4 = arith.constant 0 : index
    %3 = vector.load %arg3[%c0_3, %c0_4] : memref<1x3xf32, #tpu.memory_space<vmem>>, vector<1x3xf32>
    %4 = vector.broadcast %3 : vector<1x3xf32> to vector<256x3xf32>
    %5 = arith.addf %2, %4 : vector<256x3xf32>
    %c0_5 = arith.constant 0 : index
    %c0_6 = arith.constant 0 : index
    %6 = vector.load %arg4[%c0_5, %c0_6] : memref<256x3xf32, #tpu.memory_space<vmem>>, vector<256x3xf32>
    tpu.vector_store %arg4[%c0_5, %c0_6], %5 {strides = array<i32>} : memref<256x3xf32, #tpu.memory_space<vmem>>, vector<256x3xf32>,
    return
  }
  func.func @transform_0(%arg0: i32) -> (i32, i32) {
    %c0_i32 = arith.constant 0 : i32
    %c0_i32_0 = arith.constant 0 : i32
    return %arg0, %c0_i32 : i32, i32
  }
  func.func @transform_1(%arg0: i32) -> (i32, i32) {
    %c0_i32 = arith.constant 0 : i32
    %c0_i32_0 = arith.constant 0 : i32
    %c0_i32_1 = arith.constant 0 : i32
    return %c0_i32, %c0_i32_0 : i32, i32
  }
  func.func @transform_2(%arg0: i32) -> (i32, i32) {
    %c0_i32 = arith.constant 0 : i32
    %c0_i32_0 = arith.constant 0 : i32
    %c0_i32_1 = arith.constant 0 : i32
    return %c0_i32, %c0_i32_0 : i32, i32
  }
  func.func @transform_3(%arg0: i32) -> (i32, i32) {
    %c0_i32 = arith.constant 0 : i32
    %c0_i32_0 = arith.constant 0 : i32
    return %arg0, %c0_i32 : i32, i32
  }
}

module attributes {stable_mosaic.version = 11 : i64} {
  func.func @_matmul_bias_kernel(%arg0: i32, %arg1: memref<256x3xbf16, #tpu.memory_space<vmem>>, %arg2: memref<3x2xbf16, #tpu.memory_space<vmem>>, %arg3: memref<1x2xf32, #tpu.memory_space<vmem>>, %arg4: memref<256x2xf32, #tpu.memory_space<vmem>>) attributes {dimension_semantics = [#tpu.dimension_semantics<parallel>], iteration_bounds = array<i64: 3>, scalar_prefetch = 0 : i64, scratch_operands = 0 : i64, tpu.core_type = #tpu.core_type<tc>, window_params = [{transform_indices = @transform_0, window_bounds = array<i64: 256, 3>}, {pipeline_mode = #tpu.pipeline_mode<synchronous>, transform_indices = @transform_1, window_bounds = array<i64: 3, 2>}, {pipeline_mode = #tpu.pipeline_mode<synchronous>, transform_indices = @transform_2, window_bounds = array<i64: 1, 2>}, {transform_indices = @transform_3, window_bounds = array<i64: 256, 2>}]} {
    %c0 = arith.constant 0 : index
    %c0_0 = arith.constant 0 : index
    %0 = vector.load %arg1[%c0, %c0_0] : memref<256x3xbf16, #tpu.memory_space<vmem>>, vector<256x3xbf16>
    %c0_1 = arith.constant 0 : index
    %c0_2 = arith.constant 0 : index
    %1 = vector.load %arg2[%c0_1, %c0_2] : memref<3x2xbf16, #tpu.memory_space<vmem>>, vector<3x2xbf16>
    %cst = arith.constant dense<0.000000e+00> : vector<256x2xf32>
    %2 = tpu.matmul %0, %1, %cst {dimension_numbers = #tpu.dot_dimension_numbers<[1], [0], [0], [1], [0, 0, 1, 1], [], []>} : vector<256x3xbf16>, vector<3x2xbf16>, vector<256x2xf32> -> vector<256x2xf32>
    %c0_3 = arith.constant 0 : index
    %c0_4 = arith.constant 0 : index
    %3 = vector.load %arg3[%c0_3, %c0_4] : memref<1x2xf32, #tpu.memory_space<vmem>>, vector<1x2xf32>
    %4 = vector.broadcast %3 : vector<1x2xf32> to vector<256x2xf32>
    %5 = arith.addf %2, %4 : vector<256x2xf32>
    %c0_5 = arith.constant 0 : index
    %c0_6 = arith.constant 0 : index
    %6 = vector.load %arg4[%c0_5, %c0_6] : memref<256x2xf32, #tpu.memory_space<vmem>>, vector<256x2xf32>
    tpu.vector_store %arg4[%c0_5, %c0_6], %5 {strides = array<i32>} : memref<256x2xf32, #tpu.memory_space<vmem>>, vector<256x2xf32>,
    return
  }
  func.func @transform_0(%arg0: i32) -> (i32, i32) {
    %c0_i32 = arith.constant 0 : i32
    %c0_i32_0 = arith.constant 0 : i32
    return %arg0, %c0_i32 : i32, i32
  }
  func.func @transform_1(%arg0: i32) -> (i32, i32) {
    %c0_i32 = arith.constant 0 : i32
    %c0_i32_0 = arith.constant 0 : i32
    %c0_i32_1 = arith.constant 0 : i32
    return %c0_i32, %c0_i32_0 : i32, i32
  }
  func.func @transform_2(%arg0: i32) -> (i32, i32) {
    %c0_i32 = arith.constant 0 : i32
    %c0_i32_0 = arith.constant 0 : i32
    %c0_i32_1 = arith.constant 0 : i32
    return %c0_i32, %c0_i32_0 : i32, i32
  }
  func.func @transform_3(%arg0: i32) -> (i32, i32) {
    %c0_i32 = arith.constant 0 : i32
    %c0_i32_0 = arith.constant 0 : i32
    return %arg0, %c0_i32 : i32, i32
  }
}

module attributes {stable_mosaic.version = 11 : i64} {
  func.func @_matmul_bias_kernel(%arg0: i32, %arg1: memref<256x3xbf16, #tpu.memory_space<vmem>>, %arg2: memref<3x4xbf16, #tpu.memory_space<vmem>>, %arg3: memref<1x4xf32, #tpu.memory_space<vmem>>, %arg4: memref<256x4xf32, #tpu.memory_space<vmem>>) attributes {dimension_semantics = [#tpu.dimension_semantics<parallel>], iteration_bounds = array<i64: 3>, scalar_prefetch = 0 : i64, scratch_operands = 0 : i64, tpu.core_type = #tpu.core_type<tc>, window_params = [{transform_indices = @transform_0, window_bounds = array<i64: 256, 3>}, {pipeline_mode = #tpu.pipeline_mode<synchronous>, transform_indices = @transform_1, window_bounds = array<i64: 3, 4>}, {pipeline_mode = #tpu.pipeline_mode<synchronous>, transform_indices = @transform_2, window_bounds = array<i64: 1, 4>}, {transform_indices = @transform_3, window_bounds = array<i64: 256, 4>}]} {
    %c0 = arith.constant 0 : index
    %c0_0 = arith.constant 0 : index
    %0 = vector.load %arg1[%c0, %c0_0] : memref<256x3xbf16, #tpu.memory_space<vmem>>, vector<256x3xbf16>
    %c0_1 = arith.constant 0 : index
    %c0_2 = arith.constant 0 : index
    %1 = vector.load %arg2[%c0_1, %c0_2] : memref<3x4xbf16, #tpu.memory_space<vmem>>, vector<3x4xbf16>
    %cst = arith.constant dense<0.000000e+00> : vector<256x4xf32>
    %2 = tpu.matmul %0, %1, %cst {dimension_numbers = #tpu.dot_dimension_numbers<[1], [0], [0], [1], [0, 0, 1, 1], [], []>} : vector<256x3xbf16>, vector<3x4xbf16>, vector<256x4xf32> -> vector<256x4xf32>
    %c0_3 = arith.constant 0 : index
    %c0_4 = arith.constant 0 : index
    %3 = vector.load %arg3[%c0_3, %c0_4] : memref<1x4xf32, #tpu.memory_space<vmem>>, vector<1x4xf32>
    %4 = vector.broadcast %3 : vector<1x4xf32> to vector<256x4xf32>
    %5 = arith.addf %2, %4 : vector<256x4xf32>
    %c0_5 = arith.constant 0 : index
    %c0_6 = arith.constant 0 : index
    %6 = vector.load %arg4[%c0_5, %c0_6] : memref<256x4xf32, #tpu.memory_space<vmem>>, vector<256x4xf32>
    tpu.vector_store %arg4[%c0_5, %c0_6], %5 {strides = array<i32>} : memref<256x4xf32, #tpu.memory_space<vmem>>, vector<256x4xf32>,
    return
  }
  func.func @transform_0(%arg0: i32) -> (i32, i32) {
    %c0_i32 = arith.constant 0 : i32
    %c0_i32_0 = arith.constant 0 : i32
    return %arg0, %c0_i32 : i32, i32
  }
  func.func @transform_1(%arg0: i32) -> (i32, i32) {
    %c0_i32 = arith.constant 0 : i32
    %c0_i32_0 = arith.constant 0 : i32
    %c0_i32_1 = arith.constant 0 : i32
    return %c0_i32, %c0_i32_0 : i32, i32
  }
  func.func @transform_2(%arg0: i32) -> (i32, i32) {
    %c0_i32 = arith.constant 0 : i32
    %c0_i32_0 = arith.constant 0 : i32
    %c0_i32_1 = arith.constant 0 : i32
    return %c0_i32, %c0_i32_0 : i32, i32
  }
  func.func @transform_3(%arg0: i32) -> (i32, i32) {
    %c0_i32 = arith.constant 0 : i32
    %c0_i32_0 = arith.constant 0 : i32
    return %arg0, %c0_i32 : i32, i32
  }
}

module attributes {stable_mosaic.version = 11 : i64} {
  func.func @_matmul_bias_kernel(%arg0: i32, %arg1: memref<256x24xbf16, #tpu.memory_space<vmem>>, %arg2: memref<24x15xbf16, #tpu.memory_space<vmem>>, %arg3: memref<1x15xf32, #tpu.memory_space<vmem>>, %arg4: memref<256x15xf32, #tpu.memory_space<vmem>>) attributes {dimension_semantics = [#tpu.dimension_semantics<parallel>], iteration_bounds = array<i64: 2>, scalar_prefetch = 0 : i64, scratch_operands = 0 : i64, tpu.core_type = #tpu.core_type<tc>, window_params = [{transform_indices = @transform_0, window_bounds = array<i64: 256, 24>}, {pipeline_mode = #tpu.pipeline_mode<synchronous>, transform_indices = @transform_1, window_bounds = array<i64: 24, 15>}, {pipeline_mode = #tpu.pipeline_mode<synchronous>, transform_indices = @transform_2, window_bounds = array<i64: 1, 15>}, {transform_indices = @transform_3, window_bounds = array<i64: 256, 15>}]} {
    %c0 = arith.constant 0 : index
    %c0_0 = arith.constant 0 : index
    %0 = vector.load %arg1[%c0, %c0_0] : memref<256x24xbf16, #tpu.memory_space<vmem>>, vector<256x24xbf16>
    %c0_1 = arith.constant 0 : index
    %c0_2 = arith.constant 0 : index
    %1 = vector.load %arg2[%c0_1, %c0_2] : memref<24x15xbf16, #tpu.memory_space<vmem>>, vector<24x15xbf16>
    %cst = arith.constant dense<0.000000e+00> : vector<256x15xf32>
    %2 = tpu.matmul %0, %1, %cst {dimension_numbers = #tpu.dot_dimension_numbers<[1], [0], [0], [1], [0, 0, 1, 1], [], []>} : vector<256x24xbf16>, vector<24x15xbf16>, vector<256x15xf32> -> vector<256x15xf32>
    %c0_3 = arith.constant 0 : index
    %c0_4 = arith.constant 0 : index
    %3 = vector.load %arg3[%c0_3, %c0_4] : memref<1x15xf32, #tpu.memory_space<vmem>>, vector<1x15xf32>
    %4 = vector.broadcast %3 : vector<1x15xf32> to vector<256x15xf32>
    %5 = arith.addf %2, %4 : vector<256x15xf32>
    %c0_5 = arith.constant 0 : index
    %c0_6 = arith.constant 0 : index
    %6 = vector.load %arg4[%c0_5, %c0_6] : memref<256x15xf32, #tpu.memory_space<vmem>>, vector<256x15xf32>
    tpu.vector_store %arg4[%c0_5, %c0_6], %5 {strides = array<i32>} : memref<256x15xf32, #tpu.memory_space<vmem>>, vector<256x15xf32>,
    return
  }
  func.func @transform_0(%arg0: i32) -> (i32, i32) {
    %c0_i32 = arith.constant 0 : i32
    %c0_i32_0 = arith.constant 0 : i32
    return %arg0, %c0_i32 : i32, i32
  }
  func.func @transform_1(%arg0: i32) -> (i32, i32) {
    %c0_i32 = arith.constant 0 : i32
    %c0_i32_0 = arith.constant 0 : i32
    %c0_i32_1 = arith.constant 0 : i32
    return %c0_i32, %c0_i32_0 : i32, i32
  }
  func.func @transform_2(%arg0: i32) -> (i32, i32) {
    %c0_i32 = arith.constant 0 : i32
    %c0_i32_0 = arith.constant 0 : i32
    %c0_i32_1 = arith.constant 0 : i32
    return %c0_i32, %c0_i32_0 : i32, i32
  }
  func.func @transform_3(%arg0: i32) -> (i32, i32) {
    %c0_i32 = arith.constant 0 : i32
    %c0_i32_0 = arith.constant 0 : i32
    return %arg0, %c0_i32 : i32, i32
  }
}

module attributes {stable_mosaic.version = 11 : i64} {
  func.func @_matmul_bias_kernel(%arg0: i32, %arg1: memref<256x15xbf16, #tpu.memory_space<vmem>>, %arg2: memref<15x9xbf16, #tpu.memory_space<vmem>>, %arg3: memref<1x9xf32, #tpu.memory_space<vmem>>, %arg4: memref<256x9xf32, #tpu.memory_space<vmem>>) attributes {dimension_semantics = [#tpu.dimension_semantics<parallel>], iteration_bounds = array<i64: 2>, scalar_prefetch = 0 : i64, scratch_operands = 0 : i64, tpu.core_type = #tpu.core_type<tc>, window_params = [{transform_indices = @transform_0, window_bounds = array<i64: 256, 15>}, {pipeline_mode = #tpu.pipeline_mode<synchronous>, transform_indices = @transform_1, window_bounds = array<i64: 15, 9>}, {pipeline_mode = #tpu.pipeline_mode<synchronous>, transform_indices = @transform_2, window_bounds = array<i64: 1, 9>}, {transform_indices = @transform_3, window_bounds = array<i64: 256, 9>}]} {
    %c0 = arith.constant 0 : index
    %c0_0 = arith.constant 0 : index
    %0 = vector.load %arg1[%c0, %c0_0] : memref<256x15xbf16, #tpu.memory_space<vmem>>, vector<256x15xbf16>
    %c0_1 = arith.constant 0 : index
    %c0_2 = arith.constant 0 : index
    %1 = vector.load %arg2[%c0_1, %c0_2] : memref<15x9xbf16, #tpu.memory_space<vmem>>, vector<15x9xbf16>
    %cst = arith.constant dense<0.000000e+00> : vector<256x9xf32>
    %2 = tpu.matmul %0, %1, %cst {dimension_numbers = #tpu.dot_dimension_numbers<[1], [0], [0], [1], [0, 0, 1, 1], [], []>} : vector<256x15xbf16>, vector<15x9xbf16>, vector<256x9xf32> -> vector<256x9xf32>
    %c0_3 = arith.constant 0 : index
    %c0_4 = arith.constant 0 : index
    %3 = vector.load %arg3[%c0_3, %c0_4] : memref<1x9xf32, #tpu.memory_space<vmem>>, vector<1x9xf32>
    %4 = vector.broadcast %3 : vector<1x9xf32> to vector<256x9xf32>
    %5 = arith.addf %2, %4 : vector<256x9xf32>
    %c0_5 = arith.constant 0 : index
    %c0_6 = arith.constant 0 : index
    %6 = vector.load %arg4[%c0_5, %c0_6] : memref<256x9xf32, #tpu.memory_space<vmem>>, vector<256x9xf32>
    tpu.vector_store %arg4[%c0_5, %c0_6], %5 {strides = array<i32>} : memref<256x9xf32, #tpu.memory_space<vmem>>, vector<256x9xf32>,
    return
  }
  func.func @transform_0(%arg0: i32) -> (i32, i32) {
    %c0_i32 = arith.constant 0 : i32
    %c0_i32_0 = arith.constant 0 : i32
    return %arg0, %c0_i32 : i32, i32
  }
  func.func @transform_1(%arg0: i32) -> (i32, i32) {
    %c0_i32 = arith.constant 0 : i32
    %c0_i32_0 = arith.constant 0 : i32
    %c0_i32_1 = arith.constant 0 : i32
    return %c0_i32, %c0_i32_0 : i32, i32
  }
  func.func @transform_2(%arg0: i32) -> (i32, i32) {
    %c0_i32 = arith.constant 0 : i32
    %c0_i32_0 = arith.constant 0 : i32
    %c0_i32_1 = arith.constant 0 : i32
    return %c0_i32, %c0_i32_0 : i32, i32
  }
  func.func @transform_3(%arg0: i32) -> (i32, i32) {
    %c0_i32 = arith.constant 0 : i32
    %c0_i32_0 = arith.constant 0 : i32
    return %arg0, %c0_i32 : i32, i32
  }
}

module attributes {stable_mosaic.version = 11 : i64} {
  func.func @_max_sublane_kernel(%arg0: i32, %arg1: memref<64x8x9xf32, #tpu.memory_space<vmem>>, %arg2: memref<64x9xf32, #tpu.memory_space<vmem>>) attributes {dimension_semantics = [#tpu.dimension_semantics<parallel>], iteration_bounds = array<i64: 1>, scalar_prefetch = 0 : i64, scratch_operands = 0 : i64, tpu.core_type = #tpu.core_type<tc>, window_params = [{transform_indices = @transform_0, window_bounds = array<i64: 64, 8, 9>}, {transform_indices = @transform_1, window_bounds = array<i64: 64, 9>}]} {
    %c0 = arith.constant 0 : index
    %c0_0 = arith.constant 0 : index
    %c0_1 = arith.constant 0 : index
    %0 = vector.load %arg1[%c0, %c0_0, %c0_1] : memref<64x8x9xf32, #tpu.memory_space<vmem>>, vector<64x8x9xf32>
    %cst = arith.constant dense<0xFF800000> : vector<64x9xf32>
    %1 = vector.multi_reduction <maximumf>, %0, %cst [1] : vector<64x8x9xf32> to vector<64x9xf32>
    %c0_2 = arith.constant 0 : index
    %c0_3 = arith.constant 0 : index
    %2 = vector.load %arg2[%c0_2, %c0_3] : memref<64x9xf32, #tpu.memory_space<vmem>>, vector<64x9xf32>
    tpu.vector_store %arg2[%c0_2, %c0_3], %1 {strides = array<i32>} : memref<64x9xf32, #tpu.memory_space<vmem>>, vector<64x9xf32>,
    return
  }
  func.func @transform_0(%arg0: i32) -> (i32, i32, i32) {
    %c0_i32 = arith.constant 0 : i32
    %c0_i32_0 = arith.constant 0 : i32
    %c0_i32_1 = arith.constant 0 : i32
    return %arg0, %c0_i32, %c0_i32_0 : i32, i32, i32
  }
  func.func @transform_1(%arg0: i32) -> (i32, i32) {
    %c0_i32 = arith.constant 0 : i32
    %c0_i32_0 = arith.constant 0 : i32
    return %arg0, %c0_i32 : i32, i32
  }
}

module attributes {stable_mosaic.version = 11 : i64} {
  func.func @_matmul_bias_kernel(%arg0: i32, %arg1: memref<256x18xbf16, #tpu.memory_space<vmem>>, %arg2: memref<18x11xbf16, #tpu.memory_space<vmem>>, %arg3: memref<1x11xf32, #tpu.memory_space<vmem>>, %arg4: memref<256x11xf32, #tpu.memory_space<vmem>>) attributes {dimension_semantics = [#tpu.dimension_semantics<parallel>], iteration_bounds = array<i64: 2>, scalar_prefetch = 0 : i64, scratch_operands = 0 : i64, tpu.core_type = #tpu.core_type<tc>, window_params = [{transform_indices = @transform_0, window_bounds = array<i64: 256, 18>}, {pipeline_mode = #tpu.pipeline_mode<synchronous>, transform_indices = @transform_1, window_bounds = array<i64: 18, 11>}, {pipeline_mode = #tpu.pipeline_mode<synchronous>, transform_indices = @transform_2, window_bounds = array<i64: 1, 11>}, {transform_indices = @transform_3, window_bounds = array<i64: 256, 11>}]} {
    %c0 = arith.constant 0 : index
    %c0_0 = arith.constant 0 : index
    %0 = vector.load %arg1[%c0, %c0_0] : memref<256x18xbf16, #tpu.memory_space<vmem>>, vector<256x18xbf16>
    %c0_1 = arith.constant 0 : index
    %c0_2 = arith.constant 0 : index
    %1 = vector.load %arg2[%c0_1, %c0_2] : memref<18x11xbf16, #tpu.memory_space<vmem>>, vector<18x11xbf16>
    %cst = arith.constant dense<0.000000e+00> : vector<256x11xf32>
    %2 = tpu.matmul %0, %1, %cst {dimension_numbers = #tpu.dot_dimension_numbers<[1], [0], [0], [1], [0, 0, 1, 1], [], []>} : vector<256x18xbf16>, vector<18x11xbf16>, vector<256x11xf32> -> vector<256x11xf32>
    %c0_3 = arith.constant 0 : index
    %c0_4 = arith.constant 0 : index
    %3 = vector.load %arg3[%c0_3, %c0_4] : memref<1x11xf32, #tpu.memory_space<vmem>>, vector<1x11xf32>
    %4 = vector.broadcast %3 : vector<1x11xf32> to vector<256x11xf32>
    %5 = arith.addf %2, %4 : vector<256x11xf32>
    %c0_5 = arith.constant 0 : index
    %c0_6 = arith.constant 0 : index
    %6 = vector.load %arg4[%c0_5, %c0_6] : memref<256x11xf32, #tpu.memory_space<vmem>>, vector<256x11xf32>
    tpu.vector_store %arg4[%c0_5, %c0_6], %5 {strides = array<i32>} : memref<256x11xf32, #tpu.memory_space<vmem>>, vector<256x11xf32>,
    return
  }
  func.func @transform_0(%arg0: i32) -> (i32, i32) {
    %c0_i32 = arith.constant 0 : i32
    %c0_i32_0 = arith.constant 0 : i32
    return %arg0, %c0_i32 : i32, i32
  }
  func.func @transform_1(%arg0: i32) -> (i32, i32) {
    %c0_i32 = arith.constant 0 : i32
    %c0_i32_0 = arith.constant 0 : i32
    %c0_i32_1 = arith.constant 0 : i32
    return %c0_i32, %c0_i32_0 : i32, i32
  }
  func.func @transform_2(%arg0: i32) -> (i32, i32) {
    %c0_i32 = arith.constant 0 : i32
    %c0_i32_0 = arith.constant 0 : i32
    %c0_i32_1 = arith.constant 0 : i32
    return %c0_i32, %c0_i32_0 : i32, i32
  }
  func.func @transform_3(%arg0: i32) -> (i32, i32) {
    %c0_i32 = arith.constant 0 : i32
    %c0_i32_0 = arith.constant 0 : i32
    return %arg0, %c0_i32 : i32, i32
  }
}

module attributes {stable_mosaic.version = 11 : i64} {
  func.func @_matmul_bias_kernel(%arg0: i32, %arg1: memref<256x11xbf16, #tpu.memory_space<vmem>>, %arg2: memref<11x8xbf16, #tpu.memory_space<vmem>>, %arg3: memref<1x8xf32, #tpu.memory_space<vmem>>, %arg4: memref<256x8xf32, #tpu.memory_space<vmem>>) attributes {dimension_semantics = [#tpu.dimension_semantics<parallel>], iteration_bounds = array<i64: 2>, scalar_prefetch = 0 : i64, scratch_operands = 0 : i64, tpu.core_type = #tpu.core_type<tc>, window_params = [{transform_indices = @transform_0, window_bounds = array<i64: 256, 11>}, {pipeline_mode = #tpu.pipeline_mode<synchronous>, transform_indices = @transform_1, window_bounds = array<i64: 11, 8>}, {pipeline_mode = #tpu.pipeline_mode<synchronous>, transform_indices = @transform_2, window_bounds = array<i64: 1, 8>}, {transform_indices = @transform_3, window_bounds = array<i64: 256, 8>}]} {
    %c0 = arith.constant 0 : index
    %c0_0 = arith.constant 0 : index
    %0 = vector.load %arg1[%c0, %c0_0] : memref<256x11xbf16, #tpu.memory_space<vmem>>, vector<256x11xbf16>
    %c0_1 = arith.constant 0 : index
    %c0_2 = arith.constant 0 : index
    %1 = vector.load %arg2[%c0_1, %c0_2] : memref<11x8xbf16, #tpu.memory_space<vmem>>, vector<11x8xbf16>
    %cst = arith.constant dense<0.000000e+00> : vector<256x8xf32>
    %2 = tpu.matmul %0, %1, %cst {dimension_numbers = #tpu.dot_dimension_numbers<[1], [0], [0], [1], [0, 0, 1, 1], [], []>} : vector<256x11xbf16>, vector<11x8xbf16>, vector<256x8xf32> -> vector<256x8xf32>
    %c0_3 = arith.constant 0 : index
    %c0_4 = arith.constant 0 : index
    %3 = vector.load %arg3[%c0_3, %c0_4] : memref<1x8xf32, #tpu.memory_space<vmem>>, vector<1x8xf32>
    %4 = vector.broadcast %3 : vector<1x8xf32> to vector<256x8xf32>
    %5 = arith.addf %2, %4 : vector<256x8xf32>
    %c0_5 = arith.constant 0 : index
    %c0_6 = arith.constant 0 : index
    %6 = vector.load %arg4[%c0_5, %c0_6] : memref<256x8xf32, #tpu.memory_space<vmem>>, vector<256x8xf32>
    tpu.vector_store %arg4[%c0_5, %c0_6], %5 {strides = array<i32>} : memref<256x8xf32, #tpu.memory_space<vmem>>, vector<256x8xf32>,
    return
  }
  func.func @transform_0(%arg0: i32) -> (i32, i32) {
    %c0_i32 = arith.constant 0 : i32
    %c0_i32_0 = arith.constant 0 : i32
    return %arg0, %c0_i32 : i32, i32
  }
  func.func @transform_1(%arg0: i32) -> (i32, i32) {
    %c0_i32 = arith.constant 0 : i32
    %c0_i32_0 = arith.constant 0 : i32
    %c0_i32_1 = arith.constant 0 : i32
    return %c0_i32, %c0_i32_0 : i32, i32
  }
  func.func @transform_2(%arg0: i32) -> (i32, i32) {
    %c0_i32 = arith.constant 0 : i32
    %c0_i32_0 = arith.constant 0 : i32
    %c0_i32_1 = arith.constant 0 : i32
    return %c0_i32, %c0_i32_0 : i32, i32
  }
  func.func @transform_3(%arg0: i32) -> (i32, i32) {
    %c0_i32 = arith.constant 0 : i32
    %c0_i32_0 = arith.constant 0 : i32
    return %arg0, %c0_i32 : i32, i32
  }
}

module attributes {stable_mosaic.version = 11 : i64} {
  func.func @_max_sublane_kernel(%arg0: i32, %arg1: memref<64x8x8xf32, #tpu.memory_space<vmem>>, %arg2: memref<64x8xf32, #tpu.memory_space<vmem>>) attributes {dimension_semantics = [#tpu.dimension_semantics<parallel>], iteration_bounds = array<i64: 1>, scalar_prefetch = 0 : i64, scratch_operands = 0 : i64, tpu.core_type = #tpu.core_type<tc>, window_params = [{transform_indices = @transform_0, window_bounds = array<i64: 64, 8, 8>}, {transform_indices = @transform_1, window_bounds = array<i64: 64, 8>}]} {
    %c0 = arith.constant 0 : index
    %c0_0 = arith.constant 0 : index
    %c0_1 = arith.constant 0 : index
    %0 = vector.load %arg1[%c0, %c0_0, %c0_1] : memref<64x8x8xf32, #tpu.memory_space<vmem>>, vector<64x8x8xf32>
    %cst = arith.constant dense<0xFF800000> : vector<64x8xf32>
    %1 = vector.multi_reduction <maximumf>, %0, %cst [1] : vector<64x8x8xf32> to vector<64x8xf32>
    %c0_2 = arith.constant 0 : index
    %c0_3 = arith.constant 0 : index
    %2 = vector.load %arg2[%c0_2, %c0_3] : memref<64x8xf32, #tpu.memory_space<vmem>>, vector<64x8xf32>
    tpu.vector_store %arg2[%c0_2, %c0_3], %1 {strides = array<i32>} : memref<64x8xf32, #tpu.memory_space<vmem>>, vector<64x8xf32>,
    return
  }
  func.func @transform_0(%arg0: i32) -> (i32, i32, i32) {
    %c0_i32 = arith.constant 0 : i32
    %c0_i32_0 = arith.constant 0 : i32
    %c0_i32_1 = arith.constant 0 : i32
    return %arg0, %c0_i32, %c0_i32_0 : i32, i32, i32
  }
  func.func @transform_1(%arg0: i32) -> (i32, i32) {
    %c0_i32 = arith.constant 0 : i32
    %c0_i32_0 = arith.constant 0 : i32
    return %arg0, %c0_i32 : i32, i32
  }
}

module attributes {stable_mosaic.version = 11 : i64} {
  func.func @_matmul_bias_kernel(%arg0: i32, %arg1: memref<128x48xbf16, #tpu.memory_space<vmem>>, %arg2: memref<48x30xbf16, #tpu.memory_space<vmem>>, %arg3: memref<1x30xf32, #tpu.memory_space<vmem>>, %arg4: memref<128x30xf32, #tpu.memory_space<vmem>>) attributes {dimension_semantics = [#tpu.dimension_semantics<parallel>], iteration_bounds = array<i64: 2>, scalar_prefetch = 0 : i64, scratch_operands = 0 : i64, tpu.core_type = #tpu.core_type<tc>, window_params = [{transform_indices = @transform_0, window_bounds = array<i64: 128, 48>}, {pipeline_mode = #tpu.pipeline_mode<synchronous>, transform_indices = @transform_1, window_bounds = array<i64: 48, 30>}, {pipeline_mode = #tpu.pipeline_mode<synchronous>, transform_indices = @transform_2, window_bounds = array<i64: 1, 30>}, {transform_indices = @transform_3, window_bounds = array<i64: 128, 30>}]} {
    %c0 = arith.constant 0 : index
    %c0_0 = arith.constant 0 : index
    %0 = vector.load %arg1[%c0, %c0_0] : memref<128x48xbf16, #tpu.memory_space<vmem>>, vector<128x48xbf16>
    %c0_1 = arith.constant 0 : index
    %c0_2 = arith.constant 0 : index
    %1 = vector.load %arg2[%c0_1, %c0_2] : memref<48x30xbf16, #tpu.memory_space<vmem>>, vector<48x30xbf16>
    %cst = arith.constant dense<0.000000e+00> : vector<128x30xf32>
    %2 = tpu.matmul %0, %1, %cst {dimension_numbers = #tpu.dot_dimension_numbers<[1], [0], [0], [1], [0, 0, 1, 1], [], []>} : vector<128x48xbf16>, vector<48x30xbf16>, vector<128x30xf32> -> vector<128x30xf32>
    %c0_3 = arith.constant 0 : index
    %c0_4 = arith.constant 0 : index
    %3 = vector.load %arg3[%c0_3, %c0_4] : memref<1x30xf32, #tpu.memory_space<vmem>>, vector<1x30xf32>
    %4 = vector.broadcast %3 : vector<1x30xf32> to vector<128x30xf32>
    %5 = arith.addf %2, %4 : vector<128x30xf32>
    %c0_5 = arith.constant 0 : index
    %c0_6 = arith.constant 0 : index
    %6 = vector.load %arg4[%c0_5, %c0_6] : memref<128x30xf32, #tpu.memory_space<vmem>>, vector<128x30xf32>
    tpu.vector_store %arg4[%c0_5, %c0_6], %5 {strides = array<i32>} : memref<128x30xf32, #tpu.memory_space<vmem>>, vector<128x30xf32>,
    return
  }
  func.func @transform_0(%arg0: i32) -> (i32, i32) {
    %c0_i32 = arith.constant 0 : i32
    %c0_i32_0 = arith.constant 0 : i32
    return %arg0, %c0_i32 : i32, i32
  }
  func.func @transform_1(%arg0: i32) -> (i32, i32) {
    %c0_i32 = arith.constant 0 : i32
    %c0_i32_0 = arith.constant 0 : i32
    %c0_i32_1 = arith.constant 0 : i32
    return %c0_i32, %c0_i32_0 : i32, i32
  }
  func.func @transform_2(%arg0: i32) -> (i32, i32) {
    %c0_i32 = arith.constant 0 : i32
    %c0_i32_0 = arith.constant 0 : i32
    %c0_i32_1 = arith.constant 0 : i32
    return %c0_i32, %c0_i32_0 : i32, i32
  }
  func.func @transform_3(%arg0: i32) -> (i32, i32) {
    %c0_i32 = arith.constant 0 : i32
    %c0_i32_0 = arith.constant 0 : i32
    return %arg0, %c0_i32 : i32, i32
  }
}

module attributes {stable_mosaic.version = 11 : i64} {
  func.func @_matmul_bias_kernel(%arg0: i32, %arg1: memref<128x30xbf16, #tpu.memory_space<vmem>>, %arg2: memref<30x19xbf16, #tpu.memory_space<vmem>>, %arg3: memref<1x19xf32, #tpu.memory_space<vmem>>, %arg4: memref<128x19xf32, #tpu.memory_space<vmem>>) attributes {dimension_semantics = [#tpu.dimension_semantics<parallel>], iteration_bounds = array<i64: 2>, scalar_prefetch = 0 : i64, scratch_operands = 0 : i64, tpu.core_type = #tpu.core_type<tc>, window_params = [{transform_indices = @transform_0, window_bounds = array<i64: 128, 30>}, {pipeline_mode = #tpu.pipeline_mode<synchronous>, transform_indices = @transform_1, window_bounds = array<i64: 30, 19>}, {pipeline_mode = #tpu.pipeline_mode<synchronous>, transform_indices = @transform_2, window_bounds = array<i64: 1, 19>}, {transform_indices = @transform_3, window_bounds = array<i64: 128, 19>}]} {
    %c0 = arith.constant 0 : index
    %c0_0 = arith.constant 0 : index
    %0 = vector.load %arg1[%c0, %c0_0] : memref<128x30xbf16, #tpu.memory_space<vmem>>, vector<128x30xbf16>
    %c0_1 = arith.constant 0 : index
    %c0_2 = arith.constant 0 : index
    %1 = vector.load %arg2[%c0_1, %c0_2] : memref<30x19xbf16, #tpu.memory_space<vmem>>, vector<30x19xbf16>
    %cst = arith.constant dense<0.000000e+00> : vector<128x19xf32>
    %2 = tpu.matmul %0, %1, %cst {dimension_numbers = #tpu.dot_dimension_numbers<[1], [0], [0], [1], [0, 0, 1, 1], [], []>} : vector<128x30xbf16>, vector<30x19xbf16>, vector<128x19xf32> -> vector<128x19xf32>
    %c0_3 = arith.constant 0 : index
    %c0_4 = arith.constant 0 : index
    %3 = vector.load %arg3[%c0_3, %c0_4] : memref<1x19xf32, #tpu.memory_space<vmem>>, vector<1x19xf32>
    %4 = vector.broadcast %3 : vector<1x19xf32> to vector<128x19xf32>
    %5 = arith.addf %2, %4 : vector<128x19xf32>
    %c0_5 = arith.constant 0 : index
    %c0_6 = arith.constant 0 : index
    %6 = vector.load %arg4[%c0_5, %c0_6] : memref<128x19xf32, #tpu.memory_space<vmem>>, vector<128x19xf32>
    tpu.vector_store %arg4[%c0_5, %c0_6], %5 {strides = array<i32>} : memref<128x19xf32, #tpu.memory_space<vmem>>, vector<128x19xf32>,
    return
  }
  func.func @transform_0(%arg0: i32) -> (i32, i32) {
    %c0_i32 = arith.constant 0 : i32
    %c0_i32_0 = arith.constant 0 : i32
    return %arg0, %c0_i32 : i32, i32
  }
  func.func @transform_1(%arg0: i32) -> (i32, i32) {
    %c0_i32 = arith.constant 0 : i32
    %c0_i32_0 = arith.constant 0 : i32
    %c0_i32_1 = arith.constant 0 : i32
    return %c0_i32, %c0_i32_0 : i32, i32
  }
  func.func @transform_2(%arg0: i32) -> (i32, i32) {
    %c0_i32 = arith.constant 0 : i32
    %c0_i32_0 = arith.constant 0 : i32
    %c0_i32_1 = arith.constant 0 : i32
    return %c0_i32, %c0_i32_0 : i32, i32
  }
  func.func @transform_3(%arg0: i32) -> (i32, i32) {
    %c0_i32 = arith.constant 0 : i32
    %c0_i32_0 = arith.constant 0 : i32
    return %arg0, %c0_i32 : i32, i32
  }
}

module attributes {stable_mosaic.version = 11 : i64} {
  func.func @_matmul_bias_kernel(%arg0: i32, %arg1: memref<128x38xbf16, #tpu.memory_space<vmem>>, %arg2: memref<38x24xbf16, #tpu.memory_space<vmem>>, %arg3: memref<1x24xf32, #tpu.memory_space<vmem>>, %arg4: memref<128x24xf32, #tpu.memory_space<vmem>>) attributes {dimension_semantics = [#tpu.dimension_semantics<parallel>], iteration_bounds = array<i64: 2>, scalar_prefetch = 0 : i64, scratch_operands = 0 : i64, tpu.core_type = #tpu.core_type<tc>, window_params = [{transform_indices = @transform_0, window_bounds = array<i64: 128, 38>}, {pipeline_mode = #tpu.pipeline_mode<synchronous>, transform_indices = @transform_1, window_bounds = array<i64: 38, 24>}, {pipeline_mode = #tpu.pipeline_mode<synchronous>, transform_indices = @transform_2, window_bounds = array<i64: 1, 24>}, {transform_indices = @transform_3, window_bounds = array<i64: 128, 24>}]} {
    %c0 = arith.constant 0 : index
    %c0_0 = arith.constant 0 : index
    %0 = vector.load %arg1[%c0, %c0_0] : memref<128x38xbf16, #tpu.memory_space<vmem>>, vector<128x38xbf16>
    %c0_1 = arith.constant 0 : index
    %c0_2 = arith.constant 0 : index
    %1 = vector.load %arg2[%c0_1, %c0_2] : memref<38x24xbf16, #tpu.memory_space<vmem>>, vector<38x24xbf16>
    %cst = arith.constant dense<0.000000e+00> : vector<128x24xf32>
    %2 = tpu.matmul %0, %1, %cst {dimension_numbers = #tpu.dot_dimension_numbers<[1], [0], [0], [1], [0, 0, 1, 1], [], []>} : vector<128x38xbf16>, vector<38x24xbf16>, vector<128x24xf32> -> vector<128x24xf32>
    %c0_3 = arith.constant 0 : index
    %c0_4 = arith.constant 0 : index
    %3 = vector.load %arg3[%c0_3, %c0_4] : memref<1x24xf32, #tpu.memory_space<vmem>>, vector<1x24xf32>
    %4 = vector.broadcast %3 : vector<1x24xf32> to vector<128x24xf32>
    %5 = arith.addf %2, %4 : vector<128x24xf32>
    %c0_5 = arith.constant 0 : index
    %c0_6 = arith.constant 0 : index
    %6 = vector.load %arg4[%c0_5, %c0_6] : memref<128x24xf32, #tpu.memory_space<vmem>>, vector<128x24xf32>
    tpu.vector_store %arg4[%c0_5, %c0_6], %5 {strides = array<i32>} : memref<128x24xf32, #tpu.memory_space<vmem>>, vector<128x24xf32>,
    return
  }
  func.func @transform_0(%arg0: i32) -> (i32, i32) {
    %c0_i32 = arith.constant 0 : i32
    %c0_i32_0 = arith.constant 0 : i32
    return %arg0, %c0_i32 : i32, i32
  }
  func.func @transform_1(%arg0: i32) -> (i32, i32) {
    %c0_i32 = arith.constant 0 : i32
    %c0_i32_0 = arith.constant 0 : i32
    %c0_i32_1 = arith.constant 0 : i32
    return %c0_i32, %c0_i32_0 : i32, i32
  }
  func.func @transform_2(%arg0: i32) -> (i32, i32) {
    %c0_i32 = arith.constant 0 : i32
    %c0_i32_0 = arith.constant 0 : i32
    %c0_i32_1 = arith.constant 0 : i32
    return %c0_i32, %c0_i32_0 : i32, i32
  }
  func.func @transform_3(%arg0: i32) -> (i32, i32) {
    %c0_i32 = arith.constant 0 : i32
    %c0_i32_0 = arith.constant 0 : i32
    return %arg0, %c0_i32 : i32, i32
  }
}

module attributes {stable_mosaic.version = 11 : i64} {
  func.func @_matmul_bias_kernel(%arg0: i32, %arg1: memref<128x24xbf16, #tpu.memory_space<vmem>>, %arg2: memref<24x16xbf16, #tpu.memory_space<vmem>>, %arg3: memref<1x16xf32, #tpu.memory_space<vmem>>, %arg4: memref<128x16xf32, #tpu.memory_space<vmem>>) attributes {dimension_semantics = [#tpu.dimension_semantics<parallel>], iteration_bounds = array<i64: 2>, scalar_prefetch = 0 : i64, scratch_operands = 0 : i64, tpu.core_type = #tpu.core_type<tc>, window_params = [{transform_indices = @transform_0, window_bounds = array<i64: 128, 24>}, {pipeline_mode = #tpu.pipeline_mode<synchronous>, transform_indices = @transform_1, window_bounds = array<i64: 24, 16>}, {pipeline_mode = #tpu.pipeline_mode<synchronous>, transform_indices = @transform_2, window_bounds = array<i64: 1, 16>}, {transform_indices = @transform_3, window_bounds = array<i64: 128, 16>}]} {
    %c0 = arith.constant 0 : index
    %c0_0 = arith.constant 0 : index
    %0 = vector.load %arg1[%c0, %c0_0] : memref<128x24xbf16, #tpu.memory_space<vmem>>, vector<128x24xbf16>
    %c0_1 = arith.constant 0 : index
    %c0_2 = arith.constant 0 : index
    %1 = vector.load %arg2[%c0_1, %c0_2] : memref<24x16xbf16, #tpu.memory_space<vmem>>, vector<24x16xbf16>
    %cst = arith.constant dense<0.000000e+00> : vector<128x16xf32>
    %2 = tpu.matmul %0, %1, %cst {dimension_numbers = #tpu.dot_dimension_numbers<[1], [0], [0], [1], [0, 0, 1, 1], [], []>} : vector<128x24xbf16>, vector<24x16xbf16>, vector<128x16xf32> -> vector<128x16xf32>
    %c0_3 = arith.constant 0 : index
    %c0_4 = arith.constant 0 : index
    %3 = vector.load %arg3[%c0_3, %c0_4] : memref<1x16xf32, #tpu.memory_space<vmem>>, vector<1x16xf32>
    %4 = vector.broadcast %3 : vector<1x16xf32> to vector<128x16xf32>
    %5 = arith.addf %2, %4 : vector<128x16xf32>
    %c0_5 = arith.constant 0 : index
    %c0_6 = arith.constant 0 : index
    %6 = vector.load %arg4[%c0_5, %c0_6] : memref<128x16xf32, #tpu.memory_space<vmem>>, vector<128x16xf32>
    tpu.vector_store %arg4[%c0_5, %c0_6], %5 {strides = array<i32>} : memref<128x16xf32, #tpu.memory_space<vmem>>, vector<128x16xf32>,
    return
  }
  func.func @transform_0(%arg0: i32) -> (i32, i32) {
    %c0_i32 = arith.constant 0 : i32
    %c0_i32_0 = arith.constant 0 : i32
    return %arg0, %c0_i32 : i32, i32
  }
  func.func @transform_1(%arg0: i32) -> (i32, i32) {
    %c0_i32 = arith.constant 0 : i32
    %c0_i32_0 = arith.constant 0 : i32
    %c0_i32_1 = arith.constant 0 : i32
    return %c0_i32, %c0_i32_0 : i32, i32
  }
  func.func @transform_2(%arg0: i32) -> (i32, i32) {
    %c0_i32 = arith.constant 0 : i32
    %c0_i32_0 = arith.constant 0 : i32
    %c0_i32_1 = arith.constant 0 : i32
    return %c0_i32, %c0_i32_0 : i32, i32
  }
  func.func @transform_3(%arg0: i32) -> (i32, i32) {
    %c0_i32 = arith.constant 0 : i32
    %c0_i32_0 = arith.constant 0 : i32
    return %arg0, %c0_i32 : i32, i32
  }
}

module attributes {stable_mosaic.version = 11 : i64} {
  func.func @_matmul_bias_kernel(%arg0: i32, %arg1: memref<128x144xbf16, #tpu.memory_space<vmem>>, %arg2: memref<144x58xbf16, #tpu.memory_space<vmem>>, %arg3: memref<1x58xf32, #tpu.memory_space<vmem>>, %arg4: memref<128x58xf32, #tpu.memory_space<vmem>>) attributes {dimension_semantics = [#tpu.dimension_semantics<parallel>], iteration_bounds = array<i64: 1>, scalar_prefetch = 0 : i64, scratch_operands = 0 : i64, tpu.core_type = #tpu.core_type<tc>, window_params = [{transform_indices = @transform_0, window_bounds = array<i64: 128, 144>}, {pipeline_mode = #tpu.pipeline_mode<synchronous>, transform_indices = @transform_1, window_bounds = array<i64: 144, 58>}, {pipeline_mode = #tpu.pipeline_mode<synchronous>, transform_indices = @transform_2, window_bounds = array<i64: 1, 58>}, {transform_indices = @transform_3, window_bounds = array<i64: 128, 58>}]} {
    %c0 = arith.constant 0 : index
    %c0_0 = arith.constant 0 : index
    %0 = vector.load %arg1[%c0, %c0_0] : memref<128x144xbf16, #tpu.memory_space<vmem>>, vector<128x144xbf16>
    %c0_1 = arith.constant 0 : index
    %c0_2 = arith.constant 0 : index
    %1 = vector.load %arg2[%c0_1, %c0_2] : memref<144x58xbf16, #tpu.memory_space<vmem>>, vector<144x58xbf16>
    %cst = arith.constant dense<0.000000e+00> : vector<128x58xf32>
    %2 = tpu.matmul %0, %1, %cst {dimension_numbers = #tpu.dot_dimension_numbers<[1], [0], [0], [1], [0, 0, 1, 1], [], []>} : vector<128x144xbf16>, vector<144x58xbf16>, vector<128x58xf32> -> vector<128x58xf32>
    %c0_3 = arith.constant 0 : index
    %c0_4 = arith.constant 0 : index
    %3 = vector.load %arg3[%c0_3, %c0_4] : memref<1x58xf32, #tpu.memory_space<vmem>>, vector<1x58xf32>
    %4 = vector.broadcast %3 : vector<1x58xf32> to vector<128x58xf32>
    %5 = arith.addf %2, %4 : vector<128x58xf32>
    %c0_5 = arith.constant 0 : index
    %c0_6 = arith.constant 0 : index
    %6 = vector.load %arg4[%c0_5, %c0_6] : memref<128x58xf32, #tpu.memory_space<vmem>>, vector<128x58xf32>
    tpu.vector_store %arg4[%c0_5, %c0_6], %5 {strides = array<i32>} : memref<128x58xf32, #tpu.memory_space<vmem>>, vector<128x58xf32>,
    return
  }
  func.func @transform_0(%arg0: i32) -> (i32, i32) {
    %c0_i32 = arith.constant 0 : i32
    %c0_i32_0 = arith.constant 0 : i32
    return %arg0, %c0_i32 : i32, i32
  }
  func.func @transform_1(%arg0: i32) -> (i32, i32) {
    %c0_i32 = arith.constant 0 : i32
    %c0_i32_0 = arith.constant 0 : i32
    %c0_i32_1 = arith.constant 0 : i32
    return %c0_i32, %c0_i32_0 : i32, i32
  }
  func.func @transform_2(%arg0: i32) -> (i32, i32) {
    %c0_i32 = arith.constant 0 : i32
    %c0_i32_0 = arith.constant 0 : i32
    %c0_i32_1 = arith.constant 0 : i32
    return %c0_i32, %c0_i32_0 : i32, i32
  }
  func.func @transform_3(%arg0: i32) -> (i32, i32) {
    %c0_i32 = arith.constant 0 : i32
    %c0_i32_0 = arith.constant 0 : i32
    return %arg0, %c0_i32 : i32, i32
  }
}

module attributes {stable_mosaic.version = 11 : i64} {
  func.func @_matmul_bias_kernel(%arg0: i32, %arg1: memref<128x58xbf16, #tpu.memory_space<vmem>>, %arg2: memref<58x24xbf16, #tpu.memory_space<vmem>>, %arg3: memref<1x24xf32, #tpu.memory_space<vmem>>, %arg4: memref<128x24xf32, #tpu.memory_space<vmem>>) attributes {dimension_semantics = [#tpu.dimension_semantics<parallel>], iteration_bounds = array<i64: 1>, scalar_prefetch = 0 : i64, scratch_operands = 0 : i64, tpu.core_type = #tpu.core_type<tc>, window_params = [{transform_indices = @transform_0, window_bounds = array<i64: 128, 58>}, {pipeline_mode = #tpu.pipeline_mode<synchronous>, transform_indices = @transform_1, window_bounds = array<i64: 58, 24>}, {pipeline_mode = #tpu.pipeline_mode<synchronous>, transform_indices = @transform_2, window_bounds = array<i64: 1, 24>}, {transform_indices = @transform_3, window_bounds = array<i64: 128, 24>}]} {
    %c0 = arith.constant 0 : index
    %c0_0 = arith.constant 0 : index
    %0 = vector.load %arg1[%c0, %c0_0] : memref<128x58xbf16, #tpu.memory_space<vmem>>, vector<128x58xbf16>
    %c0_1 = arith.constant 0 : index
    %c0_2 = arith.constant 0 : index
    %1 = vector.load %arg2[%c0_1, %c0_2] : memref<58x24xbf16, #tpu.memory_space<vmem>>, vector<58x24xbf16>
    %cst = arith.constant dense<0.000000e+00> : vector<128x24xf32>
    %2 = tpu.matmul %0, %1, %cst {dimension_numbers = #tpu.dot_dimension_numbers<[1], [0], [0], [1], [0, 0, 1, 1], [], []>} : vector<128x58xbf16>, vector<58x24xbf16>, vector<128x24xf32> -> vector<128x24xf32>
    %c0_3 = arith.constant 0 : index
    %c0_4 = arith.constant 0 : index
    %3 = vector.load %arg3[%c0_3, %c0_4] : memref<1x24xf32, #tpu.memory_space<vmem>>, vector<1x24xf32>
    %4 = vector.broadcast %3 : vector<1x24xf32> to vector<128x24xf32>
    %5 = arith.addf %2, %4 : vector<128x24xf32>
    %c0_5 = arith.constant 0 : index
    %c0_6 = arith.constant 0 : index
    %6 = vector.load %arg4[%c0_5, %c0_6] : memref<128x24xf32, #tpu.memory_space<vmem>>, vector<128x24xf32>
    tpu.vector_store %arg4[%c0_5, %c0_6], %5 {strides = array<i32>} : memref<128x24xf32, #tpu.memory_space<vmem>>, vector<128x24xf32>,
    return
  }
  func.func @transform_0(%arg0: i32) -> (i32, i32) {
    %c0_i32 = arith.constant 0 : i32
    %c0_i32_0 = arith.constant 0 : i32
    return %arg0, %c0_i32 : i32, i32
  }
  func.func @transform_1(%arg0: i32) -> (i32, i32) {
    %c0_i32 = arith.constant 0 : i32
    %c0_i32_0 = arith.constant 0 : i32
    %c0_i32_1 = arith.constant 0 : i32
    return %c0_i32, %c0_i32_0 : i32, i32
  }
  func.func @transform_2(%arg0: i32) -> (i32, i32) {
    %c0_i32 = arith.constant 0 : i32
    %c0_i32_0 = arith.constant 0 : i32
    %c0_i32_1 = arith.constant 0 : i32
    return %c0_i32, %c0_i32_0 : i32, i32
  }
  func.func @transform_3(%arg0: i32) -> (i32, i32) {
    %c0_i32 = arith.constant 0 : i32
    %c0_i32_0 = arith.constant 0 : i32
    return %arg0, %c0_i32 : i32, i32
  }
}

module attributes {stable_mosaic.version = 11 : i64} {
  func.func @_matmul_bias_kernel(%arg0: i32, %arg1: memref<128x48xbf16, #tpu.memory_space<vmem>>, %arg2: memref<48x19xbf16, #tpu.memory_space<vmem>>, %arg3: memref<1x19xf32, #tpu.memory_space<vmem>>, %arg4: memref<128x19xf32, #tpu.memory_space<vmem>>) attributes {dimension_semantics = [#tpu.dimension_semantics<parallel>], iteration_bounds = array<i64: 1>, scalar_prefetch = 0 : i64, scratch_operands = 0 : i64, tpu.core_type = #tpu.core_type<tc>, window_params = [{transform_indices = @transform_0, window_bounds = array<i64: 128, 48>}, {pipeline_mode = #tpu.pipeline_mode<synchronous>, transform_indices = @transform_1, window_bounds = array<i64: 48, 19>}, {pipeline_mode = #tpu.pipeline_mode<synchronous>, transform_indices = @transform_2, window_bounds = array<i64: 1, 19>}, {transform_indices = @transform_3, window_bounds = array<i64: 128, 19>}]} {
    %c0 = arith.constant 0 : index
    %c0_0 = arith.constant 0 : index
    %0 = vector.load %arg1[%c0, %c0_0] : memref<128x48xbf16, #tpu.memory_space<vmem>>, vector<128x48xbf16>
    %c0_1 = arith.constant 0 : index
    %c0_2 = arith.constant 0 : index
    %1 = vector.load %arg2[%c0_1, %c0_2] : memref<48x19xbf16, #tpu.memory_space<vmem>>, vector<48x19xbf16>
    %cst = arith.constant dense<0.000000e+00> : vector<128x19xf32>
    %2 = tpu.matmul %0, %1, %cst {dimension_numbers = #tpu.dot_dimension_numbers<[1], [0], [0], [1], [0, 0, 1, 1], [], []>} : vector<128x48xbf16>, vector<48x19xbf16>, vector<128x19xf32> -> vector<128x19xf32>
    %c0_3 = arith.constant 0 : index
    %c0_4 = arith.constant 0 : index
    %3 = vector.load %arg3[%c0_3, %c0_4] : memref<1x19xf32, #tpu.memory_space<vmem>>, vector<1x19xf32>
    %4 = vector.broadcast %3 : vector<1x19xf32> to vector<128x19xf32>
    %5 = arith.addf %2, %4 : vector<128x19xf32>
    %c0_5 = arith.constant 0 : index
    %c0_6 = arith.constant 0 : index
    %6 = vector.load %arg4[%c0_5, %c0_6] : memref<128x19xf32, #tpu.memory_space<vmem>>, vector<128x19xf32>
    tpu.vector_store %arg4[%c0_5, %c0_6], %5 {strides = array<i32>} : memref<128x19xf32, #tpu.memory_space<vmem>>, vector<128x19xf32>,
    return
  }
  func.func @transform_0(%arg0: i32) -> (i32, i32) {
    %c0_i32 = arith.constant 0 : i32
    %c0_i32_0 = arith.constant 0 : i32
    return %arg0, %c0_i32 : i32, i32
  }
  func.func @transform_1(%arg0: i32) -> (i32, i32) {
    %c0_i32 = arith.constant 0 : i32
    %c0_i32_0 = arith.constant 0 : i32
    %c0_i32_1 = arith.constant 0 : i32
    return %c0_i32, %c0_i32_0 : i32, i32
  }
  func.func @transform_2(%arg0: i32) -> (i32, i32) {
    %c0_i32 = arith.constant 0 : i32
    %c0_i32_0 = arith.constant 0 : i32
    %c0_i32_1 = arith.constant 0 : i32
    return %c0_i32, %c0_i32_0 : i32, i32
  }
  func.func @transform_3(%arg0: i32) -> (i32, i32) {
    %c0_i32 = arith.constant 0 : i32
    %c0_i32_0 = arith.constant 0 : i32
    return %arg0, %c0_i32 : i32, i32
  }
}

module attributes {stable_mosaic.version = 11 : i64} {
  func.func @_matmul_bias_kernel(%arg0: i32, %arg1: memref<128x19xbf16, #tpu.memory_space<vmem>>, %arg2: memref<19x8xbf16, #tpu.memory_space<vmem>>, %arg3: memref<1x8xf32, #tpu.memory_space<vmem>>, %arg4: memref<128x8xf32, #tpu.memory_space<vmem>>) attributes {dimension_semantics = [#tpu.dimension_semantics<parallel>], iteration_bounds = array<i64: 1>, scalar_prefetch = 0 : i64, scratch_operands = 0 : i64, tpu.core_type = #tpu.core_type<tc>, window_params = [{transform_indices = @transform_0, window_bounds = array<i64: 128, 19>}, {pipeline_mode = #tpu.pipeline_mode<synchronous>, transform_indices = @transform_1, window_bounds = array<i64: 19, 8>}, {pipeline_mode = #tpu.pipeline_mode<synchronous>, transform_indices = @transform_2, window_bounds = array<i64: 1, 8>}, {transform_indices = @transform_3, window_bounds = array<i64: 128, 8>}]} {
    %c0 = arith.constant 0 : index
    %c0_0 = arith.constant 0 : index
    %0 = vector.load %arg1[%c0, %c0_0] : memref<128x19xbf16, #tpu.memory_space<vmem>>, vector<128x19xbf16>
    %c0_1 = arith.constant 0 : index
    %c0_2 = arith.constant 0 : index
    %1 = vector.load %arg2[%c0_1, %c0_2] : memref<19x8xbf16, #tpu.memory_space<vmem>>, vector<19x8xbf16>
    %cst = arith.constant dense<0.000000e+00> : vector<128x8xf32>
    %2 = tpu.matmul %0, %1, %cst {dimension_numbers = #tpu.dot_dimension_numbers<[1], [0], [0], [1], [0, 0, 1, 1], [], []>} : vector<128x19xbf16>, vector<19x8xbf16>, vector<128x8xf32> -> vector<128x8xf32>
    %c0_3 = arith.constant 0 : index
    %c0_4 = arith.constant 0 : index
    %3 = vector.load %arg3[%c0_3, %c0_4] : memref<1x8xf32, #tpu.memory_space<vmem>>, vector<1x8xf32>
    %4 = vector.broadcast %3 : vector<1x8xf32> to vector<128x8xf32>
    %5 = arith.addf %2, %4 : vector<128x8xf32>
    %c0_5 = arith.constant 0 : index
    %c0_6 = arith.constant 0 : index
    %6 = vector.load %arg4[%c0_5, %c0_6] : memref<128x8xf32, #tpu.memory_space<vmem>>, vector<128x8xf32>
    tpu.vector_store %arg4[%c0_5, %c0_6], %5 {strides = array<i32>} : memref<128x8xf32, #tpu.memory_space<vmem>>, vector<128x8xf32>,
    return
  }
  func.func @transform_0(%arg0: i32) -> (i32, i32) {
    %c0_i32 = arith.constant 0 : i32
    %c0_i32_0 = arith.constant 0 : i32
    return %arg0, %c0_i32 : i32, i32
  }
  func.func @transform_1(%arg0: i32) -> (i32, i32) {
    %c0_i32 = arith.constant 0 : i32
    %c0_i32_0 = arith.constant 0 : i32
    %c0_i32_1 = arith.constant 0 : i32
    return %c0_i32, %c0_i32_0 : i32, i32
  }
  func.func @transform_2(%arg0: i32) -> (i32, i32) {
    %c0_i32 = arith.constant 0 : i32
    %c0_i32_0 = arith.constant 0 : i32
    %c0_i32_1 = arith.constant 0 : i32
    return %c0_i32, %c0_i32_0 : i32, i32
  }
  func.func @transform_3(%arg0: i32) -> (i32, i32) {
    %c0_i32 = arith.constant 0 : i32
    %c0_i32_0 = arith.constant 0 : i32
    return %arg0, %c0_i32 : i32, i32
  }
}

</mosaic_0001>

<llo_original>
// kernel: sub.749
$region0: #{sub.749}
  %s0 = inlined_call_operand.vmem [shape: f32[2,4,8], index: 0, kind: input, shape index: {}]
  %s1 = inlined_call_operand.vmem [shape: f32[2,32], index: 1, kind: output, shape index: {}]
  $region1: #{sub.749} parent=0
    #allocation0 [shape = 'u8[4096]{0}', space=vmem, size = 0x1000, scoped, tag = 'scoped mem for output reshape']
    #allocation1 [shape = 'u8[8192]{0}', space=vmem, size = 0x2000, scoped, tag = 'scoped mem for input reshape']
    %s3 = ssub.s32 16, 1
    %s4 = scalar_lea.vmem %s0, 4
    %v5 = vld [vmem:[%s4] sm:%s3]
    %s6 = scalar_lea.vmem [#allocation1], 8
    %7 = vst [vmem:[%s6] sm:%s3] %v5
    %v8 = vld [vmem:[%s0] sm:%s3]
    %9 = vst [vmem:[#allocation1] sm:%s3] %v8
    %s10 = smov 3
    %v11 = vld [vmem:[#allocation1] ss:$8 sm:%s10]
    %vm12 = vcmask 64512
    %13 = vst.msk [vmem:[#allocation0] sm:$0x3] %vm12, %v11
    %s14 = scalar_lea.vmem [#allocation1], 3
    %s15 = smov 3
    %v16 = vld [vmem:[%s14] ss:$8 sm:%s15]
    %17 = vrot.lane.b32.xlu0 %v16, 24
    %v18 = vpop.permute.xlu0 %17
    %vm19 = vcmask 261312
    %20 = vst.msk [vmem:[#allocation0] sm:$0x3] %vm19, %v18
    %s21 = scalar_lea.vmem [#allocation1], 2
    %s22 = smov 3
    %v23 = vld [vmem:[%s21] ss:$8 sm:%s22]
    %24 = vrot.lane.b32.xlu0 %v23, 16
    %v25 = vpop.permute.xlu0 %24
    %vm26 = vcmask 195712
    %27 = vst.msk [vmem:[#allocation0] sm:$0x3] %vm26, %v25
    %s28 = scalar_lea.vmem [#allocation1], 1
    %s29 = smov 3
    %v30 = vld [vmem:[%s28] ss:$8 sm:%s29]
    %31 = vrot.lane.b32.xlu0 %v30, 8
    %v32 = vpop.permute.xlu0 %31
    %vm33 = vcmask 130112
    %34 = vst.msk [vmem:[#allocation0] sm:$0x3] %vm33, %v32
    %s36 = ssub.s32 4, 1
    %v37 = vld [vmem:[#allocation0] sm:%s36]
    %s39 = ssub.s32 4, 1
    %40 = vst [vmem:[%s1] sm:%s39] %v37

// kernel: _lambda_.18
$region0: #{_lambda_.18}
  #allocation0 [shape = 'u32[]', space=smem, size = 0x4, offset = 0x4, fixed_abs, tag = 'smem constant byte address 0x4 - core index']
  #allocation1 [shape = 'u32[72,128]{1,0:T(1,128)}', space=vmem, size = 0x9000, scoped, tag = 'internal scratch']
  %s0 = inlined_call_operand.vmem [shape: bf16[640,4], index: 0, kind: input, shape index: {}]
  %s1 = inlined_call_operand.vmem [shape: bf16[4,3], index: 1, kind: input, shape index: {}]
  %s2 = inlined_call_operand.vmem [shape: f32[1,3], index: 2, kind: input, shape index: {}]
  %s3 = inlined_call_operand.vmem [shape: f32[640,3], index: 3, kind: output, shape index: {}]
  %s4 = sld [smem:[#allocation0]]
  $region93: #{_lambda_.18} parent=0
    _
  %s6 = ssub.s32 1, %s4
  %s7 = scalar_select 0, %s6, %s4
  $region1: #{_lambda_.18} parent=0
    #allocation2 [shape = 'u8[262144]{0}', space=vmem, size = 0x40000, scoped, tag = 'output window, operand 0']
    loop: start=0, step=1, limit=5
    $region2: #{_lambda_.18} parent=1 // loop_pre_header
      _
    $region3: #{_lambda_.18} parent=1 // loop_header
      %s9 = sphi 0, %s13
      %p10 = scmp.ge.s32.totalorder %s9, 5
      %s19 = sphi 0, %s21
      %s22 = sphi 0, %s19
      %s23 = sphi 0, %s22
      %s39 = sphi 0, %s23
      %s43 = sphi 0, %s43
      %s45 = sphi 0, %s43
      %s46 = sphi 0, %s45
      %s60 = sphi 0, %s46
      %s64 = sphi 0, %s64
      %s66 = sphi 0, %s64
      %s67 = sphi 0, %s66
      %s81 = sphi 0, %s67
      %s87 = sphi 0, %s89
      %s90 = sphi 0, %s87
      %s91 = sphi 0, %s90
      %s107 = sphi 0, %s91
    $region4: #{_lambda_.18} parent=1 // loop_header_branch
      %12 = sbr.rel (%p10) target = $region8
    $region5: #{_lambda_.18} parent=1 // loop_body
      %s14 = ssub.s32 %s9, 1
      %s15 = ssub.s32 %s9, 2
      %s16 = sadd.s32 %s9, 1
      %s17 = ssub.s32 %s9, %s16
      %p18 = scmp.eq.s32.totalorder %s17, 0
      %s20 = sadd.s32 %s19, 1
      %s21 = scalar_select %p18, %s19, %s20
      %p24 = pneg %p18
      %p25 = scmp.eq.s32.totalorder %s9, 2
      %p26 = por %p24, %p25
      %p27 = scmp.ne.s32.totalorder %s19, %s22
      %p28 = scmp.eq.s32.totalorder %s9, 0
      %p29 = por %p27, %p28
      %p30 = scmp.ne.s32.totalorder %s19, %s22
      %p31 = scmp.eq.s32.totalorder %s14, 2
      %p32 = por %p30, %p31
      %p33 = scmp.ne.s32.totalorder %s22, %s23
      %p34 = scmp.eq.s32.totalorder %s14, 0
      %p35 = por %p33, %p34
      %p36 = scmp.ne.s32.totalorder %s22, %s23
      %p37 = scmp.eq.s32.totalorder %s15, 2
      %p38 = por %p36, %p37
      %p40 = scmp.ne.s32.totalorder %s23, %s39
      %p41 = scmp.eq.s32.totalorder %s15, 0
      %p42 = por %p40, %p41
      %s44 = sadd.s32 %s43, 1
      %p47 = scmp.eq.s32.totalorder %s9, 2
      %p48 = scmp.ne.s32.totalorder %s43, %s45
      %p49 = scmp.eq.s32.totalorder %s9, 0
      %p50 = por %p48, %p49
      %p51 = scmp.ne.s32.totalorder %s43, %s45
      %p52 = scmp.eq.s32.totalorder %s14, 2
      %p53 = por %p51, %p52
      %p54 = scmp.ne.s32.totalorder %s45, %s46
      %p55 = scmp.eq.s32.totalorder %s14, 0
      %p56 = por %p54, %p55
      %p57 = scmp.ne.s32.totalorder %s45, %s46
      %p58 = scmp.eq.s32.totalorder %s15, 2
      %p59 = por %p57, %p58
      %p61 = scmp.ne.s32.totalorder %s46, %s60
      %p62 = scmp.eq.s32.totalorder %s15, 0
      %p63 = por %p61, %p62
      %s65 = sadd.s32 %s64, 1
      %p68 = scmp.eq.s32.totalorder %s9, 2
      %p69 = scmp.ne.s32.totalorder %s64, %s66
      %p70 = scmp.eq.s32.totalorder %s9, 0
      %p71 = por %p69, %p70
      %p72 = scmp.ne.s32.totalorder %s64, %s66
      %p73 = scmp.eq.s32.totalorder %s14, 2
      %p74 = por %p72, %p73
      %p75 = scmp.ne.s32.totalorder %s66, %s67
      %p76 = scmp.eq.s32.totalorder %s14, 0
      %p77 = por %p75, %p76
      %p78 = scmp.ne.s32.totalorder %s66, %s67
      %p79 = scmp.eq.s32.totalorder %s15, 2
      %p80 = por %p78, %p79
      %p82 = scmp.ne.s32.totalorder %s67, %s81
      %p83 = scmp.eq.s32.totalorder %s15, 0
      %p84 = por %p82, %p83
      %s85 = ssub.s32 %s9, %s16
      %p86 = scmp.eq.s32.totalorder %s85, 0
      %s88 = sadd.s32 %s87, 1
      %s89 = scalar_select %p86, %s87, %s88
      %p92 = pneg %p86
      %p93 = scmp.eq.s32.totalorder %s9, 2
      %p94 = por %p92, %p93
      %p95 = scmp.ne.s32.totalorder %s87, %s90
      %p96 = scmp.eq.s32.totalorder %s9, 0
      %p97 = por %p95, %p96
      %p98 = scmp.ne.s32.totalorder %s87, %s90
      %p99 = scmp.eq.s32.totalorder %s14, 2
      %p100 = por %p98, %p99
      %p101 = scmp.ne.s32.totalorder %s90, %s91
      %p102 = scmp.eq.s32.totalorder %s14, 0
      %p103 = por %p101, %p102
      %p104 = scmp.ne.s32.totalorder %s90, %s91
      %p105 = scmp.eq.s32.totalorder %s15, 2
      %p106 = por %p104, %p105
      %p108 = scmp.ne.s32.totalorder %s91, %s107
      %p109 = scmp.eq.s32.totalorder %s15, 0
      %p110 = por %p108, %p109
      %p111 = scmp.le.s32.totalorder 1, %s9
      %p112 = scmp.lt.s32.totalorder %s9, 4
      %p113 = pnand %p111, %p112
      %p114 = pneg %p113
      // Predicated region
      $region9: #{_lambda_.18} parent=5 // pred_check
        _
      $region10: #{_lambda_.18} parent=5 // pred_check_branch
        %116 = sbr.rel (%p113) target = $region12
      $region11: #{_lambda_.18} parent=5 // pred_region
        %s117 = ssub.s32 %s9, 1
        // Predicated region
        $region13: #{_lambda_.18} parent=11 // pred_check
          %p118 = pneg %p56
        $region14: #{_lambda_.18} parent=11 // pred_check_branch
          %120 = sbr.rel (%p118) target = $region16
        $region15: #{_lambda_.18} parent=11 // pred_region
          _
        $region16: #{_lambda_.18} parent=11 // pred_fallthru
          _
        // Predicated region
        $region17: #{_lambda_.18} parent=11 // pred_check
          %p121 = pneg %p77
        $region18: #{_lambda_.18} parent=11 // pred_check_branch
          %123 = sbr.rel (%p121) target = $region20
        $region19: #{_lambda_.18} parent=11 // pred_region
          _
        $region20: #{_lambda_.18} parent=11 // pred_fallthru
          _
      $region12: #{_lambda_.18} parent=5 // pred_fallthru
        _
      %p124 = scmp.lt.s32.totalorder %s9, 3
      // Predicated region
      $region21: #{_lambda_.18} parent=5 // pred_check
        %p125 = pneg %p124
      $region22: #{_lambda_.18} parent=5 // pred_check_branch
        %127 = sbr.rel (%p125) target = $region24
      $region23: #{_lambda_.18} parent=5 // pred_region
        // Predicated region
        $region25: #{_lambda_.18} parent=23 // pred_check
          %p128 = pneg %p29
        $region26: #{_lambda_.18} parent=23 // pred_check_branch
          %130 = sbr.rel (%p128) target = $region28
        $region27: #{_lambda_.18} parent=23 // pred_region
          %s131 = smul.u32 32, %s9
          %s132 = ssub.s32 80, %s131
          %p133 = scmp.lt.s32.totalorder %s132, 32
          %s134 = scalar_select %p133, %s132, 32
          %s135 = smul.u32 4, %s134
          %p136 = scmp.lt.s32.totalorder %s131, 79
          %s137 = scalar_select %p136, %s131, 79
          %s138 = smul.addr %s137, 4
          %s139 = scalar_lea.vmem %s0, %s138
          %s140 = smul.u32 32, %s9
          %s141 = ssub.s32 80, %s140
          %p142 = scmp.lt.s32.totalorder %s141, 32
          %s143 = scalar_select %p142, %s141, 32
          %s144 = smul.u32 4, %s143
        $region28: #{_lambda_.18} parent=23 // pred_fallthru
          _
      $region24: #{_lambda_.18} parent=5 // pred_fallthru
        _
      %p145 = scmp.le.s32.totalorder 1, %s9
      %p146 = scmp.lt.s32.totalorder %s9, 4
      %p147 = pnand %p145, %p146
      %p148 = pneg %p147
      // Predicated region
      $region29: #{_lambda_.18} parent=5 // pred_check
        _
      $region30: #{_lambda_.18} parent=5 // pred_check_branch
        %150 = sbr.rel (%p147) target = $region32
      $region31: #{_lambda_.18} parent=5 // pred_region
        %s151 = ssub.s32 %s9, 1
        %s152 = smul.u32 32, %s14
        %s153 = ssub.s32 80, %s152
        %p154 = scmp.lt.s32.totalorder %s153, 32
        %s155 = scalar_select %p154, %s153, 32
        %s156 = smul.u32 4, %s155
        %p157 = scmp.lt.s32.totalorder %s152, 79
        %s158 = scalar_select %p157, %s152, 79
        %s159 = smul.addr %s158, 4
        %s160 = scalar_lea.vmem %s0, %s159
        %p161 = pneg %p35
        %p162 = pneg %p32
        %p163 = pneg %p56
        %p164 = pneg %p53
        %p165 = pneg %p77
        %p166 = pneg %p74
        %p167 = pneg %p103
        %p168 = pneg %p100
        %s169 = sand.u32 %s90, 1
        %s170 = sand.u32 %s90, 1
        %s171 = smul.addr %s170, 256
        %s172 = scalar_lea.vmem [#allocation2], %s171
        %s173 = smul.u32 32, %s14
        %s174 = ssub.s32 80, %s173
        %p175 = scmp.lt.s32.totalorder %s174, 32
        %s176 = scalar_select %p175, %s174, 32
        %s177 = smul.u32 4, %s176
        %p178 = scmp.lt.s32.totalorder %s173, 79
        %s179 = scalar_select %p178, %s173, 79
        %s180 = smul.addr %s179, 4
        %s181 = scalar_lea.vmem %s0, %s180
        %s182 = smul.u32 32, %s14
        %s183 = ssub.s32 80, %s182
        %p184 = scmp.lt.s32.totalorder %s183, 32
        %s185 = scalar_select %p184, %s183, 32
        %s186 = smul.u32 4, %s185
        %s187 = smul.u32 32, %s14
        %s188 = ssub.s32 80, %s187
        %p189 = scmp.lt.s32.totalorder %s188, 32
        %s190 = scalar_select %p189, %s188, 32
        %s191 = smul.u32 8, %s190
        %v193 = vld [vmem:[%s181] sm:$0xf]
        %v194 = vld [vmem:[%s181 + $0x4] sm:$0xf]
        %v195 = vld [vmem:[%s181 + $0x8] sm:$0xf]
        %v196 = vld [vmem:[%s181 + $0xc] sm:$0xf]
        %v197 = vld [vmem:[%s181 + $0x10] sm:$0xf]
        %v198 = vld [vmem:[%s181 + $0x14] sm:$0xf]
        %v199 = vld [vmem:[%s181 + $0x18] sm:$0xf]
        %v200 = vld [vmem:[%s181 + $0x1c] sm:$0xf]
        %v201 = vld [vmem:[%s181 + $0x20] sm:$0xf]
        %v202 = vld [vmem:[%s181 + $0x24] sm:$0xf]
        %v203 = vld [vmem:[%s181 + $0x28] sm:$0xf]
        %v204 = vld [vmem:[%s181 + $0x2c] sm:$0xf]
        %v205 = vld [vmem:[%s181 + $0x30] sm:$0xf]
        %v206 = vld [vmem:[%s181 + $0x34] sm:$0xf]
        %v207 = vld [vmem:[%s181 + $0x38] sm:$0xf]
        %v208 = vld [vmem:[%s181 + $0x3c] sm:$0xf]
        %v209 = vld [vmem:[%s181 + $0x40] sm:$0xf]
        %v210 = vld [vmem:[%s181 + $0x44] sm:$0xf]
        %v211 = vld [vmem:[%s181 + $0x48] sm:$0xf]
        %v212 = vld [vmem:[%s181 + $0x4c] sm:$0xf]
        %v213 = vld [vmem:[%s181 + $0x50] sm:$0xf]
        %v214 = vld [vmem:[%s181 + $0x54] sm:$0xf]
        %v215 = vld [vmem:[%s181 + $0x58] sm:$0xf]
        %v216 = vld [vmem:[%s181 + $0x5c] sm:$0xf]
        %v217 = vld [vmem:[%s181 + $0x60] sm:$0xf]
        %v218 = vld [vmem:[%s181 + $0x64] sm:$0xf]
        %v219 = vld [vmem:[%s181 + $0x68] sm:$0xf]
        %v220 = vld [vmem:[%s181 + $0x6c] sm:$0xf]
        %v221 = vld [vmem:[%s181 + $0x70] sm:$0xf]
        %v222 = vld [vmem:[%s181 + $0x74] sm:$0xf]
        %v223 = vld [vmem:[%s181 + $0x78] sm:$0xf]
        %v224 = vld [vmem:[%s181 + $0x7c] sm:$0xf]
        %v225 = vld [vmem:[%s1] sm:$0x3]
        %v226 = vld [vmem:[%s2] sm:$0x1]
        %v228 = vperm.slane %v226, 0
        %v262 = vunpack.c.l.b16 %v193
        %v263 = vunpack.c.l.b16 %v194
        %v264 = vunpack.c.l.b16 %v195
        %v265 = vunpack.c.l.b16 %v196
        %v266 = vunpack.c.l.b16 %v197
        %v267 = vunpack.c.l.b16 %v198
        %v268 = vunpack.c.l.b16 %v199
        %v269 = vunpack.c.l.b16 %v200
        %v270 = vunpack.c.l.b16 %v201
        %v271 = vunpack.c.l.b16 %v202
        %v272 = vunpack.c.l.b16 %v203
        %v273 = vunpack.c.l.b16 %v204
        %v274 = vunpack.c.l.b16 %v205
        %v275 = vunpack.c.l.b16 %v206
        %v276 = vunpack.c.l.b16 %v207
        %v277 = vunpack.c.l.b16 %v208
        %v278 = vunpack.c.l.b16 %v209
        %v279 = vunpack.c.l.b16 %v210
        %v280 = vunpack.c.l.b16 %v211
        %v281 = vunpack.c.l.b16 %v212
        %v282 = vunpack.c.l.b16 %v213
        %v283 = vunpack.c.l.b16 %v214
        %v284 = vunpack.c.l.b16 %v215
        %v285 = vunpack.c.l.b16 %v216
        %v286 = vunpack.c.l.b16 %v217
        %v287 = vunpack.c.l.b16 %v218
        %v288 = vunpack.c.l.b16 %v219
        %v289 = vunpack.c.l.b16 %v220
        %v290 = vunpack.c.l.b16 %v221
        %v291 = vunpack.c.l.b16 %v222
        %v292 = vunpack.c.l.b16 %v223
        %v293 = vunpack.c.l.b16 %v224
        %v294 = vpack.c.b16 %v263, %v262
        %v295 = vpack.c.b16 %v265, %v264
        %v296 = vpack.c.b16 %v267, %v266
        %v297 = vpack.c.b16 %v269, %v268
        %v298 = vpack.c.b16 %v271, %v270
        %v299 = vpack.c.b16 %v273, %v272
        %v300 = vpack.c.b16 %v275, %v274
        %v301 = vpack.c.b16 %v277, %v276
        %v302 = vpack.c.b16 %v279, %v278
        %v303 = vpack.c.b16 %v281, %v280
        %v304 = vpack.c.b16 %v283, %v282
        %v305 = vpack.c.b16 %v285, %v284
        %v306 = vpack.c.b16 %v287, %v286
        %v307 = vpack.c.b16 %v289, %v288
        %v308 = vpack.c.b16 %v291, %v290
        %v309 = vpack.c.b16 %v293, %v292
        %vm310 = vcmask 31744
        %v312 = vsel %vm310, %v294, 0
        %v315 = vsel %vm310, %v295, 0
        %v318 = vsel %vm310, %v296, 0
        %v321 = vsel %vm310, %v297, 0
        %v324 = vsel %vm310, %v298, 0
        %v327 = vsel %vm310, %v299, 0
        %v330 = vsel %vm310, %v300, 0
        %v333 = vsel %vm310, %v301, 0
        %v336 = vsel %vm310, %v302, 0
        %v339 = vsel %vm310, %v303, 0
        %v342 = vsel %vm310, %v304, 0
        %v345 = vsel %vm310, %v305, 0
        %v348 = vsel %vm310, %v306, 0
        %v351 = vsel %vm310, %v307, 0
        %v354 = vsel %vm310, %v308, 0
        %v357 = vsel %vm310, %v309, 0
        %vm359 = vcmask 1041408
        %v361 = vsel %vm359, %v225, 0
        %363 = vmatpush.bf16.msra.mxu0 0
        %364 = vmatpush.bf16.msra.mxu0 0
        %365 = vmatpush.bf16.msra.mxu0 0
        %366 = vmatpush.bf16.msra.mxu0 0
        %367 = vmatpush.bf16.msra.mxu0 0
        %368 = vmatpush.bf16.msra.mxu0 0
        %369 = vmatpush.bf16.msra.mxu0 0
        %370 = vmatpush.bf16.msra.mxu0 %v361
        %371 = vmatmul.bf16.gmra.mxu0 %v312
        %v372 = vpop.f32.mrf.mxu0
        %v373 = vadd.f32 %v228, %v372
        %v374 = vpop.f32.mrf.mxu0
        %v375 = vadd.f32 %v228, %v374
        %376 = vmatmul.bf16.gmra.mxu0 %v315
        %v377 = vpop.f32.mrf.mxu0
        %v378 = vadd.f32 %v228, %v377
        %v379 = vpop.f32.mrf.mxu0
        %v380 = vadd.f32 %v228, %v379
        %381 = vmatmul.bf16.gmra.mxu0 %v318
        %v382 = vpop.f32.mrf.mxu0
        %v383 = vadd.f32 %v228, %v382
        %v384 = vpop.f32.mrf.mxu0
        %v385 = vadd.f32 %v228, %v384
        %386 = vmatmul.bf16.gmra.mxu0 %v321
        %v387 = vpop.f32.mrf.mxu0
        %v388 = vadd.f32 %v228, %v387
        %v389 = vpop.f32.mrf.mxu0
        %v390 = vadd.f32 %v228, %v389
        %391 = vmatmul.bf16.gmra.mxu0 %v324
        %v392 = vpop.f32.mrf.mxu0
        %v393 = vadd.f32 %v228, %v392
        %v394 = vpop.f32.mrf.mxu0
        %v395 = vadd.f32 %v228, %v394
        %396 = vmatmul.bf16.gmra.mxu0 %v327
        %v397 = vpop.f32.mrf.mxu0
        %v398 = vadd.f32 %v228, %v397
        %v399 = vpop.f32.mrf.mxu0
        %v400 = vadd.f32 %v228, %v399
        %401 = vmatmul.bf16.gmra.mxu0 %v330
        %v402 = vpop.f32.mrf.mxu0
        %v403 = vadd.f32 %v228, %v402
        %v404 = vpop.f32.mrf.mxu0
        %v405 = vadd.f32 %v228, %v404
        %406 = vmatmul.bf16.gmra.mxu0 %v333
        %v407 = vpop.f32.mrf.mxu0
        %v408 = vadd.f32 %v228, %v407
        %v409 = vpop.f32.mrf.mxu0
        %v410 = vadd.f32 %v228, %v409
        %411 = vmatmul.bf16.gmra.mxu0 %v336
        %v412 = vpop.f32.mrf.mxu0
        %v413 = vadd.f32 %v228, %v412
        %v414 = vpop.f32.mrf.mxu0
        %v415 = vadd.f32 %v228, %v414
        %416 = vmatmul.bf16.gmra.mxu0 %v339
        %v417 = vpop.f32.mrf.mxu0
        %v418 = vadd.f32 %v228, %v417
        %v419 = vpop.f32.mrf.mxu0
        %v420 = vadd.f32 %v228, %v419
        %421 = vmatmul.bf16.gmra.mxu0 %v342
        %v422 = vpop.f32.mrf.mxu0
        %v423 = vadd.f32 %v228, %v422
        %v424 = vpop.f32.mrf.mxu0
        %v425 = vadd.f32 %v228, %v424
        %426 = vmatmul.bf16.gmra.mxu0 %v345
        %v427 = vpop.f32.mrf.mxu0
        %v428 = vadd.f32 %v228, %v427
        %v429 = vpop.f32.mrf.mxu0
        %v430 = vadd.f32 %v228, %v429
        %431 = vmatmul.bf16.gmra.mxu0 %v348
        %v432 = vpop.f32.mrf.mxu0
        %v433 = vadd.f32 %v228, %v432
        %v434 = vpop.f32.mrf.mxu0
        %v435 = vadd.f32 %v228, %v434
        %436 = vmatmul.bf16.gmra.mxu0 %v351
        %v437 = vpop.f32.mrf.mxu0
        %v438 = vadd.f32 %v228, %v437
        %v439 = vpop.f32.mrf.mxu0
        %v440 = vadd.f32 %v228, %v439
        %441 = vmatmul.bf16.gmra.mxu0 %v354
        %v442 = vpop.f32.mrf.mxu0
        %v443 = vadd.f32 %v228, %v442
        %v444 = vpop.f32.mrf.mxu0
        %v445 = vadd.f32 %v228, %v444
        %446 = vmatmul.bf16.gmra.mxu0 %v357
        %v447 = vpop.f32.mrf.mxu0
        %v448 = vadd.f32 %v228, %v447
        %v449 = vpop.f32.mrf.mxu0
        %v450 = vadd.f32 %v228, %v449
        %451 = vdwg.mxu0
        %vm452 = vcmask 23552
        %453 = vst.msk [vmem:[%s172] sm:$0xff] %vm452, %v373
        %454 = vst.msk [vmem:[%s172 + $0x8] sm:$0xff] %vm452, %v375
        %455 = vst.msk [vmem:[%s172 + $0x10] sm:$0xff] %vm452, %v378
        %456 = vst.msk [vmem:[%s172 + $0x18] sm:$0xff] %vm452, %v380
        %457 = vst.msk [vmem:[%s172 + $0x20] sm:$0xff] %vm452, %v383
        %458 = vst.msk [vmem:[%s172 + $0x28] sm:$0xff] %vm452, %v385
        %459 = vst.msk [vmem:[%s172 + $0x30] sm:$0xff] %vm452, %v388
        %460 = vst.msk [vmem:[%s172 + $0x38] sm:$0xff] %vm452, %v390
        %461 = vst.msk [vmem:[%s172 + $0x40] sm:$0xff] %vm452, %v393
        %462 = vst.msk [vmem:[%s172 + $0x48] sm:$0xff] %vm452, %v395
        %463 = vst.msk [vmem:[%s172 + $0x50] sm:$0xff] %vm452, %v398
        %464 = vst.msk [vmem:[%s172 + $0x58] sm:$0xff] %vm452, %v400
        %465 = vst.msk [vmem:[%s172 + $0x60] sm:$0xff] %vm452, %v403
        %466 = vst.msk [vmem:[%s172 + $0x68] sm:$0xff] %vm452, %v405
        %467 = vst.msk [vmem:[%s172 + $0x70] sm:$0xff] %vm452, %v408
        %468 = vst.msk [vmem:[%s172 + $0x78] sm:$0xff] %vm452, %v410
        %469 = vst.msk [vmem:[%s172 + $0x80] sm:$0xff] %vm452, %v413
        %470 = vst.msk [vmem:[%s172 + $0x88] sm:$0xff] %vm452, %v415
        %471 = vst.msk [vmem:[%s172 + $0x90] sm:$0xff] %vm452, %v418
        %472 = vst.msk [vmem:[%s172 + $0x98] sm:$0xff] %vm452, %v420
        %473 = vst.msk [vmem:[%s172 + $0xa0] sm:$0xff] %vm452, %v423
        %474 = vst.msk [vmem:[%s172 + $0xa8] sm:$0xff] %vm452, %v425
        %475 = vst.msk [vmem:[%s172 + $0xb0] sm:$0xff] %vm452, %v428
        %476 = vst.msk [vmem:[%s172 + $0xb8] sm:$0xff] %vm452, %v430
        %477 = vst.msk [vmem:[%s172 + $0xc0] sm:$0xff] %vm452, %v433
        %478 = vst.msk [vmem:[%s172 + $0xc8] sm:$0xff] %vm452, %v435
        %479 = vst.msk [vmem:[%s172 + $0xd0] sm:$0xff] %vm452, %v438
        %480 = vst.msk [vmem:[%s172 + $0xd8] sm:$0xff] %vm452, %v440
        %481 = vst.msk [vmem:[%s172 + $0xe0] sm:$0xff] %vm452, %v443
        %482 = vst.msk [vmem:[%s172 + $0xe8] sm:$0xff] %vm452, %v445
        %483 = vst.msk [vmem:[%s172 + $0xf0] sm:$0xff] %vm452, %v448
        %484 = vst.msk [vmem:[%s172 + $0xf8] sm:$0xff] %vm452, %v450
        %s485 = sand.u32 %s90, 1
        %s486 = sand.u32 %s90, 1
        %s487 = smul.addr %s486, 256
        %s488 = scalar_lea.vmem [#allocation2], %s487
        // Predicated region
        $region33: #{_lambda_.18} parent=31 // pred_check
          %p489 = pneg %p100
        $region34: #{_lambda_.18} parent=31 // pred_check_branch
          %491 = sbr.rel (%p489) target = $region36
        $region35: #{_lambda_.18} parent=31 // pred_region
          %s492 = smul.u32 32, %s14
          %s493 = ssub.s32 80, %s492
          %p494 = scmp.lt.s32.totalorder %s493, 32
          %s495 = scalar_select %p494, %s493, 32
          %s496 = smul.u32 8, %s495
          %p497 = scmp.ne.s32.totalorder 0, %s496
          %s498 = smul.addr %s492, 8
          %s499 = scalar_lea.vmem %s3, %s498
          // Predicated region
          $region37: #{_lambda_.18} parent=35 // pred_check
            %p500 = pneg %p497
          $region38: #{_lambda_.18} parent=35 // pred_check_branch
            %502 = sbr.rel (%p500) target = $region40
          $region39: #{_lambda_.18} parent=35 // pred_region
            // Predicated region
            $region41: #{_lambda_.18} parent=39 // pred_check
              _
            $region42: #{_lambda_.18} parent=39 // pred_check_branch
              %504 = sbr.rel (0) target = $region44
            $region43: #{_lambda_.18} parent=39 // pred_region
              // Predicated region
              $region63: #{_lambda_.18} parent=43 // pred_check
                _
              $region64: #{_lambda_.18} parent=43 // pred_check_branch
                %616 = sbr.rel (0) target = $region66
              $region65: #{_lambda_.18} parent=43 // pred_region
                %s617 = sshrl.u32 %s495, 5
                // While loop
                $region67: #{_lambda_.18} parent=65 // loop_pre_header
                  _
                $region68: #{_lambda_.18} parent=65 // loop_header
                  %s619 = sphi 0, %s621
                  %p620 = scmp.ge.s32.totalorder %s619, %s617
                  %s624 = sphi 0, %s693
                  %s625 = sphi %s488, %s696
                  %s626 = sphi %s499, %s697
                $region69: #{_lambda_.18} parent=65 // loop_header_branch
                  %623 = sbr.rel (%p620) target = $region73
                $region70: #{_lambda_.18} parent=65 // loop_body
                  %v627 = vld [vmem:[%s625] sm:$0xff]
                  %628 = vst [vmem:[%s626] sm:$0xff] %v627
                  %v629 = vld [vmem:[%s625 + $0x8] sm:$0xff]
                  %630 = vst [vmem:[%s626 + $0x8] sm:$0xff] %v629
                  %v631 = vld [vmem:[%s625 + $0x10] sm:$0xff]
                  %632 = vst [vmem:[%s626 + $0x10] sm:$0xff] %v631
                  %v633 = vld [vmem:[%s625 + $0x18] sm:$0xff]
                  %634 = vst [vmem:[%s626 + $0x18] sm:$0xff] %v633
                  %v635 = vld [vmem:[%s625 + $0x20] sm:$0xff]
                  %636 = vst [vmem:[%s626 + $0x20] sm:$0xff] %v635
                  %v637 = vld [vmem:[%s625 + $0x28] sm:$0xff]
                  %638 = vst [vmem:[%s626 + $0x28] sm:$0xff] %v637
                  %v639 = vld [vmem:[%s625 + $0x30] sm:$0xff]
                  %640 = vst [vmem:[%s626 + $0x30] sm:$0xff] %v639
                  %v641 = vld [vmem:[%s625 + $0x38] sm:$0xff]
                  %642 = vst [vmem:[%s626 + $0x38] sm:$0xff] %v641
                  %v643 = vld [vmem:[%s625 + $0x40] sm:$0xff]
                  %644 = vst [vmem:[%s626 + $0x40] sm:$0xff] %v643
                  %v645 = vld [vmem:[%s625 + $0x48] sm:$0xff]
                  %646 = vst [vmem:[%s626 + $0x48] sm:$0xff] %v645
                  %v647 = vld [vmem:[%s625 + $0x50] sm:$0xff]
                  %648 = vst [vmem:[%s626 + $0x50] sm:$0xff] %v647
                  %v649 = vld [vmem:[%s625 + $0x58] sm:$0xff]
                  %650 = vst [vmem:[%s626 + $0x58] sm:$0xff] %v649
                  %v651 = vld [vmem:[%s625 + $0x60] sm:$0xff]
                  %652 = vst [vmem:[%s626 + $0x60] sm:$0xff] %v651
                  %v653 = vld [vmem:[%s625 + $0x68] sm:$0xff]
                  %654 = vst [vmem:[%s626 + $0x68] sm:$0xff] %v653
                  %v655 = vld [vmem:[%s625 + $0x70] sm:$0xff]
                  %656 = vst [vmem:[%s626 + $0x70] sm:$0xff] %v655
                  %v657 = vld [vmem:[%s625 + $0x78] sm:$0xff]
                  %658 = vst [vmem:[%s626 + $0x78] sm:$0xff] %v657
                  %v659 = vld [vmem:[%s625 + $0x80] sm:$0xff]
                  %660 = vst [vmem:[%s626 + $0x80] sm:$0xff] %v659
                  %v661 = vld [vmem:[%s625 + $0x88] sm:$0xff]
                  %662 = vst [vmem:[%s626 + $0x88] sm:$0xff] %v661
                  %v663 = vld [vmem:[%s625 + $0x90] sm:$0xff]
                  %664 = vst [vmem:[%s626 + $0x90] sm:$0xff] %v663
                  %v665 = vld [vmem:[%s625 + $0x98] sm:$0xff]
                  %666 = vst [vmem:[%s626 + $0x98] sm:$0xff] %v665
                  %v667 = vld [vmem:[%s625 + $0xa0] sm:$0xff]
                  %668 = vst [vmem:[%s626 + $0xa0] sm:$0xff] %v667
                  %v669 = vld [vmem:[%s625 + $0xa8] sm:$0xff]
                  %670 = vst [vmem:[%s626 + $0xa8] sm:$0xff] %v669
                  %v671 = vld [vmem:[%s625 + $0xb0] sm:$0xff]
                  %672 = vst [vmem:[%s626 + $0xb0] sm:$0xff] %v671
                  %v673 = vld [vmem:[%s625 + $0xb8] sm:$0xff]
                  %674 = vst [vmem:[%s626 + $0xb8] sm:$0xff] %v673
                  %v675 = vld [vmem:[%s625 + $0xc0] sm:$0xff]
                  %676 = vst [vmem:[%s626 + $0xc0] sm:$0xff] %v675
                  %v677 = vld [vmem:[%s625 + $0xc8] sm:$0xff]
                  %678 = vst [vmem:[%s626 + $0xc8] sm:$0xff] %v677
                  %v679 = vld [vmem:[%s625 + $0xd0] sm:$0xff]
                  %680 = vst [vmem:[%s626 + $0xd0] sm:$0xff] %v679
                  %v681 = vld [vmem:[%s625 + $0xd8] sm:$0xff]
                  %682 = vst [vmem:[%s626 + $0xd8] sm:$0xff] %v681
                  %v683 = vld [vmem:[%s625 + $0xe0] sm:$0xff]
                  %684 = vst [vmem:[%s626 + $0xe0] sm:$0xff] %v683
                  %v685 = vld [vmem:[%s625 + $0xe8] sm:$0xff]
                  %686 = vst [vmem:[%s626 + $0xe8] sm:$0xff] %v685
                  %v687 = vld [vmem:[%s625 + $0xf0] sm:$0xff]
                  %688 = vst [vmem:[%s626 + $0xf0] sm:$0xff] %v687
                  %v689 = vld [vmem:[%s625 + $0xf8] sm:$0xff]
                  %690 = vst [vmem:[%s626 + $0xf8] sm:$0xff] %v689
                  %s691 = sadd.s32 1, %s624
                  %p692 = scmp.ge.s32.totalorder %s691, %s617
                  %s693 = scalar_select %p692, 0, %s691
                  %s694 = smul.u32 %s693, 256
                  %s695 = smul.u32 %s693, 256
                  %s696 = scalar_lea.vmem %s488, %s694 [#allocation2]
                  %s697 = scalar_lea.vmem %s499, %s695
                $region71: #{_lambda_.18} parent=65 // loop_footer
                  %s621 = sadd.s32 %s619, 1
                $region72: #{_lambda_.18} parent=65 // loop_footer_branch
                  %618 = sbr.rel target = $region68
                $region73: #{_lambda_.18} parent=65 // loop_exit
                  _
                %s698 = sshrl.u32 %s495, 5
                %s699 = sand.u32 %s495, 31
                %s700 = smul.u32 %s698, 32
                %s701 = smul.u32 8, %s700
                %s702 = scalar_lea.vmem %s488, %s701 [#allocation2]
                %s703 = smul.u32 8, %s700
                %s704 = scalar_lea.vmem %s499, %s703
                // While loop
                $region74: #{_lambda_.18} parent=65 // loop_pre_header
                  _
                $region75: #{_lambda_.18} parent=65 // loop_header
                  %s706 = sphi 0, %s708
                  %p707 = scmp.ge.s32.totalorder %s706, %s699
                  %s711 = sphi 0, %s718
                  %s712 = sphi %s702, %s721
                  %s713 = sphi %s704, %s722
                $region76: #{_lambda_.18} parent=65 // loop_header_branch
                  %710 = sbr.rel (%p707) target = $region80
                $region77: #{_lambda_.18} parent=65 // loop_body
                  %v714 = vld [vmem:[%s712] sm:$0xff]
                  %715 = vst [vmem:[%s713] sm:$0xff] %v714
                  %s716 = sadd.s32 1, %s711
                  %p717 = scmp.ge.s32.totalorder %s716, %s699
                  %s718 = scalar_select %p717, 0, %s716
                  %s719 = smul.u32 %s718, 8
                  %s720 = smul.u32 %s718, 8
                  %s721 = scalar_lea.vmem %s702, %s719 [#allocation2]
                  %s722 = scalar_lea.vmem %s704, %s720
                $region78: #{_lambda_.18} parent=65 // loop_footer
                  %s708 = sadd.s32 %s706, 1
                $region79: #{_lambda_.18} parent=65 // loop_footer_branch
                  %705 = sbr.rel target = $region75
                $region80: #{_lambda_.18} parent=65 // loop_exit
                  _
              $region66: #{_lambda_.18} parent=43 // pred_fallthru
                _
              // Predicated region
              $region81: #{_lambda_.18} parent=43 // pred_check
                _
              $region82: #{_lambda_.18} parent=43 // pred_check_branch
                %724 = sbr.rel target = $region84
              $region83: #{_lambda_.18} parent=43 // pred_region
                _
              $region84: #{_lambda_.18} parent=43 // pred_fallthru
                _
            $region44: #{_lambda_.18} parent=39 // pred_fallthru
              _
            // Predicated region
            $region45: #{_lambda_.18} parent=39 // pred_check
              _
            $region46: #{_lambda_.18} parent=39 // pred_check_branch
              %506 = sbr.rel target = $region48
            $region47: #{_lambda_.18} parent=39 // pred_region
              %s508 = ssub.s32 256, 1
              %s509 = sshrl.u32 %s495, 5
              // While loop
              $region49: #{_lambda_.18} parent=47 // loop_pre_header
                _
              $region50: #{_lambda_.18} parent=47 // loop_header
                %s511 = sphi 0, %s513
                %p512 = scmp.ge.s32.totalorder %s511, %s509
                %s516 = sphi 0, %s585
                %s517 = sphi %s488, %s588
                %s518 = sphi %s499, %s589
              $region51: #{_lambda_.18} parent=47 // loop_header_branch
                %515 = sbr.rel (%p512) target = $region55
              $region52: #{_lambda_.18} parent=47 // loop_body
                %v519 = vld [vmem:[%s517] sm:%s508]
                %520 = vst [vmem:[%s518] sm:%s508] %v519
                %v521 = vld [vmem:[%s517 + $0x8] sm:%s508]
                %522 = vst [vmem:[%s518 + $0x8] sm:%s508] %v521
                %v523 = vld [vmem:[%s517 + $0x10] sm:%s508]
                %524 = vst [vmem:[%s518 + $0x10] sm:%s508] %v523
                %v525 = vld [vmem:[%s517 + $0x18] sm:%s508]
                %526 = vst [vmem:[%s518 + $0x18] sm:%s508] %v525
                %v527 = vld [vmem:[%s517 + $0x20] sm:%s508]
                %528 = vst [vmem:[%s518 + $0x20] sm:%s508] %v527
                %v529 = vld [vmem:[%s517 + $0x28] sm:%s508]
                %530 = vst [vmem:[%s518 + $0x28] sm:%s508] %v529
                %v531 = vld [vmem:[%s517 + $0x30] sm:%s508]
                %532 = vst [vmem:[%s518 + $0x30] sm:%s508] %v531
                %v533 = vld [vmem:[%s517 + $0x38] sm:%s508]
                %534 = vst [vmem:[%s518 + $0x38] sm:%s508] %v533
                %v535 = vld [vmem:[%s517 + $0x40] sm:%s508]
                %536 = vst [vmem:[%s518 + $0x40] sm:%s508] %v535
                %v537 = vld [vmem:[%s517 + $0x48] sm:%s508]
                %538 = vst [vmem:[%s518 + $0x48] sm:%s508] %v537
                %v539 = vld [vmem:[%s517 + $0x50] sm:%s508]
                %540 = vst [vmem:[%s518 + $0x50] sm:%s508] %v539
                %v541 = vld [vmem:[%s517 + $0x58] sm:%s508]
                %542 = vst [vmem:[%s518 + $0x58] sm:%s508] %v541
                %v543 = vld [vmem:[%s517 + $0x60] sm:%s508]
                %544 = vst [vmem:[%s518 + $0x60] sm:%s508] %v543
                %v545 = vld [vmem:[%s517 + $0x68] sm:%s508]
                %546 = vst [vmem:[%s518 + $0x68] sm:%s508] %v545
                %v547 = vld [vmem:[%s517 + $0x70] sm:%s508]
                %548 = vst [vmem:[%s518 + $0x70] sm:%s508] %v547
                %v549 = vld [vmem:[%s517 + $0x78] sm:%s508]
                %550 = vst [vmem:[%s518 + $0x78] sm:%s508] %v549
                %v551 = vld [vmem:[%s517 + $0x80] sm:%s508]
                %552 = vst [vmem:[%s518 + $0x80] sm:%s508] %v551
                %v553 = vld [vmem:[%s517 + $0x88] sm:%s508]
                %554 = vst [vmem:[%s518 + $0x88] sm:%s508] %v553
                %v555 = vld [vmem:[%s517 + $0x90] sm:%s508]
                %556 = vst [vmem:[%s518 + $0x90] sm:%s508] %v555
                %v557 = vld [vmem:[%s517 + $0x98] sm:%s508]
                %558 = vst [vmem:[%s518 + $0x98] sm:%s508] %v557
                %v559 = vld [vmem:[%s517 + $0xa0] sm:%s508]
                %560 = vst [vmem:[%s518 + $0xa0] sm:%s508] %v559
                %v561 = vld [vmem:[%s517 + $0xa8] sm:%s508]
                %562 = vst [vmem:[%s518 + $0xa8] sm:%s508] %v561
                %v563 = vld [vmem:[%s517 + $0xb0] sm:%s508]
                %564 = vst [vmem:[%s518 + $0xb0] sm:%s508] %v563
                %v565 = vld [vmem:[%s517 + $0xb8] sm:%s508]
                %566 = vst [vmem:[%s518 + $0xb8] sm:%s508] %v565
                %v567 = vld [vmem:[%s517 + $0xc0] sm:%s508]
                %568 = vst [vmem:[%s518 + $0xc0] sm:%s508] %v567
                %v569 = vld [vmem:[%s517 + $0xc8] sm:%s508]
                %570 = vst [vmem:[%s518 + $0xc8] sm:%s508] %v569
                %v571 = vld [vmem:[%s517 + $0xd0] sm:%s508]
                %572 = vst [vmem:[%s518 + $0xd0] sm:%s508] %v571
                %v573 = vld [vmem:[%s517 + $0xd8] sm:%s508]
                %574 = vst [vmem:[%s518 + $0xd8] sm:%s508] %v573
                %v575 = vld [vmem:[%s517 + $0xe0] sm:%s508]
                %576 = vst [vmem:[%s518 + $0xe0] sm:%s508] %v575
                %v577 = vld [vmem:[%s517 + $0xe8] sm:%s508]
                %578 = vst [vmem:[%s518 + $0xe8] sm:%s508] %v577
                %v579 = vld [vmem:[%s517 + $0xf0] sm:%s508]
                %580 = vst [vmem:[%s518 + $0xf0] sm:%s508] %v579
                %v581 = vld [vmem:[%s517 + $0xf8] sm:%s508]
                %582 = vst [vmem:[%s518 + $0xf8] sm:%s508] %v581
                %s583 = sadd.s32 1, %s516
                %p584 = scmp.ge.s32.totalorder %s583, %s509
                %s585 = scalar_select %p584, 0, %s583
                %s586 = smul.u32 %s585, 256
                %s587 = smul.u32 %s585, 256
                %s588 = scalar_lea.vmem %s488, %s586 [#allocation2]
                %s589 = scalar_lea.vmem %s499, %s587
              $region53: #{_lambda_.18} parent=47 // loop_footer
                %s513 = sadd.s32 %s511, 1
              $region54: #{_lambda_.18} parent=47 // loop_footer_branch
                %510 = sbr.rel target = $region50
              $region55: #{_lambda_.18} parent=47 // loop_exit
                _
              %s590 = sshrl.u32 %s495, 5
              %s591 = sand.u32 %s495, 31
              %s592 = smul.u32 %s590, 32
              %s593 = smul.u32 8, %s592
              %s594 = scalar_lea.vmem %s488, %s593 [#allocation2]
              %s595 = smul.u32 8, %s592
              %s596 = scalar_lea.vmem %s499, %s595
              // While loop
              $region56: #{_lambda_.18} parent=47 // loop_pre_header
                _
              $region57: #{_lambda_.18} parent=47 // loop_header
                %s598 = sphi 0, %s600
                %p599 = scmp.ge.s32.totalorder %s598, %s591
                %s603 = sphi 0, %s610
                %s604 = sphi %s594, %s613
                %s605 = sphi %s596, %s614
              $region58: #{_lambda_.18} parent=47 // loop_header_branch
                %602 = sbr.rel (%p599) target = $region62
              $region59: #{_lambda_.18} parent=47 // loop_body
                %v606 = vld [vmem:[%s604] sm:%s508]
                %607 = vst [vmem:[%s605] sm:%s508] %v606
                %s608 = sadd.s32 1, %s603
                %p609 = scmp.ge.s32.totalorder %s608, %s591
                %s610 = scalar_select %p609, 0, %s608
                %s611 = smul.u32 %s610, 8
                %s612 = smul.u32 %s610, 8
                %s613 = scalar_lea.vmem %s594, %s611 [#allocation2]
                %s614 = scalar_lea.vmem %s596, %s612
              $region60: #{_lambda_.18} parent=47 // loop_footer
                %s600 = sadd.s32 %s598, 1
              $region61: #{_lambda_.18} parent=47 // loop_footer_branch
                %597 = sbr.rel target = $region57
              $region62: #{_lambda_.18} parent=47 // loop_exit
                _
            $region48: #{_lambda_.18} parent=39 // pred_fallthru
              _
          $region40: #{_lambda_.18} parent=35 // pred_fallthru
            _
          %725 = vnop
        $region36: #{_lambda_.18} parent=31 // pred_fallthru
          _
      $region32: #{_lambda_.18} parent=5 // pred_fallthru
        _
      %p726 = scmp.le.s32.totalorder 2, %s9
      // Predicated region
      $region85: #{_lambda_.18} parent=5 // pred_check
        %p727 = pneg %p726
      $region86: #{_lambda_.18} parent=5 // pred_check_branch
        %729 = sbr.rel (%p727) target = $region88
      $region87: #{_lambda_.18} parent=5 // pred_region
        %s730 = ssub.s32 %s9, 2
        // Predicated region
        $region89: #{_lambda_.18} parent=87 // pred_check
          %p731 = pneg %p106
        $region90: #{_lambda_.18} parent=87 // pred_check_branch
          %733 = sbr.rel (%p731) target = $region92
        $region91: #{_lambda_.18} parent=87 // pred_region
          %s734 = sand.u32 %s91, 1
          %s735 = sand.u32 %s91, 1
          %s736 = smul.addr %s735, 256
          %s737 = scalar_lea.vmem [#allocation2], %s736
        $region92: #{_lambda_.18} parent=87 // pred_fallthru
          _
      $region88: #{_lambda_.18} parent=5 // pred_fallthru
        _
    $region6: #{_lambda_.18} parent=1 // loop_footer
      %s13 = sadd.s32 1, %s9
    $region7: #{_lambda_.18} parent=1 // loop_footer_branch
      %8 = sbr.rel target = $region3
    $region8: #{_lambda_.18} parent=1 // loop_exit
      _

// kernel: _lambda_.19
$region0: #{_lambda_.19}
  #allocation0 [shape = 'u32[]', space=smem, size = 0x4, offset = 0x4, fixed_abs, tag = 'smem constant byte address 0x4 - core index']
  #allocation1 [shape = 'u32[72,128]{1,0:T(1,128)}', space=vmem, size = 0x9000, scoped, tag = 'internal scratch']
  %s0 = inlined_call_operand.vmem [shape: bf16[640,3], index: 0, kind: input, shape index: {}]
  %s1 = inlined_call_operand.vmem [shape: bf16[3,2], index: 1, kind: input, shape index: {}]
  %s2 = inlined_call_operand.vmem [shape: f32[1,2], index: 2, kind: input, shape index: {}]
  %s3 = inlined_call_operand.vmem [shape: f32[640,2], index: 3, kind: output, shape index: {}]
  %s4 = sld [smem:[#allocation0]]
  $region93: #{_lambda_.19} parent=0
    _
  %s6 = ssub.s32 1, %s4
  %s7 = scalar_select 0, %s6, %s4
  $region1: #{_lambda_.19} parent=0
    #allocation2 [shape = 'u8[262144]{0}', space=vmem, size = 0x40000, scoped, tag = 'output window, operand 0']
    loop: start=0, step=1, limit=5
    $region2: #{_lambda_.19} parent=1 // loop_pre_header
      _
    $region3: #{_lambda_.19} parent=1 // loop_header
      %s9 = sphi 0, %s13
      %p10 = scmp.ge.s32.totalorder %s9, 5
      %s19 = sphi 0, %s21
      %s22 = sphi 0, %s19
      %s23 = sphi 0, %s22
      %s39 = sphi 0, %s23
      %s43 = sphi 0, %s43
      %s45 = sphi 0, %s43
      %s46 = sphi 0, %s45
      %s60 = sphi 0, %s46
      %s64 = sphi 0, %s64
      %s66 = sphi 0, %s64
      %s67 = sphi 0, %s66
      %s81 = sphi 0, %s67
      %s87 = sphi 0, %s89
      %s90 = sphi 0, %s87
      %s91 = sphi 0, %s90
      %s107 = sphi 0, %s91
    $region4: #{_lambda_.19} parent=1 // loop_header_branch
      %12 = sbr.rel (%p10) target = $region8
    $region5: #{_lambda_.19} parent=1 // loop_body
      %s14 = ssub.s32 %s9, 1
      %s15 = ssub.s32 %s9, 2
      %s16 = sadd.s32 %s9, 1
      %s17 = ssub.s32 %s9, %s16
      %p18 = scmp.eq.s32.totalorder %s17, 0
      %s20 = sadd.s32 %s19, 1
      %s21 = scalar_select %p18, %s19, %s20
      %p24 = pneg %p18
      %p25 = scmp.eq.s32.totalorder %s9, 2
      %p26 = por %p24, %p25
      %p27 = scmp.ne.s32.totalorder %s19, %s22
      %p28 = scmp.eq.s32.totalorder %s9, 0
      %p29 = por %p27, %p28
      %p30 = scmp.ne.s32.totalorder %s19, %s22
      %p31 = scmp.eq.s32.totalorder %s14, 2
      %p32 = por %p30, %p31
      %p33 = scmp.ne.s32.totalorder %s22, %s23
      %p34 = scmp.eq.s32.totalorder %s14, 0
      %p35 = por %p33, %p34
      %p36 = scmp.ne.s32.totalorder %s22, %s23
      %p37 = scmp.eq.s32.totalorder %s15, 2
      %p38 = por %p36, %p37
      %p40 = scmp.ne.s32.totalorder %s23, %s39
      %p41 = scmp.eq.s32.totalorder %s15, 0
      %p42 = por %p40, %p41
      %s44 = sadd.s32 %s43, 1
      %p47 = scmp.eq.s32.totalorder %s9, 2
      %p48 = scmp.ne.s32.totalorder %s43, %s45
      %p49 = scmp.eq.s32.totalorder %s9, 0
      %p50 = por %p48, %p49
      %p51 = scmp.ne.s32.totalorder %s43, %s45
      %p52 = scmp.eq.s32.totalorder %s14, 2
      %p53 = por %p51, %p52
      %p54 = scmp.ne.s32.totalorder %s45, %s46
      %p55 = scmp.eq.s32.totalorder %s14, 0
      %p56 = por %p54, %p55
      %p57 = scmp.ne.s32.totalorder %s45, %s46
      %p58 = scmp.eq.s32.totalorder %s15, 2
      %p59 = por %p57, %p58
      %p61 = scmp.ne.s32.totalorder %s46, %s60
      %p62 = scmp.eq.s32.totalorder %s15, 0
      %p63 = por %p61, %p62
      %s65 = sadd.s32 %s64, 1
      %p68 = scmp.eq.s32.totalorder %s9, 2
      %p69 = scmp.ne.s32.totalorder %s64, %s66
      %p70 = scmp.eq.s32.totalorder %s9, 0
      %p71 = por %p69, %p70
      %p72 = scmp.ne.s32.totalorder %s64, %s66
      %p73 = scmp.eq.s32.totalorder %s14, 2
      %p74 = por %p72, %p73
      %p75 = scmp.ne.s32.totalorder %s66, %s67
      %p76 = scmp.eq.s32.totalorder %s14, 0
      %p77 = por %p75, %p76
      %p78 = scmp.ne.s32.totalorder %s66, %s67
      %p79 = scmp.eq.s32.totalorder %s15, 2
      %p80 = por %p78, %p79
      %p82 = scmp.ne.s32.totalorder %s67, %s81
      %p83 = scmp.eq.s32.totalorder %s15, 0
      %p84 = por %p82, %p83
      %s85 = ssub.s32 %s9, %s16
      %p86 = scmp.eq.s32.totalorder %s85, 0
      %s88 = sadd.s32 %s87, 1
      %s89 = scalar_select %p86, %s87, %s88
      %p92 = pneg %p86
      %p93 = scmp.eq.s32.totalorder %s9, 2
      %p94 = por %p92, %p93
      %p95 = scmp.ne.s32.totalorder %s87, %s90
      %p96 = scmp.eq.s32.totalorder %s9, 0
      %p97 = por %p95, %p96
      %p98 = scmp.ne.s32.totalorder %s87, %s90
      %p99 = scmp.eq.s32.totalorder %s14, 2
      %p100 = por %p98, %p99
      %p101 = scmp.ne.s32.totalorder %s90, %s91
      %p102 = scmp.eq.s32.totalorder %s14, 0
      %p103 = por %p101, %p102
      %p104 = scmp.ne.s32.totalorder %s90, %s91
      %p105 = scmp.eq.s32.totalorder %s15, 2
      %p106 = por %p104, %p105
      %p108 = scmp.ne.s32.totalorder %s91, %s107
      %p109 = scmp.eq.s32.totalorder %s15, 0
      %p110 = por %p108, %p109
      %p111 = scmp.le.s32.totalorder 1, %s9
      %p112 = scmp.lt.s32.totalorder %s9, 4
      %p113 = pnand %p111, %p112
      %p114 = pneg %p113
      // Predicated region
      $region9: #{_lambda_.19} parent=5 // pred_check
        _
      $region10: #{_lambda_.19} parent=5 // pred_check_branch
        %116 = sbr.rel (%p113) target = $region12
      $region11: #{_lambda_.19} parent=5 // pred_region
        %s117 = ssub.s32 %s9, 1
        // Predicated region
        $region13: #{_lambda_.19} parent=11 // pred_check
          %p118 = pneg %p56
        $region14: #{_lambda_.19} parent=11 // pred_check_branch
          %120 = sbr.rel (%p118) target = $region16
        $region15: #{_lambda_.19} parent=11 // pred_region
          _
        $region16: #{_lambda_.19} parent=11 // pred_fallthru
          _
        // Predicated region
        $region17: #{_lambda_.19} parent=11 // pred_check
          %p121 = pneg %p77
        $region18: #{_lambda_.19} parent=11 // pred_check_branch
          %123 = sbr.rel (%p121) target = $region20
        $region19: #{_lambda_.19} parent=11 // pred_region
          _
        $region20: #{_lambda_.19} parent=11 // pred_fallthru
          _
      $region12: #{_lambda_.19} parent=5 // pred_fallthru
        _
      %p124 = scmp.lt.s32.totalorder %s9, 3
      // Predicated region
      $region21: #{_lambda_.19} parent=5 // pred_check
        %p125 = pneg %p124
      $region22: #{_lambda_.19} parent=5 // pred_check_branch
        %127 = sbr.rel (%p125) target = $region24
      $region23: #{_lambda_.19} parent=5 // pred_region
        // Predicated region
        $region25: #{_lambda_.19} parent=23 // pred_check
          %p128 = pneg %p29
        $region26: #{_lambda_.19} parent=23 // pred_check_branch
          %130 = sbr.rel (%p128) target = $region28
        $region27: #{_lambda_.19} parent=23 // pred_region
          %s131 = smul.u32 32, %s9
          %s132 = ssub.s32 80, %s131
          %p133 = scmp.lt.s32.totalorder %s132, 32
          %s134 = scalar_select %p133, %s132, 32
          %s135 = smul.u32 4, %s134
          %p136 = scmp.lt.s32.totalorder %s131, 79
          %s137 = scalar_select %p136, %s131, 79
          %s138 = smul.addr %s137, 4
          %s139 = scalar_lea.vmem %s0, %s138
          %s140 = smul.u32 32, %s9
          %s141 = ssub.s32 80, %s140
          %p142 = scmp.lt.s32.totalorder %s141, 32
          %s143 = scalar_select %p142, %s141, 32
          %s144 = smul.u32 4, %s143
        $region28: #{_lambda_.19} parent=23 // pred_fallthru
          _
      $region24: #{_lambda_.19} parent=5 // pred_fallthru
        _
      %p145 = scmp.le.s32.totalorder 1, %s9
      %p146 = scmp.lt.s32.totalorder %s9, 4
      %p147 = pnand %p145, %p146
      %p148 = pneg %p147
      // Predicated region
      $region29: #{_lambda_.19} parent=5 // pred_check
        _
      $region30: #{_lambda_.19} parent=5 // pred_check_branch
        %150 = sbr.rel (%p147) target = $region32
      $region31: #{_lambda_.19} parent=5 // pred_region
        %s151 = ssub.s32 %s9, 1
        %s152 = smul.u32 32, %s14
        %s153 = ssub.s32 80, %s152
        %p154 = scmp.lt.s32.totalorder %s153, 32
        %s155 = scalar_select %p154, %s153, 32
        %s156 = smul.u32 4, %s155
        %p157 = scmp.lt.s32.totalorder %s152, 79
        %s158 = scalar_select %p157, %s152, 79
        %s159 = smul.addr %s158, 4
        %s160 = scalar_lea.vmem %s0, %s159
        %p161 = pneg %p35
        %p162 = pneg %p32
        %p163 = pneg %p56
        %p164 = pneg %p53
        %p165 = pneg %p77
        %p166 = pneg %p74
        %p167 = pneg %p103
        %p168 = pneg %p100
        %s169 = sand.u32 %s90, 1
        %s170 = sand.u32 %s90, 1
        %s171 = smul.addr %s170, 256
        %s172 = scalar_lea.vmem [#allocation2], %s171
        %s173 = smul.u32 32, %s14
        %s174 = ssub.s32 80, %s173
        %p175 = scmp.lt.s32.totalorder %s174, 32
        %s176 = scalar_select %p175, %s174, 32
        %s177 = smul.u32 4, %s176
        %p178 = scmp.lt.s32.totalorder %s173, 79
        %s179 = scalar_select %p178, %s173, 79
        %s180 = smul.addr %s179, 4
        %s181 = scalar_lea.vmem %s0, %s180
        %s182 = smul.u32 32, %s14
        %s183 = ssub.s32 80, %s182
        %p184 = scmp.lt.s32.totalorder %s183, 32
        %s185 = scalar_select %p184, %s183, 32
        %s186 = smul.u32 4, %s185
        %s187 = smul.u32 32, %s14
        %s188 = ssub.s32 80, %s187
        %p189 = scmp.lt.s32.totalorder %s188, 32
        %s190 = scalar_select %p189, %s188, 32
        %s191 = smul.u32 8, %s190
        %v193 = vld [vmem:[%s181] sm:$0xf]
        %v194 = vld [vmem:[%s181 + $0x4] sm:$0xf]
        %v195 = vld [vmem:[%s181 + $0x8] sm:$0xf]
        %v196 = vld [vmem:[%s181 + $0xc] sm:$0xf]
        %v197 = vld [vmem:[%s181 + $0x10] sm:$0xf]
        %v198 = vld [vmem:[%s181 + $0x14] sm:$0xf]
        %v199 = vld [vmem:[%s181 + $0x18] sm:$0xf]
        %v200 = vld [vmem:[%s181 + $0x1c] sm:$0xf]
        %v201 = vld [vmem:[%s181 + $0x20] sm:$0xf]
        %v202 = vld [vmem:[%s181 + $0x24] sm:$0xf]
        %v203 = vld [vmem:[%s181 + $0x28] sm:$0xf]
        %v204 = vld [vmem:[%s181 + $0x2c] sm:$0xf]
        %v205 = vld [vmem:[%s181 + $0x30] sm:$0xf]
        %v206 = vld [vmem:[%s181 + $0x34] sm:$0xf]
        %v207 = vld [vmem:[%s181 + $0x38] sm:$0xf]
        %v208 = vld [vmem:[%s181 + $0x3c] sm:$0xf]
        %v209 = vld [vmem:[%s181 + $0x40] sm:$0xf]
        %v210 = vld [vmem:[%s181 + $0x44] sm:$0xf]
        %v211 = vld [vmem:[%s181 + $0x48] sm:$0xf]
        %v212 = vld [vmem:[%s181 + $0x4c] sm:$0xf]
        %v213 = vld [vmem:[%s181 + $0x50] sm:$0xf]
        %v214 = vld [vmem:[%s181 + $0x54] sm:$0xf]
        %v215 = vld [vmem:[%s181 + $0x58] sm:$0xf]
        %v216 = vld [vmem:[%s181 + $0x5c] sm:$0xf]
        %v217 = vld [vmem:[%s181 + $0x60] sm:$0xf]
        %v218 = vld [vmem:[%s181 + $0x64] sm:$0xf]
        %v219 = vld [vmem:[%s181 + $0x68] sm:$0xf]
        %v220 = vld [vmem:[%s181 + $0x6c] sm:$0xf]
        %v221 = vld [vmem:[%s181 + $0x70] sm:$0xf]
        %v222 = vld [vmem:[%s181 + $0x74] sm:$0xf]
        %v223 = vld [vmem:[%s181 + $0x78] sm:$0xf]
        %v224 = vld [vmem:[%s181 + $0x7c] sm:$0xf]
        %v225 = vld [vmem:[%s1] sm:$0x3]
        %v226 = vld [vmem:[%s2] sm:$0x1]
        %v228 = vperm.slane %v226, 0
        %v262 = vunpack.c.l.b16 %v193
        %v263 = vunpack.c.l.b16 %v194
        %v264 = vunpack.c.l.b16 %v195
        %v265 = vunpack.c.l.b16 %v196
        %v266 = vunpack.c.l.b16 %v197
        %v267 = vunpack.c.l.b16 %v198
        %v268 = vunpack.c.l.b16 %v199
        %v269 = vunpack.c.l.b16 %v200
        %v270 = vunpack.c.l.b16 %v201
        %v271 = vunpack.c.l.b16 %v202
        %v272 = vunpack.c.l.b16 %v203
        %v273 = vunpack.c.l.b16 %v204
        %v274 = vunpack.c.l.b16 %v205
        %v275 = vunpack.c.l.b16 %v206
        %v276 = vunpack.c.l.b16 %v207
        %v277 = vunpack.c.l.b16 %v208
        %v278 = vunpack.c.l.b16 %v209
        %v279 = vunpack.c.l.b16 %v210
        %v280 = vunpack.c.l.b16 %v211
        %v281 = vunpack.c.l.b16 %v212
        %v282 = vunpack.c.l.b16 %v213
        %v283 = vunpack.c.l.b16 %v214
        %v284 = vunpack.c.l.b16 %v215
        %v285 = vunpack.c.l.b16 %v216
        %v286 = vunpack.c.l.b16 %v217
        %v287 = vunpack.c.l.b16 %v218
        %v288 = vunpack.c.l.b16 %v219
        %v289 = vunpack.c.l.b16 %v220
        %v290 = vunpack.c.l.b16 %v221
        %v291 = vunpack.c.l.b16 %v222
        %v292 = vunpack.c.l.b16 %v223
        %v293 = vunpack.c.l.b16 %v224
        %v294 = vpack.c.b16 %v263, %v262
        %v295 = vpack.c.b16 %v265, %v264
        %v296 = vpack.c.b16 %v267, %v266
        %v297 = vpack.c.b16 %v269, %v268
        %v298 = vpack.c.b16 %v271, %v270
        %v299 = vpack.c.b16 %v273, %v272
        %v300 = vpack.c.b16 %v275, %v274
        %v301 = vpack.c.b16 %v277, %v276
        %v302 = vpack.c.b16 %v279, %v278
        %v303 = vpack.c.b16 %v281, %v280
        %v304 = vpack.c.b16 %v283, %v282
        %v305 = vpack.c.b16 %v285, %v284
        %v306 = vpack.c.b16 %v287, %v286
        %v307 = vpack.c.b16 %v289, %v288
        %v308 = vpack.c.b16 %v291, %v290
        %v309 = vpack.c.b16 %v293, %v292
        %vm310 = vcmask 23552
        %v312 = vsel %vm310, %v294, 0
        %v315 = vsel %vm310, %v295, 0
        %v318 = vsel %vm310, %v296, 0
        %v321 = vsel %vm310, %v297, 0
        %v324 = vsel %vm310, %v298, 0
        %v327 = vsel %vm310, %v299, 0
        %v330 = vsel %vm310, %v300, 0
        %v333 = vsel %vm310, %v301, 0
        %v336 = vsel %vm310, %v302, 0
        %v339 = vsel %vm310, %v303, 0
        %v342 = vsel %vm310, %v304, 0
        %v345 = vsel %vm310, %v305, 0
        %v348 = vsel %vm310, %v306, 0
        %v351 = vsel %vm310, %v307, 0
        %v354 = vsel %vm310, %v308, 0
        %v357 = vsel %vm310, %v309, 0
        %vm359 = vcmask 1040384
        %vm360 = vcmask 1041408
        %v361 = vsel %vm359, 4294967295, 65535
        %v362 = vsel %vm360, %v361, 0
        %v364 = vand.u32 %v225, %v362
        %366 = vmatpush.bf16.msra.mxu0 0
        %367 = vmatpush.bf16.msra.mxu0 0
        %368 = vmatpush.bf16.msra.mxu0 0
        %369 = vmatpush.bf16.msra.mxu0 0
        %370 = vmatpush.bf16.msra.mxu0 0
        %371 = vmatpush.bf16.msra.mxu0 0
        %372 = vmatpush.bf16.msra.mxu0 0
        %373 = vmatpush.bf16.msra.mxu0 %v364
        %374 = vmatmul.bf16.gmra.mxu0 %v312
        %v375 = vpop.f32.mrf.mxu0
        %v376 = vadd.f32 %v228, %v375
        %v377 = vpop.f32.mrf.mxu0
        %v378 = vadd.f32 %v228, %v377
        %379 = vmatmul.bf16.gmra.mxu0 %v315
        %v380 = vpop.f32.mrf.mxu0
        %v381 = vadd.f32 %v228, %v380
        %v382 = vpop.f32.mrf.mxu0
        %v383 = vadd.f32 %v228, %v382
        %384 = vmatmul.bf16.gmra.mxu0 %v318
        %v385 = vpop.f32.mrf.mxu0
        %v386 = vadd.f32 %v228, %v385
        %v387 = vpop.f32.mrf.mxu0
        %v388 = vadd.f32 %v228, %v387
        %389 = vmatmul.bf16.gmra.mxu0 %v321
        %v390 = vpop.f32.mrf.mxu0
        %v391 = vadd.f32 %v228, %v390
        %v392 = vpop.f32.mrf.mxu0
        %v393 = vadd.f32 %v228, %v392
        %394 = vmatmul.bf16.gmra.mxu0 %v324
        %v395 = vpop.f32.mrf.mxu0
        %v396 = vadd.f32 %v228, %v395
        %v397 = vpop.f32.mrf.mxu0
        %v398 = vadd.f32 %v228, %v397
        %399 = vmatmul.bf16.gmra.mxu0 %v327
        %v400 = vpop.f32.mrf.mxu0
        %v401 = vadd.f32 %v228, %v400
        %v402 = vpop.f32.mrf.mxu0
        %v403 = vadd.f32 %v228, %v402
        %404 = vmatmul.bf16.gmra.mxu0 %v330
        %v405 = vpop.f32.mrf.mxu0
        %v406 = vadd.f32 %v228, %v405
        %v407 = vpop.f32.mrf.mxu0
        %v408 = vadd.f32 %v228, %v407
        %409 = vmatmul.bf16.gmra.mxu0 %v333
        %v410 = vpop.f32.mrf.mxu0
        %v411 = vadd.f32 %v228, %v410
        %v412 = vpop.f32.mrf.mxu0
        %v413 = vadd.f32 %v228, %v412
        %414 = vmatmul.bf16.gmra.mxu0 %v336
        %v415 = vpop.f32.mrf.mxu0
        %v416 = vadd.f32 %v228, %v415
        %v417 = vpop.f32.mrf.mxu0
        %v418 = vadd.f32 %v228, %v417
        %419 = vmatmul.bf16.gmra.mxu0 %v339
        %v420 = vpop.f32.mrf.mxu0
        %v421 = vadd.f32 %v228, %v420
        %v422 = vpop.f32.mrf.mxu0
        %v423 = vadd.f32 %v228, %v422
        %424 = vmatmul.bf16.gmra.mxu0 %v342
        %v425 = vpop.f32.mrf.mxu0
        %v426 = vadd.f32 %v228, %v425
        %v427 = vpop.f32.mrf.mxu0
        %v428 = vadd.f32 %v228, %v427
        %429 = vmatmul.bf16.gmra.mxu0 %v345
        %v430 = vpop.f32.mrf.mxu0
        %v431 = vadd.f32 %v228, %v430
        %v432 = vpop.f32.mrf.mxu0
        %v433 = vadd.f32 %v228, %v432
        %434 = vmatmul.bf16.gmra.mxu0 %v348
        %v435 = vpop.f32.mrf.mxu0
        %v436 = vadd.f32 %v228, %v435
        %v437 = vpop.f32.mrf.mxu0
        %v438 = vadd.f32 %v228, %v437
        %439 = vmatmul.bf16.gmra.mxu0 %v351
        %v440 = vpop.f32.mrf.mxu0
        %v441 = vadd.f32 %v228, %v440
        %v442 = vpop.f32.mrf.mxu0
        %v443 = vadd.f32 %v228, %v442
        %444 = vmatmul.bf16.gmra.mxu0 %v354
        %v445 = vpop.f32.mrf.mxu0
        %v446 = vadd.f32 %v228, %v445
        %v447 = vpop.f32.mrf.mxu0
        %v448 = vadd.f32 %v228, %v447
        %449 = vmatmul.bf16.gmra.mxu0 %v357
        %v450 = vpop.f32.mrf.mxu0
        %v451 = vadd.f32 %v228, %v450
        %v452 = vpop.f32.mrf.mxu0
        %v453 = vadd.f32 %v228, %v452
        %454 = vdwg.mxu0
        %vm455 = vcmask 15360
        %456 = vst.msk [vmem:[%s172] sm:$0xff] %vm455, %v376
        %457 = vst.msk [vmem:[%s172 + $0x8] sm:$0xff] %vm455, %v378
        %458 = vst.msk [vmem:[%s172 + $0x10] sm:$0xff] %vm455, %v381
        %459 = vst.msk [vmem:[%s172 + $0x18] sm:$0xff] %vm455, %v383
        %460 = vst.msk [vmem:[%s172 + $0x20] sm:$0xff] %vm455, %v386
        %461 = vst.msk [vmem:[%s172 + $0x28] sm:$0xff] %vm455, %v388
        %462 = vst.msk [vmem:[%s172 + $0x30] sm:$0xff] %vm455, %v391
        %463 = vst.msk [vmem:[%s172 + $0x38] sm:$0xff] %vm455, %v393
        %464 = vst.msk [vmem:[%s172 + $0x40] sm:$0xff] %vm455, %v396
        %465 = vst.msk [vmem:[%s172 + $0x48] sm:$0xff] %vm455, %v398
        %466 = vst.msk [vmem:[%s172 + $0x50] sm:$0xff] %vm455, %v401
        %467 = vst.msk [vmem:[%s172 + $0x58] sm:$0xff] %vm455, %v403
        %468 = vst.msk [vmem:[%s172 + $0x60] sm:$0xff] %vm455, %v406
        %469 = vst.msk [vmem:[%s172 + $0x68] sm:$0xff] %vm455, %v408
        %470 = vst.msk [vmem:[%s172 + $0x70] sm:$0xff] %vm455, %v411
        %471 = vst.msk [vmem:[%s172 + $0x78] sm:$0xff] %vm455, %v413
        %472 = vst.msk [vmem:[%s172 + $0x80] sm:$0xff] %vm455, %v416
        %473 = vst.msk [vmem:[%s172 + $0x88] sm:$0xff] %vm455, %v418
        %474 = vst.msk [vmem:[%s172 + $0x90] sm:$0xff] %vm455, %v421
        %475 = vst.msk [vmem:[%s172 + $0x98] sm:$0xff] %vm455, %v423
        %476 = vst.msk [vmem:[%s172 + $0xa0] sm:$0xff] %vm455, %v426
        %477 = vst.msk [vmem:[%s172 + $0xa8] sm:$0xff] %vm455, %v428
        %478 = vst.msk [vmem:[%s172 + $0xb0] sm:$0xff] %vm455, %v431
        %479 = vst.msk [vmem:[%s172 + $0xb8] sm:$0xff] %vm455, %v433
        %480 = vst.msk [vmem:[%s172 + $0xc0] sm:$0xff] %vm455, %v436
        %481 = vst.msk [vmem:[%s172 + $0xc8] sm:$0xff] %vm455, %v438
        %482 = vst.msk [vmem:[%s172 + $0xd0] sm:$0xff] %vm455, %v441
        %483 = vst.msk [vmem:[%s172 + $0xd8] sm:$0xff] %vm455, %v443
        %484 = vst.msk [vmem:[%s172 + $0xe0] sm:$0xff] %vm455, %v446
        %485 = vst.msk [vmem:[%s172 + $0xe8] sm:$0xff] %vm455, %v448
        %486 = vst.msk [vmem:[%s172 + $0xf0] sm:$0xff] %vm455, %v451
        %487 = vst.msk [vmem:[%s172 + $0xf8] sm:$0xff] %vm455, %v453
        %s488 = sand.u32 %s90, 1
        %s489 = sand.u32 %s90, 1
        %s490 = smul.addr %s489, 256
        %s491 = scalar_lea.vmem [#allocation2], %s490
        // Predicated region
        $region33: #{_lambda_.19} parent=31 // pred_check
          %p492 = pneg %p100
        $region34: #{_lambda_.19} parent=31 // pred_check_branch
          %494 = sbr.rel (%p492) target = $region36
        $region35: #{_lambda_.19} parent=31 // pred_region
          %s495 = smul.u32 32, %s14
          %s496 = ssub.s32 80, %s495
          %p497 = scmp.lt.s32.totalorder %s496, 32
          %s498 = scalar_select %p497, %s496, 32
          %s499 = smul.u32 8, %s498
          %p500 = scmp.ne.s32.totalorder 0, %s499
          %s501 = smul.addr %s495, 8
          %s502 = scalar_lea.vmem %s3, %s501
          // Predicated region
          $region37: #{_lambda_.19} parent=35 // pred_check
            %p503 = pneg %p500
          $region38: #{_lambda_.19} parent=35 // pred_check_branch
            %505 = sbr.rel (%p503) target = $region40
          $region39: #{_lambda_.19} parent=35 // pred_region
            // Predicated region
            $region41: #{_lambda_.19} parent=39 // pred_check
              _
            $region42: #{_lambda_.19} parent=39 // pred_check_branch
              %507 = sbr.rel (0) target = $region44
            $region43: #{_lambda_.19} parent=39 // pred_region
              // Predicated region
              $region63: #{_lambda_.19} parent=43 // pred_check
                _
              $region64: #{_lambda_.19} parent=43 // pred_check_branch
                %619 = sbr.rel (0) target = $region66
              $region65: #{_lambda_.19} parent=43 // pred_region
                %s620 = sshrl.u32 %s498, 5
                // While loop
                $region67: #{_lambda_.19} parent=65 // loop_pre_header
                  _
                $region68: #{_lambda_.19} parent=65 // loop_header
                  %s622 = sphi 0, %s624
                  %p623 = scmp.ge.s32.totalorder %s622, %s620
                  %s627 = sphi 0, %s696
                  %s628 = sphi %s491, %s699
                  %s629 = sphi %s502, %s700
                $region69: #{_lambda_.19} parent=65 // loop_header_branch
                  %626 = sbr.rel (%p623) target = $region73
                $region70: #{_lambda_.19} parent=65 // loop_body
                  %v630 = vld [vmem:[%s628] sm:$0xff]
                  %631 = vst [vmem:[%s629] sm:$0xff] %v630
                  %v632 = vld [vmem:[%s628 + $0x8] sm:$0xff]
                  %633 = vst [vmem:[%s629 + $0x8] sm:$0xff] %v632
                  %v634 = vld [vmem:[%s628 + $0x10] sm:$0xff]
                  %635 = vst [vmem:[%s629 + $0x10] sm:$0xff] %v634
                  %v636 = vld [vmem:[%s628 + $0x18] sm:$0xff]
                  %637 = vst [vmem:[%s629 + $0x18] sm:$0xff] %v636
                  %v638 = vld [vmem:[%s628 + $0x20] sm:$0xff]
                  %639 = vst [vmem:[%s629 + $0x20] sm:$0xff] %v638
                  %v640 = vld [vmem:[%s628 + $0x28] sm:$0xff]
                  %641 = vst [vmem:[%s629 + $0x28] sm:$0xff] %v640
                  %v642 = vld [vmem:[%s628 + $0x30] sm:$0xff]
                  %643 = vst [vmem:[%s629 + $0x30] sm:$0xff] %v642
                  %v644 = vld [vmem:[%s628 + $0x38] sm:$0xff]
                  %645 = vst [vmem:[%s629 + $0x38] sm:$0xff] %v644
                  %v646 = vld [vmem:[%s628 + $0x40] sm:$0xff]
                  %647 = vst [vmem:[%s629 + $0x40] sm:$0xff] %v646
                  %v648 = vld [vmem:[%s628 + $0x48] sm:$0xff]
                  %649 = vst [vmem:[%s629 + $0x48] sm:$0xff] %v648
                  %v650 = vld [vmem:[%s628 + $0x50] sm:$0xff]
                  %651 = vst [vmem:[%s629 + $0x50] sm:$0xff] %v650
                  %v652 = vld [vmem:[%s628 + $0x58] sm:$0xff]
                  %653 = vst [vmem:[%s629 + $0x58] sm:$0xff] %v652
                  %v654 = vld [vmem:[%s628 + $0x60] sm:$0xff]
                  %655 = vst [vmem:[%s629 + $0x60] sm:$0xff] %v654
                  %v656 = vld [vmem:[%s628 + $0x68] sm:$0xff]
                  %657 = vst [vmem:[%s629 + $0x68] sm:$0xff] %v656
                  %v658 = vld [vmem:[%s628 + $0x70] sm:$0xff]
                  %659 = vst [vmem:[%s629 + $0x70] sm:$0xff] %v658
                  %v660 = vld [vmem:[%s628 + $0x78] sm:$0xff]
                  %661 = vst [vmem:[%s629 + $0x78] sm:$0xff] %v660
                  %v662 = vld [vmem:[%s628 + $0x80] sm:$0xff]
                  %663 = vst [vmem:[%s629 + $0x80] sm:$0xff] %v662
                  %v664 = vld [vmem:[%s628 + $0x88] sm:$0xff]
                  %665 = vst [vmem:[%s629 + $0x88] sm:$0xff] %v664
                  %v666 = vld [vmem:[%s628 + $0x90] sm:$0xff]
                  %667 = vst [vmem:[%s629 + $0x90] sm:$0xff] %v666
                  %v668 = vld [vmem:[%s628 + $0x98] sm:$0xff]
                  %669 = vst [vmem:[%s629 + $0x98] sm:$0xff] %v668
                  %v670 = vld [vmem:[%s628 + $0xa0] sm:$0xff]
                  %671 = vst [vmem:[%s629 + $0xa0] sm:$0xff] %v670
                  %v672 = vld [vmem:[%s628 + $0xa8] sm:$0xff]
                  %673 = vst [vmem:[%s629 + $0xa8] sm:$0xff] %v672
                  %v674 = vld [vmem:[%s628 + $0xb0] sm:$0xff]
                  %675 = vst [vmem:[%s629 + $0xb0] sm:$0xff] %v674
                  %v676 = vld [vmem:[%s628 + $0xb8] sm:$0xff]
                  %677 = vst [vmem:[%s629 + $0xb8] sm:$0xff] %v676
                  %v678 = vld [vmem:[%s628 + $0xc0] sm:$0xff]
                  %679 = vst [vmem:[%s629 + $0xc0] sm:$0xff] %v678
                  %v680 = vld [vmem:[%s628 + $0xc8] sm:$0xff]
                  %681 = vst [vmem:[%s629 + $0xc8] sm:$0xff] %v680
                  %v682 = vld [vmem:[%s628 + $0xd0] sm:$0xff]
                  %683 = vst [vmem:[%s629 + $0xd0] sm:$0xff] %v682
                  %v684 = vld [vmem:[%s628 + $0xd8] sm:$0xff]
                  %685 = vst [vmem:[%s629 + $0xd8] sm:$0xff] %v684
                  %v686 = vld [vmem:[%s628 + $0xe0] sm:$0xff]
                  %687 = vst [vmem:[%s629 + $0xe0] sm:$0xff] %v686
                  %v688 = vld [vmem:[%s628 + $0xe8] sm:$0xff]
                  %689 = vst [vmem:[%s629 + $0xe8] sm:$0xff] %v688
                  %v690 = vld [vmem:[%s628 + $0xf0] sm:$0xff]
                  %691 = vst [vmem:[%s629 + $0xf0] sm:$0xff] %v690
                  %v692 = vld [vmem:[%s628 + $0xf8] sm:$0xff]
                  %693 = vst [vmem:[%s629 + $0xf8] sm:$0xff] %v692
                  %s694 = sadd.s32 1, %s627
                  %p695 = scmp.ge.s32.totalorder %s694, %s620
                  %s696 = scalar_select %p695, 0, %s694
                  %s697 = smul.u32 %s696, 256
                  %s698 = smul.u32 %s696, 256
                  %s699 = scalar_lea.vmem %s491, %s697 [#allocation2]
                  %s700 = scalar_lea.vmem %s502, %s698
                $region71: #{_lambda_.19} parent=65 // loop_footer
                  %s624 = sadd.s32 %s622, 1
                $region72: #{_lambda_.19} parent=65 // loop_footer_branch
                  %621 = sbr.rel target = $region68
                $region73: #{_lambda_.19} parent=65 // loop_exit
                  _
                %s701 = sshrl.u32 %s498, 5
                %s702 = sand.u32 %s498, 31
                %s703 = smul.u32 %s701, 32
                %s704 = smul.u32 8, %s703
                %s705 = scalar_lea.vmem %s491, %s704 [#allocation2]
                %s706 = smul.u32 8, %s703
                %s707 = scalar_lea.vmem %s502, %s706
                // While loop
                $region74: #{_lambda_.19} parent=65 // loop_pre_header
                  _
                $region75: #{_lambda_.19} parent=65 // loop_header
                  %s709 = sphi 0, %s711
                  %p710 = scmp.ge.s32.totalorder %s709, %s702
                  %s714 = sphi 0, %s721
                  %s715 = sphi %s705, %s724
                  %s716 = sphi %s707, %s725
                $region76: #{_lambda_.19} parent=65 // loop_header_branch
                  %713 = sbr.rel (%p710) target = $region80
                $region77: #{_lambda_.19} parent=65 // loop_body
                  %v717 = vld [vmem:[%s715] sm:$0xff]
                  %718 = vst [vmem:[%s716] sm:$0xff] %v717
                  %s719 = sadd.s32 1, %s714
                  %p720 = scmp.ge.s32.totalorder %s719, %s702
                  %s721 = scalar_select %p720, 0, %s719
                  %s722 = smul.u32 %s721, 8
                  %s723 = smul.u32 %s721, 8
                  %s724 = scalar_lea.vmem %s705, %s722 [#allocation2]
                  %s725 = scalar_lea.vmem %s707, %s723
                $region78: #{_lambda_.19} parent=65 // loop_footer
                  %s711 = sadd.s32 %s709, 1
                $region79: #{_lambda_.19} parent=65 // loop_footer_branch
                  %708 = sbr.rel target = $region75
                $region80: #{_lambda_.19} parent=65 // loop_exit
                  _
              $region66: #{_lambda_.19} parent=43 // pred_fallthru
                _
              // Predicated region
              $region81: #{_lambda_.19} parent=43 // pred_check
                _
              $region82: #{_lambda_.19} parent=43 // pred_check_branch
                %727 = sbr.rel target = $region84
              $region83: #{_lambda_.19} parent=43 // pred_region
                _
              $region84: #{_lambda_.19} parent=43 // pred_fallthru
                _
            $region44: #{_lambda_.19} parent=39 // pred_fallthru
              _
            // Predicated region
            $region45: #{_lambda_.19} parent=39 // pred_check
              _
            $region46: #{_lambda_.19} parent=39 // pred_check_branch
              %509 = sbr.rel target = $region48
            $region47: #{_lambda_.19} parent=39 // pred_region
              %s511 = ssub.s32 256, 1
              %s512 = sshrl.u32 %s498, 5
              // While loop
              $region49: #{_lambda_.19} parent=47 // loop_pre_header
                _
              $region50: #{_lambda_.19} parent=47 // loop_header
                %s514 = sphi 0, %s516
                %p515 = scmp.ge.s32.totalorder %s514, %s512
                %s519 = sphi 0, %s588
                %s520 = sphi %s491, %s591
                %s521 = sphi %s502, %s592
              $region51: #{_lambda_.19} parent=47 // loop_header_branch
                %518 = sbr.rel (%p515) target = $region55
              $region52: #{_lambda_.19} parent=47 // loop_body
                %v522 = vld [vmem:[%s520] sm:%s511]
                %523 = vst [vmem:[%s521] sm:%s511] %v522
                %v524 = vld [vmem:[%s520 + $0x8] sm:%s511]
                %525 = vst [vmem:[%s521 + $0x8] sm:%s511] %v524
                %v526 = vld [vmem:[%s520 + $0x10] sm:%s511]
                %527 = vst [vmem:[%s521 + $0x10] sm:%s511] %v526
                %v528 = vld [vmem:[%s520 + $0x18] sm:%s511]
                %529 = vst [vmem:[%s521 + $0x18] sm:%s511] %v528
                %v530 = vld [vmem:[%s520 + $0x20] sm:%s511]
                %531 = vst [vmem:[%s521 + $0x20] sm:%s511] %v530
                %v532 = vld [vmem:[%s520 + $0x28] sm:%s511]
                %533 = vst [vmem:[%s521 + $0x28] sm:%s511] %v532
                %v534 = vld [vmem:[%s520 + $0x30] sm:%s511]
                %535 = vst [vmem:[%s521 + $0x30] sm:%s511] %v534
                %v536 = vld [vmem:[%s520 + $0x38] sm:%s511]
                %537 = vst [vmem:[%s521 + $0x38] sm:%s511] %v536
                %v538 = vld [vmem:[%s520 + $0x40] sm:%s511]
                %539 = vst [vmem:[%s521 + $0x40] sm:%s511] %v538
                %v540 = vld [vmem:[%s520 + $0x48] sm:%s511]
                %541 = vst [vmem:[%s521 + $0x48] sm:%s511] %v540
                %v542 = vld [vmem:[%s520 + $0x50] sm:%s511]
                %543 = vst [vmem:[%s521 + $0x50] sm:%s511] %v542
                %v544 = vld [vmem:[%s520 + $0x58] sm:%s511]
                %545 = vst [vmem:[%s521 + $0x58] sm:%s511] %v544
                %v546 = vld [vmem:[%s520 + $0x60] sm:%s511]
                %547 = vst [vmem:[%s521 + $0x60] sm:%s511] %v546
                %v548 = vld [vmem:[%s520 + $0x68] sm:%s511]
                %549 = vst [vmem:[%s521 + $0x68] sm:%s511] %v548
                %v550 = vld [vmem:[%s520 + $0x70] sm:%s511]
                %551 = vst [vmem:[%s521 + $0x70] sm:%s511] %v550
                %v552 = vld [vmem:[%s520 + $0x78] sm:%s511]
                %553 = vst [vmem:[%s521 + $0x78] sm:%s511] %v552
                %v554 = vld [vmem:[%s520 + $0x80] sm:%s511]
                %555 = vst [vmem:[%s521 + $0x80] sm:%s511] %v554
                %v556 = vld [vmem:[%s520 + $0x88] sm:%s511]
                %557 = vst [vmem:[%s521 + $0x88] sm:%s511] %v556
                %v558 = vld [vmem:[%s520 + $0x90] sm:%s511]
                %559 = vst [vmem:[%s521 + $0x90] sm:%s511] %v558
                %v560 = vld [vmem:[%s520 + $0x98] sm:%s511]
                %561 = vst [vmem:[%s521 + $0x98] sm:%s511] %v560
                %v562 = vld [vmem:[%s520 + $0xa0] sm:%s511]
                %563 = vst [vmem:[%s521 + $0xa0] sm:%s511] %v562
                %v564 = vld [vmem:[%s520 + $0xa8] sm:%s511]
                %565 = vst [vmem:[%s521 + $0xa8] sm:%s511] %v564
                %v566 = vld [vmem:[%s520 + $0xb0] sm:%s511]
                %567 = vst [vmem:[%s521 + $0xb0] sm:%s511] %v566
                %v568 = vld [vmem:[%s520 + $0xb8] sm:%s511]
                %569 = vst [vmem:[%s521 + $0xb8] sm:%s511] %v568
                %v570 = vld [vmem:[%s520 + $0xc0] sm:%s511]
                %571 = vst [vmem:[%s521 + $0xc0] sm:%s511] %v570
                %v572 = vld [vmem:[%s520 + $0xc8] sm:%s511]
                %573 = vst [vmem:[%s521 + $0xc8] sm:%s511] %v572
                %v574 = vld [vmem:[%s520 + $0xd0] sm:%s511]
                %575 = vst [vmem:[%s521 + $0xd0] sm:%s511] %v574
                %v576 = vld [vmem:[%s520 + $0xd8] sm:%s511]
                %577 = vst [vmem:[%s521 + $0xd8] sm:%s511] %v576
                %v578 = vld [vmem:[%s520 + $0xe0] sm:%s511]
                %579 = vst [vmem:[%s521 + $0xe0] sm:%s511] %v578
                %v580 = vld [vmem:[%s520 + $0xe8] sm:%s511]
                %581 = vst [vmem:[%s521 + $0xe8] sm:%s511] %v580
                %v582 = vld [vmem:[%s520 + $0xf0] sm:%s511]
                %583 = vst [vmem:[%s521 + $0xf0] sm:%s511] %v582
                %v584 = vld [vmem:[%s520 + $0xf8] sm:%s511]
                %585 = vst [vmem:[%s521 + $0xf8] sm:%s511] %v584
                %s586 = sadd.s32 1, %s519
                %p587 = scmp.ge.s32.totalorder %s586, %s512
                %s588 = scalar_select %p587, 0, %s586
                %s589 = smul.u32 %s588, 256
                %s590 = smul.u32 %s588, 256
                %s591 = scalar_lea.vmem %s491, %s589 [#allocation2]
                %s592 = scalar_lea.vmem %s502, %s590
              $region53: #{_lambda_.19} parent=47 // loop_footer
                %s516 = sadd.s32 %s514, 1
              $region54: #{_lambda_.19} parent=47 // loop_footer_branch
                %513 = sbr.rel target = $region50
              $region55: #{_lambda_.19} parent=47 // loop_exit
                _
              %s593 = sshrl.u32 %s498, 5
              %s594 = sand.u32 %s498, 31
              %s595 = smul.u32 %s593, 32
              %s596 = smul.u32 8, %s595
              %s597 = scalar_lea.vmem %s491, %s596 [#allocation2]
              %s598 = smul.u32 8, %s595
              %s599 = scalar_lea.vmem %s502, %s598
              // While loop
              $region56: #{_lambda_.19} parent=47 // loop_pre_header
                _
              $region57: #{_lambda_.19} parent=47 // loop_header
                %s601 = sphi 0, %s603
                %p602 = scmp.ge.s32.totalorder %s601, %s594
                %s606 = sphi 0, %s613
                %s607 = sphi %s597, %s616
                %s608 = sphi %s599, %s617
              $region58: #{_lambda_.19} parent=47 // loop_header_branch
                %605 = sbr.rel (%p602) target = $region62
              $region59: #{_lambda_.19} parent=47 // loop_body
                %v609 = vld [vmem:[%s607] sm:%s511]
                %610 = vst [vmem:[%s608] sm:%s511] %v609
                %s611 = sadd.s32 1, %s606
                %p612 = scmp.ge.s32.totalorder %s611, %s594
                %s613 = scalar_select %p612, 0, %s611
                %s614 = smul.u32 %s613, 8
                %s615 = smul.u32 %s613, 8
                %s616 = scalar_lea.vmem %s597, %s614 [#allocation2]
                %s617 = scalar_lea.vmem %s599, %s615
              $region60: #{_lambda_.19} parent=47 // loop_footer
                %s603 = sadd.s32 %s601, 1
              $region61: #{_lambda_.19} parent=47 // loop_footer_branch
                %600 = sbr.rel target = $region57
              $region62: #{_lambda_.19} parent=47 // loop_exit
                _
            $region48: #{_lambda_.19} parent=39 // pred_fallthru
              _
          $region40: #{_lambda_.19} parent=35 // pred_fallthru
            _
          %728 = vnop
        $region36: #{_lambda_.19} parent=31 // pred_fallthru
          _
      $region32: #{_lambda_.19} parent=5 // pred_fallthru
        _
      %p729 = scmp.le.s32.totalorder 2, %s9
      // Predicated region
      $region85: #{_lambda_.19} parent=5 // pred_check
        %p730 = pneg %p729
      $region86: #{_lambda_.19} parent=5 // pred_check_branch
        %732 = sbr.rel (%p730) target = $region88
      $region87: #{_lambda_.19} parent=5 // pred_region
        %s733 = ssub.s32 %s9, 2
        // Predicated region
        $region89: #{_lambda_.19} parent=87 // pred_check
          %p734 = pneg %p106
        $region90: #{_lambda_.19} parent=87 // pred_check_branch
          %736 = sbr.rel (%p734) target = $region92
        $region91: #{_lambda_.19} parent=87 // pred_region
          %s737 = sand.u32 %s91, 1
          %s738 = sand.u32 %s91, 1
          %s739 = smul.addr %s738, 256
          %s740 = scalar_lea.vmem [#allocation2], %s739
        $region92: #{_lambda_.19} parent=87 // pred_fallthru
          _
      $region88: #{_lambda_.19} parent=5 // pred_fallthru
        _
    $region6: #{_lambda_.19} parent=1 // loop_footer
      %s13 = sadd.s32 1, %s9
    $region7: #{_lambda_.19} parent=1 // loop_footer_branch
      %8 = sbr.rel target = $region3
    $region8: #{_lambda_.19} parent=1 // loop_exit
      _

// kernel: _lambda_.21
$region0: #{_lambda_.21}
  #allocation0 [shape = 'u32[]', space=smem, size = 0x4, offset = 0x4, fixed_abs, tag = 'smem constant byte address 0x4 - core index']
  #allocation1 [shape = 'u32[72,128]{1,0:T(1,128)}', space=vmem, size = 0x9000, scoped, tag = 'internal scratch']
  %s0 = inlined_call_operand.vmem [shape: bf16[640,3], index: 0, kind: input, shape index: {}]
  %s1 = inlined_call_operand.vmem [shape: bf16[3,4], index: 1, kind: input, shape index: {}]
  %s2 = inlined_call_operand.vmem [shape: f32[1,4], index: 2, kind: input, shape index: {}]
  %s3 = inlined_call_operand.vmem [shape: f32[640,4], index: 3, kind: output, shape index: {}]
  %s4 = sld [smem:[#allocation0]]
  $region93: #{_lambda_.21} parent=0
    _
  %s6 = ssub.s32 1, %s4
  %s7 = scalar_select 0, %s6, %s4
  $region1: #{_lambda_.21} parent=0
    #allocation2 [shape = 'u8[262144]{0}', space=vmem, size = 0x40000, scoped, tag = 'output window, operand 0']
    loop: start=0, step=1, limit=5
    $region2: #{_lambda_.21} parent=1 // loop_pre_header
      _
    $region3: #{_lambda_.21} parent=1 // loop_header
      %s9 = sphi 0, %s13
      %p10 = scmp.ge.s32.totalorder %s9, 5
      %s19 = sphi 0, %s21
      %s22 = sphi 0, %s19
      %s23 = sphi 0, %s22
      %s39 = sphi 0, %s23
      %s43 = sphi 0, %s43
      %s45 = sphi 0, %s43
      %s46 = sphi 0, %s45
      %s60 = sphi 0, %s46
      %s64 = sphi 0, %s64
      %s66 = sphi 0, %s64
      %s67 = sphi 0, %s66
      %s81 = sphi 0, %s67
      %s87 = sphi 0, %s89
      %s90 = sphi 0, %s87
      %s91 = sphi 0, %s90
      %s107 = sphi 0, %s91
    $region4: #{_lambda_.21} parent=1 // loop_header_branch
      %12 = sbr.rel (%p10) target = $region8
    $region5: #{_lambda_.21} parent=1 // loop_body
      %s14 = ssub.s32 %s9, 1
      %s15 = ssub.s32 %s9, 2
      %s16 = sadd.s32 %s9, 1
      %s17 = ssub.s32 %s9, %s16
      %p18 = scmp.eq.s32.totalorder %s17, 0
      %s20 = sadd.s32 %s19, 1
      %s21 = scalar_select %p18, %s19, %s20
      %p24 = pneg %p18
      %p25 = scmp.eq.s32.totalorder %s9, 2
      %p26 = por %p24, %p25
      %p27 = scmp.ne.s32.totalorder %s19, %s22
      %p28 = scmp.eq.s32.totalorder %s9, 0
      %p29 = por %p27, %p28
      %p30 = scmp.ne.s32.totalorder %s19, %s22
      %p31 = scmp.eq.s32.totalorder %s14, 2
      %p32 = por %p30, %p31
      %p33 = scmp.ne.s32.totalorder %s22, %s23
      %p34 = scmp.eq.s32.totalorder %s14, 0
      %p35 = por %p33, %p34
      %p36 = scmp.ne.s32.totalorder %s22, %s23
      %p37 = scmp.eq.s32.totalorder %s15, 2
      %p38 = por %p36, %p37
      %p40 = scmp.ne.s32.totalorder %s23, %s39
      %p41 = scmp.eq.s32.totalorder %s15, 0
      %p42 = por %p40, %p41
      %s44 = sadd.s32 %s43, 1
      %p47 = scmp.eq.s32.totalorder %s9, 2
      %p48 = scmp.ne.s32.totalorder %s43, %s45
      %p49 = scmp.eq.s32.totalorder %s9, 0
      %p50 = por %p48, %p49
      %p51 = scmp.ne.s32.totalorder %s43, %s45
      %p52 = scmp.eq.s32.totalorder %s14, 2
      %p53 = por %p51, %p52
      %p54 = scmp.ne.s32.totalorder %s45, %s46
      %p55 = scmp.eq.s32.totalorder %s14, 0
      %p56 = por %p54, %p55
      %p57 = scmp.ne.s32.totalorder %s45, %s46
      %p58 = scmp.eq.s32.totalorder %s15, 2
      %p59 = por %p57, %p58
      %p61 = scmp.ne.s32.totalorder %s46, %s60
      %p62 = scmp.eq.s32.totalorder %s15, 0
      %p63 = por %p61, %p62
      %s65 = sadd.s32 %s64, 1
      %p68 = scmp.eq.s32.totalorder %s9, 2
      %p69 = scmp.ne.s32.totalorder %s64, %s66
      %p70 = scmp.eq.s32.totalorder %s9, 0
      %p71 = por %p69, %p70
      %p72 = scmp.ne.s32.totalorder %s64, %s66
      %p73 = scmp.eq.s32.totalorder %s14, 2
      %p74 = por %p72, %p73
      %p75 = scmp.ne.s32.totalorder %s66, %s67
      %p76 = scmp.eq.s32.totalorder %s14, 0
      %p77 = por %p75, %p76
      %p78 = scmp.ne.s32.totalorder %s66, %s67
      %p79 = scmp.eq.s32.totalorder %s15, 2
      %p80 = por %p78, %p79
      %p82 = scmp.ne.s32.totalorder %s67, %s81
      %p83 = scmp.eq.s32.totalorder %s15, 0
      %p84 = por %p82, %p83
      %s85 = ssub.s32 %s9, %s16
      %p86 = scmp.eq.s32.totalorder %s85, 0
      %s88 = sadd.s32 %s87, 1
      %s89 = scalar_select %p86, %s87, %s88
      %p92 = pneg %p86
      %p93 = scmp.eq.s32.totalorder %s9, 2
      %p94 = por %p92, %p93
      %p95 = scmp.ne.s32.totalorder %s87, %s90
      %p96 = scmp.eq.s32.totalorder %s9, 0
      %p97 = por %p95, %p96
      %p98 = scmp.ne.s32.totalorder %s87, %s90
      %p99 = scmp.eq.s32.totalorder %s14, 2
      %p100 = por %p98, %p99
      %p101 = scmp.ne.s32.totalorder %s90, %s91
      %p102 = scmp.eq.s32.totalorder %s14, 0
      %p103 = por %p101, %p102
      %p104 = scmp.ne.s32.totalorder %s90, %s91
      %p105 = scmp.eq.s32.totalorder %s15, 2
      %p106 = por %p104, %p105
      %p108 = scmp.ne.s32.totalorder %s91, %s107
      %p109 = scmp.eq.s32.totalorder %s15, 0
      %p110 = por %p108, %p109
      %p111 = scmp.le.s32.totalorder 1, %s9
      %p112 = scmp.lt.s32.totalorder %s9, 4
      %p113 = pnand %p111, %p112
      %p114 = pneg %p113
      // Predicated region
      $region9: #{_lambda_.21} parent=5 // pred_check
        _
      $region10: #{_lambda_.21} parent=5 // pred_check_branch
        %116 = sbr.rel (%p113) target = $region12
      $region11: #{_lambda_.21} parent=5 // pred_region
        %s117 = ssub.s32 %s9, 1
        // Predicated region
        $region13: #{_lambda_.21} parent=11 // pred_check
          %p118 = pneg %p56
        $region14: #{_lambda_.21} parent=11 // pred_check_branch
          %120 = sbr.rel (%p118) target = $region16
        $region15: #{_lambda_.21} parent=11 // pred_region
          _
        $region16: #{_lambda_.21} parent=11 // pred_fallthru
          _
        // Predicated region
        $region17: #{_lambda_.21} parent=11 // pred_check
          %p121 = pneg %p77
        $region18: #{_lambda_.21} parent=11 // pred_check_branch
          %123 = sbr.rel (%p121) target = $region20
        $region19: #{_lambda_.21} parent=11 // pred_region
          _
        $region20: #{_lambda_.21} parent=11 // pred_fallthru
          _
      $region12: #{_lambda_.21} parent=5 // pred_fallthru
        _
      %p124 = scmp.lt.s32.totalorder %s9, 3
      // Predicated region
      $region21: #{_lambda_.21} parent=5 // pred_check
        %p125 = pneg %p124
      $region22: #{_lambda_.21} parent=5 // pred_check_branch
        %127 = sbr.rel (%p125) target = $region24
      $region23: #{_lambda_.21} parent=5 // pred_region
        // Predicated region
        $region25: #{_lambda_.21} parent=23 // pred_check
          %p128 = pneg %p29
        $region26: #{_lambda_.21} parent=23 // pred_check_branch
          %130 = sbr.rel (%p128) target = $region28
        $region27: #{_lambda_.21} parent=23 // pred_region
          %s131 = smul.u32 32, %s9
          %s132 = ssub.s32 80, %s131
          %p133 = scmp.lt.s32.totalorder %s132, 32
          %s134 = scalar_select %p133, %s132, 32
          %s135 = smul.u32 4, %s134
          %p136 = scmp.lt.s32.totalorder %s131, 79
          %s137 = scalar_select %p136, %s131, 79
          %s138 = smul.addr %s137, 4
          %s139 = scalar_lea.vmem %s0, %s138
          %s140 = smul.u32 32, %s9
          %s141 = ssub.s32 80, %s140
          %p142 = scmp.lt.s32.totalorder %s141, 32
          %s143 = scalar_select %p142, %s141, 32
          %s144 = smul.u32 4, %s143
        $region28: #{_lambda_.21} parent=23 // pred_fallthru
          _
      $region24: #{_lambda_.21} parent=5 // pred_fallthru
        _
      %p145 = scmp.le.s32.totalorder 1, %s9
      %p146 = scmp.lt.s32.totalorder %s9, 4
      %p147 = pnand %p145, %p146
      %p148 = pneg %p147
      // Predicated region
      $region29: #{_lambda_.21} parent=5 // pred_check
        _
      $region30: #{_lambda_.21} parent=5 // pred_check_branch
        %150 = sbr.rel (%p147) target = $region32
      $region31: #{_lambda_.21} parent=5 // pred_region
        %s151 = ssub.s32 %s9, 1
        %s152 = smul.u32 32, %s14
        %s153 = ssub.s32 80, %s152
        %p154 = scmp.lt.s32.totalorder %s153, 32
        %s155 = scalar_select %p154, %s153, 32
        %s156 = smul.u32 4, %s155
        %p157 = scmp.lt.s32.totalorder %s152, 79
        %s158 = scalar_select %p157, %s152, 79
        %s159 = smul.addr %s158, 4
        %s160 = scalar_lea.vmem %s0, %s159
        %p161 = pneg %p35
        %p162 = pneg %p32
        %p163 = pneg %p56
        %p164 = pneg %p53
        %p165 = pneg %p77
        %p166 = pneg %p74
        %p167 = pneg %p103
        %p168 = pneg %p100
        %s169 = sand.u32 %s90, 1
        %s170 = sand.u32 %s90, 1
        %s171 = smul.addr %s170, 256
        %s172 = scalar_lea.vmem [#allocation2], %s171
        %s173 = smul.u32 32, %s14
        %s174 = ssub.s32 80, %s173
        %p175 = scmp.lt.s32.totalorder %s174, 32
        %s176 = scalar_select %p175, %s174, 32
        %s177 = smul.u32 4, %s176
        %p178 = scmp.lt.s32.totalorder %s173, 79
        %s179 = scalar_select %p178, %s173, 79
        %s180 = smul.addr %s179, 4
        %s181 = scalar_lea.vmem %s0, %s180
        %s182 = smul.u32 32, %s14
        %s183 = ssub.s32 80, %s182
        %p184 = scmp.lt.s32.totalorder %s183, 32
        %s185 = scalar_select %p184, %s183, 32
        %s186 = smul.u32 4, %s185
        %s187 = smul.u32 32, %s14
        %s188 = ssub.s32 80, %s187
        %p189 = scmp.lt.s32.totalorder %s188, 32
        %s190 = scalar_select %p189, %s188, 32
        %s191 = smul.u32 8, %s190
        %v193 = vld [vmem:[%s181] sm:$0xf]
        %v194 = vld [vmem:[%s181 + $0x4] sm:$0xf]
        %v195 = vld [vmem:[%s181 + $0x8] sm:$0xf]
        %v196 = vld [vmem:[%s181 + $0xc] sm:$0xf]
        %v197 = vld [vmem:[%s181 + $0x10] sm:$0xf]
        %v198 = vld [vmem:[%s181 + $0x14] sm:$0xf]
        %v199 = vld [vmem:[%s181 + $0x18] sm:$0xf]
        %v200 = vld [vmem:[%s181 + $0x1c] sm:$0xf]
        %v201 = vld [vmem:[%s181 + $0x20] sm:$0xf]
        %v202 = vld [vmem:[%s181 + $0x24] sm:$0xf]
        %v203 = vld [vmem:[%s181 + $0x28] sm:$0xf]
        %v204 = vld [vmem:[%s181 + $0x2c] sm:$0xf]
        %v205 = vld [vmem:[%s181 + $0x30] sm:$0xf]
        %v206 = vld [vmem:[%s181 + $0x34] sm:$0xf]
        %v207 = vld [vmem:[%s181 + $0x38] sm:$0xf]
        %v208 = vld [vmem:[%s181 + $0x3c] sm:$0xf]
        %v209 = vld [vmem:[%s181 + $0x40] sm:$0xf]
        %v210 = vld [vmem:[%s181 + $0x44] sm:$0xf]
        %v211 = vld [vmem:[%s181 + $0x48] sm:$0xf]
        %v212 = vld [vmem:[%s181 + $0x4c] sm:$0xf]
        %v213 = vld [vmem:[%s181 + $0x50] sm:$0xf]
        %v214 = vld [vmem:[%s181 + $0x54] sm:$0xf]
        %v215 = vld [vmem:[%s181 + $0x58] sm:$0xf]
        %v216 = vld [vmem:[%s181 + $0x5c] sm:$0xf]
        %v217 = vld [vmem:[%s181 + $0x60] sm:$0xf]
        %v218 = vld [vmem:[%s181 + $0x64] sm:$0xf]
        %v219 = vld [vmem:[%s181 + $0x68] sm:$0xf]
        %v220 = vld [vmem:[%s181 + $0x6c] sm:$0xf]
        %v221 = vld [vmem:[%s181 + $0x70] sm:$0xf]
        %v222 = vld [vmem:[%s181 + $0x74] sm:$0xf]
        %v223 = vld [vmem:[%s181 + $0x78] sm:$0xf]
        %v224 = vld [vmem:[%s181 + $0x7c] sm:$0xf]
        %v225 = vld [vmem:[%s1] sm:$0x3]
        %v226 = vld [vmem:[%s2] sm:$0x1]
        %v228 = vperm.slane %v226, 0
        %v262 = vunpack.c.l.b16 %v193
        %v263 = vunpack.c.l.b16 %v194
        %v264 = vunpack.c.l.b16 %v195
        %v265 = vunpack.c.l.b16 %v196
        %v266 = vunpack.c.l.b16 %v197
        %v267 = vunpack.c.l.b16 %v198
        %v268 = vunpack.c.l.b16 %v199
        %v269 = vunpack.c.l.b16 %v200
        %v270 = vunpack.c.l.b16 %v201
        %v271 = vunpack.c.l.b16 %v202
        %v272 = vunpack.c.l.b16 %v203
        %v273 = vunpack.c.l.b16 %v204
        %v274 = vunpack.c.l.b16 %v205
        %v275 = vunpack.c.l.b16 %v206
        %v276 = vunpack.c.l.b16 %v207
        %v277 = vunpack.c.l.b16 %v208
        %v278 = vunpack.c.l.b16 %v209
        %v279 = vunpack.c.l.b16 %v210
        %v280 = vunpack.c.l.b16 %v211
        %v281 = vunpack.c.l.b16 %v212
        %v282 = vunpack.c.l.b16 %v213
        %v283 = vunpack.c.l.b16 %v214
        %v284 = vunpack.c.l.b16 %v215
        %v285 = vunpack.c.l.b16 %v216
        %v286 = vunpack.c.l.b16 %v217
        %v287 = vunpack.c.l.b16 %v218
        %v288 = vunpack.c.l.b16 %v219
        %v289 = vunpack.c.l.b16 %v220
        %v290 = vunpack.c.l.b16 %v221
        %v291 = vunpack.c.l.b16 %v222
        %v292 = vunpack.c.l.b16 %v223
        %v293 = vunpack.c.l.b16 %v224
        %v294 = vpack.c.b16 %v263, %v262
        %v295 = vpack.c.b16 %v265, %v264
        %v296 = vpack.c.b16 %v267, %v266
        %v297 = vpack.c.b16 %v269, %v268
        %v298 = vpack.c.b16 %v271, %v270
        %v299 = vpack.c.b16 %v273, %v272
        %v300 = vpack.c.b16 %v275, %v274
        %v301 = vpack.c.b16 %v277, %v276
        %v302 = vpack.c.b16 %v279, %v278
        %v303 = vpack.c.b16 %v281, %v280
        %v304 = vpack.c.b16 %v283, %v282
        %v305 = vpack.c.b16 %v285, %v284
        %v306 = vpack.c.b16 %v287, %v286
        %v307 = vpack.c.b16 %v289, %v288
        %v308 = vpack.c.b16 %v291, %v290
        %v309 = vpack.c.b16 %v293, %v292
        %vm310 = vcmask 23552
        %v312 = vsel %vm310, %v294, 0
        %v315 = vsel %vm310, %v295, 0
        %v318 = vsel %vm310, %v296, 0
        %v321 = vsel %vm310, %v297, 0
        %v324 = vsel %vm310, %v298, 0
        %v327 = vsel %vm310, %v299, 0
        %v330 = vsel %vm310, %v300, 0
        %v333 = vsel %vm310, %v301, 0
        %v336 = vsel %vm310, %v302, 0
        %v339 = vsel %vm310, %v303, 0
        %v342 = vsel %vm310, %v304, 0
        %v345 = vsel %vm310, %v305, 0
        %v348 = vsel %vm310, %v306, 0
        %v351 = vsel %vm310, %v307, 0
        %v354 = vsel %vm310, %v308, 0
        %v357 = vsel %vm310, %v309, 0
        %vm359 = vcmask 1040384
        %vm360 = vcmask 1041408
        %v361 = vsel %vm359, 4294967295, 65535
        %v362 = vsel %vm360, %v361, 0
        %v364 = vand.u32 %v225, %v362
        %366 = vmatpush.bf16.msra.mxu0 0
        %367 = vmatpush.bf16.msra.mxu0 0
        %368 = vmatpush.bf16.msra.mxu0 0
        %369 = vmatpush.bf16.msra.mxu0 0
        %370 = vmatpush.bf16.msra.mxu0 0
        %371 = vmatpush.bf16.msra.mxu0 0
        %372 = vmatpush.bf16.msra.mxu0 0
        %373 = vmatpush.bf16.msra.mxu0 %v364
        %374 = vmatmul.bf16.gmra.mxu0 %v312
        %v375 = vpop.f32.mrf.mxu0
        %v376 = vadd.f32 %v228, %v375
        %v377 = vpop.f32.mrf.mxu0
        %v378 = vadd.f32 %v228, %v377
        %379 = vmatmul.bf16.gmra.mxu0 %v315
        %v380 = vpop.f32.mrf.mxu0
        %v381 = vadd.f32 %v228, %v380
        %v382 = vpop.f32.mrf.mxu0
        %v383 = vadd.f32 %v228, %v382
        %384 = vmatmul.bf16.gmra.mxu0 %v318
        %v385 = vpop.f32.mrf.mxu0
        %v386 = vadd.f32 %v228, %v385
        %v387 = vpop.f32.mrf.mxu0
        %v388 = vadd.f32 %v228, %v387
        %389 = vmatmul.bf16.gmra.mxu0 %v321
        %v390 = vpop.f32.mrf.mxu0
        %v391 = vadd.f32 %v228, %v390
        %v392 = vpop.f32.mrf.mxu0
        %v393 = vadd.f32 %v228, %v392
        %394 = vmatmul.bf16.gmra.mxu0 %v324
        %v395 = vpop.f32.mrf.mxu0
        %v396 = vadd.f32 %v228, %v395
        %v397 = vpop.f32.mrf.mxu0
        %v398 = vadd.f32 %v228, %v397
        %399 = vmatmul.bf16.gmra.mxu0 %v327
        %v400 = vpop.f32.mrf.mxu0
        %v401 = vadd.f32 %v228, %v400
        %v402 = vpop.f32.mrf.mxu0
        %v403 = vadd.f32 %v228, %v402
        %404 = vmatmul.bf16.gmra.mxu0 %v330
        %v405 = vpop.f32.mrf.mxu0
        %v406 = vadd.f32 %v228, %v405
        %v407 = vpop.f32.mrf.mxu0
        %v408 = vadd.f32 %v228, %v407
        %409 = vmatmul.bf16.gmra.mxu0 %v333
        %v410 = vpop.f32.mrf.mxu0
        %v411 = vadd.f32 %v228, %v410
        %v412 = vpop.f32.mrf.mxu0
        %v413 = vadd.f32 %v228, %v412
        %414 = vmatmul.bf16.gmra.mxu0 %v336
        %v415 = vpop.f32.mrf.mxu0
        %v416 = vadd.f32 %v228, %v415
        %v417 = vpop.f32.mrf.mxu0
        %v418 = vadd.f32 %v228, %v417
        %419 = vmatmul.bf16.gmra.mxu0 %v339
        %v420 = vpop.f32.mrf.mxu0
        %v421 = vadd.f32 %v228, %v420
        %v422 = vpop.f32.mrf.mxu0
        %v423 = vadd.f32 %v228, %v422
        %424 = vmatmul.bf16.gmra.mxu0 %v342
        %v425 = vpop.f32.mrf.mxu0
        %v426 = vadd.f32 %v228, %v425
        %v427 = vpop.f32.mrf.mxu0
        %v428 = vadd.f32 %v228, %v427
        %429 = vmatmul.bf16.gmra.mxu0 %v345
        %v430 = vpop.f32.mrf.mxu0
        %v431 = vadd.f32 %v228, %v430
        %v432 = vpop.f32.mrf.mxu0
        %v433 = vadd.f32 %v228, %v432
        %434 = vmatmul.bf16.gmra.mxu0 %v348
        %v435 = vpop.f32.mrf.mxu0
        %v436 = vadd.f32 %v228, %v435
        %v437 = vpop.f32.mrf.mxu0
        %v438 = vadd.f32 %v228, %v437
        %439 = vmatmul.bf16.gmra.mxu0 %v351
        %v440 = vpop.f32.mrf.mxu0
        %v441 = vadd.f32 %v228, %v440
        %v442 = vpop.f32.mrf.mxu0
        %v443 = vadd.f32 %v228, %v442
        %444 = vmatmul.bf16.gmra.mxu0 %v354
        %v445 = vpop.f32.mrf.mxu0
        %v446 = vadd.f32 %v228, %v445
        %v447 = vpop.f32.mrf.mxu0
        %v448 = vadd.f32 %v228, %v447
        %449 = vmatmul.bf16.gmra.mxu0 %v357
        %v450 = vpop.f32.mrf.mxu0
        %v451 = vadd.f32 %v228, %v450
        %v452 = vpop.f32.mrf.mxu0
        %v453 = vadd.f32 %v228, %v452
        %454 = vdwg.mxu0
        %vm455 = vcmask 31744
        %456 = vst.msk [vmem:[%s172] sm:$0xff] %vm455, %v376
        %457 = vst.msk [vmem:[%s172 + $0x8] sm:$0xff] %vm455, %v378
        %458 = vst.msk [vmem:[%s172 + $0x10] sm:$0xff] %vm455, %v381
        %459 = vst.msk [vmem:[%s172 + $0x18] sm:$0xff] %vm455, %v383
        %460 = vst.msk [vmem:[%s172 + $0x20] sm:$0xff] %vm455, %v386
        %461 = vst.msk [vmem:[%s172 + $0x28] sm:$0xff] %vm455, %v388
        %462 = vst.msk [vmem:[%s172 + $0x30] sm:$0xff] %vm455, %v391
        %463 = vst.msk [vmem:[%s172 + $0x38] sm:$0xff] %vm455, %v393
        %464 = vst.msk [vmem:[%s172 + $0x40] sm:$0xff] %vm455, %v396
        %465 = vst.msk [vmem:[%s172 + $0x48] sm:$0xff] %vm455, %v398
        %466 = vst.msk [vmem:[%s172 + $0x50] sm:$0xff] %vm455, %v401
        %467 = vst.msk [vmem:[%s172 + $0x58] sm:$0xff] %vm455, %v403
        %468 = vst.msk [vmem:[%s172 + $0x60] sm:$0xff] %vm455, %v406
        %469 = vst.msk [vmem:[%s172 + $0x68] sm:$0xff] %vm455, %v408
        %470 = vst.msk [vmem:[%s172 + $0x70] sm:$0xff] %vm455, %v411
        %471 = vst.msk [vmem:[%s172 + $0x78] sm:$0xff] %vm455, %v413
        %472 = vst.msk [vmem:[%s172 + $0x80] sm:$0xff] %vm455, %v416
        %473 = vst.msk [vmem:[%s172 + $0x88] sm:$0xff] %vm455, %v418
        %474 = vst.msk [vmem:[%s172 + $0x90] sm:$0xff] %vm455, %v421
        %475 = vst.msk [vmem:[%s172 + $0x98] sm:$0xff] %vm455, %v423
        %476 = vst.msk [vmem:[%s172 + $0xa0] sm:$0xff] %vm455, %v426
        %477 = vst.msk [vmem:[%s172 + $0xa8] sm:$0xff] %vm455, %v428
        %478 = vst.msk [vmem:[%s172 + $0xb0] sm:$0xff] %vm455, %v431
        %479 = vst.msk [vmem:[%s172 + $0xb8] sm:$0xff] %vm455, %v433
        %480 = vst.msk [vmem:[%s172 + $0xc0] sm:$0xff] %vm455, %v436
        %481 = vst.msk [vmem:[%s172 + $0xc8] sm:$0xff] %vm455, %v438
        %482 = vst.msk [vmem:[%s172 + $0xd0] sm:$0xff] %vm455, %v441
        %483 = vst.msk [vmem:[%s172 + $0xd8] sm:$0xff] %vm455, %v443
        %484 = vst.msk [vmem:[%s172 + $0xe0] sm:$0xff] %vm455, %v446
        %485 = vst.msk [vmem:[%s172 + $0xe8] sm:$0xff] %vm455, %v448
        %486 = vst.msk [vmem:[%s172 + $0xf0] sm:$0xff] %vm455, %v451
        %487 = vst.msk [vmem:[%s172 + $0xf8] sm:$0xff] %vm455, %v453
        %s488 = sand.u32 %s90, 1
        %s489 = sand.u32 %s90, 1
        %s490 = smul.addr %s489, 256
        %s491 = scalar_lea.vmem [#allocation2], %s490
        // Predicated region
        $region33: #{_lambda_.21} parent=31 // pred_check
          %p492 = pneg %p100
        $region34: #{_lambda_.21} parent=31 // pred_check_branch
          %494 = sbr.rel (%p492) target = $region36
        $region35: #{_lambda_.21} parent=31 // pred_region
          %s495 = smul.u32 32, %s14
          %s496 = ssub.s32 80, %s495
          %p497 = scmp.lt.s32.totalorder %s496, 32
          %s498 = scalar_select %p497, %s496, 32
          %s499 = smul.u32 8, %s498
          %p500 = scmp.ne.s32.totalorder 0, %s499
          %s501 = smul.addr %s495, 8
          %s502 = scalar_lea.vmem %s3, %s501
          // Predicated region
          $region37: #{_lambda_.21} parent=35 // pred_check
            %p503 = pneg %p500
          $region38: #{_lambda_.21} parent=35 // pred_check_branch
            %505 = sbr.rel (%p503) target = $region40
          $region39: #{_lambda_.21} parent=35 // pred_region
            // Predicated region
            $region41: #{_lambda_.21} parent=39 // pred_check
              _
            $region42: #{_lambda_.21} parent=39 // pred_check_branch
              %507 = sbr.rel (0) target = $region44
            $region43: #{_lambda_.21} parent=39 // pred_region
              // Predicated region
              $region63: #{_lambda_.21} parent=43 // pred_check
                _
              $region64: #{_lambda_.21} parent=43 // pred_check_branch
                %619 = sbr.rel (0) target = $region66
              $region65: #{_lambda_.21} parent=43 // pred_region
                %s620 = sshrl.u32 %s498, 5
                // While loop
                $region67: #{_lambda_.21} parent=65 // loop_pre_header
                  _
                $region68: #{_lambda_.21} parent=65 // loop_header
                  %s622 = sphi 0, %s624
                  %p623 = scmp.ge.s32.totalorder %s622, %s620
                  %s627 = sphi 0, %s696
                  %s628 = sphi %s491, %s699
                  %s629 = sphi %s502, %s700
                $region69: #{_lambda_.21} parent=65 // loop_header_branch
                  %626 = sbr.rel (%p623) target = $region73
                $region70: #{_lambda_.21} parent=65 // loop_body
                  %v630 = vld [vmem:[%s628] sm:$0xff]
                  %631 = vst [vmem:[%s629] sm:$0xff] %v630
                  %v632 = vld [vmem:[%s628 + $0x8] sm:$0xff]
                  %633 = vst [vmem:[%s629 + $0x8] sm:$0xff] %v632
                  %v634 = vld [vmem:[%s628 + $0x10] sm:$0xff]
                  %635 = vst [vmem:[%s629 + $0x10] sm:$0xff] %v634
                  %v636 = vld [vmem:[%s628 + $0x18] sm:$0xff]
                  %637 = vst [vmem:[%s629 + $0x18] sm:$0xff] %v636
                  %v638 = vld [vmem:[%s628 + $0x20] sm:$0xff]
                  %639 = vst [vmem:[%s629 + $0x20] sm:$0xff] %v638
                  %v640 = vld [vmem:[%s628 + $0x28] sm:$0xff]
                  %641 = vst [vmem:[%s629 + $0x28] sm:$0xff] %v640
                  %v642 = vld [vmem:[%s628 + $0x30] sm:$0xff]
                  %643 = vst [vmem:[%s629 + $0x30] sm:$0xff] %v642
                  %v644 = vld [vmem:[%s628 + $0x38] sm:$0xff]
                  %645 = vst [vmem:[%s629 + $0x38] sm:$0xff] %v644
                  %v646 = vld [vmem:[%s628 + $0x40] sm:$0xff]
                  %647 = vst [vmem:[%s629 + $0x40] sm:$0xff] %v646
                  %v648 = vld [vmem:[%s628 + $0x48] sm:$0xff]
                  %649 = vst [vmem:[%s629 + $0x48] sm:$0xff] %v648
                  %v650 = vld [vmem:[%s628 + $0x50] sm:$0xff]
                  %651 = vst [vmem:[%s629 + $0x50] sm:$0xff] %v650
                  %v652 = vld [vmem:[%s628 + $0x58] sm:$0xff]
                  %653 = vst [vmem:[%s629 + $0x58] sm:$0xff] %v652
                  %v654 = vld [vmem:[%s628 + $0x60] sm:$0xff]
                  %655 = vst [vmem:[%s629 + $0x60] sm:$0xff] %v654
                  %v656 = vld [vmem:[%s628 + $0x68] sm:$0xff]
                  %657 = vst [vmem:[%s629 + $0x68] sm:$0xff] %v656
                  %v658 = vld [vmem:[%s628 + $0x70] sm:$0xff]
                  %659 = vst [vmem:[%s629 + $0x70] sm:$0xff] %v658
                  %v660 = vld [vmem:[%s628 + $0x78] sm:$0xff]
                  %661 = vst [vmem:[%s629 + $0x78] sm:$0xff] %v660
                  %v662 = vld [vmem:[%s628 + $0x80] sm:$0xff]
                  %663 = vst [vmem:[%s629 + $0x80] sm:$0xff] %v662
                  %v664 = vld [vmem:[%s628 + $0x88] sm:$0xff]
                  %665 = vst [vmem:[%s629 + $0x88] sm:$0xff] %v664
                  %v666 = vld [vmem:[%s628 + $0x90] sm:$0xff]
                  %667 = vst [vmem:[%s629 + $0x90] sm:$0xff] %v666
                  %v668 = vld [vmem:[%s628 + $0x98] sm:$0xff]
                  %669 = vst [vmem:[%s629 + $0x98] sm:$0xff] %v668
                  %v670 = vld [vmem:[%s628 + $0xa0] sm:$0xff]
                  %671 = vst [vmem:[%s629 + $0xa0] sm:$0xff] %v670
                  %v672 = vld [vmem:[%s628 + $0xa8] sm:$0xff]
                  %673 = vst [vmem:[%s629 + $0xa8] sm:$0xff] %v672
                  %v674 = vld [vmem:[%s628 + $0xb0] sm:$0xff]
                  %675 = vst [vmem:[%s629 + $0xb0] sm:$0xff] %v674
                  %v676 = vld [vmem:[%s628 + $0xb8] sm:$0xff]
                  %677 = vst [vmem:[%s629 + $0xb8] sm:$0xff] %v676
                  %v678 = vld [vmem:[%s628 + $0xc0] sm:$0xff]
                  %679 = vst [vmem:[%s629 + $0xc0] sm:$0xff] %v678
                  %v680 = vld [vmem:[%s628 + $0xc8] sm:$0xff]
                  %681 = vst [vmem:[%s629 + $0xc8] sm:$0xff] %v680
                  %v682 = vld [vmem:[%s628 + $0xd0] sm:$0xff]
                  %683 = vst [vmem:[%s629 + $0xd0] sm:$0xff] %v682
                  %v684 = vld [vmem:[%s628 + $0xd8] sm:$0xff]
                  %685 = vst [vmem:[%s629 + $0xd8] sm:$0xff] %v684
                  %v686 = vld [vmem:[%s628 + $0xe0] sm:$0xff]
                  %687 = vst [vmem:[%s629 + $0xe0] sm:$0xff] %v686
                  %v688 = vld [vmem:[%s628 + $0xe8] sm:$0xff]
                  %689 = vst [vmem:[%s629 + $0xe8] sm:$0xff] %v688
                  %v690 = vld [vmem:[%s628 + $0xf0] sm:$0xff]
                  %691 = vst [vmem:[%s629 + $0xf0] sm:$0xff] %v690
                  %v692 = vld [vmem:[%s628 + $0xf8] sm:$0xff]
                  %693 = vst [vmem:[%s629 + $0xf8] sm:$0xff] %v692
                  %s694 = sadd.s32 1, %s627
                  %p695 = scmp.ge.s32.totalorder %s694, %s620
                  %s696 = scalar_select %p695, 0, %s694
                  %s697 = smul.u32 %s696, 256
                  %s698 = smul.u32 %s696, 256
                  %s699 = scalar_lea.vmem %s491, %s697 [#allocation2]
                  %s700 = scalar_lea.vmem %s502, %s698
                $region71: #{_lambda_.21} parent=65 // loop_footer
                  %s624 = sadd.s32 %s622, 1
                $region72: #{_lambda_.21} parent=65 // loop_footer_branch
                  %621 = sbr.rel target = $region68
                $region73: #{_lambda_.21} parent=65 // loop_exit
                  _
                %s701 = sshrl.u32 %s498, 5
                %s702 = sand.u32 %s498, 31
                %s703 = smul.u32 %s701, 32
                %s704 = smul.u32 8, %s703
                %s705 = scalar_lea.vmem %s491, %s704 [#allocation2]
                %s706 = smul.u32 8, %s703
                %s707 = scalar_lea.vmem %s502, %s706
                // While loop
                $region74: #{_lambda_.21} parent=65 // loop_pre_header
                  _
                $region75: #{_lambda_.21} parent=65 // loop_header
                  %s709 = sphi 0, %s711
                  %p710 = scmp.ge.s32.totalorder %s709, %s702
                  %s714 = sphi 0, %s721
                  %s715 = sphi %s705, %s724
                  %s716 = sphi %s707, %s725
                $region76: #{_lambda_.21} parent=65 // loop_header_branch
                  %713 = sbr.rel (%p710) target = $region80
                $region77: #{_lambda_.21} parent=65 // loop_body
                  %v717 = vld [vmem:[%s715] sm:$0xff]
                  %718 = vst [vmem:[%s716] sm:$0xff] %v717
                  %s719 = sadd.s32 1, %s714
                  %p720 = scmp.ge.s32.totalorder %s719, %s702
                  %s721 = scalar_select %p720, 0, %s719
                  %s722 = smul.u32 %s721, 8
                  %s723 = smul.u32 %s721, 8
                  %s724 = scalar_lea.vmem %s705, %s722 [#allocation2]
                  %s725 = scalar_lea.vmem %s707, %s723
                $region78: #{_lambda_.21} parent=65 // loop_footer
                  %s711 = sadd.s32 %s709, 1
                $region79: #{_lambda_.21} parent=65 // loop_footer_branch
                  %708 = sbr.rel target = $region75
                $region80: #{_lambda_.21} parent=65 // loop_exit
                  _
              $region66: #{_lambda_.21} parent=43 // pred_fallthru
                _
              // Predicated region
              $region81: #{_lambda_.21} parent=43 // pred_check
                _
              $region82: #{_lambda_.21} parent=43 // pred_check_branch
                %727 = sbr.rel target = $region84
              $region83: #{_lambda_.21} parent=43 // pred_region
                _
              $region84: #{_lambda_.21} parent=43 // pred_fallthru
                _
            $region44: #{_lambda_.21} parent=39 // pred_fallthru
              _
            // Predicated region
            $region45: #{_lambda_.21} parent=39 // pred_check
              _
            $region46: #{_lambda_.21} parent=39 // pred_check_branch
              %509 = sbr.rel target = $region48
            $region47: #{_lambda_.21} parent=39 // pred_region
              %s511 = ssub.s32 256, 1
              %s512 = sshrl.u32 %s498, 5
              // While loop
              $region49: #{_lambda_.21} parent=47 // loop_pre_header
                _
              $region50: #{_lambda_.21} parent=47 // loop_header
                %s514 = sphi 0, %s516
                %p515 = scmp.ge.s32.totalorder %s514, %s512
                %s519 = sphi 0, %s588
                %s520 = sphi %s491, %s591
                %s521 = sphi %s502, %s592
              $region51: #{_lambda_.21} parent=47 // loop_header_branch
                %518 = sbr.rel (%p515) target = $region55
              $region52: #{_lambda_.21} parent=47 // loop_body
                %v522 = vld [vmem:[%s520] sm:%s511]
                %523 = vst [vmem:[%s521] sm:%s511] %v522
                %v524 = vld [vmem:[%s520 + $0x8] sm:%s511]
                %525 = vst [vmem:[%s521 + $0x8] sm:%s511] %v524
                %v526 = vld [vmem:[%s520 + $0x10] sm:%s511]
                %527 = vst [vmem:[%s521 + $0x10] sm:%s511] %v526
                %v528 = vld [vmem:[%s520 + $0x18] sm:%s511]
                %529 = vst [vmem:[%s521 + $0x18] sm:%s511] %v528
                %v530 = vld [vmem:[%s520 + $0x20] sm:%s511]
                %531 = vst [vmem:[%s521 + $0x20] sm:%s511] %v530
                %v532 = vld [vmem:[%s520 + $0x28] sm:%s511]
                %533 = vst [vmem:[%s521 + $0x28] sm:%s511] %v532
                %v534 = vld [vmem:[%s520 + $0x30] sm:%s511]
                %535 = vst [vmem:[%s521 + $0x30] sm:%s511] %v534
                %v536 = vld [vmem:[%s520 + $0x38] sm:%s511]
                %537 = vst [vmem:[%s521 + $0x38] sm:%s511] %v536
                %v538 = vld [vmem:[%s520 + $0x40] sm:%s511]
                %539 = vst [vmem:[%s521 + $0x40] sm:%s511] %v538
                %v540 = vld [vmem:[%s520 + $0x48] sm:%s511]
                %541 = vst [vmem:[%s521 + $0x48] sm:%s511] %v540
                %v542 = vld [vmem:[%s520 + $0x50] sm:%s511]
                %543 = vst [vmem:[%s521 + $0x50] sm:%s511] %v542
                %v544 = vld [vmem:[%s520 + $0x58] sm:%s511]
                %545 = vst [vmem:[%s521 + $0x58] sm:%s511] %v544
                %v546 = vld [vmem:[%s520 + $0x60] sm:%s511]
                %547 = vst [vmem:[%s521 + $0x60] sm:%s511] %v546
                %v548 = vld [vmem:[%s520 + $0x68] sm:%s511]
                %549 = vst [vmem:[%s521 + $0x68] sm:%s511] %v548
                %v550 = vld [vmem:[%s520 + $0x70] sm:%s511]
                %551 = vst [vmem:[%s521 + $0x70] sm:%s511] %v550
                %v552 = vld [vmem:[%s520 + $0x78] sm:%s511]
                %553 = vst [vmem:[%s521 + $0x78] sm:%s511] %v552
                %v554 = vld [vmem:[%s520 + $0x80] sm:%s511]
                %555 = vst [vmem:[%s521 + $0x80] sm:%s511] %v554
                %v556 = vld [vmem:[%s520 + $0x88] sm:%s511]
                %557 = vst [vmem:[%s521 + $0x88] sm:%s511] %v556
                %v558 = vld [vmem:[%s520 + $0x90] sm:%s511]
                %559 = vst [vmem:[%s521 + $0x90] sm:%s511] %v558
                %v560 = vld [vmem:[%s520 + $0x98] sm:%s511]
                %561 = vst [vmem:[%s521 + $0x98] sm:%s511] %v560
                %v562 = vld [vmem:[%s520 + $0xa0] sm:%s511]
                %563 = vst [vmem:[%s521 + $0xa0] sm:%s511] %v562
                %v564 = vld [vmem:[%s520 + $0xa8] sm:%s511]
                %565 = vst [vmem:[%s521 + $0xa8] sm:%s511] %v564
                %v566 = vld [vmem:[%s520 + $0xb0] sm:%s511]
                %567 = vst [vmem:[%s521 + $0xb0] sm:%s511] %v566
                %v568 = vld [vmem:[%s520 + $0xb8] sm:%s511]
                %569 = vst [vmem:[%s521 + $0xb8] sm:%s511] %v568
                %v570 = vld [vmem:[%s520 + $0xc0] sm:%s511]
                %571 = vst [vmem:[%s521 + $0xc0] sm:%s511] %v570
                %v572 = vld [vmem:[%s520 + $0xc8] sm:%s511]
                %573 = vst [vmem:[%s521 + $0xc8] sm:%s511] %v572
                %v574 = vld [vmem:[%s520 + $0xd0] sm:%s511]
                %575 = vst [vmem:[%s521 + $0xd0] sm:%s511] %v574
                %v576 = vld [vmem:[%s520 + $0xd8] sm:%s511]
                %577 = vst [vmem:[%s521 + $0xd8] sm:%s511] %v576
                %v578 = vld [vmem:[%s520 + $0xe0] sm:%s511]
                %579 = vst [vmem:[%s521 + $0xe0] sm:%s511] %v578
                %v580 = vld [vmem:[%s520 + $0xe8] sm:%s511]
                %581 = vst [vmem:[%s521 + $0xe8] sm:%s511] %v580
                %v582 = vld [vmem:[%s520 + $0xf0] sm:%s511]
                %583 = vst [vmem:[%s521 + $0xf0] sm:%s511] %v582
                %v584 = vld [vmem:[%s520 + $0xf8] sm:%s511]
                %585 = vst [vmem:[%s521 + $0xf8] sm:%s511] %v584
                %s586 = sadd.s32 1, %s519
                %p587 = scmp.ge.s32.totalorder %s586, %s512
                %s588 = scalar_select %p587, 0, %s586
                %s589 = smul.u32 %s588, 256
                %s590 = smul.u32 %s588, 256
                %s591 = scalar_lea.vmem %s491, %s589 [#allocation2]
                %s592 = scalar_lea.vmem %s502, %s590
              $region53: #{_lambda_.21} parent=47 // loop_footer
                %s516 = sadd.s32 %s514, 1
              $region54: #{_lambda_.21} parent=47 // loop_footer_branch
                %513 = sbr.rel target = $region50
              $region55: #{_lambda_.21} parent=47 // loop_exit
                _
              %s593 = sshrl.u32 %s498, 5
              %s594 = sand.u32 %s498, 31
              %s595 = smul.u32 %s593, 32
              %s596 = smul.u32 8, %s595
              %s597 = scalar_lea.vmem %s491, %s596 [#allocation2]
              %s598 = smul.u32 8, %s595
              %s599 = scalar_lea.vmem %s502, %s598
              // While loop
              $region56: #{_lambda_.21} parent=47 // loop_pre_header
                _
              $region57: #{_lambda_.21} parent=47 // loop_header
                %s601 = sphi 0, %s603
                %p602 = scmp.ge.s32.totalorder %s601, %s594
                %s606 = sphi 0, %s613
                %s607 = sphi %s597, %s616
                %s608 = sphi %s599, %s617
              $region58: #{_lambda_.21} parent=47 // loop_header_branch
                %605 = sbr.rel (%p602) target = $region62
              $region59: #{_lambda_.21} parent=47 // loop_body
                %v609 = vld [vmem:[%s607] sm:%s511]
                %610 = vst [vmem:[%s608] sm:%s511] %v609
                %s611 = sadd.s32 1, %s606
                %p612 = scmp.ge.s32.totalorder %s611, %s594
                %s613 = scalar_select %p612, 0, %s611
                %s614 = smul.u32 %s613, 8
                %s615 = smul.u32 %s613, 8
                %s616 = scalar_lea.vmem %s597, %s614 [#allocation2]
                %s617 = scalar_lea.vmem %s599, %s615
              $region60: #{_lambda_.21} parent=47 // loop_footer
                %s603 = sadd.s32 %s601, 1
              $region61: #{_lambda_.21} parent=47 // loop_footer_branch
                %600 = sbr.rel target = $region57
              $region62: #{_lambda_.21} parent=47 // loop_exit
                _
            $region48: #{_lambda_.21} parent=39 // pred_fallthru
              _
          $region40: #{_lambda_.21} parent=35 // pred_fallthru
            _
          %728 = vnop
        $region36: #{_lambda_.21} parent=31 // pred_fallthru
          _
      $region32: #{_lambda_.21} parent=5 // pred_fallthru
        _
      %p729 = scmp.le.s32.totalorder 2, %s9
      // Predicated region
      $region85: #{_lambda_.21} parent=5 // pred_check
        %p730 = pneg %p729
      $region86: #{_lambda_.21} parent=5 // pred_check_branch
        %732 = sbr.rel (%p730) target = $region88
      $region87: #{_lambda_.21} parent=5 // pred_region
        %s733 = ssub.s32 %s9, 2
        // Predicated region
        $region89: #{_lambda_.21} parent=87 // pred_check
          %p734 = pneg %p106
        $region90: #{_lambda_.21} parent=87 // pred_check_branch
          %736 = sbr.rel (%p734) target = $region92
        $region91: #{_lambda_.21} parent=87 // pred_region
          %s737 = sand.u32 %s91, 1
          %s738 = sand.u32 %s91, 1
          %s739 = smul.addr %s738, 256
          %s740 = scalar_lea.vmem [#allocation2], %s739
        $region92: #{_lambda_.21} parent=87 // pred_fallthru
          _
      $region88: #{_lambda_.21} parent=5 // pred_fallthru
        _
    $region6: #{_lambda_.21} parent=1 // loop_footer
      %s13 = sadd.s32 1, %s9
    $region7: #{_lambda_.21} parent=1 // loop_footer_branch
      %8 = sbr.rel target = $region3
    $region8: #{_lambda_.21} parent=1 // loop_exit
      _

// kernel: _lambda_.22
$region0: #{_lambda_.22}
  #allocation0 [shape = 'u32[]', space=smem, size = 0x4, offset = 0x4, fixed_abs, tag = 'smem constant byte address 0x4 - core index']
  #allocation1 [shape = 'u32[72,128]{1,0:T(1,128)}', space=vmem, size = 0x9000, scoped, tag = 'internal scratch']
  %s0 = inlined_call_operand.vmem [shape: bf16[512,24], index: 0, kind: input, shape index: {}]
  %s1 = inlined_call_operand.vmem [shape: bf16[24,15], index: 1, kind: input, shape index: {}]
  %s2 = inlined_call_operand.vmem [shape: f32[1,15], index: 2, kind: input, shape index: {}]
  %s3 = inlined_call_operand.vmem [shape: f32[512,15], index: 3, kind: output, shape index: {}]
  %s4 = sld [smem:[#allocation0]]
  $region45: #{_lambda_.22} parent=0
    _
  %s6 = ssub.s32 1, %s4
  %s7 = scalar_select 0, %s6, %s4
  loop: start=0, step=1, limit=4
  $region2: #{_lambda_.22} parent=0 // loop_pre_header
    _
  $region3: #{_lambda_.22} parent=0 // loop_header
    %s9 = sphi 0, %s13
    %p10 = scmp.ge.s32.totalorder %s9, 4
    %s19 = sphi 0, %s21
    %s22 = sphi 0, %s19
    %s23 = sphi 0, %s22
    %s39 = sphi 0, %s23
    %s43 = sphi 0, %s43
    %s45 = sphi 0, %s43
    %s46 = sphi 0, %s45
    %s60 = sphi 0, %s46
    %s64 = sphi 0, %s64
    %s66 = sphi 0, %s64
    %s67 = sphi 0, %s66
    %s81 = sphi 0, %s67
    %s87 = sphi 0, %s89
    %s90 = sphi 0, %s87
    %s91 = sphi 0, %s90
    %s107 = sphi 0, %s91
  $region4: #{_lambda_.22} parent=0 // loop_header_branch
    %12 = sbr.rel (%p10) target = $region8
  $region5: #{_lambda_.22} parent=0 // loop_body
    %s14 = ssub.s32 %s9, 1
    %s15 = ssub.s32 %s9, 2
    %s16 = sadd.s32 %s9, 1
    %s17 = ssub.s32 %s9, %s16
    %p18 = scmp.eq.s32.totalorder %s17, 0
    %s20 = sadd.s32 %s19, 1
    %s21 = scalar_select %p18, %s19, %s20
    %p24 = pneg %p18
    %p25 = scmp.eq.s32.totalorder %s9, 1
    %p26 = por %p24, %p25
    %p27 = scmp.ne.s32.totalorder %s19, %s22
    %p28 = scmp.eq.s32.totalorder %s9, 0
    %p29 = por %p27, %p28
    %p30 = scmp.ne.s32.totalorder %s19, %s22
    %p31 = scmp.eq.s32.totalorder %s14, 1
    %p32 = por %p30, %p31
    %p33 = scmp.ne.s32.totalorder %s22, %s23
    %p34 = scmp.eq.s32.totalorder %s14, 0
    %p35 = por %p33, %p34
    %p36 = scmp.ne.s32.totalorder %s22, %s23
    %p37 = scmp.eq.s32.totalorder %s15, 1
    %p38 = por %p36, %p37
    %p40 = scmp.ne.s32.totalorder %s23, %s39
    %p41 = scmp.eq.s32.totalorder %s15, 0
    %p42 = por %p40, %p41
    %s44 = sadd.s32 %s43, 1
    %p47 = scmp.eq.s32.totalorder %s9, 1
    %p48 = scmp.ne.s32.totalorder %s43, %s45
    %p49 = scmp.eq.s32.totalorder %s9, 0
    %p50 = por %p48, %p49
    %p51 = scmp.ne.s32.totalorder %s43, %s45
    %p52 = scmp.eq.s32.totalorder %s14, 1
    %p53 = por %p51, %p52
    %p54 = scmp.ne.s32.totalorder %s45, %s46
    %p55 = scmp.eq.s32.totalorder %s14, 0
    %p56 = por %p54, %p55
    %p57 = scmp.ne.s32.totalorder %s45, %s46
    %p58 = scmp.eq.s32.totalorder %s15, 1
    %p59 = por %p57, %p58
    %p61 = scmp.ne.s32.totalorder %s46, %s60
    %p62 = scmp.eq.s32.totalorder %s15, 0
    %p63 = por %p61, %p62
    %s65 = sadd.s32 %s64, 1
    %p68 = scmp.eq.s32.totalorder %s9, 1
    %p69 = scmp.ne.s32.totalorder %s64, %s66
    %p70 = scmp.eq.s32.totalorder %s9, 0
    %p71 = por %p69, %p70
    %p72 = scmp.ne.s32.totalorder %s64, %s66
    %p73 = scmp.eq.s32.totalorder %s14, 1
    %p74 = por %p72, %p73
    %p75 = scmp.ne.s32.totalorder %s66, %s67
    %p76 = scmp.eq.s32.totalorder %s14, 0
    %p77 = por %p75, %p76
    %p78 = scmp.ne.s32.totalorder %s66, %s67
    %p79 = scmp.eq.s32.totalorder %s15, 1
    %p80 = por %p78, %p79
    %p82 = scmp.ne.s32.totalorder %s67, %s81
    %p83 = scmp.eq.s32.totalorder %s15, 0
    %p84 = por %p82, %p83
    %s85 = ssub.s32 %s9, %s16
    %p86 = scmp.eq.s32.totalorder %s85, 0
    %s88 = sadd.s32 %s87, 1
    %s89 = scalar_select %p86, %s87, %s88
    %p92 = pneg %p86
    %p93 = scmp.eq.s32.totalorder %s9, 1
    %p94 = por %p92, %p93
    %p95 = scmp.ne.s32.totalorder %s87, %s90
    %p96 = scmp.eq.s32.totalorder %s9, 0
    %p97 = por %p95, %p96
    %p98 = scmp.ne.s32.totalorder %s87, %s90
    %p99 = scmp.eq.s32.totalorder %s14, 1
    %p100 = por %p98, %p99
    %p101 = scmp.ne.s32.totalorder %s90, %s91
    %p102 = scmp.eq.s32.totalorder %s14, 0
    %p103 = por %p101, %p102
    %p104 = scmp.ne.s32.totalorder %s90, %s91
    %p105 = scmp.eq.s32.totalorder %s15, 1
    %p106 = por %p104, %p105
    %p108 = scmp.ne.s32.totalorder %s91, %s107
    %p109 = scmp.eq.s32.totalorder %s15, 0
    %p110 = por %p108, %p109
    %p111 = scmp.le.s32.totalorder 1, %s9
    %p112 = scmp.lt.s32.totalorder %s9, 3
    %p113 = pnand %p111, %p112
    %p114 = pneg %p113
    // Predicated region
    $region9: #{_lambda_.22} parent=5 // pred_check
      _
    $region10: #{_lambda_.22} parent=5 // pred_check_branch
      %116 = sbr.rel (%p113) target = $region12
    $region11: #{_lambda_.22} parent=5 // pred_region
      %s117 = ssub.s32 %s9, 1
      // Predicated region
      $region13: #{_lambda_.22} parent=11 // pred_check
        %p118 = pneg %p56
      $region14: #{_lambda_.22} parent=11 // pred_check_branch
        %120 = sbr.rel (%p118) target = $region16
      $region15: #{_lambda_.22} parent=11 // pred_region
        _
      $region16: #{_lambda_.22} parent=11 // pred_fallthru
        _
      // Predicated region
      $region17: #{_lambda_.22} parent=11 // pred_check
        %p121 = pneg %p77
      $region18: #{_lambda_.22} parent=11 // pred_check_branch
        %123 = sbr.rel (%p121) target = $region20
      $region19: #{_lambda_.22} parent=11 // pred_region
        _
      $region20: #{_lambda_.22} parent=11 // pred_fallthru
        _
    $region12: #{_lambda_.22} parent=5 // pred_fallthru
      _
    %p124 = scmp.lt.s32.totalorder %s9, 2
    // Predicated region
    $region21: #{_lambda_.22} parent=5 // pred_check
      %p125 = pneg %p124
    $region22: #{_lambda_.22} parent=5 // pred_check_branch
      %127 = sbr.rel (%p125) target = $region24
    $region23: #{_lambda_.22} parent=5 // pred_region
      // Predicated region
      $region25: #{_lambda_.22} parent=23 // pred_check
        %p128 = pneg %p29
      $region26: #{_lambda_.22} parent=23 // pred_check_branch
        %130 = sbr.rel (%p128) target = $region28
      $region27: #{_lambda_.22} parent=23 // pred_region
        %s131 = smul.u32 32, %s9
        %p132 = scmp.lt.s32.totalorder %s131, 63
        %s133 = scalar_select %p132, %s131, 63
        %s134 = smul.addr %s133, 4
        %s135 = scalar_lea.vmem %s0, %s134
        %s136 = smul.u32 32, %s9
      $region28: #{_lambda_.22} parent=23 // pred_fallthru
        _
    $region24: #{_lambda_.22} parent=5 // pred_fallthru
      _
    %p137 = scmp.le.s32.totalorder 1, %s9
    %p138 = scmp.lt.s32.totalorder %s9, 3
    %p139 = pnand %p137, %p138
    %p140 = pneg %p139
    // Predicated region
    $region29: #{_lambda_.22} parent=5 // pred_check
      _
    $region30: #{_lambda_.22} parent=5 // pred_check_branch
      %142 = sbr.rel (%p139) target = $region32
    $region31: #{_lambda_.22} parent=5 // pred_region
      %s143 = ssub.s32 %s9, 1
      %s144 = smul.u32 32, %s14
      %p145 = scmp.lt.s32.totalorder %s144, 63
      %s146 = scalar_select %p145, %s144, 63
      %s147 = smul.addr %s146, 4
      %s148 = scalar_lea.vmem %s0, %s147
      %p149 = pneg %p35
      %p150 = pneg %p32
      %p151 = pneg %p56
      %p152 = pneg %p53
      %p153 = pneg %p77
      %p154 = pneg %p74
      %p155 = pneg %p103
      %p156 = pneg %p100
      %s157 = smul.u32 32, %s14
      %p158 = scmp.lt.s32.totalorder %s157, 63
      %s159 = scalar_select %p158, %s157, 63
      %s160 = smul.addr %s159, 8
      %s161 = scalar_lea.vmem %s3, %s160
      %s162 = smul.u32 32, %s14
      %p163 = scmp.lt.s32.totalorder %s162, 63
      %s164 = scalar_select %p163, %s162, 63
      %s165 = smul.addr %s164, 4
      %s166 = scalar_lea.vmem %s0, %s165
      %s167 = smul.u32 32, %s14
      %s168 = smul.u32 32, %s14
      %p169 = scmp.lt.s32.totalorder %s168, 63
      %s170 = scalar_select %p169, %s168, 63
      %s171 = smul.addr %s170, 8
      %s172 = scalar_lea.vmem %s3, %s171
      %s173 = smul.u32 32, %s14
      %v175 = vld [vmem:[%s166] sm:$0xf]
      %v176 = vld [vmem:[%s166 + $0x4] sm:$0xf]
      %v177 = vld [vmem:[%s166 + $0x8] sm:$0xf]
      %v178 = vld [vmem:[%s166 + $0xc] sm:$0xf]
      %v179 = vld [vmem:[%s166 + $0x10] sm:$0xf]
      %v180 = vld [vmem:[%s166 + $0x14] sm:$0xf]
      %v181 = vld [vmem:[%s166 + $0x18] sm:$0xf]
      %v182 = vld [vmem:[%s166 + $0x1c] sm:$0xf]
      %v183 = vld [vmem:[%s166 + $0x20] sm:$0xf]
      %v184 = vld [vmem:[%s166 + $0x24] sm:$0xf]
      %v185 = vld [vmem:[%s166 + $0x28] sm:$0xf]
      %v186 = vld [vmem:[%s166 + $0x2c] sm:$0xf]
      %v187 = vld [vmem:[%s166 + $0x30] sm:$0xf]
      %v188 = vld [vmem:[%s166 + $0x34] sm:$0xf]
      %v189 = vld [vmem:[%s166 + $0x38] sm:$0xf]
      %v190 = vld [vmem:[%s166 + $0x3c] sm:$0xf]
      %v191 = vld [vmem:[%s166 + $0x40] sm:$0xf]
      %v192 = vld [vmem:[%s166 + $0x44] sm:$0xf]
      %v193 = vld [vmem:[%s166 + $0x48] sm:$0xf]
      %v194 = vld [vmem:[%s166 + $0x4c] sm:$0xf]
      %v195 = vld [vmem:[%s166 + $0x50] sm:$0xf]
      %v196 = vld [vmem:[%s166 + $0x54] sm:$0xf]
      %v197 = vld [vmem:[%s166 + $0x58] sm:$0xf]
      %v198 = vld [vmem:[%s166 + $0x5c] sm:$0xf]
      %v199 = vld [vmem:[%s166 + $0x60] sm:$0xf]
      %v200 = vld [vmem:[%s166 + $0x64] sm:$0xf]
      %v201 = vld [vmem:[%s166 + $0x68] sm:$0xf]
      %v202 = vld [vmem:[%s166 + $0x6c] sm:$0xf]
      %v203 = vld [vmem:[%s166 + $0x70] sm:$0xf]
      %v204 = vld [vmem:[%s166 + $0x74] sm:$0xf]
      %v205 = vld [vmem:[%s166 + $0x78] sm:$0xf]
      %v206 = vld [vmem:[%s166 + $0x7c] sm:$0xf]
      %v207 = vld [vmem:[%s1] sm:$0xf]
      %v208 = vld [vmem:[%s1 + $0x4] sm:$0xf]
      %v209 = vld [vmem:[%s1 + $0x8] sm:$0xf]
      %v210 = vld [vmem:[%s2] sm:$0x1]
      %v212 = vperm.slane %v210, 0
      %v246 = vunpack.c.l.b16 %v175
      %v247 = vunpack.c.l.b16 %v176
      %v248 = vunpack.c.l.b16 %v177
      %v249 = vunpack.c.l.b16 %v178
      %v250 = vunpack.c.l.b16 %v179
      %v251 = vunpack.c.l.b16 %v180
      %v252 = vunpack.c.l.b16 %v181
      %v253 = vunpack.c.l.b16 %v182
      %v254 = vunpack.c.l.b16 %v183
      %v255 = vunpack.c.l.b16 %v184
      %v256 = vunpack.c.l.b16 %v185
      %v257 = vunpack.c.l.b16 %v186
      %v258 = vunpack.c.l.b16 %v187
      %v259 = vunpack.c.l.b16 %v188
      %v260 = vunpack.c.l.b16 %v189
      %v261 = vunpack.c.l.b16 %v190
      %v262 = vunpack.c.l.b16 %v191
      %v263 = vunpack.c.l.b16 %v192
      %v264 = vunpack.c.l.b16 %v193
      %v265 = vunpack.c.l.b16 %v194
      %v266 = vunpack.c.l.b16 %v195
      %v267 = vunpack.c.l.b16 %v196
      %v268 = vunpack.c.l.b16 %v197
      %v269 = vunpack.c.l.b16 %v198
      %v270 = vunpack.c.l.b16 %v199
      %v271 = vunpack.c.l.b16 %v200
      %v272 = vunpack.c.l.b16 %v201
      %v273 = vunpack.c.l.b16 %v202
      %v274 = vunpack.c.l.b16 %v203
      %v275 = vunpack.c.l.b16 %v204
      %v276 = vunpack.c.l.b16 %v205
      %v277 = vunpack.c.l.b16 %v206
      %v278 = vpack.c.b16 %v247, %v246
      %v279 = vpack.c.b16 %v249, %v248
      %v280 = vpack.c.b16 %v251, %v250
      %v281 = vpack.c.b16 %v253, %v252
      %v282 = vpack.c.b16 %v255, %v254
      %v283 = vpack.c.b16 %v257, %v256
      %v284 = vpack.c.b16 %v259, %v258
      %v285 = vpack.c.b16 %v261, %v260
      %v286 = vpack.c.b16 %v263, %v262
      %v287 = vpack.c.b16 %v265, %v264
      %v288 = vpack.c.b16 %v267, %v266
      %v289 = vpack.c.b16 %v269, %v268
      %v290 = vpack.c.b16 %v271, %v270
      %v291 = vpack.c.b16 %v273, %v272
      %v292 = vpack.c.b16 %v275, %v274
      %v293 = vpack.c.b16 %v277, %v276
      %v297 = vunpack.c.l.b16 %v207
      %v298 = vunpack.c.l.b16 %v208
      %v299 = vunpack.c.l.b16 %v209
      %v300 = vpack.c.b16 %v298, %v297
      %v301 = vpack.c.b16 %v299, %v299
      %vm303 = vcmask 195584
      %v305 = vsel %vm303, %v278, 0
      %v308 = vsel %vm303, %v279, 0
      %v311 = vsel %vm303, %v280, 0
      %v314 = vsel %vm303, %v281, 0
      %v317 = vsel %vm303, %v282, 0
      %v320 = vsel %vm303, %v283, 0
      %v323 = vsel %vm303, %v284, 0
      %v326 = vsel %vm303, %v285, 0
      %v329 = vsel %vm303, %v286, 0
      %v332 = vsel %vm303, %v287, 0
      %v335 = vsel %vm303, %v288, 0
      %v338 = vsel %vm303, %v289, 0
      %v341 = vsel %vm303, %v290, 0
      %v344 = vsel %vm303, %v291, 0
      %v347 = vsel %vm303, %v292, 0
      %v350 = vsel %vm303, %v293, 0
      %vm352 = vcmask 1043456
      %v354 = vsel %vm352, %v301, 0
      %356 = vmatpush.bf16.msra.mxu0 0
      %357 = vmatpush.bf16.msra.mxu0 0
      %358 = vmatpush.bf16.msra.mxu0 0
      %359 = vmatpush.bf16.msra.mxu0 0
      %360 = vmatpush.bf16.msra.mxu0 0
      %361 = vmatpush.bf16.msra.mxu0 0
      %362 = vmatpush.bf16.msra.mxu0 %v354
      %363 = vmatpush.bf16.msra.mxu0 %v300
      %364 = vmatmul.bf16.gmra.mxu0 %v305
      %v365 = vpop.f32.mrf.mxu0
      %v366 = vadd.f32 %v212, %v365
      %v367 = vpop.f32.mrf.mxu0
      %v368 = vadd.f32 %v212, %v367
      %369 = vmatmul.bf16.gmra.mxu0 %v308
      %v370 = vpop.f32.mrf.mxu0
      %v371 = vadd.f32 %v212, %v370
      %v372 = vpop.f32.mrf.mxu0
      %v373 = vadd.f32 %v212, %v372
      %374 = vmatmul.bf16.gmra.mxu0 %v311
      %v375 = vpop.f32.mrf.mxu0
      %v376 = vadd.f32 %v212, %v375
      %v377 = vpop.f32.mrf.mxu0
      %v378 = vadd.f32 %v212, %v377
      %379 = vmatmul.bf16.gmra.mxu0 %v314
      %v380 = vpop.f32.mrf.mxu0
      %v381 = vadd.f32 %v212, %v380
      %v382 = vpop.f32.mrf.mxu0
      %v383 = vadd.f32 %v212, %v382
      %384 = vmatmul.bf16.gmra.mxu0 %v317
      %v385 = vpop.f32.mrf.mxu0
      %v386 = vadd.f32 %v212, %v385
      %v387 = vpop.f32.mrf.mxu0
      %v388 = vadd.f32 %v212, %v387
      %389 = vmatmul.bf16.gmra.mxu0 %v320
      %v390 = vpop.f32.mrf.mxu0
      %v391 = vadd.f32 %v212, %v390
      %v392 = vpop.f32.mrf.mxu0
      %v393 = vadd.f32 %v212, %v392
      %394 = vmatmul.bf16.gmra.mxu0 %v323
      %v395 = vpop.f32.mrf.mxu0
      %v396 = vadd.f32 %v212, %v395
      %v397 = vpop.f32.mrf.mxu0
      %v398 = vadd.f32 %v212, %v397
      %399 = vmatmul.bf16.gmra.mxu0 %v326
      %v400 = vpop.f32.mrf.mxu0
      %v401 = vadd.f32 %v212, %v400
      %v402 = vpop.f32.mrf.mxu0
      %v403 = vadd.f32 %v212, %v402
      %404 = vmatmul.bf16.gmra.mxu0 %v329
      %v405 = vpop.f32.mrf.mxu0
      %v406 = vadd.f32 %v212, %v405
      %v407 = vpop.f32.mrf.mxu0
      %v408 = vadd.f32 %v212, %v407
      %409 = vmatmul.bf16.gmra.mxu0 %v332
      %v410 = vpop.f32.mrf.mxu0
      %v411 = vadd.f32 %v212, %v410
      %v412 = vpop.f32.mrf.mxu0
      %v413 = vadd.f32 %v212, %v412
      %414 = vmatmul.bf16.gmra.mxu0 %v335
      %v415 = vpop.f32.mrf.mxu0
      %v416 = vadd.f32 %v212, %v415
      %v417 = vpop.f32.mrf.mxu0
      %v418 = vadd.f32 %v212, %v417
      %419 = vmatmul.bf16.gmra.mxu0 %v338
      %v420 = vpop.f32.mrf.mxu0
      %v421 = vadd.f32 %v212, %v420
      %v422 = vpop.f32.mrf.mxu0
      %v423 = vadd.f32 %v212, %v422
      %424 = vmatmul.bf16.gmra.mxu0 %v341
      %v425 = vpop.f32.mrf.mxu0
      %v426 = vadd.f32 %v212, %v425
      %v427 = vpop.f32.mrf.mxu0
      %v428 = vadd.f32 %v212, %v427
      %429 = vmatmul.bf16.gmra.mxu0 %v344
      %v430 = vpop.f32.mrf.mxu0
      %v431 = vadd.f32 %v212, %v430
      %v432 = vpop.f32.mrf.mxu0
      %v433 = vadd.f32 %v212, %v432
      %434 = vmatmul.bf16.gmra.mxu0 %v347
      %v435 = vpop.f32.mrf.mxu0
      %v436 = vadd.f32 %v212, %v435
      %v437 = vpop.f32.mrf.mxu0
      %v438 = vadd.f32 %v212, %v437
      %439 = vmatmul.bf16.gmra.mxu0 %v350
      %v440 = vpop.f32.mrf.mxu0
      %v441 = vadd.f32 %v212, %v440
      %v442 = vpop.f32.mrf.mxu0
      %v443 = vadd.f32 %v212, %v442
      %444 = vdwg.mxu0
      %vm445 = vcmask 121856
      %446 = vst.msk [vmem:[%s172] sm:$0xff] %vm445, %v366
      %447 = vst.msk [vmem:[%s172 + $0x8] sm:$0xff] %vm445, %v368
      %448 = vst.msk [vmem:[%s172 + $0x10] sm:$0xff] %vm445, %v371
      %449 = vst.msk [vmem:[%s172 + $0x18] sm:$0xff] %vm445, %v373
      %450 = vst.msk [vmem:[%s172 + $0x20] sm:$0xff] %vm445, %v376
      %451 = vst.msk [vmem:[%s172 + $0x28] sm:$0xff] %vm445, %v378
      %452 = vst.msk [vmem:[%s172 + $0x30] sm:$0xff] %vm445, %v381
      %453 = vst.msk [vmem:[%s172 + $0x38] sm:$0xff] %vm445, %v383
      %454 = vst.msk [vmem:[%s172 + $0x40] sm:$0xff] %vm445, %v386
      %455 = vst.msk [vmem:[%s172 + $0x48] sm:$0xff] %vm445, %v388
      %456 = vst.msk [vmem:[%s172 + $0x50] sm:$0xff] %vm445, %v391
      %457 = vst.msk [vmem:[%s172 + $0x58] sm:$0xff] %vm445, %v393
      %458 = vst.msk [vmem:[%s172 + $0x60] sm:$0xff] %vm445, %v396
      %459 = vst.msk [vmem:[%s172 + $0x68] sm:$0xff] %vm445, %v398
      %460 = vst.msk [vmem:[%s172 + $0x70] sm:$0xff] %vm445, %v401
      %461 = vst.msk [vmem:[%s172 + $0x78] sm:$0xff] %vm445, %v403
      %462 = vst.msk [vmem:[%s172 + $0x80] sm:$0xff] %vm445, %v406
      %463 = vst.msk [vmem:[%s172 + $0x88] sm:$0xff] %vm445, %v408
      %464 = vst.msk [vmem:[%s172 + $0x90] sm:$0xff] %vm445, %v411
      %465 = vst.msk [vmem:[%s172 + $0x98] sm:$0xff] %vm445, %v413
      %466 = vst.msk [vmem:[%s172 + $0xa0] sm:$0xff] %vm445, %v416
      %467 = vst.msk [vmem:[%s172 + $0xa8] sm:$0xff] %vm445, %v418
      %468 = vst.msk [vmem:[%s172 + $0xb0] sm:$0xff] %vm445, %v421
      %469 = vst.msk [vmem:[%s172 + $0xb8] sm:$0xff] %vm445, %v423
      %470 = vst.msk [vmem:[%s172 + $0xc0] sm:$0xff] %vm445, %v426
      %471 = vst.msk [vmem:[%s172 + $0xc8] sm:$0xff] %vm445, %v428
      %472 = vst.msk [vmem:[%s172 + $0xd0] sm:$0xff] %vm445, %v431
      %473 = vst.msk [vmem:[%s172 + $0xd8] sm:$0xff] %vm445, %v433
      %474 = vst.msk [vmem:[%s172 + $0xe0] sm:$0xff] %vm445, %v436
      %475 = vst.msk [vmem:[%s172 + $0xe8] sm:$0xff] %vm445, %v438
      %476 = vst.msk [vmem:[%s172 + $0xf0] sm:$0xff] %vm445, %v441
      %477 = vst.msk [vmem:[%s172 + $0xf8] sm:$0xff] %vm445, %v443
      %s478 = smul.u32 32, %s14
      %p479 = scmp.lt.s32.totalorder %s478, 63
      %s480 = scalar_select %p479, %s478, 63
      %s481 = smul.addr %s480, 8
      %s482 = scalar_lea.vmem %s3, %s481
      // Predicated region
      $region33: #{_lambda_.22} parent=31 // pred_check
        %p483 = pneg %p100
      $region34: #{_lambda_.22} parent=31 // pred_check_branch
        %485 = sbr.rel (%p483) target = $region36
      $region35: #{_lambda_.22} parent=31 // pred_region
        %s486 = smul.u32 32, %s14
      $region36: #{_lambda_.22} parent=31 // pred_fallthru
        _
    $region32: #{_lambda_.22} parent=5 // pred_fallthru
      _
    %p487 = scmp.le.s32.totalorder 2, %s9
    // Predicated region
    $region37: #{_lambda_.22} parent=5 // pred_check
      %p488 = pneg %p487
    $region38: #{_lambda_.22} parent=5 // pred_check_branch
      %490 = sbr.rel (%p488) target = $region40
    $region39: #{_lambda_.22} parent=5 // pred_region
      %s491 = ssub.s32 %s9, 2
      // Predicated region
      $region41: #{_lambda_.22} parent=39 // pred_check
        %p492 = pneg %p106
      $region42: #{_lambda_.22} parent=39 // pred_check_branch
        %494 = sbr.rel (%p492) target = $region44
      $region43: #{_lambda_.22} parent=39 // pred_region
        %s495 = smul.u32 32, %s15
        %p496 = scmp.lt.s32.totalorder %s495, 63
        %s497 = scalar_select %p496, %s495, 63
        %s498 = smul.addr %s497, 8
        %s499 = scalar_lea.vmem %s3, %s498
      $region44: #{_lambda_.22} parent=39 // pred_fallthru
        _
    $region40: #{_lambda_.22} parent=5 // pred_fallthru
      _
  $region6: #{_lambda_.22} parent=0 // loop_footer
    %s13 = sadd.s32 1, %s9
  $region7: #{_lambda_.22} parent=0 // loop_footer_branch
    %8 = sbr.rel target = $region3
  $region8: #{_lambda_.22} parent=0 // loop_exit
    _

// kernel: _lambda_.23
$region0: #{_lambda_.23}
  #allocation0 [shape = 'u32[]', space=smem, size = 0x4, offset = 0x4, fixed_abs, tag = 'smem constant byte address 0x4 - core index']
  #allocation1 [shape = 'u32[72,128]{1,0:T(1,128)}', space=vmem, size = 0x9000, scoped, tag = 'internal scratch']
  %s0 = inlined_call_operand.vmem [shape: bf16[512,15], index: 0, kind: input, shape index: {}]
  %s1 = inlined_call_operand.vmem [shape: bf16[15,9], index: 1, kind: input, shape index: {}]
  %s2 = inlined_call_operand.vmem [shape: f32[1,9], index: 2, kind: input, shape index: {}]
  %s3 = inlined_call_operand.vmem [shape: f32[512,9], index: 3, kind: output, shape index: {}]
  %s4 = sld [smem:[#allocation0]]
  $region45: #{_lambda_.23} parent=0
    _
  %s6 = ssub.s32 1, %s4
  %s7 = scalar_select 0, %s6, %s4
  loop: start=0, step=1, limit=4
  $region2: #{_lambda_.23} parent=0 // loop_pre_header
    _
  $region3: #{_lambda_.23} parent=0 // loop_header
    %s9 = sphi 0, %s13
    %p10 = scmp.ge.s32.totalorder %s9, 4
    %s19 = sphi 0, %s21
    %s22 = sphi 0, %s19
    %s23 = sphi 0, %s22
    %s39 = sphi 0, %s23
    %s43 = sphi 0, %s43
    %s45 = sphi 0, %s43
    %s46 = sphi 0, %s45
    %s60 = sphi 0, %s46
    %s64 = sphi 0, %s64
    %s66 = sphi 0, %s64
    %s67 = sphi 0, %s66
    %s81 = sphi 0, %s67
    %s87 = sphi 0, %s89
    %s90 = sphi 0, %s87
    %s91 = sphi 0, %s90
    %s107 = sphi 0, %s91
  $region4: #{_lambda_.23} parent=0 // loop_header_branch
    %12 = sbr.rel (%p10) target = $region8
  $region5: #{_lambda_.23} parent=0 // loop_body
    %s14 = ssub.s32 %s9, 1
    %s15 = ssub.s32 %s9, 2
    %s16 = sadd.s32 %s9, 1
    %s17 = ssub.s32 %s9, %s16
    %p18 = scmp.eq.s32.totalorder %s17, 0
    %s20 = sadd.s32 %s19, 1
    %s21 = scalar_select %p18, %s19, %s20
    %p24 = pneg %p18
    %p25 = scmp.eq.s32.totalorder %s9, 1
    %p26 = por %p24, %p25
    %p27 = scmp.ne.s32.totalorder %s19, %s22
    %p28 = scmp.eq.s32.totalorder %s9, 0
    %p29 = por %p27, %p28
    %p30 = scmp.ne.s32.totalorder %s19, %s22
    %p31 = scmp.eq.s32.totalorder %s14, 1
    %p32 = por %p30, %p31
    %p33 = scmp.ne.s32.totalorder %s22, %s23
    %p34 = scmp.eq.s32.totalorder %s14, 0
    %p35 = por %p33, %p34
    %p36 = scmp.ne.s32.totalorder %s22, %s23
    %p37 = scmp.eq.s32.totalorder %s15, 1
    %p38 = por %p36, %p37
    %p40 = scmp.ne.s32.totalorder %s23, %s39
    %p41 = scmp.eq.s32.totalorder %s15, 0
    %p42 = por %p40, %p41
    %s44 = sadd.s32 %s43, 1
    %p47 = scmp.eq.s32.totalorder %s9, 1
    %p48 = scmp.ne.s32.totalorder %s43, %s45
    %p49 = scmp.eq.s32.totalorder %s9, 0
    %p50 = por %p48, %p49
    %p51 = scmp.ne.s32.totalorder %s43, %s45
    %p52 = scmp.eq.s32.totalorder %s14, 1
    %p53 = por %p51, %p52
    %p54 = scmp.ne.s32.totalorder %s45, %s46
    %p55 = scmp.eq.s32.totalorder %s14, 0
    %p56 = por %p54, %p55
    %p57 = scmp.ne.s32.totalorder %s45, %s46
    %p58 = scmp.eq.s32.totalorder %s15, 1
    %p59 = por %p57, %p58
    %p61 = scmp.ne.s32.totalorder %s46, %s60
    %p62 = scmp.eq.s32.totalorder %s15, 0
    %p63 = por %p61, %p62
    %s65 = sadd.s32 %s64, 1
    %p68 = scmp.eq.s32.totalorder %s9, 1
    %p69 = scmp.ne.s32.totalorder %s64, %s66
    %p70 = scmp.eq.s32.totalorder %s9, 0
    %p71 = por %p69, %p70
    %p72 = scmp.ne.s32.totalorder %s64, %s66
    %p73 = scmp.eq.s32.totalorder %s14, 1
    %p74 = por %p72, %p73
    %p75 = scmp.ne.s32.totalorder %s66, %s67
    %p76 = scmp.eq.s32.totalorder %s14, 0
    %p77 = por %p75, %p76
    %p78 = scmp.ne.s32.totalorder %s66, %s67
    %p79 = scmp.eq.s32.totalorder %s15, 1
    %p80 = por %p78, %p79
    %p82 = scmp.ne.s32.totalorder %s67, %s81
    %p83 = scmp.eq.s32.totalorder %s15, 0
    %p84 = por %p82, %p83
    %s85 = ssub.s32 %s9, %s16
    %p86 = scmp.eq.s32.totalorder %s85, 0
    %s88 = sadd.s32 %s87, 1
    %s89 = scalar_select %p86, %s87, %s88
    %p92 = pneg %p86
    %p93 = scmp.eq.s32.totalorder %s9, 1
    %p94 = por %p92, %p93
    %p95 = scmp.ne.s32.totalorder %s87, %s90
    %p96 = scmp.eq.s32.totalorder %s9, 0
    %p97 = por %p95, %p96
    %p98 = scmp.ne.s32.totalorder %s87, %s90
    %p99 = scmp.eq.s32.totalorder %s14, 1
    %p100 = por %p98, %p99
    %p101 = scmp.ne.s32.totalorder %s90, %s91
    %p102 = scmp.eq.s32.totalorder %s14, 0
    %p103 = por %p101, %p102
    %p104 = scmp.ne.s32.totalorder %s90, %s91
    %p105 = scmp.eq.s32.totalorder %s15, 1
    %p106 = por %p104, %p105
    %p108 = scmp.ne.s32.totalorder %s91, %s107
    %p109 = scmp.eq.s32.totalorder %s15, 0
    %p110 = por %p108, %p109
    %p111 = scmp.le.s32.totalorder 1, %s9
    %p112 = scmp.lt.s32.totalorder %s9, 3
    %p113 = pnand %p111, %p112
    %p114 = pneg %p113
    // Predicated region
    $region9: #{_lambda_.23} parent=5 // pred_check
      _
    $region10: #{_lambda_.23} parent=5 // pred_check_branch
      %116 = sbr.rel (%p113) target = $region12
    $region11: #{_lambda_.23} parent=5 // pred_region
      %s117 = ssub.s32 %s9, 1
      // Predicated region
      $region13: #{_lambda_.23} parent=11 // pred_check
        %p118 = pneg %p56
      $region14: #{_lambda_.23} parent=11 // pred_check_branch
        %120 = sbr.rel (%p118) target = $region16
      $region15: #{_lambda_.23} parent=11 // pred_region
        _
      $region16: #{_lambda_.23} parent=11 // pred_fallthru
        _
      // Predicated region
      $region17: #{_lambda_.23} parent=11 // pred_check
        %p121 = pneg %p77
      $region18: #{_lambda_.23} parent=11 // pred_check_branch
        %123 = sbr.rel (%p121) target = $region20
      $region19: #{_lambda_.23} parent=11 // pred_region
        _
      $region20: #{_lambda_.23} parent=11 // pred_fallthru
        _
    $region12: #{_lambda_.23} parent=5 // pred_fallthru
      _
    %p124 = scmp.lt.s32.totalorder %s9, 2
    // Predicated region
    $region21: #{_lambda_.23} parent=5 // pred_check
      %p125 = pneg %p124
    $region22: #{_lambda_.23} parent=5 // pred_check_branch
      %127 = sbr.rel (%p125) target = $region24
    $region23: #{_lambda_.23} parent=5 // pred_region
      // Predicated region
      $region25: #{_lambda_.23} parent=23 // pred_check
        %p128 = pneg %p29
      $region26: #{_lambda_.23} parent=23 // pred_check_branch
        %130 = sbr.rel (%p128) target = $region28
      $region27: #{_lambda_.23} parent=23 // pred_region
        %s131 = smul.u32 32, %s9
        %p132 = scmp.lt.s32.totalorder %s131, 63
        %s133 = scalar_select %p132, %s131, 63
        %s134 = smul.addr %s133, 4
        %s135 = scalar_lea.vmem %s0, %s134
        %s136 = smul.u32 32, %s9
      $region28: #{_lambda_.23} parent=23 // pred_fallthru
        _
    $region24: #{_lambda_.23} parent=5 // pred_fallthru
      _
    %p137 = scmp.le.s32.totalorder 1, %s9
    %p138 = scmp.lt.s32.totalorder %s9, 3
    %p139 = pnand %p137, %p138
    %p140 = pneg %p139
    // Predicated region
    $region29: #{_lambda_.23} parent=5 // pred_check
      _
    $region30: #{_lambda_.23} parent=5 // pred_check_branch
      %142 = sbr.rel (%p139) target = $region32
    $region31: #{_lambda_.23} parent=5 // pred_region
      %s143 = ssub.s32 %s9, 1
      %s144 = smul.u32 32, %s14
      %p145 = scmp.lt.s32.totalorder %s144, 63
      %s146 = scalar_select %p145, %s144, 63
      %s147 = smul.addr %s146, 4
      %s148 = scalar_lea.vmem %s0, %s147
      %p149 = pneg %p35
      %p150 = pneg %p32
      %p151 = pneg %p56
      %p152 = pneg %p53
      %p153 = pneg %p77
      %p154 = pneg %p74
      %p155 = pneg %p103
      %p156 = pneg %p100
      %s157 = smul.u32 32, %s14
      %p158 = scmp.lt.s32.totalorder %s157, 63
      %s159 = scalar_select %p158, %s157, 63
      %s160 = smul.addr %s159, 8
      %s161 = scalar_lea.vmem %s3, %s160
      %s162 = smul.u32 32, %s14
      %p163 = scmp.lt.s32.totalorder %s162, 63
      %s164 = scalar_select %p163, %s162, 63
      %s165 = smul.addr %s164, 4
      %s166 = scalar_lea.vmem %s0, %s165
      %s167 = smul.u32 32, %s14
      %s168 = smul.u32 32, %s14
      %p169 = scmp.lt.s32.totalorder %s168, 63
      %s170 = scalar_select %p169, %s168, 63
      %s171 = smul.addr %s170, 8
      %s172 = scalar_lea.vmem %s3, %s171
      %s173 = smul.u32 32, %s14
      %v175 = vld [vmem:[%s166] sm:$0xf]
      %v176 = vld [vmem:[%s166 + $0x4] sm:$0xf]
      %v177 = vld [vmem:[%s166 + $0x8] sm:$0xf]
      %v178 = vld [vmem:[%s166 + $0xc] sm:$0xf]
      %v179 = vld [vmem:[%s166 + $0x10] sm:$0xf]
      %v180 = vld [vmem:[%s166 + $0x14] sm:$0xf]
      %v181 = vld [vmem:[%s166 + $0x18] sm:$0xf]
      %v182 = vld [vmem:[%s166 + $0x1c] sm:$0xf]
      %v183 = vld [vmem:[%s166 + $0x20] sm:$0xf]
      %v184 = vld [vmem:[%s166 + $0x24] sm:$0xf]
      %v185 = vld [vmem:[%s166 + $0x28] sm:$0xf]
      %v186 = vld [vmem:[%s166 + $0x2c] sm:$0xf]
      %v187 = vld [vmem:[%s166 + $0x30] sm:$0xf]
      %v188 = vld [vmem:[%s166 + $0x34] sm:$0xf]
      %v189 = vld [vmem:[%s166 + $0x38] sm:$0xf]
      %v190 = vld [vmem:[%s166 + $0x3c] sm:$0xf]
      %v191 = vld [vmem:[%s166 + $0x40] sm:$0xf]
      %v192 = vld [vmem:[%s166 + $0x44] sm:$0xf]
      %v193 = vld [vmem:[%s166 + $0x48] sm:$0xf]
      %v194 = vld [vmem:[%s166 + $0x4c] sm:$0xf]
      %v195 = vld [vmem:[%s166 + $0x50] sm:$0xf]
      %v196 = vld [vmem:[%s166 + $0x54] sm:$0xf]
      %v197 = vld [vmem:[%s166 + $0x58] sm:$0xf]
      %v198 = vld [vmem:[%s166 + $0x5c] sm:$0xf]
      %v199 = vld [vmem:[%s166 + $0x60] sm:$0xf]
      %v200 = vld [vmem:[%s166 + $0x64] sm:$0xf]
      %v201 = vld [vmem:[%s166 + $0x68] sm:$0xf]
      %v202 = vld [vmem:[%s166 + $0x6c] sm:$0xf]
      %v203 = vld [vmem:[%s166 + $0x70] sm:$0xf]
      %v204 = vld [vmem:[%s166 + $0x74] sm:$0xf]
      %v205 = vld [vmem:[%s166 + $0x78] sm:$0xf]
      %v206 = vld [vmem:[%s166 + $0x7c] sm:$0xf]
      %v207 = vld [vmem:[%s1] sm:$0xf]
      %v208 = vld [vmem:[%s1 + $0x4] sm:$0xf]
      %v209 = vld [vmem:[%s2] sm:$0x1]
      %v211 = vperm.slane %v209, 0
      %v245 = vunpack.c.l.b16 %v175
      %v246 = vunpack.c.l.b16 %v176
      %v247 = vunpack.c.l.b16 %v177
      %v248 = vunpack.c.l.b16 %v178
      %v249 = vunpack.c.l.b16 %v179
      %v250 = vunpack.c.l.b16 %v180
      %v251 = vunpack.c.l.b16 %v181
      %v252 = vunpack.c.l.b16 %v182
      %v253 = vunpack.c.l.b16 %v183
      %v254 = vunpack.c.l.b16 %v184
      %v255 = vunpack.c.l.b16 %v185
      %v256 = vunpack.c.l.b16 %v186
      %v257 = vunpack.c.l.b16 %v187
      %v258 = vunpack.c.l.b16 %v188
      %v259 = vunpack.c.l.b16 %v189
      %v260 = vunpack.c.l.b16 %v190
      %v261 = vunpack.c.l.b16 %v191
      %v262 = vunpack.c.l.b16 %v192
      %v263 = vunpack.c.l.b16 %v193
      %v264 = vunpack.c.l.b16 %v194
      %v265 = vunpack.c.l.b16 %v195
      %v266 = vunpack.c.l.b16 %v196
      %v267 = vunpack.c.l.b16 %v197
      %v268 = vunpack.c.l.b16 %v198
      %v269 = vunpack.c.l.b16 %v199
      %v270 = vunpack.c.l.b16 %v200
      %v271 = vunpack.c.l.b16 %v201
      %v272 = vunpack.c.l.b16 %v202
      %v273 = vunpack.c.l.b16 %v203
      %v274 = vunpack.c.l.b16 %v204
      %v275 = vunpack.c.l.b16 %v205
      %v276 = vunpack.c.l.b16 %v206
      %v277 = vpack.c.b16 %v246, %v245
      %v278 = vpack.c.b16 %v248, %v247
      %v279 = vpack.c.b16 %v250, %v249
      %v280 = vpack.c.b16 %v252, %v251
      %v281 = vpack.c.b16 %v254, %v253
      %v282 = vpack.c.b16 %v256, %v255
      %v283 = vpack.c.b16 %v258, %v257
      %v284 = vpack.c.b16 %v260, %v259
      %v285 = vpack.c.b16 %v262, %v261
      %v286 = vpack.c.b16 %v264, %v263
      %v287 = vpack.c.b16 %v266, %v265
      %v288 = vpack.c.b16 %v268, %v267
      %v289 = vpack.c.b16 %v270, %v269
      %v290 = vpack.c.b16 %v272, %v271
      %v291 = vpack.c.b16 %v274, %v273
      %v292 = vpack.c.b16 %v276, %v275
      %v295 = vunpack.c.l.b16 %v207
      %v296 = vunpack.c.l.b16 %v208
      %v297 = vpack.c.b16 %v296, %v295
      %vm298 = vcmask 121856
      %v300 = vsel %vm298, %v277, 0
      %v303 = vsel %vm298, %v278, 0
      %v306 = vsel %vm298, %v279, 0
      %v309 = vsel %vm298, %v280, 0
      %v312 = vsel %vm298, %v281, 0
      %v315 = vsel %vm298, %v282, 0
      %v318 = vsel %vm298, %v283, 0
      %v321 = vsel %vm298, %v284, 0
      %v324 = vsel %vm298, %v285, 0
      %v327 = vsel %vm298, %v286, 0
      %v330 = vsel %vm298, %v287, 0
      %v333 = vsel %vm298, %v288, 0
      %v336 = vsel %vm298, %v289, 0
      %v339 = vsel %vm298, %v290, 0
      %v342 = vsel %vm298, %v291, 0
      %v345 = vsel %vm298, %v292, 0
      %vm347 = vcmask 1046528
      %vm348 = vcmask 1047552
      %v349 = vsel %vm347, 4294967295, 65535
      %v350 = vsel %vm348, %v349, 0
      %v352 = vand.u32 %v297, %v350
      %354 = vmatpush.bf16.msra.mxu0 0
      %355 = vmatpush.bf16.msra.mxu0 0
      %356 = vmatpush.bf16.msra.mxu0 0
      %357 = vmatpush.bf16.msra.mxu0 0
      %358 = vmatpush.bf16.msra.mxu0 0
      %359 = vmatpush.bf16.msra.mxu0 0
      %360 = vmatpush.bf16.msra.mxu0 0
      %361 = vmatpush.bf16.msra.mxu0 %v352
      %362 = vmatmul.bf16.gmra.mxu0 %v300
      %v363 = vpop.f32.mrf.mxu0
      %v364 = vadd.f32 %v211, %v363
      %v365 = vpop.f32.mrf.mxu0
      %v366 = vadd.f32 %v211, %v365
      %367 = vmatmul.bf16.gmra.mxu0 %v303
      %v368 = vpop.f32.mrf.mxu0
      %v369 = vadd.f32 %v211, %v368
      %v370 = vpop.f32.mrf.mxu0
      %v371 = vadd.f32 %v211, %v370
      %372 = vmatmul.bf16.gmra.mxu0 %v306
      %v373 = vpop.f32.mrf.mxu0
      %v374 = vadd.f32 %v211, %v373
      %v375 = vpop.f32.mrf.mxu0
      %v376 = vadd.f32 %v211, %v375
      %377 = vmatmul.bf16.gmra.mxu0 %v309
      %v378 = vpop.f32.mrf.mxu0
      %v379 = vadd.f32 %v211, %v378
      %v380 = vpop.f32.mrf.mxu0
      %v381 = vadd.f32 %v211, %v380
      %382 = vmatmul.bf16.gmra.mxu0 %v312
      %v383 = vpop.f32.mrf.mxu0
      %v384 = vadd.f32 %v211, %v383
      %v385 = vpop.f32.mrf.mxu0
      %v386 = vadd.f32 %v211, %v385
      %387 = vmatmul.bf16.gmra.mxu0 %v315
      %v388 = vpop.f32.mrf.mxu0
      %v389 = vadd.f32 %v211, %v388
      %v390 = vpop.f32.mrf.mxu0
      %v391 = vadd.f32 %v211, %v390
      %392 = vmatmul.bf16.gmra.mxu0 %v318
      %v393 = vpop.f32.mrf.mxu0
      %v394 = vadd.f32 %v211, %v393
      %v395 = vpop.f32.mrf.mxu0
      %v396 = vadd.f32 %v211, %v395
      %397 = vmatmul.bf16.gmra.mxu0 %v321
      %v398 = vpop.f32.mrf.mxu0
      %v399 = vadd.f32 %v211, %v398
      %v400 = vpop.f32.mrf.mxu0
      %v401 = vadd.f32 %v211, %v400
      %402 = vmatmul.bf16.gmra.mxu0 %v324
      %v403 = vpop.f32.mrf.mxu0
      %v404 = vadd.f32 %v211, %v403
      %v405 = vpop.f32.mrf.mxu0
      %v406 = vadd.f32 %v211, %v405
      %407 = vmatmul.bf16.gmra.mxu0 %v327
      %v408 = vpop.f32.mrf.mxu0
      %v409 = vadd.f32 %v211, %v408
      %v410 = vpop.f32.mrf.mxu0
      %v411 = vadd.f32 %v211, %v410
      %412 = vmatmul.bf16.gmra.mxu0 %v330
      %v413 = vpop.f32.mrf.mxu0
      %v414 = vadd.f32 %v211, %v413
      %v415 = vpop.f32.mrf.mxu0
      %v416 = vadd.f32 %v211, %v415
      %417 = vmatmul.bf16.gmra.mxu0 %v333
      %v418 = vpop.f32.mrf.mxu0
      %v419 = vadd.f32 %v211, %v418
      %v420 = vpop.f32.mrf.mxu0
      %v421 = vadd.f32 %v211, %v420
      %422 = vmatmul.bf16.gmra.mxu0 %v336
      %v423 = vpop.f32.mrf.mxu0
      %v424 = vadd.f32 %v211, %v423
      %v425 = vpop.f32.mrf.mxu0
      %v426 = vadd.f32 %v211, %v425
      %427 = vmatmul.bf16.gmra.mxu0 %v339
      %v428 = vpop.f32.mrf.mxu0
      %v429 = vadd.f32 %v211, %v428
      %v430 = vpop.f32.mrf.mxu0
      %v431 = vadd.f32 %v211, %v430
      %432 = vmatmul.bf16.gmra.mxu0 %v342
      %v433 = vpop.f32.mrf.mxu0
      %v434 = vadd.f32 %v211, %v433
      %v435 = vpop.f32.mrf.mxu0
      %v436 = vadd.f32 %v211, %v435
      %437 = vmatmul.bf16.gmra.mxu0 %v345
      %v438 = vpop.f32.mrf.mxu0
      %v439 = vadd.f32 %v211, %v438
      %v440 = vpop.f32.mrf.mxu0
      %v441 = vadd.f32 %v211, %v440
      %442 = vdwg.mxu0
      %vm443 = vcmask 72704
      %444 = vst.msk [vmem:[%s172] sm:$0xff] %vm443, %v364
      %445 = vst.msk [vmem:[%s172 + $0x8] sm:$0xff] %vm443, %v366
      %446 = vst.msk [vmem:[%s172 + $0x10] sm:$0xff] %vm443, %v369
      %447 = vst.msk [vmem:[%s172 + $0x18] sm:$0xff] %vm443, %v371
      %448 = vst.msk [vmem:[%s172 + $0x20] sm:$0xff] %vm443, %v374
      %449 = vst.msk [vmem:[%s172 + $0x28] sm:$0xff] %vm443, %v376
      %450 = vst.msk [vmem:[%s172 + $0x30] sm:$0xff] %vm443, %v379
      %451 = vst.msk [vmem:[%s172 + $0x38] sm:$0xff] %vm443, %v381
      %452 = vst.msk [vmem:[%s172 + $0x40] sm:$0xff] %vm443, %v384
      %453 = vst.msk [vmem:[%s172 + $0x48] sm:$0xff] %vm443, %v386
      %454 = vst.msk [vmem:[%s172 + $0x50] sm:$0xff] %vm443, %v389
      %455 = vst.msk [vmem:[%s172 + $0x58] sm:$0xff] %vm443, %v391
      %456 = vst.msk [vmem:[%s172 + $0x60] sm:$0xff] %vm443, %v394
      %457 = vst.msk [vmem:[%s172 + $0x68] sm:$0xff] %vm443, %v396
      %458 = vst.msk [vmem:[%s172 + $0x70] sm:$0xff] %vm443, %v399
      %459 = vst.msk [vmem:[%s172 + $0x78] sm:$0xff] %vm443, %v401
      %460 = vst.msk [vmem:[%s172 + $0x80] sm:$0xff] %vm443, %v404
      %461 = vst.msk [vmem:[%s172 + $0x88] sm:$0xff] %vm443, %v406
      %462 = vst.msk [vmem:[%s172 + $0x90] sm:$0xff] %vm443, %v409
      %463 = vst.msk [vmem:[%s172 + $0x98] sm:$0xff] %vm443, %v411
      %464 = vst.msk [vmem:[%s172 + $0xa0] sm:$0xff] %vm443, %v414
      %465 = vst.msk [vmem:[%s172 + $0xa8] sm:$0xff] %vm443, %v416
      %466 = vst.msk [vmem:[%s172 + $0xb0] sm:$0xff] %vm443, %v419
      %467 = vst.msk [vmem:[%s172 + $0xb8] sm:$0xff] %vm443, %v421
      %468 = vst.msk [vmem:[%s172 + $0xc0] sm:$0xff] %vm443, %v424
      %469 = vst.msk [vmem:[%s172 + $0xc8] sm:$0xff] %vm443, %v426
      %470 = vst.msk [vmem:[%s172 + $0xd0] sm:$0xff] %vm443, %v429
      %471 = vst.msk [vmem:[%s172 + $0xd8] sm:$0xff] %vm443, %v431
      %472 = vst.msk [vmem:[%s172 + $0xe0] sm:$0xff] %vm443, %v434
      %473 = vst.msk [vmem:[%s172 + $0xe8] sm:$0xff] %vm443, %v436
      %474 = vst.msk [vmem:[%s172 + $0xf0] sm:$0xff] %vm443, %v439
      %475 = vst.msk [vmem:[%s172 + $0xf8] sm:$0xff] %vm443, %v441
      %s476 = smul.u32 32, %s14
      %p477 = scmp.lt.s32.totalorder %s476, 63
      %s478 = scalar_select %p477, %s476, 63
      %s479 = smul.addr %s478, 8
      %s480 = scalar_lea.vmem %s3, %s479
      // Predicated region
      $region33: #{_lambda_.23} parent=31 // pred_check
        %p481 = pneg %p100
      $region34: #{_lambda_.23} parent=31 // pred_check_branch
        %483 = sbr.rel (%p481) target = $region36
      $region35: #{_lambda_.23} parent=31 // pred_region
        %s484 = smul.u32 32, %s14
      $region36: #{_lambda_.23} parent=31 // pred_fallthru
        _
    $region32: #{_lambda_.23} parent=5 // pred_fallthru
      _
    %p485 = scmp.le.s32.totalorder 2, %s9
    // Predicated region
    $region37: #{_lambda_.23} parent=5 // pred_check
      %p486 = pneg %p485
    $region38: #{_lambda_.23} parent=5 // pred_check_branch
      %488 = sbr.rel (%p486) target = $region40
    $region39: #{_lambda_.23} parent=5 // pred_region
      %s489 = ssub.s32 %s9, 2
      // Predicated region
      $region41: #{_lambda_.23} parent=39 // pred_check
        %p490 = pneg %p106
      $region42: #{_lambda_.23} parent=39 // pred_check_branch
        %492 = sbr.rel (%p490) target = $region44
      $region43: #{_lambda_.23} parent=39 // pred_region
        %s493 = smul.u32 32, %s15
        %p494 = scmp.lt.s32.totalorder %s493, 63
        %s495 = scalar_select %p494, %s493, 63
        %s496 = smul.addr %s495, 8
        %s497 = scalar_lea.vmem %s3, %s496
      $region44: #{_lambda_.23} parent=39 // pred_fallthru
        _
    $region40: #{_lambda_.23} parent=5 // pred_fallthru
      _
  $region6: #{_lambda_.23} parent=0 // loop_footer
    %s13 = sadd.s32 1, %s9
  $region7: #{_lambda_.23} parent=0 // loop_footer_branch
    %8 = sbr.rel target = $region3
  $region8: #{_lambda_.23} parent=0 // loop_exit
    _

// kernel: sub.919
$region0: #{sub.919}
  %s0 = inlined_call_operand.vmem [shape: f32[64], index: 0, kind: input, shape index: {}]
  %s1 = inlined_call_operand.vmem [shape: f32[2,32], index: 1, kind: output, shape index: {}]
  $region1: #{sub.919} parent=0
    #allocation0 [shape = 'u8[4096]{0}', space=vmem, size = 0x1000, scoped, tag = 'scoped mem for output reshape']
    #allocation1 [shape = 'u8[4096]{0}', space=vmem, size = 0x1000, scoped, tag = 'scoped mem for input reshape']
    %s3 = ssub.s32 2, 1
    %v4 = vld [vmem:[%s0] sm:%s3]
    %5 = vst [vmem:[#allocation1] sm:%s3] %v4
    %v6 = vld [vmem:[#allocation1] sm:$0x1]
    %vm7 = vcmask 261120
    %8 = vst.msk [vmem:[#allocation0] sm:$0x1] %vm7, %v6
    %v9 = vld [vmem:[#allocation1] sm:$0x1]
    %10 = vrot.lane.b32.xlu0 %v9, 96
    %v11 = vpop.permute.xlu0 %10
    %vm12 = vcmask 261120
    %s13 = scalar_lea.vmem [#allocation0], 1
    %14 = vst.msk [vmem:[%s13] sm:$0x1] %vm12, %v11
    %s16 = ssub.s32 4, 1
    %v17 = vld [vmem:[#allocation0] sm:%s16]
    %s19 = ssub.s32 4, 1
    %20 = vst [vmem:[%s1] sm:%s19] %v17

// kernel: _lambda_.24
$region0: #{_lambda_.24}
  #allocation0 [shape = 'u32[]', space=smem, size = 0x4, offset = 0x4, fixed_abs, tag = 'smem constant byte address 0x4 - core index']
  #allocation1 [shape = 'u32[72,128]{1,0:T(1,128)}', space=vmem, size = 0x9000, scoped, tag = 'internal scratch']
  %s0 = inlined_call_operand.vmem [shape: f32[64,8,9], index: 0, kind: input, shape index: {}]
  %s1 = inlined_call_operand.vmem [shape: f32[64,9], index: 1, kind: output, shape index: {}]
  %s2 = sld [smem:[#allocation0]]
  $region14: #{_lambda_.24} parent=0
    _
  %s4 = ssub.s32 1, %s2
  %s5 = scalar_select 0, %s4, %s2
  // Predicated region
  $region2: #{_lambda_.24} parent=0 // pred_check
    _
  $region3: #{_lambda_.24} parent=0 // pred_check_branch
    %7 = sbr.rel (0) target = $region5
  $region4: #{_lambda_.24} parent=0 // pred_region
    _
  $region5: #{_lambda_.24} parent=0 // pred_fallthru
    _
  %v8 = vld [vmem:[%s0] sm:$0xff]
  %v9 = vld [vmem:[%s0 + $0x8] sm:$0xff]
  %v10 = vld [vmem:[%s0 + $0x10] sm:$0xff]
  %v11 = vld [vmem:[%s0 + $0x18] sm:$0xff]
  %v12 = vld [vmem:[%s0 + $0x20] sm:$0xff]
  %v13 = vld [vmem:[%s0 + $0x28] sm:$0xff]
  %v14 = vld [vmem:[%s0 + $0x30] sm:$0xff]
  %v15 = vld [vmem:[%s0 + $0x38] sm:$0xff]
  %v16 = vld [vmem:[%s0 + $0x40] sm:$0xff]
  %v17 = vld [vmem:[%s0 + $0x48] sm:$0xff]
  %v18 = vld [vmem:[%s0 + $0x50] sm:$0xff]
  %v19 = vld [vmem:[%s0 + $0x58] sm:$0xff]
  %v20 = vld [vmem:[%s0 + $0x60] sm:$0xff]
  %v21 = vld [vmem:[%s0 + $0x68] sm:$0xff]
  %v22 = vld [vmem:[%s0 + $0x70] sm:$0xff]
  %v23 = vld [vmem:[%s0 + $0x78] sm:$0xff]
  %v24 = vld [vmem:[%s0 + $0x80] sm:$0xff]
  %v25 = vld [vmem:[%s0 + $0x88] sm:$0xff]
  %v26 = vld [vmem:[%s0 + $0x90] sm:$0xff]
  %v27 = vld [vmem:[%s0 + $0x98] sm:$0xff]
  %v28 = vld [vmem:[%s0 + $0xa0] sm:$0xff]
  %v29 = vld [vmem:[%s0 + $0xa8] sm:$0xff]
  %v30 = vld [vmem:[%s0 + $0xb0] sm:$0xff]
  %v31 = vld [vmem:[%s0 + $0xb8] sm:$0xff]
  %v32 = vld [vmem:[%s0 + $0xc0] sm:$0xff]
  %v33 = vld [vmem:[%s0 + $0xc8] sm:$0xff]
  %v34 = vld [vmem:[%s0 + $0xd0] sm:$0xff]
  %v35 = vld [vmem:[%s0 + $0xd8] sm:$0xff]
  %v36 = vld [vmem:[%s0 + $0xe0] sm:$0xff]
  %v37 = vld [vmem:[%s0 + $0xe8] sm:$0xff]
  %v38 = vld [vmem:[%s0 + $0xf0] sm:$0xff]
  %v39 = vld [vmem:[%s0 + $0xf8] sm:$0xff]
  %v40 = vld [vmem:[%s0 + $0x100] sm:$0xff]
  %v41 = vld [vmem:[%s0 + $0x108] sm:$0xff]
  %v42 = vld [vmem:[%s0 + $0x110] sm:$0xff]
  %v43 = vld [vmem:[%s0 + $0x118] sm:$0xff]
  %v44 = vld [vmem:[%s0 + $0x120] sm:$0xff]
  %v45 = vld [vmem:[%s0 + $0x128] sm:$0xff]
  %v46 = vld [vmem:[%s0 + $0x130] sm:$0xff]
  %v47 = vld [vmem:[%s0 + $0x138] sm:$0xff]
  %v48 = vld [vmem:[%s0 + $0x140] sm:$0xff]
  %v49 = vld [vmem:[%s0 + $0x148] sm:$0xff]
  %v50 = vld [vmem:[%s0 + $0x150] sm:$0xff]
  %v51 = vld [vmem:[%s0 + $0x158] sm:$0xff]
  %v52 = vld [vmem:[%s0 + $0x160] sm:$0xff]
  %v53 = vld [vmem:[%s0 + $0x168] sm:$0xff]
  %v54 = vld [vmem:[%s0 + $0x170] sm:$0xff]
  %v55 = vld [vmem:[%s0 + $0x178] sm:$0xff]
  %v56 = vld [vmem:[%s0 + $0x180] sm:$0xff]
  %v57 = vld [vmem:[%s0 + $0x188] sm:$0xff]
  %v58 = vld [vmem:[%s0 + $0x190] sm:$0xff]
  %v59 = vld [vmem:[%s0 + $0x198] sm:$0xff]
  %v60 = vld [vmem:[%s0 + $0x1a0] sm:$0xff]
  %v61 = vld [vmem:[%s0 + $0x1a8] sm:$0xff]
  %v62 = vld [vmem:[%s0 + $0x1b0] sm:$0xff]
  %v63 = vld [vmem:[%s0 + $0x1b8] sm:$0xff]
  %v64 = vld [vmem:[%s0 + $0x1c0] sm:$0xff]
  %v65 = vld [vmem:[%s0 + $0x1c8] sm:$0xff]
  %v66 = vld [vmem:[%s0 + $0x1d0] sm:$0xff]
  %v67 = vld [vmem:[%s0 + $0x1d8] sm:$0xff]
  %v68 = vld [vmem:[%s0 + $0x1e0] sm:$0xff]
  %v69 = vld [vmem:[%s0 + $0x1e8] sm:$0xff]
  %v70 = vld [vmem:[%s0 + $0x1f0] sm:$0xff]
  %v71 = vld [vmem:[%s0 + $0x1f8] sm:$0xff]
  %vm72 = vcmask 72704
  %v73 = vsel %vm72, %v8, -inf
  %v74 = vrot.slane %v73, 4
  %v75 = vmax.f32 %v73, %v74
  %v76 = vrot.slane %v75, 2
  %v77 = vmax.f32 %v75, %v76
  %v78 = vrot.slane %v77, 1
  %v79 = vmax.f32 %v77, %v78
  %v80 = vsel %vm72, %v9, -inf
  %v81 = vrot.slane %v80, 4
  %v82 = vmax.f32 %v80, %v81
  %v83 = vrot.slane %v82, 2
  %v84 = vmax.f32 %v82, %v83
  %v85 = vrot.slane %v84, 1
  %v86 = vmax.f32 %v84, %v85
  %v87 = vsel %vm72, %v10, -inf
  %v88 = vrot.slane %v87, 4
  %v89 = vmax.f32 %v87, %v88
  %v90 = vrot.slane %v89, 2
  %v91 = vmax.f32 %v89, %v90
  %v92 = vrot.slane %v91, 1
  %v93 = vmax.f32 %v91, %v92
  %v94 = vsel %vm72, %v11, -inf
  %v95 = vrot.slane %v94, 4
  %v96 = vmax.f32 %v94, %v95
  %v97 = vrot.slane %v96, 2
  %v98 = vmax.f32 %v96, %v97
  %v99 = vrot.slane %v98, 1
  %v100 = vmax.f32 %v98, %v99
  %v101 = vsel %vm72, %v12, -inf
  %v102 = vrot.slane %v101, 4
  %v103 = vmax.f32 %v101, %v102
  %v104 = vrot.slane %v103, 2
  %v105 = vmax.f32 %v103, %v104
  %v106 = vrot.slane %v105, 1
  %v107 = vmax.f32 %v105, %v106
  %v108 = vsel %vm72, %v13, -inf
  %v109 = vrot.slane %v108, 4
  %v110 = vmax.f32 %v108, %v109
  %v111 = vrot.slane %v110, 2
  %v112 = vmax.f32 %v110, %v111
  %v113 = vrot.slane %v112, 1
  %v114 = vmax.f32 %v112, %v113
  %v115 = vsel %vm72, %v14, -inf
  %v116 = vrot.slane %v115, 4
  %v117 = vmax.f32 %v115, %v116
  %v118 = vrot.slane %v117, 2
  %v119 = vmax.f32 %v117, %v118
  %v120 = vrot.slane %v119, 1
  %v121 = vmax.f32 %v119, %v120
  %v122 = vsel %vm72, %v15, -inf
  %v123 = vrot.slane %v122, 4
  %v124 = vmax.f32 %v122, %v123
  %v125 = vrot.slane %v124, 2
  %v126 = vmax.f32 %v124, %v125
  %v127 = vrot.slane %v126, 1
  %v128 = vmax.f32 %v126, %v127
  %v129 = vsel %vm72, %v16, -inf
  %v130 = vrot.slane %v129, 4
  %v131 = vmax.f32 %v129, %v130
  %v132 = vrot.slane %v131, 2
  %v133 = vmax.f32 %v131, %v132
  %v134 = vrot.slane %v133, 1
  %v135 = vmax.f32 %v133, %v134
  %v136 = vsel %vm72, %v17, -inf
  %v137 = vrot.slane %v136, 4
  %v138 = vmax.f32 %v136, %v137
  %v139 = vrot.slane %v138, 2
  %v140 = vmax.f32 %v138, %v139
  %v141 = vrot.slane %v140, 1
  %v142 = vmax.f32 %v140, %v141
  %v143 = vsel %vm72, %v18, -inf
  %v144 = vrot.slane %v143, 4
  %v145 = vmax.f32 %v143, %v144
  %v146 = vrot.slane %v145, 2
  %v147 = vmax.f32 %v145, %v146
  %v148 = vrot.slane %v147, 1
  %v149 = vmax.f32 %v147, %v148
  %v150 = vsel %vm72, %v19, -inf
  %v151 = vrot.slane %v150, 4
  %v152 = vmax.f32 %v150, %v151
  %v153 = vrot.slane %v152, 2
  %v154 = vmax.f32 %v152, %v153
  %v155 = vrot.slane %v154, 1
  %v156 = vmax.f32 %v154, %v155
  %v157 = vsel %vm72, %v20, -inf
  %v158 = vrot.slane %v157, 4
  %v159 = vmax.f32 %v157, %v158
  %v160 = vrot.slane %v159, 2
  %v161 = vmax.f32 %v159, %v160
  %v162 = vrot.slane %v161, 1
  %v163 = vmax.f32 %v161, %v162
  %v164 = vsel %vm72, %v21, -inf
  %v165 = vrot.slane %v164, 4
  %v166 = vmax.f32 %v164, %v165
  %v167 = vrot.slane %v166, 2
  %v168 = vmax.f32 %v166, %v167
  %v169 = vrot.slane %v168, 1
  %v170 = vmax.f32 %v168, %v169
  %v171 = vsel %vm72, %v22, -inf
  %v172 = vrot.slane %v171, 4
  %v173 = vmax.f32 %v171, %v172
  %v174 = vrot.slane %v173, 2
  %v175 = vmax.f32 %v173, %v174
  %v176 = vrot.slane %v175, 1
  %v177 = vmax.f32 %v175, %v176
  %v178 = vsel %vm72, %v23, -inf
  %v179 = vrot.slane %v178, 4
  %v180 = vmax.f32 %v178, %v179
  %v181 = vrot.slane %v180, 2
  %v182 = vmax.f32 %v180, %v181
  %v183 = vrot.slane %v182, 1
  %v184 = vmax.f32 %v182, %v183
  %v185 = vsel %vm72, %v24, -inf
  %v186 = vrot.slane %v185, 4
  %v187 = vmax.f32 %v185, %v186
  %v188 = vrot.slane %v187, 2
  %v189 = vmax.f32 %v187, %v188
  %v190 = vrot.slane %v189, 1
  %v191 = vmax.f32 %v189, %v190
  %v192 = vsel %vm72, %v25, -inf
  %v193 = vrot.slane %v192, 4
  %v194 = vmax.f32 %v192, %v193
  %v195 = vrot.slane %v194, 2
  %v196 = vmax.f32 %v194, %v195
  %v197 = vrot.slane %v196, 1
  %v198 = vmax.f32 %v196, %v197
  %v199 = vsel %vm72, %v26, -inf
  %v200 = vrot.slane %v199, 4
  %v201 = vmax.f32 %v199, %v200
  %v202 = vrot.slane %v201, 2
  %v203 = vmax.f32 %v201, %v202
  %v204 = vrot.slane %v203, 1
  %v205 = vmax.f32 %v203, %v204
  %v206 = vsel %vm72, %v27, -inf
  %v207 = vrot.slane %v206, 4
  %v208 = vmax.f32 %v206, %v207
  %v209 = vrot.slane %v208, 2
  %v210 = vmax.f32 %v208, %v209
  %v211 = vrot.slane %v210, 1
  %v212 = vmax.f32 %v210, %v211
  %v213 = vsel %vm72, %v28, -inf
  %v214 = vrot.slane %v213, 4
  %v215 = vmax.f32 %v213, %v214
  %v216 = vrot.slane %v215, 2
  %v217 = vmax.f32 %v215, %v216
  %v218 = vrot.slane %v217, 1
  %v219 = vmax.f32 %v217, %v218
  %v220 = vsel %vm72, %v29, -inf
  %v221 = vrot.slane %v220, 4
  %v222 = vmax.f32 %v220, %v221
  %v223 = vrot.slane %v222, 2
  %v224 = vmax.f32 %v222, %v223
  %v225 = vrot.slane %v224, 1
  %v226 = vmax.f32 %v224, %v225
  %v227 = vsel %vm72, %v30, -inf
  %v228 = vrot.slane %v227, 4
  %v229 = vmax.f32 %v227, %v228
  %v230 = vrot.slane %v229, 2
  %v231 = vmax.f32 %v229, %v230
  %v232 = vrot.slane %v231, 1
  %v233 = vmax.f32 %v231, %v232
  %v234 = vsel %vm72, %v31, -inf
  %v235 = vrot.slane %v234, 4
  %v236 = vmax.f32 %v234, %v235
  %v237 = vrot.slane %v236, 2
  %v238 = vmax.f32 %v236, %v237
  %v239 = vrot.slane %v238, 1
  %v240 = vmax.f32 %v238, %v239
  %v241 = vsel %vm72, %v32, -inf
  %v242 = vrot.slane %v241, 4
  %v243 = vmax.f32 %v241, %v242
  %v244 = vrot.slane %v243, 2
  %v245 = vmax.f32 %v243, %v244
  %v246 = vrot.slane %v245, 1
  %v247 = vmax.f32 %v245, %v246
  %v248 = vsel %vm72, %v33, -inf
  %v249 = vrot.slane %v248, 4
  %v250 = vmax.f32 %v248, %v249
  %v251 = vrot.slane %v250, 2
  %v252 = vmax.f32 %v250, %v251
  %v253 = vrot.slane %v252, 1
  %v254 = vmax.f32 %v252, %v253
  %v255 = vsel %vm72, %v34, -inf
  %v256 = vrot.slane %v255, 4
  %v257 = vmax.f32 %v255, %v256
  %v258 = vrot.slane %v257, 2
  %v259 = vmax.f32 %v257, %v258
  %v260 = vrot.slane %v259, 1
  %v261 = vmax.f32 %v259, %v260
  %v262 = vsel %vm72, %v35, -inf
  %v263 = vrot.slane %v262, 4
  %v264 = vmax.f32 %v262, %v263
  %v265 = vrot.slane %v264, 2
  %v266 = vmax.f32 %v264, %v265
  %v267 = vrot.slane %v266, 1
  %v268 = vmax.f32 %v266, %v267
  %v269 = vsel %vm72, %v36, -inf
  %v270 = vrot.slane %v269, 4
  %v271 = vmax.f32 %v269, %v270
  %v272 = vrot.slane %v271, 2
  %v273 = vmax.f32 %v271, %v272
  %v274 = vrot.slane %v273, 1
  %v275 = vmax.f32 %v273, %v274
  %v276 = vsel %vm72, %v37, -inf
  %v277 = vrot.slane %v276, 4
  %v278 = vmax.f32 %v276, %v277
  %v279 = vrot.slane %v278, 2
  %v280 = vmax.f32 %v278, %v279
  %v281 = vrot.slane %v280, 1
  %v282 = vmax.f32 %v280, %v281
  %v283 = vsel %vm72, %v38, -inf
  %v284 = vrot.slane %v283, 4
  %v285 = vmax.f32 %v283, %v284
  %v286 = vrot.slane %v285, 2
  %v287 = vmax.f32 %v285, %v286
  %v288 = vrot.slane %v287, 1
  %v289 = vmax.f32 %v287, %v288
  %v290 = vsel %vm72, %v39, -inf
  %v291 = vrot.slane %v290, 4
  %v292 = vmax.f32 %v290, %v291
  %v293 = vrot.slane %v292, 2
  %v294 = vmax.f32 %v292, %v293
  %v295 = vrot.slane %v294, 1
  %v296 = vmax.f32 %v294, %v295
  %v297 = vsel %vm72, %v40, -inf
  %v298 = vrot.slane %v297, 4
  %v299 = vmax.f32 %v297, %v298
  %v300 = vrot.slane %v299, 2
  %v301 = vmax.f32 %v299, %v300
  %v302 = vrot.slane %v301, 1
  %v303 = vmax.f32 %v301, %v302
  %v304 = vsel %vm72, %v41, -inf
  %v305 = vrot.slane %v304, 4
  %v306 = vmax.f32 %v304, %v305
  %v307 = vrot.slane %v306, 2
  %v308 = vmax.f32 %v306, %v307
  %v309 = vrot.slane %v308, 1
  %v310 = vmax.f32 %v308, %v309
  %v311 = vsel %vm72, %v42, -inf
  %v312 = vrot.slane %v311, 4
  %v313 = vmax.f32 %v311, %v312
  %v314 = vrot.slane %v313, 2
  %v315 = vmax.f32 %v313, %v314
  %v316 = vrot.slane %v315, 1
  %v317 = vmax.f32 %v315, %v316
  %v318 = vsel %vm72, %v43, -inf
  %v319 = vrot.slane %v318, 4
  %v320 = vmax.f32 %v318, %v319
  %v321 = vrot.slane %v320, 2
  %v322 = vmax.f32 %v320, %v321
  %v323 = vrot.slane %v322, 1
  %v324 = vmax.f32 %v322, %v323
  %v325 = vsel %vm72, %v44, -inf
  %v326 = vrot.slane %v325, 4
  %v327 = vmax.f32 %v325, %v326
  %v328 = vrot.slane %v327, 2
  %v329 = vmax.f32 %v327, %v328
  %v330 = vrot.slane %v329, 1
  %v331 = vmax.f32 %v329, %v330
  %v332 = vsel %vm72, %v45, -inf
  %v333 = vrot.slane %v332, 4
  %v334 = vmax.f32 %v332, %v333
  %v335 = vrot.slane %v334, 2
  %v336 = vmax.f32 %v334, %v335
  %v337 = vrot.slane %v336, 1
  %v338 = vmax.f32 %v336, %v337
  %v339 = vsel %vm72, %v46, -inf
  %v340 = vrot.slane %v339, 4
  %v341 = vmax.f32 %v339, %v340
  %v342 = vrot.slane %v341, 2
  %v343 = vmax.f32 %v341, %v342
  %v344 = vrot.slane %v343, 1
  %v345 = vmax.f32 %v343, %v344
  %v346 = vsel %vm72, %v47, -inf
  %v347 = vrot.slane %v346, 4
  %v348 = vmax.f32 %v346, %v347
  %v349 = vrot.slane %v348, 2
  %v350 = vmax.f32 %v348, %v349
  %v351 = vrot.slane %v350, 1
  %v352 = vmax.f32 %v350, %v351
  %v353 = vsel %vm72, %v48, -inf
  %v354 = vrot.slane %v353, 4
  %v355 = vmax.f32 %v353, %v354
  %v356 = vrot.slane %v355, 2
  %v357 = vmax.f32 %v355, %v356
  %v358 = vrot.slane %v357, 1
  %v359 = vmax.f32 %v357, %v358
  %v360 = vsel %vm72, %v49, -inf
  %v361 = vrot.slane %v360, 4
  %v362 = vmax.f32 %v360, %v361
  %v363 = vrot.slane %v362, 2
  %v364 = vmax.f32 %v362, %v363
  %v365 = vrot.slane %v364, 1
  %v366 = vmax.f32 %v364, %v365
  %v367 = vsel %vm72, %v50, -inf
  %v368 = vrot.slane %v367, 4
  %v369 = vmax.f32 %v367, %v368
  %v370 = vrot.slane %v369, 2
  %v371 = vmax.f32 %v369, %v370
  %v372 = vrot.slane %v371, 1
  %v373 = vmax.f32 %v371, %v372
  %v374 = vsel %vm72, %v51, -inf
  %v375 = vrot.slane %v374, 4
  %v376 = vmax.f32 %v374, %v375
  %v377 = vrot.slane %v376, 2
  %v378 = vmax.f32 %v376, %v377
  %v379 = vrot.slane %v378, 1
  %v380 = vmax.f32 %v378, %v379
  %v381 = vsel %vm72, %v52, -inf
  %v382 = vrot.slane %v381, 4
  %v383 = vmax.f32 %v381, %v382
  %v384 = vrot.slane %v383, 2
  %v385 = vmax.f32 %v383, %v384
  %v386 = vrot.slane %v385, 1
  %v387 = vmax.f32 %v385, %v386
  %v388 = vsel %vm72, %v53, -inf
  %v389 = vrot.slane %v388, 4
  %v390 = vmax.f32 %v388, %v389
  %v391 = vrot.slane %v390, 2
  %v392 = vmax.f32 %v390, %v391
  %v393 = vrot.slane %v392, 1
  %v394 = vmax.f32 %v392, %v393
  %v395 = vsel %vm72, %v54, -inf
  %v396 = vrot.slane %v395, 4
  %v397 = vmax.f32 %v395, %v396
  %v398 = vrot.slane %v397, 2
  %v399 = vmax.f32 %v397, %v398
  %v400 = vrot.slane %v399, 1
  %v401 = vmax.f32 %v399, %v400
  %v402 = vsel %vm72, %v55, -inf
  %v403 = vrot.slane %v402, 4
  %v404 = vmax.f32 %v402, %v403
  %v405 = vrot.slane %v404, 2
  %v406 = vmax.f32 %v404, %v405
  %v407 = vrot.slane %v406, 1
  %v408 = vmax.f32 %v406, %v407
  %v409 = vsel %vm72, %v56, -inf
  %v410 = vrot.slane %v409, 4
  %v411 = vmax.f32 %v409, %v410
  %v412 = vrot.slane %v411, 2
  %v413 = vmax.f32 %v411, %v412
  %v414 = vrot.slane %v413, 1
  %v415 = vmax.f32 %v413, %v414
  %v416 = vsel %vm72, %v57, -inf
  %v417 = vrot.slane %v416, 4
  %v418 = vmax.f32 %v416, %v417
  %v419 = vrot.slane %v418, 2
  %v420 = vmax.f32 %v418, %v419
  %v421 = vrot.slane %v420, 1
  %v422 = vmax.f32 %v420, %v421
  %v423 = vsel %vm72, %v58, -inf
  %v424 = vrot.slane %v423, 4
  %v425 = vmax.f32 %v423, %v424
  %v426 = vrot.slane %v425, 2
  %v427 = vmax.f32 %v425, %v426
  %v428 = vrot.slane %v427, 1
  %v429 = vmax.f32 %v427, %v428
  %v430 = vsel %vm72, %v59, -inf
  %v431 = vrot.slane %v430, 4
  %v432 = vmax.f32 %v430, %v431
  %v433 = vrot.slane %v432, 2
  %v434 = vmax.f32 %v432, %v433
  %v435 = vrot.slane %v434, 1
  %v436 = vmax.f32 %v434, %v435
  %v437 = vsel %vm72, %v60, -inf
  %v438 = vrot.slane %v437, 4
  %v439 = vmax.f32 %v437, %v438
  %v440 = vrot.slane %v439, 2
  %v441 = vmax.f32 %v439, %v440
  %v442 = vrot.slane %v441, 1
  %v443 = vmax.f32 %v441, %v442
  %v444 = vsel %vm72, %v61, -inf
  %v445 = vrot.slane %v444, 4
  %v446 = vmax.f32 %v444, %v445
  %v447 = vrot.slane %v446, 2
  %v448 = vmax.f32 %v446, %v447
  %v449 = vrot.slane %v448, 1
  %v450 = vmax.f32 %v448, %v449
  %v451 = vsel %vm72, %v62, -inf
  %v452 = vrot.slane %v451, 4
  %v453 = vmax.f32 %v451, %v452
  %v454 = vrot.slane %v453, 2
  %v455 = vmax.f32 %v453, %v454
  %v456 = vrot.slane %v455, 1
  %v457 = vmax.f32 %v455, %v456
  %v458 = vsel %vm72, %v63, -inf
  %v459 = vrot.slane %v458, 4
  %v460 = vmax.f32 %v458, %v459
  %v461 = vrot.slane %v460, 2
  %v462 = vmax.f32 %v460, %v461
  %v463 = vrot.slane %v462, 1
  %v464 = vmax.f32 %v462, %v463
  %v465 = vsel %vm72, %v64, -inf
  %v466 = vrot.slane %v465, 4
  %v467 = vmax.f32 %v465, %v466
  %v468 = vrot.slane %v467, 2
  %v469 = vmax.f32 %v467, %v468
  %v470 = vrot.slane %v469, 1
  %v471 = vmax.f32 %v469, %v470
  %v472 = vsel %vm72, %v65, -inf
  %v473 = vrot.slane %v472, 4
  %v474 = vmax.f32 %v472, %v473
  %v475 = vrot.slane %v474, 2
  %v476 = vmax.f32 %v474, %v475
  %v477 = vrot.slane %v476, 1
  %v478 = vmax.f32 %v476, %v477
  %v479 = vsel %vm72, %v66, -inf
  %v480 = vrot.slane %v479, 4
  %v481 = vmax.f32 %v479, %v480
  %v482 = vrot.slane %v481, 2
  %v483 = vmax.f32 %v481, %v482
  %v484 = vrot.slane %v483, 1
  %v485 = vmax.f32 %v483, %v484
  %v486 = vsel %vm72, %v67, -inf
  %v487 = vrot.slane %v486, 4
  %v488 = vmax.f32 %v486, %v487
  %v489 = vrot.slane %v488, 2
  %v490 = vmax.f32 %v488, %v489
  %v491 = vrot.slane %v490, 1
  %v492 = vmax.f32 %v490, %v491
  %v493 = vsel %vm72, %v68, -inf
  %v494 = vrot.slane %v493, 4
  %v495 = vmax.f32 %v493, %v494
  %v496 = vrot.slane %v495, 2
  %v497 = vmax.f32 %v495, %v496
  %v498 = vrot.slane %v497, 1
  %v499 = vmax.f32 %v497, %v498
  %v500 = vsel %vm72, %v69, -inf
  %v501 = vrot.slane %v500, 4
  %v502 = vmax.f32 %v500, %v501
  %v503 = vrot.slane %v502, 2
  %v504 = vmax.f32 %v502, %v503
  %v505 = vrot.slane %v504, 1
  %v506 = vmax.f32 %v504, %v505
  %v507 = vsel %vm72, %v70, -inf
  %v508 = vrot.slane %v507, 4
  %v509 = vmax.f32 %v507, %v508
  %v510 = vrot.slane %v509, 2
  %v511 = vmax.f32 %v509, %v510
  %v512 = vrot.slane %v511, 1
  %v513 = vmax.f32 %v511, %v512
  %v514 = vsel %vm72, %v71, -inf
  %v515 = vrot.slane %v514, 4
  %v516 = vmax.f32 %v514, %v515
  %v517 = vrot.slane %v516, 2
  %v518 = vmax.f32 %v516, %v517
  %v519 = vrot.slane %v518, 1
  %v520 = vmax.f32 %v518, %v519
  %vm585 = vcmask 1041409
  %v586 = vsel %vm585, %v86, %v79
  %vm587 = vcmask 1042434
  %v588 = vsel %vm587, %v93, %v586
  %vm589 = vcmask 1043459
  %v590 = vsel %vm589, %v100, %v588
  %vm591 = vcmask 1044484
  %v592 = vsel %vm591, %v107, %v590
  %vm593 = vcmask 1045509
  %v594 = vsel %vm593, %v114, %v592
  %vm595 = vcmask 1046534
  %v596 = vsel %vm595, %v121, %v594
  %vm597 = vcmask 1047559
  %v598 = vsel %vm597, %v128, %v596
  %v599 = vsel %vm585, %v142, %v135
  %v600 = vsel %vm587, %v149, %v599
  %v601 = vsel %vm589, %v156, %v600
  %v602 = vsel %vm591, %v163, %v601
  %v603 = vsel %vm593, %v170, %v602
  %v604 = vsel %vm595, %v177, %v603
  %v605 = vsel %vm597, %v184, %v604
  %v606 = vsel %vm585, %v198, %v191
  %v607 = vsel %vm587, %v205, %v606
  %v608 = vsel %vm589, %v212, %v607
  %v609 = vsel %vm591, %v219, %v608
  %v610 = vsel %vm593, %v226, %v609
  %v611 = vsel %vm595, %v233, %v610
  %v612 = vsel %vm597, %v240, %v611
  %v613 = vsel %vm585, %v254, %v247
  %v614 = vsel %vm587, %v261, %v613
  %v615 = vsel %vm589, %v268, %v614
  %v616 = vsel %vm591, %v275, %v615
  %v617 = vsel %vm593, %v282, %v616
  %v618 = vsel %vm595, %v289, %v617
  %v619 = vsel %vm597, %v296, %v618
  %v620 = vsel %vm585, %v310, %v303
  %v621 = vsel %vm587, %v317, %v620
  %v622 = vsel %vm589, %v324, %v621
  %v623 = vsel %vm591, %v331, %v622
  %v624 = vsel %vm593, %v338, %v623
  %v625 = vsel %vm595, %v345, %v624
  %v626 = vsel %vm597, %v352, %v625
  %v627 = vsel %vm585, %v366, %v359
  %v628 = vsel %vm587, %v373, %v627
  %v629 = vsel %vm589, %v380, %v628
  %v630 = vsel %vm591, %v387, %v629
  %v631 = vsel %vm593, %v394, %v630
  %v632 = vsel %vm595, %v401, %v631
  %v633 = vsel %vm597, %v408, %v632
  %v634 = vsel %vm585, %v422, %v415
  %v635 = vsel %vm587, %v429, %v634
  %v636 = vsel %vm589, %v436, %v635
  %v637 = vsel %vm591, %v443, %v636
  %v638 = vsel %vm593, %v450, %v637
  %v639 = vsel %vm595, %v457, %v638
  %v640 = vsel %vm597, %v464, %v639
  %v641 = vsel %vm585, %v478, %v471
  %v642 = vsel %vm587, %v485, %v641
  %v643 = vsel %vm589, %v492, %v642
  %v644 = vsel %vm591, %v499, %v643
  %v645 = vsel %vm593, %v506, %v644
  %v646 = vsel %vm595, %v513, %v645
  %v647 = vsel %vm597, %v520, %v646
  %656 = vst.msk [vmem:[%s1] sm:$0xff] %vm72, %v598
  %657 = vst.msk [vmem:[%s1 + $0x8] sm:$0xff] %vm72, %v605
  %658 = vst.msk [vmem:[%s1 + $0x10] sm:$0xff] %vm72, %v612
  %659 = vst.msk [vmem:[%s1 + $0x18] sm:$0xff] %vm72, %v619
  %660 = vst.msk [vmem:[%s1 + $0x20] sm:$0xff] %vm72, %v626
  %661 = vst.msk [vmem:[%s1 + $0x28] sm:$0xff] %vm72, %v633
  %662 = vst.msk [vmem:[%s1 + $0x30] sm:$0xff] %vm72, %v640
  %663 = vst.msk [vmem:[%s1 + $0x38] sm:$0xff] %vm72, %v647
  // Predicated region
  $region6: #{_lambda_.24} parent=0 // pred_check
    _
  $region7: #{_lambda_.24} parent=0 // pred_check_branch
    %665 = sbr.rel (0) target = $region9
  $region8: #{_lambda_.24} parent=0 // pred_region
    _
  $region9: #{_lambda_.24} parent=0 // pred_fallthru
    _
  // Predicated region
  $region10: #{_lambda_.24} parent=0 // pred_check
    _
  $region11: #{_lambda_.24} parent=0 // pred_check_branch
    %667 = sbr.rel (0) target = $region13
  $region12: #{_lambda_.24} parent=0 // pred_region
    _
  $region13: #{_lambda_.24} parent=0 // pred_fallthru
    _

// kernel: _lambda_.25
$region0: #{_lambda_.25}
  #allocation0 [shape = 'u32[]', space=smem, size = 0x4, offset = 0x4, fixed_abs, tag = 'smem constant byte address 0x4 - core index']
  #allocation1 [shape = 'u32[72,128]{1,0:T(1,128)}', space=vmem, size = 0x9000, scoped, tag = 'internal scratch']
  %s0 = inlined_call_operand.vmem [shape: bf16[512,18], index: 0, kind: input, shape index: {}]
  %s1 = inlined_call_operand.vmem [shape: bf16[18,11], index: 1, kind: input, shape index: {}]
  %s2 = inlined_call_operand.vmem [shape: f32[1,11], index: 2, kind: input, shape index: {}]
  %s3 = inlined_call_operand.vmem [shape: f32[512,11], index: 3, kind: output, shape index: {}]
  %s4 = sld [smem:[#allocation0]]
  $region45: #{_lambda_.25} parent=0
    _
  %s6 = ssub.s32 1, %s4
  %s7 = scalar_select 0, %s6, %s4
  loop: start=0, step=1, limit=4
  $region2: #{_lambda_.25} parent=0 // loop_pre_header
    _
  $region3: #{_lambda_.25} parent=0 // loop_header
    %s9 = sphi 0, %s13
    %p10 = scmp.ge.s32.totalorder %s9, 4
    %s19 = sphi 0, %s21
    %s22 = sphi 0, %s19
    %s23 = sphi 0, %s22
    %s39 = sphi 0, %s23
    %s43 = sphi 0, %s43
    %s45 = sphi 0, %s43
    %s46 = sphi 0, %s45
    %s60 = sphi 0, %s46
    %s64 = sphi 0, %s64
    %s66 = sphi 0, %s64
    %s67 = sphi 0, %s66
    %s81 = sphi 0, %s67
    %s87 = sphi 0, %s89
    %s90 = sphi 0, %s87
    %s91 = sphi 0, %s90
    %s107 = sphi 0, %s91
  $region4: #{_lambda_.25} parent=0 // loop_header_branch
    %12 = sbr.rel (%p10) target = $region8
  $region5: #{_lambda_.25} parent=0 // loop_body
    %s14 = ssub.s32 %s9, 1
    %s15 = ssub.s32 %s9, 2
    %s16 = sadd.s32 %s9, 1
    %s17 = ssub.s32 %s9, %s16
    %p18 = scmp.eq.s32.totalorder %s17, 0
    %s20 = sadd.s32 %s19, 1
    %s21 = scalar_select %p18, %s19, %s20
    %p24 = pneg %p18
    %p25 = scmp.eq.s32.totalorder %s9, 1
    %p26 = por %p24, %p25
    %p27 = scmp.ne.s32.totalorder %s19, %s22
    %p28 = scmp.eq.s32.totalorder %s9, 0
    %p29 = por %p27, %p28
    %p30 = scmp.ne.s32.totalorder %s19, %s22
    %p31 = scmp.eq.s32.totalorder %s14, 1
    %p32 = por %p30, %p31
    %p33 = scmp.ne.s32.totalorder %s22, %s23
    %p34 = scmp.eq.s32.totalorder %s14, 0
    %p35 = por %p33, %p34
    %p36 = scmp.ne.s32.totalorder %s22, %s23
    %p37 = scmp.eq.s32.totalorder %s15, 1
    %p38 = por %p36, %p37
    %p40 = scmp.ne.s32.totalorder %s23, %s39
    %p41 = scmp.eq.s32.totalorder %s15, 0
    %p42 = por %p40, %p41
    %s44 = sadd.s32 %s43, 1
    %p47 = scmp.eq.s32.totalorder %s9, 1
    %p48 = scmp.ne.s32.totalorder %s43, %s45
    %p49 = scmp.eq.s32.totalorder %s9, 0
    %p50 = por %p48, %p49
    %p51 = scmp.ne.s32.totalorder %s43, %s45
    %p52 = scmp.eq.s32.totalorder %s14, 1
    %p53 = por %p51, %p52
    %p54 = scmp.ne.s32.totalorder %s45, %s46
    %p55 = scmp.eq.s32.totalorder %s14, 0
    %p56 = por %p54, %p55
    %p57 = scmp.ne.s32.totalorder %s45, %s46
    %p58 = scmp.eq.s32.totalorder %s15, 1
    %p59 = por %p57, %p58
    %p61 = scmp.ne.s32.totalorder %s46, %s60
    %p62 = scmp.eq.s32.totalorder %s15, 0
    %p63 = por %p61, %p62
    %s65 = sadd.s32 %s64, 1
    %p68 = scmp.eq.s32.totalorder %s9, 1
    %p69 = scmp.ne.s32.totalorder %s64, %s66
    %p70 = scmp.eq.s32.totalorder %s9, 0
    %p71 = por %p69, %p70
    %p72 = scmp.ne.s32.totalorder %s64, %s66
    %p73 = scmp.eq.s32.totalorder %s14, 1
    %p74 = por %p72, %p73
    %p75 = scmp.ne.s32.totalorder %s66, %s67
    %p76 = scmp.eq.s32.totalorder %s14, 0
    %p77 = por %p75, %p76
    %p78 = scmp.ne.s32.totalorder %s66, %s67
    %p79 = scmp.eq.s32.totalorder %s15, 1
    %p80 = por %p78, %p79
    %p82 = scmp.ne.s32.totalorder %s67, %s81
    %p83 = scmp.eq.s32.totalorder %s15, 0
    %p84 = por %p82, %p83
    %s85 = ssub.s32 %s9, %s16
    %p86 = scmp.eq.s32.totalorder %s85, 0
    %s88 = sadd.s32 %s87, 1
    %s89 = scalar_select %p86, %s87, %s88
    %p92 = pneg %p86
    %p93 = scmp.eq.s32.totalorder %s9, 1
    %p94 = por %p92, %p93
    %p95 = scmp.ne.s32.totalorder %s87, %s90
    %p96 = scmp.eq.s32.totalorder %s9, 0
    %p97 = por %p95, %p96
    %p98 = scmp.ne.s32.totalorder %s87, %s90
    %p99 = scmp.eq.s32.totalorder %s14, 1
    %p100 = por %p98, %p99
    %p101 = scmp.ne.s32.totalorder %s90, %s91
    %p102 = scmp.eq.s32.totalorder %s14, 0
    %p103 = por %p101, %p102
    %p104 = scmp.ne.s32.totalorder %s90, %s91
    %p105 = scmp.eq.s32.totalorder %s15, 1
    %p106 = por %p104, %p105
    %p108 = scmp.ne.s32.totalorder %s91, %s107
    %p109 = scmp.eq.s32.totalorder %s15, 0
    %p110 = por %p108, %p109
    %p111 = scmp.le.s32.totalorder 1, %s9
    %p112 = scmp.lt.s32.totalorder %s9, 3
    %p113 = pnand %p111, %p112
    %p114 = pneg %p113
    // Predicated region
    $region9: #{_lambda_.25} parent=5 // pred_check
      _
    $region10: #{_lambda_.25} parent=5 // pred_check_branch
      %116 = sbr.rel (%p113) target = $region12
    $region11: #{_lambda_.25} parent=5 // pred_region
      %s117 = ssub.s32 %s9, 1
      // Predicated region
      $region13: #{_lambda_.25} parent=11 // pred_check
        %p118 = pneg %p56
      $region14: #{_lambda_.25} parent=11 // pred_check_branch
        %120 = sbr.rel (%p118) target = $region16
      $region15: #{_lambda_.25} parent=11 // pred_region
        _
      $region16: #{_lambda_.25} parent=11 // pred_fallthru
        _
      // Predicated region
      $region17: #{_lambda_.25} parent=11 // pred_check
        %p121 = pneg %p77
      $region18: #{_lambda_.25} parent=11 // pred_check_branch
        %123 = sbr.rel (%p121) target = $region20
      $region19: #{_lambda_.25} parent=11 // pred_region
        _
      $region20: #{_lambda_.25} parent=11 // pred_fallthru
        _
    $region12: #{_lambda_.25} parent=5 // pred_fallthru
      _
    %p124 = scmp.lt.s32.totalorder %s9, 2
    // Predicated region
    $region21: #{_lambda_.25} parent=5 // pred_check
      %p125 = pneg %p124
    $region22: #{_lambda_.25} parent=5 // pred_check_branch
      %127 = sbr.rel (%p125) target = $region24
    $region23: #{_lambda_.25} parent=5 // pred_region
      // Predicated region
      $region25: #{_lambda_.25} parent=23 // pred_check
        %p128 = pneg %p29
      $region26: #{_lambda_.25} parent=23 // pred_check_branch
        %130 = sbr.rel (%p128) target = $region28
      $region27: #{_lambda_.25} parent=23 // pred_region
        %s131 = smul.u32 32, %s9
        %p132 = scmp.lt.s32.totalorder %s131, 63
        %s133 = scalar_select %p132, %s131, 63
        %s134 = smul.addr %s133, 4
        %s135 = scalar_lea.vmem %s0, %s134
        %s136 = smul.u32 32, %s9
      $region28: #{_lambda_.25} parent=23 // pred_fallthru
        _
    $region24: #{_lambda_.25} parent=5 // pred_fallthru
      _
    %p137 = scmp.le.s32.totalorder 1, %s9
    %p138 = scmp.lt.s32.totalorder %s9, 3
    %p139 = pnand %p137, %p138
    %p140 = pneg %p139
    // Predicated region
    $region29: #{_lambda_.25} parent=5 // pred_check
      _
    $region30: #{_lambda_.25} parent=5 // pred_check_branch
      %142 = sbr.rel (%p139) target = $region32
    $region31: #{_lambda_.25} parent=5 // pred_region
      %s143 = ssub.s32 %s9, 1
      %s144 = smul.u32 32, %s14
      %p145 = scmp.lt.s32.totalorder %s144, 63
      %s146 = scalar_select %p145, %s144, 63
      %s147 = smul.addr %s146, 4
      %s148 = scalar_lea.vmem %s0, %s147
      %p149 = pneg %p35
      %p150 = pneg %p32
      %p151 = pneg %p56
      %p152 = pneg %p53
      %p153 = pneg %p77
      %p154 = pneg %p74
      %p155 = pneg %p103
      %p156 = pneg %p100
      %s157 = smul.u32 32, %s14
      %p158 = scmp.lt.s32.totalorder %s157, 63
      %s159 = scalar_select %p158, %s157, 63
      %s160 = smul.addr %s159, 8
      %s161 = scalar_lea.vmem %s3, %s160
      %s162 = smul.u32 32, %s14
      %p163 = scmp.lt.s32.totalorder %s162, 63
      %s164 = scalar_select %p163, %s162, 63
      %s165 = smul.addr %s164, 4
      %s166 = scalar_lea.vmem %s0, %s165
      %s167 = smul.u32 32, %s14
      %s168 = smul.u32 32, %s14
      %p169 = scmp.lt.s32.totalorder %s168, 63
      %s170 = scalar_select %p169, %s168, 63
      %s171 = smul.addr %s170, 8
      %s172 = scalar_lea.vmem %s3, %s171
      %s173 = smul.u32 32, %s14
      %v175 = vld [vmem:[%s166] sm:$0xf]
      %v176 = vld [vmem:[%s166 + $0x4] sm:$0xf]
      %v177 = vld [vmem:[%s166 + $0x8] sm:$0xf]
      %v178 = vld [vmem:[%s166 + $0xc] sm:$0xf]
      %v179 = vld [vmem:[%s166 + $0x10] sm:$0xf]
      %v180 = vld [vmem:[%s166 + $0x14] sm:$0xf]
      %v181 = vld [vmem:[%s166 + $0x18] sm:$0xf]
      %v182 = vld [vmem:[%s166 + $0x1c] sm:$0xf]
      %v183 = vld [vmem:[%s166 + $0x20] sm:$0xf]
      %v184 = vld [vmem:[%s166 + $0x24] sm:$0xf]
      %v185 = vld [vmem:[%s166 + $0x28] sm:$0xf]
      %v186 = vld [vmem:[%s166 + $0x2c] sm:$0xf]
      %v187 = vld [vmem:[%s166 + $0x30] sm:$0xf]
      %v188 = vld [vmem:[%s166 + $0x34] sm:$0xf]
      %v189 = vld [vmem:[%s166 + $0x38] sm:$0xf]
      %v190 = vld [vmem:[%s166 + $0x3c] sm:$0xf]
      %v191 = vld [vmem:[%s166 + $0x40] sm:$0xf]
      %v192 = vld [vmem:[%s166 + $0x44] sm:$0xf]
      %v193 = vld [vmem:[%s166 + $0x48] sm:$0xf]
      %v194 = vld [vmem:[%s166 + $0x4c] sm:$0xf]
      %v195 = vld [vmem:[%s166 + $0x50] sm:$0xf]
      %v196 = vld [vmem:[%s166 + $0x54] sm:$0xf]
      %v197 = vld [vmem:[%s166 + $0x58] sm:$0xf]
      %v198 = vld [vmem:[%s166 + $0x5c] sm:$0xf]
      %v199 = vld [vmem:[%s166 + $0x60] sm:$0xf]
      %v200 = vld [vmem:[%s166 + $0x64] sm:$0xf]
      %v201 = vld [vmem:[%s166 + $0x68] sm:$0xf]
      %v202 = vld [vmem:[%s166 + $0x6c] sm:$0xf]
      %v203 = vld [vmem:[%s166 + $0x70] sm:$0xf]
      %v204 = vld [vmem:[%s166 + $0x74] sm:$0xf]
      %v205 = vld [vmem:[%s166 + $0x78] sm:$0xf]
      %v206 = vld [vmem:[%s166 + $0x7c] sm:$0xf]
      %v207 = vld [vmem:[%s1] sm:$0xf]
      %v208 = vld [vmem:[%s1 + $0x4] sm:$0xf]
      %v209 = vld [vmem:[%s1 + $0x8] sm:$0x1]
      %v210 = vld [vmem:[%s2] sm:$0x1]
      %v212 = vperm.slane %v210, 0
      %v246 = vunpack.c.l.b16 %v175
      %v247 = vunpack.c.l.b16 %v176
      %v248 = vunpack.c.l.b16 %v177
      %v249 = vunpack.c.l.b16 %v178
      %v250 = vunpack.c.l.b16 %v179
      %v251 = vunpack.c.l.b16 %v180
      %v252 = vunpack.c.l.b16 %v181
      %v253 = vunpack.c.l.b16 %v182
      %v254 = vunpack.c.l.b16 %v183
      %v255 = vunpack.c.l.b16 %v184
      %v256 = vunpack.c.l.b16 %v185
      %v257 = vunpack.c.l.b16 %v186
      %v258 = vunpack.c.l.b16 %v187
      %v259 = vunpack.c.l.b16 %v188
      %v260 = vunpack.c.l.b16 %v189
      %v261 = vunpack.c.l.b16 %v190
      %v262 = vunpack.c.l.b16 %v191
      %v263 = vunpack.c.l.b16 %v192
      %v264 = vunpack.c.l.b16 %v193
      %v265 = vunpack.c.l.b16 %v194
      %v266 = vunpack.c.l.b16 %v195
      %v267 = vunpack.c.l.b16 %v196
      %v268 = vunpack.c.l.b16 %v197
      %v269 = vunpack.c.l.b16 %v198
      %v270 = vunpack.c.l.b16 %v199
      %v271 = vunpack.c.l.b16 %v200
      %v272 = vunpack.c.l.b16 %v201
      %v273 = vunpack.c.l.b16 %v202
      %v274 = vunpack.c.l.b16 %v203
      %v275 = vunpack.c.l.b16 %v204
      %v276 = vunpack.c.l.b16 %v205
      %v277 = vunpack.c.l.b16 %v206
      %v278 = vpack.c.b16 %v247, %v246
      %v279 = vpack.c.b16 %v249, %v248
      %v280 = vpack.c.b16 %v251, %v250
      %v281 = vpack.c.b16 %v253, %v252
      %v282 = vpack.c.b16 %v255, %v254
      %v283 = vpack.c.b16 %v257, %v256
      %v284 = vpack.c.b16 %v259, %v258
      %v285 = vpack.c.b16 %v261, %v260
      %v286 = vpack.c.b16 %v263, %v262
      %v287 = vpack.c.b16 %v265, %v264
      %v288 = vpack.c.b16 %v267, %v266
      %v289 = vpack.c.b16 %v269, %v268
      %v290 = vpack.c.b16 %v271, %v270
      %v291 = vpack.c.b16 %v273, %v272
      %v292 = vpack.c.b16 %v275, %v274
      %v293 = vpack.c.b16 %v277, %v276
      %v297 = vunpack.c.l.b16 %v207
      %v298 = vunpack.c.l.b16 %v208
      %v299 = vunpack.c.l.b16 %v209
      %v300 = vpack.c.b16 %v298, %v297
      %v301 = vpack.c.b16 %v299, %v299
      %vm303 = vcmask 146432
      %v305 = vsel %vm303, %v278, 0
      %v308 = vsel %vm303, %v279, 0
      %v311 = vsel %vm303, %v280, 0
      %v314 = vsel %vm303, %v281, 0
      %v317 = vsel %vm303, %v282, 0
      %v320 = vsel %vm303, %v283, 0
      %v323 = vsel %vm303, %v284, 0
      %v326 = vsel %vm303, %v285, 0
      %v329 = vsel %vm303, %v286, 0
      %v332 = vsel %vm303, %v287, 0
      %v335 = vsel %vm303, %v288, 0
      %v338 = vsel %vm303, %v289, 0
      %v341 = vsel %vm303, %v290, 0
      %v344 = vsel %vm303, %v291, 0
      %v347 = vsel %vm303, %v292, 0
      %v350 = vsel %vm303, %v293, 0
      %vm352 = vcmask 1040384
      %v354 = vsel %vm352, %v301, 0
      %356 = vmatpush.bf16.msra.mxu0 0
      %357 = vmatpush.bf16.msra.mxu0 0
      %358 = vmatpush.bf16.msra.mxu0 0
      %359 = vmatpush.bf16.msra.mxu0 0
      %360 = vmatpush.bf16.msra.mxu0 0
      %361 = vmatpush.bf16.msra.mxu0 0
      %362 = vmatpush.bf16.msra.mxu0 %v354
      %363 = vmatpush.bf16.msra.mxu0 %v300
      %364 = vmatmul.bf16.gmra.mxu0 %v305
      %v365 = vpop.f32.mrf.mxu0
      %v366 = vadd.f32 %v212, %v365
      %v367 = vpop.f32.mrf.mxu0
      %v368 = vadd.f32 %v212, %v367
      %369 = vmatmul.bf16.gmra.mxu0 %v308
      %v370 = vpop.f32.mrf.mxu0
      %v371 = vadd.f32 %v212, %v370
      %v372 = vpop.f32.mrf.mxu0
      %v373 = vadd.f32 %v212, %v372
      %374 = vmatmul.bf16.gmra.mxu0 %v311
      %v375 = vpop.f32.mrf.mxu0
      %v376 = vadd.f32 %v212, %v375
      %v377 = vpop.f32.mrf.mxu0
      %v378 = vadd.f32 %v212, %v377
      %379 = vmatmul.bf16.gmra.mxu0 %v314
      %v380 = vpop.f32.mrf.mxu0
      %v381 = vadd.f32 %v212, %v380
      %v382 = vpop.f32.mrf.mxu0
      %v383 = vadd.f32 %v212, %v382
      %384 = vmatmul.bf16.gmra.mxu0 %v317
      %v385 = vpop.f32.mrf.mxu0
      %v386 = vadd.f32 %v212, %v385
      %v387 = vpop.f32.mrf.mxu0
      %v388 = vadd.f32 %v212, %v387
      %389 = vmatmul.bf16.gmra.mxu0 %v320
      %v390 = vpop.f32.mrf.mxu0
      %v391 = vadd.f32 %v212, %v390
      %v392 = vpop.f32.mrf.mxu0
      %v393 = vadd.f32 %v212, %v392
      %394 = vmatmul.bf16.gmra.mxu0 %v323
      %v395 = vpop.f32.mrf.mxu0
      %v396 = vadd.f32 %v212, %v395
      %v397 = vpop.f32.mrf.mxu0
      %v398 = vadd.f32 %v212, %v397
      %399 = vmatmul.bf16.gmra.mxu0 %v326
      %v400 = vpop.f32.mrf.mxu0
      %v401 = vadd.f32 %v212, %v400
      %v402 = vpop.f32.mrf.mxu0
      %v403 = vadd.f32 %v212, %v402
      %404 = vmatmul.bf16.gmra.mxu0 %v329
      %v405 = vpop.f32.mrf.mxu0
      %v406 = vadd.f32 %v212, %v405
      %v407 = vpop.f32.mrf.mxu0
      %v408 = vadd.f32 %v212, %v407
      %409 = vmatmul.bf16.gmra.mxu0 %v332
      %v410 = vpop.f32.mrf.mxu0
      %v411 = vadd.f32 %v212, %v410
      %v412 = vpop.f32.mrf.mxu0
      %v413 = vadd.f32 %v212, %v412
      %414 = vmatmul.bf16.gmra.mxu0 %v335
      %v415 = vpop.f32.mrf.mxu0
      %v416 = vadd.f32 %v212, %v415
      %v417 = vpop.f32.mrf.mxu0
      %v418 = vadd.f32 %v212, %v417
      %419 = vmatmul.bf16.gmra.mxu0 %v338
      %v420 = vpop.f32.mrf.mxu0
      %v421 = vadd.f32 %v212, %v420
      %v422 = vpop.f32.mrf.mxu0
      %v423 = vadd.f32 %v212, %v422
      %424 = vmatmul.bf16.gmra.mxu0 %v341
      %v425 = vpop.f32.mrf.mxu0
      %v426 = vadd.f32 %v212, %v425
      %v427 = vpop.f32.mrf.mxu0
      %v428 = vadd.f32 %v212, %v427
      %429 = vmatmul.bf16.gmra.mxu0 %v344
      %v430 = vpop.f32.mrf.mxu0
      %v431 = vadd.f32 %v212, %v430
      %v432 = vpop.f32.mrf.mxu0
      %v433 = vadd.f32 %v212, %v432
      %434 = vmatmul.bf16.gmra.mxu0 %v347
      %v435 = vpop.f32.mrf.mxu0
      %v436 = vadd.f32 %v212, %v435
      %v437 = vpop.f32.mrf.mxu0
      %v438 = vadd.f32 %v212, %v437
      %439 = vmatmul.bf16.gmra.mxu0 %v350
      %v440 = vpop.f32.mrf.mxu0
      %v441 = vadd.f32 %v212, %v440
      %v442 = vpop.f32.mrf.mxu0
      %v443 = vadd.f32 %v212, %v442
      %444 = vdwg.mxu0
      %vm445 = vcmask 89088
      %446 = vst.msk [vmem:[%s172] sm:$0xff] %vm445, %v366
      %447 = vst.msk [vmem:[%s172 + $0x8] sm:$0xff] %vm445, %v368
      %448 = vst.msk [vmem:[%s172 + $0x10] sm:$0xff] %vm445, %v371
      %449 = vst.msk [vmem:[%s172 + $0x18] sm:$0xff] %vm445, %v373
      %450 = vst.msk [vmem:[%s172 + $0x20] sm:$0xff] %vm445, %v376
      %451 = vst.msk [vmem:[%s172 + $0x28] sm:$0xff] %vm445, %v378
      %452 = vst.msk [vmem:[%s172 + $0x30] sm:$0xff] %vm445, %v381
      %453 = vst.msk [vmem:[%s172 + $0x38] sm:$0xff] %vm445, %v383
      %454 = vst.msk [vmem:[%s172 + $0x40] sm:$0xff] %vm445, %v386
      %455 = vst.msk [vmem:[%s172 + $0x48] sm:$0xff] %vm445, %v388
      %456 = vst.msk [vmem:[%s172 + $0x50] sm:$0xff] %vm445, %v391
      %457 = vst.msk [vmem:[%s172 + $0x58] sm:$0xff] %vm445, %v393
      %458 = vst.msk [vmem:[%s172 + $0x60] sm:$0xff] %vm445, %v396
      %459 = vst.msk [vmem:[%s172 + $0x68] sm:$0xff] %vm445, %v398
      %460 = vst.msk [vmem:[%s172 + $0x70] sm:$0xff] %vm445, %v401
      %461 = vst.msk [vmem:[%s172 + $0x78] sm:$0xff] %vm445, %v403
      %462 = vst.msk [vmem:[%s172 + $0x80] sm:$0xff] %vm445, %v406
      %463 = vst.msk [vmem:[%s172 + $0x88] sm:$0xff] %vm445, %v408
      %464 = vst.msk [vmem:[%s172 + $0x90] sm:$0xff] %vm445, %v411
      %465 = vst.msk [vmem:[%s172 + $0x98] sm:$0xff] %vm445, %v413
      %466 = vst.msk [vmem:[%s172 + $0xa0] sm:$0xff] %vm445, %v416
      %467 = vst.msk [vmem:[%s172 + $0xa8] sm:$0xff] %vm445, %v418
      %468 = vst.msk [vmem:[%s172 + $0xb0] sm:$0xff] %vm445, %v421
      %469 = vst.msk [vmem:[%s172 + $0xb8] sm:$0xff] %vm445, %v423
      %470 = vst.msk [vmem:[%s172 + $0xc0] sm:$0xff] %vm445, %v426
      %471 = vst.msk [vmem:[%s172 + $0xc8] sm:$0xff] %vm445, %v428
      %472 = vst.msk [vmem:[%s172 + $0xd0] sm:$0xff] %vm445, %v431
      %473 = vst.msk [vmem:[%s172 + $0xd8] sm:$0xff] %vm445, %v433
      %474 = vst.msk [vmem:[%s172 + $0xe0] sm:$0xff] %vm445, %v436
      %475 = vst.msk [vmem:[%s172 + $0xe8] sm:$0xff] %vm445, %v438
      %476 = vst.msk [vmem:[%s172 + $0xf0] sm:$0xff] %vm445, %v441
      %477 = vst.msk [vmem:[%s172 + $0xf8] sm:$0xff] %vm445, %v443
      %s478 = smul.u32 32, %s14
      %p479 = scmp.lt.s32.totalorder %s478, 63
      %s480 = scalar_select %p479, %s478, 63
      %s481 = smul.addr %s480, 8
      %s482 = scalar_lea.vmem %s3, %s481
      // Predicated region
      $region33: #{_lambda_.25} parent=31 // pred_check
        %p483 = pneg %p100
      $region34: #{_lambda_.25} parent=31 // pred_check_branch
        %485 = sbr.rel (%p483) target = $region36
      $region35: #{_lambda_.25} parent=31 // pred_region
        %s486 = smul.u32 32, %s14
      $region36: #{_lambda_.25} parent=31 // pred_fallthru
        _
    $region32: #{_lambda_.25} parent=5 // pred_fallthru
      _
    %p487 = scmp.le.s32.totalorder 2, %s9
    // Predicated region
    $region37: #{_lambda_.25} parent=5 // pred_check
      %p488 = pneg %p487
    $region38: #{_lambda_.25} parent=5 // pred_check_branch
      %490 = sbr.rel (%p488) target = $region40
    $region39: #{_lambda_.25} parent=5 // pred_region
      %s491 = ssub.s32 %s9, 2
      // Predicated region
      $region41: #{_lambda_.25} parent=39 // pred_check
        %p492 = pneg %p106
      $region42: #{_lambda_.25} parent=39 // pred_check_branch
        %494 = sbr.rel (%p492) target = $region44
      $region43: #{_lambda_.25} parent=39 // pred_region
        %s495 = smul.u32 32, %s15
        %p496 = scmp.lt.s32.totalorder %s495, 63
        %s497 = scalar_select %p496, %s495, 63
        %s498 = smul.addr %s497, 8
        %s499 = scalar_lea.vmem %s3, %s498
      $region44: #{_lambda_.25} parent=39 // pred_fallthru
        _
    $region40: #{_lambda_.25} parent=5 // pred_fallthru
      _
  $region6: #{_lambda_.25} parent=0 // loop_footer
    %s13 = sadd.s32 1, %s9
  $region7: #{_lambda_.25} parent=0 // loop_footer_branch
    %8 = sbr.rel target = $region3
  $region8: #{_lambda_.25} parent=0 // loop_exit
    _

// kernel: _lambda_.26
$region0: #{_lambda_.26}
  #allocation0 [shape = 'u32[]', space=smem, size = 0x4, offset = 0x4, fixed_abs, tag = 'smem constant byte address 0x4 - core index']
  #allocation1 [shape = 'u32[72,128]{1,0:T(1,128)}', space=vmem, size = 0x9000, scoped, tag = 'internal scratch']
  %s0 = inlined_call_operand.vmem [shape: bf16[512,11], index: 0, kind: input, shape index: {}]
  %s1 = inlined_call_operand.vmem [shape: bf16[11,8], index: 1, kind: input, shape index: {}]
  %s2 = inlined_call_operand.vmem [shape: f32[1,8], index: 2, kind: input, shape index: {}]
  %s3 = inlined_call_operand.vmem [shape: f32[512,8], index: 3, kind: output, shape index: {}]
  %s4 = sld [smem:[#allocation0]]
  $region45: #{_lambda_.26} parent=0
    _
  %s6 = ssub.s32 1, %s4
  %s7 = scalar_select 0, %s6, %s4
  loop: start=0, step=1, limit=4
  $region2: #{_lambda_.26} parent=0 // loop_pre_header
    _
  $region3: #{_lambda_.26} parent=0 // loop_header
    %s9 = sphi 0, %s13
    %p10 = scmp.ge.s32.totalorder %s9, 4
    %s19 = sphi 0, %s21
    %s22 = sphi 0, %s19
    %s23 = sphi 0, %s22
    %s39 = sphi 0, %s23
    %s43 = sphi 0, %s43
    %s45 = sphi 0, %s43
    %s46 = sphi 0, %s45
    %s60 = sphi 0, %s46
    %s64 = sphi 0, %s64
    %s66 = sphi 0, %s64
    %s67 = sphi 0, %s66
    %s81 = sphi 0, %s67
    %s87 = sphi 0, %s89
    %s90 = sphi 0, %s87
    %s91 = sphi 0, %s90
    %s107 = sphi 0, %s91
  $region4: #{_lambda_.26} parent=0 // loop_header_branch
    %12 = sbr.rel (%p10) target = $region8
  $region5: #{_lambda_.26} parent=0 // loop_body
    %s14 = ssub.s32 %s9, 1
    %s15 = ssub.s32 %s9, 2
    %s16 = sadd.s32 %s9, 1
    %s17 = ssub.s32 %s9, %s16
    %p18 = scmp.eq.s32.totalorder %s17, 0
    %s20 = sadd.s32 %s19, 1
    %s21 = scalar_select %p18, %s19, %s20
    %p24 = pneg %p18
    %p25 = scmp.eq.s32.totalorder %s9, 1
    %p26 = por %p24, %p25
    %p27 = scmp.ne.s32.totalorder %s19, %s22
    %p28 = scmp.eq.s32.totalorder %s9, 0
    %p29 = por %p27, %p28
    %p30 = scmp.ne.s32.totalorder %s19, %s22
    %p31 = scmp.eq.s32.totalorder %s14, 1
    %p32 = por %p30, %p31
    %p33 = scmp.ne.s32.totalorder %s22, %s23
    %p34 = scmp.eq.s32.totalorder %s14, 0
    %p35 = por %p33, %p34
    %p36 = scmp.ne.s32.totalorder %s22, %s23
    %p37 = scmp.eq.s32.totalorder %s15, 1
    %p38 = por %p36, %p37
    %p40 = scmp.ne.s32.totalorder %s23, %s39
    %p41 = scmp.eq.s32.totalorder %s15, 0
    %p42 = por %p40, %p41
    %s44 = sadd.s32 %s43, 1
    %p47 = scmp.eq.s32.totalorder %s9, 1
    %p48 = scmp.ne.s32.totalorder %s43, %s45
    %p49 = scmp.eq.s32.totalorder %s9, 0
    %p50 = por %p48, %p49
    %p51 = scmp.ne.s32.totalorder %s43, %s45
    %p52 = scmp.eq.s32.totalorder %s14, 1
    %p53 = por %p51, %p52
    %p54 = scmp.ne.s32.totalorder %s45, %s46
    %p55 = scmp.eq.s32.totalorder %s14, 0
    %p56 = por %p54, %p55
    %p57 = scmp.ne.s32.totalorder %s45, %s46
    %p58 = scmp.eq.s32.totalorder %s15, 1
    %p59 = por %p57, %p58
    %p61 = scmp.ne.s32.totalorder %s46, %s60
    %p62 = scmp.eq.s32.totalorder %s15, 0
    %p63 = por %p61, %p62
    %s65 = sadd.s32 %s64, 1
    %p68 = scmp.eq.s32.totalorder %s9, 1
    %p69 = scmp.ne.s32.totalorder %s64, %s66
    %p70 = scmp.eq.s32.totalorder %s9, 0
    %p71 = por %p69, %p70
    %p72 = scmp.ne.s32.totalorder %s64, %s66
    %p73 = scmp.eq.s32.totalorder %s14, 1
    %p74 = por %p72, %p73
    %p75 = scmp.ne.s32.totalorder %s66, %s67
    %p76 = scmp.eq.s32.totalorder %s14, 0
    %p77 = por %p75, %p76
    %p78 = scmp.ne.s32.totalorder %s66, %s67
    %p79 = scmp.eq.s32.totalorder %s15, 1
    %p80 = por %p78, %p79
    %p82 = scmp.ne.s32.totalorder %s67, %s81
    %p83 = scmp.eq.s32.totalorder %s15, 0
    %p84 = por %p82, %p83
    %s85 = ssub.s32 %s9, %s16
    %p86 = scmp.eq.s32.totalorder %s85, 0
    %s88 = sadd.s32 %s87, 1
    %s89 = scalar_select %p86, %s87, %s88
    %p92 = pneg %p86
    %p93 = scmp.eq.s32.totalorder %s9, 1
    %p94 = por %p92, %p93
    %p95 = scmp.ne.s32.totalorder %s87, %s90
    %p96 = scmp.eq.s32.totalorder %s9, 0
    %p97 = por %p95, %p96
    %p98 = scmp.ne.s32.totalorder %s87, %s90
    %p99 = scmp.eq.s32.totalorder %s14, 1
    %p100 = por %p98, %p99
    %p101 = scmp.ne.s32.totalorder %s90, %s91
    %p102 = scmp.eq.s32.totalorder %s14, 0
    %p103 = por %p101, %p102
    %p104 = scmp.ne.s32.totalorder %s90, %s91
    %p105 = scmp.eq.s32.totalorder %s15, 1
    %p106 = por %p104, %p105
    %p108 = scmp.ne.s32.totalorder %s91, %s107
    %p109 = scmp.eq.s32.totalorder %s15, 0
    %p110 = por %p108, %p109
    %p111 = scmp.le.s32.totalorder 1, %s9
    %p112 = scmp.lt.s32.totalorder %s9, 3
    %p113 = pnand %p111, %p112
    %p114 = pneg %p113
    // Predicated region
    $region9: #{_lambda_.26} parent=5 // pred_check
      _
    $region10: #{_lambda_.26} parent=5 // pred_check_branch
      %116 = sbr.rel (%p113) target = $region12
    $region11: #{_lambda_.26} parent=5 // pred_region
      %s117 = ssub.s32 %s9, 1
      // Predicated region
      $region13: #{_lambda_.26} parent=11 // pred_check
        %p118 = pneg %p56
      $region14: #{_lambda_.26} parent=11 // pred_check_branch
        %120 = sbr.rel (%p118) target = $region16
      $region15: #{_lambda_.26} parent=11 // pred_region
        _
      $region16: #{_lambda_.26} parent=11 // pred_fallthru
        _
      // Predicated region
      $region17: #{_lambda_.26} parent=11 // pred_check
        %p121 = pneg %p77
      $region18: #{_lambda_.26} parent=11 // pred_check_branch
        %123 = sbr.rel (%p121) target = $region20
      $region19: #{_lambda_.26} parent=11 // pred_region
        _
      $region20: #{_lambda_.26} parent=11 // pred_fallthru
        _
    $region12: #{_lambda_.26} parent=5 // pred_fallthru
      _
    %p124 = scmp.lt.s32.totalorder %s9, 2
    // Predicated region
    $region21: #{_lambda_.26} parent=5 // pred_check
      %p125 = pneg %p124
    $region22: #{_lambda_.26} parent=5 // pred_check_branch
      %127 = sbr.rel (%p125) target = $region24
    $region23: #{_lambda_.26} parent=5 // pred_region
      // Predicated region
      $region25: #{_lambda_.26} parent=23 // pred_check
        %p128 = pneg %p29
      $region26: #{_lambda_.26} parent=23 // pred_check_branch
        %130 = sbr.rel (%p128) target = $region28
      $region27: #{_lambda_.26} parent=23 // pred_region
        %s131 = smul.u32 32, %s9
        %p132 = scmp.lt.s32.totalorder %s131, 63
        %s133 = scalar_select %p132, %s131, 63
        %s134 = smul.addr %s133, 4
        %s135 = scalar_lea.vmem %s0, %s134
        %s136 = smul.u32 32, %s9
      $region28: #{_lambda_.26} parent=23 // pred_fallthru
        _
    $region24: #{_lambda_.26} parent=5 // pred_fallthru
      _
    %p137 = scmp.le.s32.totalorder 1, %s9
    %p138 = scmp.lt.s32.totalorder %s9, 3
    %p139 = pnand %p137, %p138
    %p140 = pneg %p139
    // Predicated region
    $region29: #{_lambda_.26} parent=5 // pred_check
      _
    $region30: #{_lambda_.26} parent=5 // pred_check_branch
      %142 = sbr.rel (%p139) target = $region32
    $region31: #{_lambda_.26} parent=5 // pred_region
      %s143 = ssub.s32 %s9, 1
      %s144 = smul.u32 32, %s14
      %p145 = scmp.lt.s32.totalorder %s144, 63
      %s146 = scalar_select %p145, %s144, 63
      %s147 = smul.addr %s146, 4
      %s148 = scalar_lea.vmem %s0, %s147
      %p149 = pneg %p35
      %p150 = pneg %p32
      %p151 = pneg %p56
      %p152 = pneg %p53
      %p153 = pneg %p77
      %p154 = pneg %p74
      %p155 = pneg %p103
      %p156 = pneg %p100
      %s157 = smul.u32 32, %s14
      %p158 = scmp.lt.s32.totalorder %s157, 63
      %s159 = scalar_select %p158, %s157, 63
      %s160 = smul.addr %s159, 8
      %s161 = scalar_lea.vmem %s3, %s160
      %s162 = smul.u32 32, %s14
      %p163 = scmp.lt.s32.totalorder %s162, 63
      %s164 = scalar_select %p163, %s162, 63
      %s165 = smul.addr %s164, 4
      %s166 = scalar_lea.vmem %s0, %s165
      %s167 = smul.u32 32, %s14
      %s168 = smul.u32 32, %s14
      %p169 = scmp.lt.s32.totalorder %s168, 63
      %s170 = scalar_select %p169, %s168, 63
      %s171 = smul.addr %s170, 8
      %s172 = scalar_lea.vmem %s3, %s171
      %s173 = smul.u32 32, %s14
      %v175 = vld [vmem:[%s166] sm:$0xf]
      %v176 = vld [vmem:[%s166 + $0x4] sm:$0xf]
      %v177 = vld [vmem:[%s166 + $0x8] sm:$0xf]
      %v178 = vld [vmem:[%s166 + $0xc] sm:$0xf]
      %v179 = vld [vmem:[%s166 + $0x10] sm:$0xf]
      %v180 = vld [vmem:[%s166 + $0x14] sm:$0xf]
      %v181 = vld [vmem:[%s166 + $0x18] sm:$0xf]
      %v182 = vld [vmem:[%s166 + $0x1c] sm:$0xf]
      %v183 = vld [vmem:[%s166 + $0x20] sm:$0xf]
      %v184 = vld [vmem:[%s166 + $0x24] sm:$0xf]
      %v185 = vld [vmem:[%s166 + $0x28] sm:$0xf]
      %v186 = vld [vmem:[%s166 + $0x2c] sm:$0xf]
      %v187 = vld [vmem:[%s166 + $0x30] sm:$0xf]
      %v188 = vld [vmem:[%s166 + $0x34] sm:$0xf]
      %v189 = vld [vmem:[%s166 + $0x38] sm:$0xf]
      %v190 = vld [vmem:[%s166 + $0x3c] sm:$0xf]
      %v191 = vld [vmem:[%s166 + $0x40] sm:$0xf]
      %v192 = vld [vmem:[%s166 + $0x44] sm:$0xf]
      %v193 = vld [vmem:[%s166 + $0x48] sm:$0xf]
      %v194 = vld [vmem:[%s166 + $0x4c] sm:$0xf]
      %v195 = vld [vmem:[%s166 + $0x50] sm:$0xf]
      %v196 = vld [vmem:[%s166 + $0x54] sm:$0xf]
      %v197 = vld [vmem:[%s166 + $0x58] sm:$0xf]
      %v198 = vld [vmem:[%s166 + $0x5c] sm:$0xf]
      %v199 = vld [vmem:[%s166 + $0x60] sm:$0xf]
      %v200 = vld [vmem:[%s166 + $0x64] sm:$0xf]
      %v201 = vld [vmem:[%s166 + $0x68] sm:$0xf]
      %v202 = vld [vmem:[%s166 + $0x6c] sm:$0xf]
      %v203 = vld [vmem:[%s166 + $0x70] sm:$0xf]
      %v204 = vld [vmem:[%s166 + $0x74] sm:$0xf]
      %v205 = vld [vmem:[%s166 + $0x78] sm:$0xf]
      %v206 = vld [vmem:[%s166 + $0x7c] sm:$0xf]
      %v207 = vld [vmem:[%s1] sm:$0xf]
      %v208 = vld [vmem:[%s1 + $0x4] sm:$0x3]
      %v209 = vld [vmem:[%s2] sm:$0x1]
      %v211 = vperm.slane %v209, 0
      %v245 = vunpack.c.l.b16 %v175
      %v246 = vunpack.c.l.b16 %v176
      %v247 = vunpack.c.l.b16 %v177
      %v248 = vunpack.c.l.b16 %v178
      %v249 = vunpack.c.l.b16 %v179
      %v250 = vunpack.c.l.b16 %v180
      %v251 = vunpack.c.l.b16 %v181
      %v252 = vunpack.c.l.b16 %v182
      %v253 = vunpack.c.l.b16 %v183
      %v254 = vunpack.c.l.b16 %v184
      %v255 = vunpack.c.l.b16 %v185
      %v256 = vunpack.c.l.b16 %v186
      %v257 = vunpack.c.l.b16 %v187
      %v258 = vunpack.c.l.b16 %v188
      %v259 = vunpack.c.l.b16 %v189
      %v260 = vunpack.c.l.b16 %v190
      %v261 = vunpack.c.l.b16 %v191
      %v262 = vunpack.c.l.b16 %v192
      %v263 = vunpack.c.l.b16 %v193
      %v264 = vunpack.c.l.b16 %v194
      %v265 = vunpack.c.l.b16 %v195
      %v266 = vunpack.c.l.b16 %v196
      %v267 = vunpack.c.l.b16 %v197
      %v268 = vunpack.c.l.b16 %v198
      %v269 = vunpack.c.l.b16 %v199
      %v270 = vunpack.c.l.b16 %v200
      %v271 = vunpack.c.l.b16 %v201
      %v272 = vunpack.c.l.b16 %v202
      %v273 = vunpack.c.l.b16 %v203
      %v274 = vunpack.c.l.b16 %v204
      %v275 = vunpack.c.l.b16 %v205
      %v276 = vunpack.c.l.b16 %v206
      %v277 = vpack.c.b16 %v246, %v245
      %v278 = vpack.c.b16 %v248, %v247
      %v279 = vpack.c.b16 %v250, %v249
      %v280 = vpack.c.b16 %v252, %v251
      %v281 = vpack.c.b16 %v254, %v253
      %v282 = vpack.c.b16 %v256, %v255
      %v283 = vpack.c.b16 %v258, %v257
      %v284 = vpack.c.b16 %v260, %v259
      %v285 = vpack.c.b16 %v262, %v261
      %v286 = vpack.c.b16 %v264, %v263
      %v287 = vpack.c.b16 %v266, %v265
      %v288 = vpack.c.b16 %v268, %v267
      %v289 = vpack.c.b16 %v270, %v269
      %v290 = vpack.c.b16 %v272, %v271
      %v291 = vpack.c.b16 %v274, %v273
      %v292 = vpack.c.b16 %v276, %v275
      %v295 = vunpack.c.l.b16 %v207
      %v296 = vunpack.c.l.b16 %v208
      %v297 = vpack.c.b16 %v296, %v295
      %vm298 = vcmask 89088
      %v300 = vsel %vm298, %v277, 0
      %v303 = vsel %vm298, %v278, 0
      %v306 = vsel %vm298, %v279, 0
      %v309 = vsel %vm298, %v280, 0
      %v312 = vsel %vm298, %v281, 0
      %v315 = vsel %vm298, %v282, 0
      %v318 = vsel %vm298, %v283, 0
      %v321 = vsel %vm298, %v284, 0
      %v324 = vsel %vm298, %v285, 0
      %v327 = vsel %vm298, %v286, 0
      %v330 = vsel %vm298, %v287, 0
      %v333 = vsel %vm298, %v288, 0
      %v336 = vsel %vm298, %v289, 0
      %v339 = vsel %vm298, %v290, 0
      %v342 = vsel %vm298, %v291, 0
      %v345 = vsel %vm298, %v292, 0
      %vm347 = vcmask 1044480
      %vm348 = vcmask 1045504
      %v349 = vsel %vm347, 4294967295, 65535
      %v350 = vsel %vm348, %v349, 0
      %v352 = vand.u32 %v297, %v350
      %354 = vmatpush.bf16.msra.mxu0 0
      %355 = vmatpush.bf16.msra.mxu0 0
      %356 = vmatpush.bf16.msra.mxu0 0
      %357 = vmatpush.bf16.msra.mxu0 0
      %358 = vmatpush.bf16.msra.mxu0 0
      %359 = vmatpush.bf16.msra.mxu0 0
      %360 = vmatpush.bf16.msra.mxu0 0
      %361 = vmatpush.bf16.msra.mxu0 %v352
      %362 = vmatmul.bf16.gmra.mxu0 %v300
      %v363 = vpop.f32.mrf.mxu0
      %v364 = vadd.f32 %v211, %v363
      %v365 = vpop.f32.mrf.mxu0
      %v366 = vadd.f32 %v211, %v365
      %367 = vmatmul.bf16.gmra.mxu0 %v303
      %v368 = vpop.f32.mrf.mxu0
      %v369 = vadd.f32 %v211, %v368
      %v370 = vpop.f32.mrf.mxu0
      %v371 = vadd.f32 %v211, %v370
      %372 = vmatmul.bf16.gmra.mxu0 %v306
      %v373 = vpop.f32.mrf.mxu0
      %v374 = vadd.f32 %v211, %v373
      %v375 = vpop.f32.mrf.mxu0
      %v376 = vadd.f32 %v211, %v375
      %377 = vmatmul.bf16.gmra.mxu0 %v309
      %v378 = vpop.f32.mrf.mxu0
      %v379 = vadd.f32 %v211, %v378
      %v380 = vpop.f32.mrf.mxu0
      %v381 = vadd.f32 %v211, %v380
      %382 = vmatmul.bf16.gmra.mxu0 %v312
      %v383 = vpop.f32.mrf.mxu0
      %v384 = vadd.f32 %v211, %v383
      %v385 = vpop.f32.mrf.mxu0
      %v386 = vadd.f32 %v211, %v385
      %387 = vmatmul.bf16.gmra.mxu0 %v315
      %v388 = vpop.f32.mrf.mxu0
      %v389 = vadd.f32 %v211, %v388
      %v390 = vpop.f32.mrf.mxu0
      %v391 = vadd.f32 %v211, %v390
      %392 = vmatmul.bf16.gmra.mxu0 %v318
      %v393 = vpop.f32.mrf.mxu0
      %v394 = vadd.f32 %v211, %v393
      %v395 = vpop.f32.mrf.mxu0
      %v396 = vadd.f32 %v211, %v395
      %397 = vmatmul.bf16.gmra.mxu0 %v321
      %v398 = vpop.f32.mrf.mxu0
      %v399 = vadd.f32 %v211, %v398
      %v400 = vpop.f32.mrf.mxu0
      %v401 = vadd.f32 %v211, %v400
      %402 = vmatmul.bf16.gmra.mxu0 %v324
      %v403 = vpop.f32.mrf.mxu0
      %v404 = vadd.f32 %v211, %v403
      %v405 = vpop.f32.mrf.mxu0
      %v406 = vadd.f32 %v211, %v405
      %407 = vmatmul.bf16.gmra.mxu0 %v327
      %v408 = vpop.f32.mrf.mxu0
      %v409 = vadd.f32 %v211, %v408
      %v410 = vpop.f32.mrf.mxu0
      %v411 = vadd.f32 %v211, %v410
      %412 = vmatmul.bf16.gmra.mxu0 %v330
      %v413 = vpop.f32.mrf.mxu0
      %v414 = vadd.f32 %v211, %v413
      %v415 = vpop.f32.mrf.mxu0
      %v416 = vadd.f32 %v211, %v415
      %417 = vmatmul.bf16.gmra.mxu0 %v333
      %v418 = vpop.f32.mrf.mxu0
      %v419 = vadd.f32 %v211, %v418
      %v420 = vpop.f32.mrf.mxu0
      %v421 = vadd.f32 %v211, %v420
      %422 = vmatmul.bf16.gmra.mxu0 %v336
      %v423 = vpop.f32.mrf.mxu0
      %v424 = vadd.f32 %v211, %v423
      %v425 = vpop.f32.mrf.mxu0
      %v426 = vadd.f32 %v211, %v425
      %427 = vmatmul.bf16.gmra.mxu0 %v339
      %v428 = vpop.f32.mrf.mxu0
      %v429 = vadd.f32 %v211, %v428
      %v430 = vpop.f32.mrf.mxu0
      %v431 = vadd.f32 %v211, %v430
      %432 = vmatmul.bf16.gmra.mxu0 %v342
      %v433 = vpop.f32.mrf.mxu0
      %v434 = vadd.f32 %v211, %v433
      %v435 = vpop.f32.mrf.mxu0
      %v436 = vadd.f32 %v211, %v435
      %437 = vmatmul.bf16.gmra.mxu0 %v345
      %v438 = vpop.f32.mrf.mxu0
      %v439 = vadd.f32 %v211, %v438
      %v440 = vpop.f32.mrf.mxu0
      %v441 = vadd.f32 %v211, %v440
      %442 = vdwg.mxu0
      %vm443 = vcmask 64512
      %444 = vst.msk [vmem:[%s172] sm:$0xff] %vm443, %v364
      %445 = vst.msk [vmem:[%s172 + $0x8] sm:$0xff] %vm443, %v366
      %446 = vst.msk [vmem:[%s172 + $0x10] sm:$0xff] %vm443, %v369
      %447 = vst.msk [vmem:[%s172 + $0x18] sm:$0xff] %vm443, %v371
      %448 = vst.msk [vmem:[%s172 + $0x20] sm:$0xff] %vm443, %v374
      %449 = vst.msk [vmem:[%s172 + $0x28] sm:$0xff] %vm443, %v376
      %450 = vst.msk [vmem:[%s172 + $0x30] sm:$0xff] %vm443, %v379
      %451 = vst.msk [vmem:[%s172 + $0x38] sm:$0xff] %vm443, %v381
      %452 = vst.msk [vmem:[%s172 + $0x40] sm:$0xff] %vm443, %v384
      %453 = vst.msk [vmem:[%s172 + $0x48] sm:$0xff] %vm443, %v386
      %454 = vst.msk [vmem:[%s172 + $0x50] sm:$0xff] %vm443, %v389
      %455 = vst.msk [vmem:[%s172 + $0x58] sm:$0xff] %vm443, %v391
      %456 = vst.msk [vmem:[%s172 + $0x60] sm:$0xff] %vm443, %v394
      %457 = vst.msk [vmem:[%s172 + $0x68] sm:$0xff] %vm443, %v396
      %458 = vst.msk [vmem:[%s172 + $0x70] sm:$0xff] %vm443, %v399
      %459 = vst.msk [vmem:[%s172 + $0x78] sm:$0xff] %vm443, %v401
      %460 = vst.msk [vmem:[%s172 + $0x80] sm:$0xff] %vm443, %v404
      %461 = vst.msk [vmem:[%s172 + $0x88] sm:$0xff] %vm443, %v406
      %462 = vst.msk [vmem:[%s172 + $0x90] sm:$0xff] %vm443, %v409
      %463 = vst.msk [vmem:[%s172 + $0x98] sm:$0xff] %vm443, %v411
      %464 = vst.msk [vmem:[%s172 + $0xa0] sm:$0xff] %vm443, %v414
      %465 = vst.msk [vmem:[%s172 + $0xa8] sm:$0xff] %vm443, %v416
      %466 = vst.msk [vmem:[%s172 + $0xb0] sm:$0xff] %vm443, %v419
      %467 = vst.msk [vmem:[%s172 + $0xb8] sm:$0xff] %vm443, %v421
      %468 = vst.msk [vmem:[%s172 + $0xc0] sm:$0xff] %vm443, %v424
      %469 = vst.msk [vmem:[%s172 + $0xc8] sm:$0xff] %vm443, %v426
      %470 = vst.msk [vmem:[%s172 + $0xd0] sm:$0xff] %vm443, %v429
      %471 = vst.msk [vmem:[%s172 + $0xd8] sm:$0xff] %vm443, %v431
      %472 = vst.msk [vmem:[%s172 + $0xe0] sm:$0xff] %vm443, %v434
      %473 = vst.msk [vmem:[%s172 + $0xe8] sm:$0xff] %vm443, %v436
      %474 = vst.msk [vmem:[%s172 + $0xf0] sm:$0xff] %vm443, %v439
      %475 = vst.msk [vmem:[%s172 + $0xf8] sm:$0xff] %vm443, %v441
      %s476 = smul.u32 32, %s14
      %p477 = scmp.lt.s32.totalorder %s476, 63
      %s478 = scalar_select %p477, %s476, 63
      %s479 = smul.addr %s478, 8
      %s480 = scalar_lea.vmem %s3, %s479
      // Predicated region
      $region33: #{_lambda_.26} parent=31 // pred_check
        %p481 = pneg %p100
      $region34: #{_lambda_.26} parent=31 // pred_check_branch
        %483 = sbr.rel (%p481) target = $region36
      $region35: #{_lambda_.26} parent=31 // pred_region
        %s484 = smul.u32 32, %s14
      $region36: #{_lambda_.26} parent=31 // pred_fallthru
        _
    $region32: #{_lambda_.26} parent=5 // pred_fallthru
      _
    %p485 = scmp.le.s32.totalorder 2, %s9
    // Predicated region
    $region37: #{_lambda_.26} parent=5 // pred_check
      %p486 = pneg %p485
    $region38: #{_lambda_.26} parent=5 // pred_check_branch
      %488 = sbr.rel (%p486) target = $region40
    $region39: #{_lambda_.26} parent=5 // pred_region
      %s489 = ssub.s32 %s9, 2
      // Predicated region
      $region41: #{_lambda_.26} parent=39 // pred_check
        %p490 = pneg %p106
      $region42: #{_lambda_.26} parent=39 // pred_check_branch
        %492 = sbr.rel (%p490) target = $region44
      $region43: #{_lambda_.26} parent=39 // pred_region
        %s493 = smul.u32 32, %s15
        %p494 = scmp.lt.s32.totalorder %s493, 63
        %s495 = scalar_select %p494, %s493, 63
        %s496 = smul.addr %s495, 8
        %s497 = scalar_lea.vmem %s3, %s496
      $region44: #{_lambda_.26} parent=39 // pred_fallthru
        _
    $region40: #{_lambda_.26} parent=5 // pred_fallthru
      _
  $region6: #{_lambda_.26} parent=0 // loop_footer
    %s13 = sadd.s32 1, %s9
  $region7: #{_lambda_.26} parent=0 // loop_footer_branch
    %8 = sbr.rel target = $region3
  $region8: #{_lambda_.26} parent=0 // loop_exit
    _

// kernel: _lambda_.27
$region0: #{_lambda_.27}
  #allocation0 [shape = 'u32[]', space=smem, size = 0x4, offset = 0x4, fixed_abs, tag = 'smem constant byte address 0x4 - core index']
  #allocation1 [shape = 'u32[72,128]{1,0:T(1,128)}', space=vmem, size = 0x9000, scoped, tag = 'internal scratch']
  %s0 = inlined_call_operand.vmem [shape: f32[64,8,8], index: 0, kind: input, shape index: {}]
  %s1 = inlined_call_operand.vmem [shape: f32[64,8], index: 1, kind: output, shape index: {}]
  %s2 = sld [smem:[#allocation0]]
  $region14: #{_lambda_.27} parent=0
    _
  %s4 = ssub.s32 1, %s2
  %s5 = scalar_select 0, %s4, %s2
  // Predicated region
  $region2: #{_lambda_.27} parent=0 // pred_check
    _
  $region3: #{_lambda_.27} parent=0 // pred_check_branch
    %7 = sbr.rel (0) target = $region5
  $region4: #{_lambda_.27} parent=0 // pred_region
    _
  $region5: #{_lambda_.27} parent=0 // pred_fallthru
    _
  %v8 = vld [vmem:[%s0] sm:$0xff]
  %v9 = vld [vmem:[%s0 + $0x8] sm:$0xff]
  %v10 = vld [vmem:[%s0 + $0x10] sm:$0xff]
  %v11 = vld [vmem:[%s0 + $0x18] sm:$0xff]
  %v12 = vld [vmem:[%s0 + $0x20] sm:$0xff]
  %v13 = vld [vmem:[%s0 + $0x28] sm:$0xff]
  %v14 = vld [vmem:[%s0 + $0x30] sm:$0xff]
  %v15 = vld [vmem:[%s0 + $0x38] sm:$0xff]
  %v16 = vld [vmem:[%s0 + $0x40] sm:$0xff]
  %v17 = vld [vmem:[%s0 + $0x48] sm:$0xff]
  %v18 = vld [vmem:[%s0 + $0x50] sm:$0xff]
  %v19 = vld [vmem:[%s0 + $0x58] sm:$0xff]
  %v20 = vld [vmem:[%s0 + $0x60] sm:$0xff]
  %v21 = vld [vmem:[%s0 + $0x68] sm:$0xff]
  %v22 = vld [vmem:[%s0 + $0x70] sm:$0xff]
  %v23 = vld [vmem:[%s0 + $0x78] sm:$0xff]
  %v24 = vld [vmem:[%s0 + $0x80] sm:$0xff]
  %v25 = vld [vmem:[%s0 + $0x88] sm:$0xff]
  %v26 = vld [vmem:[%s0 + $0x90] sm:$0xff]
  %v27 = vld [vmem:[%s0 + $0x98] sm:$0xff]
  %v28 = vld [vmem:[%s0 + $0xa0] sm:$0xff]
  %v29 = vld [vmem:[%s0 + $0xa8] sm:$0xff]
  %v30 = vld [vmem:[%s0 + $0xb0] sm:$0xff]
  %v31 = vld [vmem:[%s0 + $0xb8] sm:$0xff]
  %v32 = vld [vmem:[%s0 + $0xc0] sm:$0xff]
  %v33 = vld [vmem:[%s0 + $0xc8] sm:$0xff]
  %v34 = vld [vmem:[%s0 + $0xd0] sm:$0xff]
  %v35 = vld [vmem:[%s0 + $0xd8] sm:$0xff]
  %v36 = vld [vmem:[%s0 + $0xe0] sm:$0xff]
  %v37 = vld [vmem:[%s0 + $0xe8] sm:$0xff]
  %v38 = vld [vmem:[%s0 + $0xf0] sm:$0xff]
  %v39 = vld [vmem:[%s0 + $0xf8] sm:$0xff]
  %v40 = vld [vmem:[%s0 + $0x100] sm:$0xff]
  %v41 = vld [vmem:[%s0 + $0x108] sm:$0xff]
  %v42 = vld [vmem:[%s0 + $0x110] sm:$0xff]
  %v43 = vld [vmem:[%s0 + $0x118] sm:$0xff]
  %v44 = vld [vmem:[%s0 + $0x120] sm:$0xff]
  %v45 = vld [vmem:[%s0 + $0x128] sm:$0xff]
  %v46 = vld [vmem:[%s0 + $0x130] sm:$0xff]
  %v47 = vld [vmem:[%s0 + $0x138] sm:$0xff]
  %v48 = vld [vmem:[%s0 + $0x140] sm:$0xff]
  %v49 = vld [vmem:[%s0 + $0x148] sm:$0xff]
  %v50 = vld [vmem:[%s0 + $0x150] sm:$0xff]
  %v51 = vld [vmem:[%s0 + $0x158] sm:$0xff]
  %v52 = vld [vmem:[%s0 + $0x160] sm:$0xff]
  %v53 = vld [vmem:[%s0 + $0x168] sm:$0xff]
  %v54 = vld [vmem:[%s0 + $0x170] sm:$0xff]
  %v55 = vld [vmem:[%s0 + $0x178] sm:$0xff]
  %v56 = vld [vmem:[%s0 + $0x180] sm:$0xff]
  %v57 = vld [vmem:[%s0 + $0x188] sm:$0xff]
  %v58 = vld [vmem:[%s0 + $0x190] sm:$0xff]
  %v59 = vld [vmem:[%s0 + $0x198] sm:$0xff]
  %v60 = vld [vmem:[%s0 + $0x1a0] sm:$0xff]
  %v61 = vld [vmem:[%s0 + $0x1a8] sm:$0xff]
  %v62 = vld [vmem:[%s0 + $0x1b0] sm:$0xff]
  %v63 = vld [vmem:[%s0 + $0x1b8] sm:$0xff]
  %v64 = vld [vmem:[%s0 + $0x1c0] sm:$0xff]
  %v65 = vld [vmem:[%s0 + $0x1c8] sm:$0xff]
  %v66 = vld [vmem:[%s0 + $0x1d0] sm:$0xff]
  %v67 = vld [vmem:[%s0 + $0x1d8] sm:$0xff]
  %v68 = vld [vmem:[%s0 + $0x1e0] sm:$0xff]
  %v69 = vld [vmem:[%s0 + $0x1e8] sm:$0xff]
  %v70 = vld [vmem:[%s0 + $0x1f0] sm:$0xff]
  %v71 = vld [vmem:[%s0 + $0x1f8] sm:$0xff]
  %vm72 = vcmask 64512
  %v73 = vsel %vm72, %v8, -inf
  %v74 = vrot.slane %v73, 4
  %v75 = vmax.f32 %v73, %v74
  %v76 = vrot.slane %v75, 2
  %v77 = vmax.f32 %v75, %v76
  %v78 = vrot.slane %v77, 1
  %v79 = vmax.f32 %v77, %v78
  %v80 = vsel %vm72, %v9, -inf
  %v81 = vrot.slane %v80, 4
  %v82 = vmax.f32 %v80, %v81
  %v83 = vrot.slane %v82, 2
  %v84 = vmax.f32 %v82, %v83
  %v85 = vrot.slane %v84, 1
  %v86 = vmax.f32 %v84, %v85
  %v87 = vsel %vm72, %v10, -inf
  %v88 = vrot.slane %v87, 4
  %v89 = vmax.f32 %v87, %v88
  %v90 = vrot.slane %v89, 2
  %v91 = vmax.f32 %v89, %v90
  %v92 = vrot.slane %v91, 1
  %v93 = vmax.f32 %v91, %v92
  %v94 = vsel %vm72, %v11, -inf
  %v95 = vrot.slane %v94, 4
  %v96 = vmax.f32 %v94, %v95
  %v97 = vrot.slane %v96, 2
  %v98 = vmax.f32 %v96, %v97
  %v99 = vrot.slane %v98, 1
  %v100 = vmax.f32 %v98, %v99
  %v101 = vsel %vm72, %v12, -inf
  %v102 = vrot.slane %v101, 4
  %v103 = vmax.f32 %v101, %v102
  %v104 = vrot.slane %v103, 2
  %v105 = vmax.f32 %v103, %v104
  %v106 = vrot.slane %v105, 1
  %v107 = vmax.f32 %v105, %v106
  %v108 = vsel %vm72, %v13, -inf
  %v109 = vrot.slane %v108, 4
  %v110 = vmax.f32 %v108, %v109
  %v111 = vrot.slane %v110, 2
  %v112 = vmax.f32 %v110, %v111
  %v113 = vrot.slane %v112, 1
  %v114 = vmax.f32 %v112, %v113
  %v115 = vsel %vm72, %v14, -inf
  %v116 = vrot.slane %v115, 4
  %v117 = vmax.f32 %v115, %v116
  %v118 = vrot.slane %v117, 2
  %v119 = vmax.f32 %v117, %v118
  %v120 = vrot.slane %v119, 1
  %v121 = vmax.f32 %v119, %v120
  %v122 = vsel %vm72, %v15, -inf
  %v123 = vrot.slane %v122, 4
  %v124 = vmax.f32 %v122, %v123
  %v125 = vrot.slane %v124, 2
  %v126 = vmax.f32 %v124, %v125
  %v127 = vrot.slane %v126, 1
  %v128 = vmax.f32 %v126, %v127
  %v129 = vsel %vm72, %v16, -inf
  %v130 = vrot.slane %v129, 4
  %v131 = vmax.f32 %v129, %v130
  %v132 = vrot.slane %v131, 2
  %v133 = vmax.f32 %v131, %v132
  %v134 = vrot.slane %v133, 1
  %v135 = vmax.f32 %v133, %v134
  %v136 = vsel %vm72, %v17, -inf
  %v137 = vrot.slane %v136, 4
  %v138 = vmax.f32 %v136, %v137
  %v139 = vrot.slane %v138, 2
  %v140 = vmax.f32 %v138, %v139
  %v141 = vrot.slane %v140, 1
  %v142 = vmax.f32 %v140, %v141
  %v143 = vsel %vm72, %v18, -inf
  %v144 = vrot.slane %v143, 4
  %v145 = vmax.f32 %v143, %v144
  %v146 = vrot.slane %v145, 2
  %v147 = vmax.f32 %v145, %v146
  %v148 = vrot.slane %v147, 1
  %v149 = vmax.f32 %v147, %v148
  %v150 = vsel %vm72, %v19, -inf
  %v151 = vrot.slane %v150, 4
  %v152 = vmax.f32 %v150, %v151
  %v153 = vrot.slane %v152, 2
  %v154 = vmax.f32 %v152, %v153
  %v155 = vrot.slane %v154, 1
  %v156 = vmax.f32 %v154, %v155
  %v157 = vsel %vm72, %v20, -inf
  %v158 = vrot.slane %v157, 4
  %v159 = vmax.f32 %v157, %v158
  %v160 = vrot.slane %v159, 2
  %v161 = vmax.f32 %v159, %v160
  %v162 = vrot.slane %v161, 1
  %v163 = vmax.f32 %v161, %v162
  %v164 = vsel %vm72, %v21, -inf
  %v165 = vrot.slane %v164, 4
  %v166 = vmax.f32 %v164, %v165
  %v167 = vrot.slane %v166, 2
  %v168 = vmax.f32 %v166, %v167
  %v169 = vrot.slane %v168, 1
  %v170 = vmax.f32 %v168, %v169
  %v171 = vsel %vm72, %v22, -inf
  %v172 = vrot.slane %v171, 4
  %v173 = vmax.f32 %v171, %v172
  %v174 = vrot.slane %v173, 2
  %v175 = vmax.f32 %v173, %v174
  %v176 = vrot.slane %v175, 1
  %v177 = vmax.f32 %v175, %v176
  %v178 = vsel %vm72, %v23, -inf
  %v179 = vrot.slane %v178, 4
  %v180 = vmax.f32 %v178, %v179
  %v181 = vrot.slane %v180, 2
  %v182 = vmax.f32 %v180, %v181
  %v183 = vrot.slane %v182, 1
  %v184 = vmax.f32 %v182, %v183
  %v185 = vsel %vm72, %v24, -inf
  %v186 = vrot.slane %v185, 4
  %v187 = vmax.f32 %v185, %v186
  %v188 = vrot.slane %v187, 2
  %v189 = vmax.f32 %v187, %v188
  %v190 = vrot.slane %v189, 1
  %v191 = vmax.f32 %v189, %v190
  %v192 = vsel %vm72, %v25, -inf
  %v193 = vrot.slane %v192, 4
  %v194 = vmax.f32 %v192, %v193
  %v195 = vrot.slane %v194, 2
  %v196 = vmax.f32 %v194, %v195
  %v197 = vrot.slane %v196, 1
  %v198 = vmax.f32 %v196, %v197
  %v199 = vsel %vm72, %v26, -inf
  %v200 = vrot.slane %v199, 4
  %v201 = vmax.f32 %v199, %v200
  %v202 = vrot.slane %v201, 2
  %v203 = vmax.f32 %v201, %v202
  %v204 = vrot.slane %v203, 1
  %v205 = vmax.f32 %v203, %v204
  %v206 = vsel %vm72, %v27, -inf
  %v207 = vrot.slane %v206, 4
  %v208 = vmax.f32 %v206, %v207
  %v209 = vrot.slane %v208, 2
  %v210 = vmax.f32 %v208, %v209
  %v211 = vrot.slane %v210, 1
  %v212 = vmax.f32 %v210, %v211
  %v213 = vsel %vm72, %v28, -inf
  %v214 = vrot.slane %v213, 4
  %v215 = vmax.f32 %v213, %v214
  %v216 = vrot.slane %v215, 2
  %v217 = vmax.f32 %v215, %v216
  %v218 = vrot.slane %v217, 1
  %v219 = vmax.f32 %v217, %v218
  %v220 = vsel %vm72, %v29, -inf
  %v221 = vrot.slane %v220, 4
  %v222 = vmax.f32 %v220, %v221
  %v223 = vrot.slane %v222, 2
  %v224 = vmax.f32 %v222, %v223
  %v225 = vrot.slane %v224, 1
  %v226 = vmax.f32 %v224, %v225
  %v227 = vsel %vm72, %v30, -inf
  %v228 = vrot.slane %v227, 4
  %v229 = vmax.f32 %v227, %v228
  %v230 = vrot.slane %v229, 2
  %v231 = vmax.f32 %v229, %v230
  %v232 = vrot.slane %v231, 1
  %v233 = vmax.f32 %v231, %v232
  %v234 = vsel %vm72, %v31, -inf
  %v235 = vrot.slane %v234, 4
  %v236 = vmax.f32 %v234, %v235
  %v237 = vrot.slane %v236, 2
  %v238 = vmax.f32 %v236, %v237
  %v239 = vrot.slane %v238, 1
  %v240 = vmax.f32 %v238, %v239
  %v241 = vsel %vm72, %v32, -inf
  %v242 = vrot.slane %v241, 4
  %v243 = vmax.f32 %v241, %v242
  %v244 = vrot.slane %v243, 2
  %v245 = vmax.f32 %v243, %v244
  %v246 = vrot.slane %v245, 1
  %v247 = vmax.f32 %v245, %v246
  %v248 = vsel %vm72, %v33, -inf
  %v249 = vrot.slane %v248, 4
  %v250 = vmax.f32 %v248, %v249
  %v251 = vrot.slane %v250, 2
  %v252 = vmax.f32 %v250, %v251
  %v253 = vrot.slane %v252, 1
  %v254 = vmax.f32 %v252, %v253
  %v255 = vsel %vm72, %v34, -inf
  %v256 = vrot.slane %v255, 4
  %v257 = vmax.f32 %v255, %v256
  %v258 = vrot.slane %v257, 2
  %v259 = vmax.f32 %v257, %v258
  %v260 = vrot.slane %v259, 1
  %v261 = vmax.f32 %v259, %v260
  %v262 = vsel %vm72, %v35, -inf
  %v263 = vrot.slane %v262, 4
  %v264 = vmax.f32 %v262, %v263
  %v265 = vrot.slane %v264, 2
  %v266 = vmax.f32 %v264, %v265
  %v267 = vrot.slane %v266, 1
  %v268 = vmax.f32 %v266, %v267
  %v269 = vsel %vm72, %v36, -inf
  %v270 = vrot.slane %v269, 4
  %v271 = vmax.f32 %v269, %v270
  %v272 = vrot.slane %v271, 2
  %v273 = vmax.f32 %v271, %v272
  %v274 = vrot.slane %v273, 1
  %v275 = vmax.f32 %v273, %v274
  %v276 = vsel %vm72, %v37, -inf
  %v277 = vrot.slane %v276, 4
  %v278 = vmax.f32 %v276, %v277
  %v279 = vrot.slane %v278, 2
  %v280 = vmax.f32 %v278, %v279
  %v281 = vrot.slane %v280, 1
  %v282 = vmax.f32 %v280, %v281
  %v283 = vsel %vm72, %v38, -inf
  %v284 = vrot.slane %v283, 4
  %v285 = vmax.f32 %v283, %v284
  %v286 = vrot.slane %v285, 2
  %v287 = vmax.f32 %v285, %v286
  %v288 = vrot.slane %v287, 1
  %v289 = vmax.f32 %v287, %v288
  %v290 = vsel %vm72, %v39, -inf
  %v291 = vrot.slane %v290, 4
  %v292 = vmax.f32 %v290, %v291
  %v293 = vrot.slane %v292, 2
  %v294 = vmax.f32 %v292, %v293
  %v295 = vrot.slane %v294, 1
  %v296 = vmax.f32 %v294, %v295
  %v297 = vsel %vm72, %v40, -inf
  %v298 = vrot.slane %v297, 4
  %v299 = vmax.f32 %v297, %v298
  %v300 = vrot.slane %v299, 2
  %v301 = vmax.f32 %v299, %v300
  %v302 = vrot.slane %v301, 1
  %v303 = vmax.f32 %v301, %v302
  %v304 = vsel %vm72, %v41, -inf
  %v305 = vrot.slane %v304, 4
  %v306 = vmax.f32 %v304, %v305
  %v307 = vrot.slane %v306, 2
  %v308 = vmax.f32 %v306, %v307
  %v309 = vrot.slane %v308, 1
  %v310 = vmax.f32 %v308, %v309
  %v311 = vsel %vm72, %v42, -inf
  %v312 = vrot.slane %v311, 4
  %v313 = vmax.f32 %v311, %v312
  %v314 = vrot.slane %v313, 2
  %v315 = vmax.f32 %v313, %v314
  %v316 = vrot.slane %v315, 1
  %v317 = vmax.f32 %v315, %v316
  %v318 = vsel %vm72, %v43, -inf
  %v319 = vrot.slane %v318, 4
  %v320 = vmax.f32 %v318, %v319
  %v321 = vrot.slane %v320, 2
  %v322 = vmax.f32 %v320, %v321
  %v323 = vrot.slane %v322, 1
  %v324 = vmax.f32 %v322, %v323
  %v325 = vsel %vm72, %v44, -inf
  %v326 = vrot.slane %v325, 4
  %v327 = vmax.f32 %v325, %v326
  %v328 = vrot.slane %v327, 2
  %v329 = vmax.f32 %v327, %v328
  %v330 = vrot.slane %v329, 1
  %v331 = vmax.f32 %v329, %v330
  %v332 = vsel %vm72, %v45, -inf
  %v333 = vrot.slane %v332, 4
  %v334 = vmax.f32 %v332, %v333
  %v335 = vrot.slane %v334, 2
  %v336 = vmax.f32 %v334, %v335
  %v337 = vrot.slane %v336, 1
  %v338 = vmax.f32 %v336, %v337
  %v339 = vsel %vm72, %v46, -inf
  %v340 = vrot.slane %v339, 4
  %v341 = vmax.f32 %v339, %v340
  %v342 = vrot.slane %v341, 2
  %v343 = vmax.f32 %v341, %v342
  %v344 = vrot.slane %v343, 1
  %v345 = vmax.f32 %v343, %v344
  %v346 = vsel %vm72, %v47, -inf
  %v347 = vrot.slane %v346, 4
  %v348 = vmax.f32 %v346, %v347
  %v349 = vrot.slane %v348, 2
  %v350 = vmax.f32 %v348, %v349
  %v351 = vrot.slane %v350, 1
  %v352 = vmax.f32 %v350, %v351
  %v353 = vsel %vm72, %v48, -inf
  %v354 = vrot.slane %v353, 4
  %v355 = vmax.f32 %v353, %v354
  %v356 = vrot.slane %v355, 2
  %v357 = vmax.f32 %v355, %v356
  %v358 = vrot.slane %v357, 1
  %v359 = vmax.f32 %v357, %v358
  %v360 = vsel %vm72, %v49, -inf
  %v361 = vrot.slane %v360, 4
  %v362 = vmax.f32 %v360, %v361
  %v363 = vrot.slane %v362, 2
  %v364 = vmax.f32 %v362, %v363
  %v365 = vrot.slane %v364, 1
  %v366 = vmax.f32 %v364, %v365
  %v367 = vsel %vm72, %v50, -inf
  %v368 = vrot.slane %v367, 4
  %v369 = vmax.f32 %v367, %v368
  %v370 = vrot.slane %v369, 2
  %v371 = vmax.f32 %v369, %v370
  %v372 = vrot.slane %v371, 1
  %v373 = vmax.f32 %v371, %v372
  %v374 = vsel %vm72, %v51, -inf
  %v375 = vrot.slane %v374, 4
  %v376 = vmax.f32 %v374, %v375
  %v377 = vrot.slane %v376, 2
  %v378 = vmax.f32 %v376, %v377
  %v379 = vrot.slane %v378, 1
  %v380 = vmax.f32 %v378, %v379
  %v381 = vsel %vm72, %v52, -inf
  %v382 = vrot.slane %v381, 4
  %v383 = vmax.f32 %v381, %v382
  %v384 = vrot.slane %v383, 2
  %v385 = vmax.f32 %v383, %v384
  %v386 = vrot.slane %v385, 1
  %v387 = vmax.f32 %v385, %v386
  %v388 = vsel %vm72, %v53, -inf
  %v389 = vrot.slane %v388, 4
  %v390 = vmax.f32 %v388, %v389
  %v391 = vrot.slane %v390, 2
  %v392 = vmax.f32 %v390, %v391
  %v393 = vrot.slane %v392, 1
  %v394 = vmax.f32 %v392, %v393
  %v395 = vsel %vm72, %v54, -inf
  %v396 = vrot.slane %v395, 4
  %v397 = vmax.f32 %v395, %v396
  %v398 = vrot.slane %v397, 2
  %v399 = vmax.f32 %v397, %v398
  %v400 = vrot.slane %v399, 1
  %v401 = vmax.f32 %v399, %v400
  %v402 = vsel %vm72, %v55, -inf
  %v403 = vrot.slane %v402, 4
  %v404 = vmax.f32 %v402, %v403
  %v405 = vrot.slane %v404, 2
  %v406 = vmax.f32 %v404, %v405
  %v407 = vrot.slane %v406, 1
  %v408 = vmax.f32 %v406, %v407
  %v409 = vsel %vm72, %v56, -inf
  %v410 = vrot.slane %v409, 4
  %v411 = vmax.f32 %v409, %v410
  %v412 = vrot.slane %v411, 2
  %v413 = vmax.f32 %v411, %v412
  %v414 = vrot.slane %v413, 1
  %v415 = vmax.f32 %v413, %v414
  %v416 = vsel %vm72, %v57, -inf
  %v417 = vrot.slane %v416, 4
  %v418 = vmax.f32 %v416, %v417
  %v419 = vrot.slane %v418, 2
  %v420 = vmax.f32 %v418, %v419
  %v421 = vrot.slane %v420, 1
  %v422 = vmax.f32 %v420, %v421
  %v423 = vsel %vm72, %v58, -inf
  %v424 = vrot.slane %v423, 4
  %v425 = vmax.f32 %v423, %v424
  %v426 = vrot.slane %v425, 2
  %v427 = vmax.f32 %v425, %v426
  %v428 = vrot.slane %v427, 1
  %v429 = vmax.f32 %v427, %v428
  %v430 = vsel %vm72, %v59, -inf
  %v431 = vrot.slane %v430, 4
  %v432 = vmax.f32 %v430, %v431
  %v433 = vrot.slane %v432, 2
  %v434 = vmax.f32 %v432, %v433
  %v435 = vrot.slane %v434, 1
  %v436 = vmax.f32 %v434, %v435
  %v437 = vsel %vm72, %v60, -inf
  %v438 = vrot.slane %v437, 4
  %v439 = vmax.f32 %v437, %v438
  %v440 = vrot.slane %v439, 2
  %v441 = vmax.f32 %v439, %v440
  %v442 = vrot.slane %v441, 1
  %v443 = vmax.f32 %v441, %v442
  %v444 = vsel %vm72, %v61, -inf
  %v445 = vrot.slane %v444, 4
  %v446 = vmax.f32 %v444, %v445
  %v447 = vrot.slane %v446, 2
  %v448 = vmax.f32 %v446, %v447
  %v449 = vrot.slane %v448, 1
  %v450 = vmax.f32 %v448, %v449
  %v451 = vsel %vm72, %v62, -inf
  %v452 = vrot.slane %v451, 4
  %v453 = vmax.f32 %v451, %v452
  %v454 = vrot.slane %v453, 2
  %v455 = vmax.f32 %v453, %v454
  %v456 = vrot.slane %v455, 1
  %v457 = vmax.f32 %v455, %v456
  %v458 = vsel %vm72, %v63, -inf
  %v459 = vrot.slane %v458, 4
  %v460 = vmax.f32 %v458, %v459
  %v461 = vrot.slane %v460, 2
  %v462 = vmax.f32 %v460, %v461
  %v463 = vrot.slane %v462, 1
  %v464 = vmax.f32 %v462, %v463
  %v465 = vsel %vm72, %v64, -inf
  %v466 = vrot.slane %v465, 4
  %v467 = vmax.f32 %v465, %v466
  %v468 = vrot.slane %v467, 2
  %v469 = vmax.f32 %v467, %v468
  %v470 = vrot.slane %v469, 1
  %v471 = vmax.f32 %v469, %v470
  %v472 = vsel %vm72, %v65, -inf
  %v473 = vrot.slane %v472, 4
  %v474 = vmax.f32 %v472, %v473
  %v475 = vrot.slane %v474, 2
  %v476 = vmax.f32 %v474, %v475
  %v477 = vrot.slane %v476, 1
  %v478 = vmax.f32 %v476, %v477
  %v479 = vsel %vm72, %v66, -inf
  %v480 = vrot.slane %v479, 4
  %v481 = vmax.f32 %v479, %v480
  %v482 = vrot.slane %v481, 2
  %v483 = vmax.f32 %v481, %v482
  %v484 = vrot.slane %v483, 1
  %v485 = vmax.f32 %v483, %v484
  %v486 = vsel %vm72, %v67, -inf
  %v487 = vrot.slane %v486, 4
  %v488 = vmax.f32 %v486, %v487
  %v489 = vrot.slane %v488, 2
  %v490 = vmax.f32 %v488, %v489
  %v491 = vrot.slane %v490, 1
  %v492 = vmax.f32 %v490, %v491
  %v493 = vsel %vm72, %v68, -inf
  %v494 = vrot.slane %v493, 4
  %v495 = vmax.f32 %v493, %v494
  %v496 = vrot.slane %v495, 2
  %v497 = vmax.f32 %v495, %v496
  %v498 = vrot.slane %v497, 1
  %v499 = vmax.f32 %v497, %v498
  %v500 = vsel %vm72, %v69, -inf
  %v501 = vrot.slane %v500, 4
  %v502 = vmax.f32 %v500, %v501
  %v503 = vrot.slane %v502, 2
  %v504 = vmax.f32 %v502, %v503
  %v505 = vrot.slane %v504, 1
  %v506 = vmax.f32 %v504, %v505
  %v507 = vsel %vm72, %v70, -inf
  %v508 = vrot.slane %v507, 4
  %v509 = vmax.f32 %v507, %v508
  %v510 = vrot.slane %v509, 2
  %v511 = vmax.f32 %v509, %v510
  %v512 = vrot.slane %v511, 1
  %v513 = vmax.f32 %v511, %v512
  %v514 = vsel %vm72, %v71, -inf
  %v515 = vrot.slane %v514, 4
  %v516 = vmax.f32 %v514, %v515
  %v517 = vrot.slane %v516, 2
  %v518 = vmax.f32 %v516, %v517
  %v519 = vrot.slane %v518, 1
  %v520 = vmax.f32 %v518, %v519
  %vm585 = vcmask 1041409
  %v586 = vsel %vm585, %v86, %v79
  %vm587 = vcmask 1042434
  %v588 = vsel %vm587, %v93, %v586
  %vm589 = vcmask 1043459
  %v590 = vsel %vm589, %v100, %v588
  %vm591 = vcmask 1044484
  %v592 = vsel %vm591, %v107, %v590
  %vm593 = vcmask 1045509
  %v594 = vsel %vm593, %v114, %v592
  %vm595 = vcmask 1046534
  %v596 = vsel %vm595, %v121, %v594
  %vm597 = vcmask 1047559
  %v598 = vsel %vm597, %v128, %v596
  %v599 = vsel %vm585, %v142, %v135
  %v600 = vsel %vm587, %v149, %v599
  %v601 = vsel %vm589, %v156, %v600
  %v602 = vsel %vm591, %v163, %v601
  %v603 = vsel %vm593, %v170, %v602
  %v604 = vsel %vm595, %v177, %v603
  %v605 = vsel %vm597, %v184, %v604
  %v606 = vsel %vm585, %v198, %v191
  %v607 = vsel %vm587, %v205, %v606
  %v608 = vsel %vm589, %v212, %v607
  %v609 = vsel %vm591, %v219, %v608
  %v610 = vsel %vm593, %v226, %v609
  %v611 = vsel %vm595, %v233, %v610
  %v612 = vsel %vm597, %v240, %v611
  %v613 = vsel %vm585, %v254, %v247
  %v614 = vsel %vm587, %v261, %v613
  %v615 = vsel %vm589, %v268, %v614
  %v616 = vsel %vm591, %v275, %v615
  %v617 = vsel %vm593, %v282, %v616
  %v618 = vsel %vm595, %v289, %v617
  %v619 = vsel %vm597, %v296, %v618
  %v620 = vsel %vm585, %v310, %v303
  %v621 = vsel %vm587, %v317, %v620
  %v622 = vsel %vm589, %v324, %v621
  %v623 = vsel %vm591, %v331, %v622
  %v624 = vsel %vm593, %v338, %v623
  %v625 = vsel %vm595, %v345, %v624
  %v626 = vsel %vm597, %v352, %v625
  %v627 = vsel %vm585, %v366, %v359
  %v628 = vsel %vm587, %v373, %v627
  %v629 = vsel %vm589, %v380, %v628
  %v630 = vsel %vm591, %v387, %v629
  %v631 = vsel %vm593, %v394, %v630
  %v632 = vsel %vm595, %v401, %v631
  %v633 = vsel %vm597, %v408, %v632
  %v634 = vsel %vm585, %v422, %v415
  %v635 = vsel %vm587, %v429, %v634
  %v636 = vsel %vm589, %v436, %v635
  %v637 = vsel %vm591, %v443, %v636
  %v638 = vsel %vm593, %v450, %v637
  %v639 = vsel %vm595, %v457, %v638
  %v640 = vsel %vm597, %v464, %v639
  %v641 = vsel %vm585, %v478, %v471
  %v642 = vsel %vm587, %v485, %v641
  %v643 = vsel %vm589, %v492, %v642
  %v644 = vsel %vm591, %v499, %v643
  %v645 = vsel %vm593, %v506, %v644
  %v646 = vsel %vm595, %v513, %v645
  %v647 = vsel %vm597, %v520, %v646
  %656 = vst.msk [vmem:[%s1] sm:$0xff] %vm72, %v598
  %657 = vst.msk [vmem:[%s1 + $0x8] sm:$0xff] %vm72, %v605
  %658 = vst.msk [vmem:[%s1 + $0x10] sm:$0xff] %vm72, %v612
  %659 = vst.msk [vmem:[%s1 + $0x18] sm:$0xff] %vm72, %v619
  %660 = vst.msk [vmem:[%s1 + $0x20] sm:$0xff] %vm72, %v626
  %661 = vst.msk [vmem:[%s1 + $0x28] sm:$0xff] %vm72, %v633
  %662 = vst.msk [vmem:[%s1 + $0x30] sm:$0xff] %vm72, %v640
  %663 = vst.msk [vmem:[%s1 + $0x38] sm:$0xff] %vm72, %v647
  // Predicated region
  $region6: #{_lambda_.27} parent=0 // pred_check
    _
  $region7: #{_lambda_.27} parent=0 // pred_check_branch
    %665 = sbr.rel (0) target = $region9
  $region8: #{_lambda_.27} parent=0 // pred_region
    _
  $region9: #{_lambda_.27} parent=0 // pred_fallthru
    _
  // Predicated region
  $region10: #{_lambda_.27} parent=0 // pred_check
    _
  $region11: #{_lambda_.27} parent=0 // pred_check_branch
    %667 = sbr.rel (0) target = $region13
  $region12: #{_lambda_.27} parent=0 // pred_region
    _
  $region13: #{_lambda_.27} parent=0 // pred_fallthru
    _

// kernel: sub.1049
$region0: #{sub.1049}
  %s0 = inlined_call_operand.vmem [shape: f32[2,4,4], index: 0, kind: input, shape index: {}]
  %s1 = inlined_call_operand.vmem [shape: f32[2,16], index: 1, kind: output, shape index: {}]
  $region1: #{sub.1049} parent=0
    #allocation0 [shape = 'u8[4096]{0}', space=vmem, size = 0x1000, scoped, tag = 'scoped mem for output reshape']
    #allocation1 [shape = 'u8[8192]{0}', space=vmem, size = 0x2000, scoped, tag = 'scoped mem for input reshape']
    %s3 = ssub.s32 16, 1
    %s4 = scalar_lea.vmem %s0, 4
    %v5 = vld [vmem:[%s4] sm:%s3]
    %s6 = scalar_lea.vmem [#allocation1], 8
    %7 = vst [vmem:[%s6] sm:%s3] %v5
    %v8 = vld [vmem:[%s0] sm:%s3]
    %9 = vst [vmem:[#allocation1] sm:%s3] %v8
    %s10 = smov 3
    %v11 = vld [vmem:[#allocation1] ss:$8 sm:%s10]
    %vm12 = vcmask 31744
    %13 = vst.msk [vmem:[#allocation0] sm:$0x3] %vm12, %v11
    %s14 = scalar_lea.vmem [#allocation1], 3
    %s15 = smov 3
    %v16 = vld [vmem:[%s14] ss:$8 sm:%s15]
    %17 = vrot.lane.b32.xlu0 %v16, 12
    %v18 = vpop.permute.xlu0 %17
    %vm19 = vcmask 130144
    %20 = vst.msk [vmem:[#allocation0] sm:$0x3] %vm19, %v18
    %s21 = scalar_lea.vmem [#allocation1], 2
    %s22 = smov 3
    %v23 = vld [vmem:[%s21] ss:$8 sm:%s22]
    %24 = vrot.lane.b32.xlu0 %v23, 8
    %v25 = vpop.permute.xlu0 %24
    %vm26 = vcmask 97344
    %27 = vst.msk [vmem:[#allocation0] sm:$0x3] %vm26, %v25
    %s28 = scalar_lea.vmem [#allocation1], 1
    %s29 = smov 3
    %v30 = vld [vmem:[%s28] ss:$8 sm:%s29]
    %31 = vrot.lane.b32.xlu0 %v30, 4
    %v32 = vpop.permute.xlu0 %31
    %vm33 = vcmask 64544
    %34 = vst.msk [vmem:[#allocation0] sm:$0x3] %vm33, %v32
    %s36 = ssub.s32 4, 1
    %v37 = vld [vmem:[#allocation0] sm:%s36]
    %s39 = ssub.s32 4, 1
    %40 = vst [vmem:[%s1] sm:%s39] %v37

// kernel: _lambda_.29
$region0: #{_lambda_.29}
  #allocation0 [shape = 'u32[]', space=smem, size = 0x4, offset = 0x4, fixed_abs, tag = 'smem constant byte address 0x4 - core index']
  #allocation1 [shape = 'u32[72,128]{1,0:T(1,128)}', space=vmem, size = 0x9000, scoped, tag = 'internal scratch']
  %s0 = inlined_call_operand.vmem [shape: bf16[256,30], index: 0, kind: input, shape index: {}]
  %s1 = inlined_call_operand.vmem [shape: bf16[30,19], index: 1, kind: input, shape index: {}]
  %s2 = inlined_call_operand.vmem [shape: f32[1,19], index: 2, kind: input, shape index: {}]
  %s3 = inlined_call_operand.vmem [shape: f32[256,19], index: 3, kind: output, shape index: {}]
  %s4 = sld [smem:[#allocation0]]
  $region45: #{_lambda_.29} parent=0
    _
  %s6 = ssub.s32 1, %s4
  %s7 = scalar_select 0, %s6, %s4
  loop: start=0, step=1, limit=4
  $region2: #{_lambda_.29} parent=0 // loop_pre_header
    _
  $region3: #{_lambda_.29} parent=0 // loop_header
    %s9 = sphi 0, %s13
    %p10 = scmp.ge.s32.totalorder %s9, 4
    %s19 = sphi 0, %s21
    %s22 = sphi 0, %s19
    %s23 = sphi 0, %s22
    %s39 = sphi 0, %s23
    %s43 = sphi 0, %s43
    %s45 = sphi 0, %s43
    %s46 = sphi 0, %s45
    %s60 = sphi 0, %s46
    %s64 = sphi 0, %s64
    %s66 = sphi 0, %s64
    %s67 = sphi 0, %s66
    %s81 = sphi 0, %s67
    %s87 = sphi 0, %s89
    %s90 = sphi 0, %s87
    %s91 = sphi 0, %s90
    %s107 = sphi 0, %s91
  $region4: #{_lambda_.29} parent=0 // loop_header_branch
    %12 = sbr.rel (%p10) target = $region8
  $region5: #{_lambda_.29} parent=0 // loop_body
    %s14 = ssub.s32 %s9, 1
    %s15 = ssub.s32 %s9, 2
    %s16 = sadd.s32 %s9, 1
    %s17 = ssub.s32 %s9, %s16
    %p18 = scmp.eq.s32.totalorder %s17, 0
    %s20 = sadd.s32 %s19, 1
    %s21 = scalar_select %p18, %s19, %s20
    %p24 = pneg %p18
    %p25 = scmp.eq.s32.totalorder %s9, 1
    %p26 = por %p24, %p25
    %p27 = scmp.ne.s32.totalorder %s19, %s22
    %p28 = scmp.eq.s32.totalorder %s9, 0
    %p29 = por %p27, %p28
    %p30 = scmp.ne.s32.totalorder %s19, %s22
    %p31 = scmp.eq.s32.totalorder %s14, 1
    %p32 = por %p30, %p31
    %p33 = scmp.ne.s32.totalorder %s22, %s23
    %p34 = scmp.eq.s32.totalorder %s14, 0
    %p35 = por %p33, %p34
    %p36 = scmp.ne.s32.totalorder %s22, %s23
    %p37 = scmp.eq.s32.totalorder %s15, 1
    %p38 = por %p36, %p37
    %p40 = scmp.ne.s32.totalorder %s23, %s39
    %p41 = scmp.eq.s32.totalorder %s15, 0
    %p42 = por %p40, %p41
    %s44 = sadd.s32 %s43, 1
    %p47 = scmp.eq.s32.totalorder %s9, 1
    %p48 = scmp.ne.s32.totalorder %s43, %s45
    %p49 = scmp.eq.s32.totalorder %s9, 0
    %p50 = por %p48, %p49
    %p51 = scmp.ne.s32.totalorder %s43, %s45
    %p52 = scmp.eq.s32.totalorder %s14, 1
    %p53 = por %p51, %p52
    %p54 = scmp.ne.s32.totalorder %s45, %s46
    %p55 = scmp.eq.s32.totalorder %s14, 0
    %p56 = por %p54, %p55
    %p57 = scmp.ne.s32.totalorder %s45, %s46
    %p58 = scmp.eq.s32.totalorder %s15, 1
    %p59 = por %p57, %p58
    %p61 = scmp.ne.s32.totalorder %s46, %s60
    %p62 = scmp.eq.s32.totalorder %s15, 0
    %p63 = por %p61, %p62
    %s65 = sadd.s32 %s64, 1
    %p68 = scmp.eq.s32.totalorder %s9, 1
    %p69 = scmp.ne.s32.totalorder %s64, %s66
    %p70 = scmp.eq.s32.totalorder %s9, 0
    %p71 = por %p69, %p70
    %p72 = scmp.ne.s32.totalorder %s64, %s66
    %p73 = scmp.eq.s32.totalorder %s14, 1
    %p74 = por %p72, %p73
    %p75 = scmp.ne.s32.totalorder %s66, %s67
    %p76 = scmp.eq.s32.totalorder %s14, 0
    %p77 = por %p75, %p76
    %p78 = scmp.ne.s32.totalorder %s66, %s67
    %p79 = scmp.eq.s32.totalorder %s15, 1
    %p80 = por %p78, %p79
    %p82 = scmp.ne.s32.totalorder %s67, %s81
    %p83 = scmp.eq.s32.totalorder %s15, 0
    %p84 = por %p82, %p83
    %s85 = ssub.s32 %s9, %s16
    %p86 = scmp.eq.s32.totalorder %s85, 0
    %s88 = sadd.s32 %s87, 1
    %s89 = scalar_select %p86, %s87, %s88
    %p92 = pneg %p86
    %p93 = scmp.eq.s32.totalorder %s9, 1
    %p94 = por %p92, %p93
    %p95 = scmp.ne.s32.totalorder %s87, %s90
    %p96 = scmp.eq.s32.totalorder %s9, 0
    %p97 = por %p95, %p96
    %p98 = scmp.ne.s32.totalorder %s87, %s90
    %p99 = scmp.eq.s32.totalorder %s14, 1
    %p100 = por %p98, %p99
    %p101 = scmp.ne.s32.totalorder %s90, %s91
    %p102 = scmp.eq.s32.totalorder %s14, 0
    %p103 = por %p101, %p102
    %p104 = scmp.ne.s32.totalorder %s90, %s91
    %p105 = scmp.eq.s32.totalorder %s15, 1
    %p106 = por %p104, %p105
    %p108 = scmp.ne.s32.totalorder %s91, %s107
    %p109 = scmp.eq.s32.totalorder %s15, 0
    %p110 = por %p108, %p109
    %p111 = scmp.le.s32.totalorder 1, %s9
    %p112 = scmp.lt.s32.totalorder %s9, 3
    %p113 = pnand %p111, %p112
    %p114 = pneg %p113
    // Predicated region
    $region9: #{_lambda_.29} parent=5 // pred_check
      _
    $region10: #{_lambda_.29} parent=5 // pred_check_branch
      %116 = sbr.rel (%p113) target = $region12
    $region11: #{_lambda_.29} parent=5 // pred_region
      %s117 = ssub.s32 %s9, 1
      // Predicated region
      $region13: #{_lambda_.29} parent=11 // pred_check
        %p118 = pneg %p56
      $region14: #{_lambda_.29} parent=11 // pred_check_branch
        %120 = sbr.rel (%p118) target = $region16
      $region15: #{_lambda_.29} parent=11 // pred_region
        _
      $region16: #{_lambda_.29} parent=11 // pred_fallthru
        _
      // Predicated region
      $region17: #{_lambda_.29} parent=11 // pred_check
        %p121 = pneg %p77
      $region18: #{_lambda_.29} parent=11 // pred_check_branch
        %123 = sbr.rel (%p121) target = $region20
      $region19: #{_lambda_.29} parent=11 // pred_region
        _
      $region20: #{_lambda_.29} parent=11 // pred_fallthru
        _
    $region12: #{_lambda_.29} parent=5 // pred_fallthru
      _
    %p124 = scmp.lt.s32.totalorder %s9, 2
    // Predicated region
    $region21: #{_lambda_.29} parent=5 // pred_check
      %p125 = pneg %p124
    $region22: #{_lambda_.29} parent=5 // pred_check_branch
      %127 = sbr.rel (%p125) target = $region24
    $region23: #{_lambda_.29} parent=5 // pred_region
      // Predicated region
      $region25: #{_lambda_.29} parent=23 // pred_check
        %p128 = pneg %p29
      $region26: #{_lambda_.29} parent=23 // pred_check_branch
        %130 = sbr.rel (%p128) target = $region28
      $region27: #{_lambda_.29} parent=23 // pred_region
        %s131 = smul.u32 16, %s9
        %p132 = scmp.lt.s32.totalorder %s131, 31
        %s133 = scalar_select %p132, %s131, 31
        %s134 = smul.addr %s133, 4
        %s135 = scalar_lea.vmem %s0, %s134
        %s136 = smul.u32 16, %s9
      $region28: #{_lambda_.29} parent=23 // pred_fallthru
        _
    $region24: #{_lambda_.29} parent=5 // pred_fallthru
      _
    %p137 = scmp.le.s32.totalorder 1, %s9
    %p138 = scmp.lt.s32.totalorder %s9, 3
    %p139 = pnand %p137, %p138
    %p140 = pneg %p139
    // Predicated region
    $region29: #{_lambda_.29} parent=5 // pred_check
      _
    $region30: #{_lambda_.29} parent=5 // pred_check_branch
      %142 = sbr.rel (%p139) target = $region32
    $region31: #{_lambda_.29} parent=5 // pred_region
      %s143 = ssub.s32 %s9, 1
      %s144 = smul.u32 16, %s14
      %p145 = scmp.lt.s32.totalorder %s144, 31
      %s146 = scalar_select %p145, %s144, 31
      %s147 = smul.addr %s146, 4
      %s148 = scalar_lea.vmem %s0, %s147
      %p149 = pneg %p35
      %p150 = pneg %p32
      %p151 = pneg %p56
      %p152 = pneg %p53
      %p153 = pneg %p77
      %p154 = pneg %p74
      %p155 = pneg %p103
      %p156 = pneg %p100
      %s157 = smul.u32 16, %s14
      %p158 = scmp.lt.s32.totalorder %s157, 31
      %s159 = scalar_select %p158, %s157, 31
      %s160 = smul.addr %s159, 8
      %s161 = scalar_lea.vmem %s3, %s160
      %s162 = smul.u32 16, %s14
      %p163 = scmp.lt.s32.totalorder %s162, 31
      %s164 = scalar_select %p163, %s162, 31
      %s165 = smul.addr %s164, 4
      %s166 = scalar_lea.vmem %s0, %s165
      %s167 = smul.u32 16, %s14
      %s168 = smul.u32 16, %s14
      %p169 = scmp.lt.s32.totalorder %s168, 31
      %s170 = scalar_select %p169, %s168, 31
      %s171 = smul.addr %s170, 8
      %s172 = scalar_lea.vmem %s3, %s171
      %s173 = smul.u32 16, %s14
      %v175 = vld [vmem:[%s166] sm:$0xf]
      %v176 = vld [vmem:[%s166 + $0x4] sm:$0xf]
      %v177 = vld [vmem:[%s166 + $0x8] sm:$0xf]
      %v178 = vld [vmem:[%s166 + $0xc] sm:$0xf]
      %v179 = vld [vmem:[%s166 + $0x10] sm:$0xf]
      %v180 = vld [vmem:[%s166 + $0x14] sm:$0xf]
      %v181 = vld [vmem:[%s166 + $0x18] sm:$0xf]
      %v182 = vld [vmem:[%s166 + $0x1c] sm:$0xf]
      %v183 = vld [vmem:[%s166 + $0x20] sm:$0xf]
      %v184 = vld [vmem:[%s166 + $0x24] sm:$0xf]
      %v185 = vld [vmem:[%s166 + $0x28] sm:$0xf]
      %v186 = vld [vmem:[%s166 + $0x2c] sm:$0xf]
      %v187 = vld [vmem:[%s166 + $0x30] sm:$0xf]
      %v188 = vld [vmem:[%s166 + $0x34] sm:$0xf]
      %v189 = vld [vmem:[%s166 + $0x38] sm:$0xf]
      %v190 = vld [vmem:[%s166 + $0x3c] sm:$0xf]
      %v191 = vld [vmem:[%s1] sm:$0xf]
      %v192 = vld [vmem:[%s1 + $0x4] sm:$0xf]
      %v193 = vld [vmem:[%s1 + $0x8] sm:$0xf]
      %v194 = vld [vmem:[%s1 + $0xc] sm:$0x7]
      %v195 = vld [vmem:[%s2] sm:$0x1]
      %v197 = vperm.slane %v195, 0
      %v215 = vunpack.c.l.b16 %v175
      %v216 = vunpack.c.l.b16 %v176
      %v217 = vunpack.c.l.b16 %v177
      %v218 = vunpack.c.l.b16 %v178
      %v219 = vunpack.c.l.b16 %v179
      %v220 = vunpack.c.l.b16 %v180
      %v221 = vunpack.c.l.b16 %v181
      %v222 = vunpack.c.l.b16 %v182
      %v223 = vunpack.c.l.b16 %v183
      %v224 = vunpack.c.l.b16 %v184
      %v225 = vunpack.c.l.b16 %v185
      %v226 = vunpack.c.l.b16 %v186
      %v227 = vunpack.c.l.b16 %v187
      %v228 = vunpack.c.l.b16 %v188
      %v229 = vunpack.c.l.b16 %v189
      %v230 = vunpack.c.l.b16 %v190
      %v231 = vpack.c.b16 %v216, %v215
      %v232 = vpack.c.b16 %v218, %v217
      %v233 = vpack.c.b16 %v220, %v219
      %v234 = vpack.c.b16 %v222, %v221
      %v235 = vpack.c.b16 %v224, %v223
      %v236 = vpack.c.b16 %v226, %v225
      %v237 = vpack.c.b16 %v228, %v227
      %v238 = vpack.c.b16 %v230, %v229
      %v243 = vunpack.c.l.b16 %v191
      %v244 = vunpack.c.l.b16 %v192
      %v245 = vunpack.c.l.b16 %v193
      %v246 = vunpack.c.l.b16 %v194
      %v247 = vpack.c.b16 %v244, %v243
      %v248 = vpack.c.b16 %v246, %v245
      %vm250 = vcmask 244736
      %v252 = vsel %vm250, %v231, 0
      %v255 = vsel %vm250, %v232, 0
      %v258 = vsel %vm250, %v233, 0
      %v261 = vsel %vm250, %v234, 0
      %v264 = vsel %vm250, %v235, 0
      %v267 = vsel %vm250, %v236, 0
      %v270 = vsel %vm250, %v237, 0
      %v273 = vsel %vm250, %v238, 0
      %vm275 = vcmask 1046528
      %v277 = vsel %vm275, %v248, 0
      %279 = vmatpush.bf16.msra.mxu0 0
      %280 = vmatpush.bf16.msra.mxu0 0
      %281 = vmatpush.bf16.msra.mxu0 0
      %282 = vmatpush.bf16.msra.mxu0 0
      %283 = vmatpush.bf16.msra.mxu0 0
      %284 = vmatpush.bf16.msra.mxu0 0
      %285 = vmatpush.bf16.msra.mxu0 %v277
      %286 = vmatpush.bf16.msra.mxu0 %v247
      %287 = vmatmul.bf16.gmra.mxu0 %v252
      %v288 = vpop.f32.mrf.mxu0
      %v289 = vadd.f32 %v197, %v288
      %v290 = vpop.f32.mrf.mxu0
      %v291 = vadd.f32 %v197, %v290
      %292 = vmatmul.bf16.gmra.mxu0 %v255
      %v293 = vpop.f32.mrf.mxu0
      %v294 = vadd.f32 %v197, %v293
      %v295 = vpop.f32.mrf.mxu0
      %v296 = vadd.f32 %v197, %v295
      %297 = vmatmul.bf16.gmra.mxu0 %v258
      %v298 = vpop.f32.mrf.mxu0
      %v299 = vadd.f32 %v197, %v298
      %v300 = vpop.f32.mrf.mxu0
      %v301 = vadd.f32 %v197, %v300
      %302 = vmatmul.bf16.gmra.mxu0 %v261
      %v303 = vpop.f32.mrf.mxu0
      %v304 = vadd.f32 %v197, %v303
      %v305 = vpop.f32.mrf.mxu0
      %v306 = vadd.f32 %v197, %v305
      %307 = vmatmul.bf16.gmra.mxu0 %v264
      %v308 = vpop.f32.mrf.mxu0
      %v309 = vadd.f32 %v197, %v308
      %v310 = vpop.f32.mrf.mxu0
      %v311 = vadd.f32 %v197, %v310
      %312 = vmatmul.bf16.gmra.mxu0 %v267
      %v313 = vpop.f32.mrf.mxu0
      %v314 = vadd.f32 %v197, %v313
      %v315 = vpop.f32.mrf.mxu0
      %v316 = vadd.f32 %v197, %v315
      %317 = vmatmul.bf16.gmra.mxu0 %v270
      %v318 = vpop.f32.mrf.mxu0
      %v319 = vadd.f32 %v197, %v318
      %v320 = vpop.f32.mrf.mxu0
      %v321 = vadd.f32 %v197, %v320
      %322 = vmatmul.bf16.gmra.mxu0 %v273
      %v323 = vpop.f32.mrf.mxu0
      %v324 = vadd.f32 %v197, %v323
      %v325 = vpop.f32.mrf.mxu0
      %v326 = vadd.f32 %v197, %v325
      %327 = vdwg.mxu0
      %vm328 = vcmask 154624
      %329 = vst.msk [vmem:[%s172] sm:$0xff] %vm328, %v289
      %330 = vst.msk [vmem:[%s172 + $0x8] sm:$0xff] %vm328, %v291
      %331 = vst.msk [vmem:[%s172 + $0x10] sm:$0xff] %vm328, %v294
      %332 = vst.msk [vmem:[%s172 + $0x18] sm:$0xff] %vm328, %v296
      %333 = vst.msk [vmem:[%s172 + $0x20] sm:$0xff] %vm328, %v299
      %334 = vst.msk [vmem:[%s172 + $0x28] sm:$0xff] %vm328, %v301
      %335 = vst.msk [vmem:[%s172 + $0x30] sm:$0xff] %vm328, %v304
      %336 = vst.msk [vmem:[%s172 + $0x38] sm:$0xff] %vm328, %v306
      %337 = vst.msk [vmem:[%s172 + $0x40] sm:$0xff] %vm328, %v309
      %338 = vst.msk [vmem:[%s172 + $0x48] sm:$0xff] %vm328, %v311
      %339 = vst.msk [vmem:[%s172 + $0x50] sm:$0xff] %vm328, %v314
      %340 = vst.msk [vmem:[%s172 + $0x58] sm:$0xff] %vm328, %v316
      %341 = vst.msk [vmem:[%s172 + $0x60] sm:$0xff] %vm328, %v319
      %342 = vst.msk [vmem:[%s172 + $0x68] sm:$0xff] %vm328, %v321
      %343 = vst.msk [vmem:[%s172 + $0x70] sm:$0xff] %vm328, %v324
      %344 = vst.msk [vmem:[%s172 + $0x78] sm:$0xff] %vm328, %v326
      %s345 = smul.u32 16, %s14
      %p346 = scmp.lt.s32.totalorder %s345, 31
      %s347 = scalar_select %p346, %s345, 31
      %s348 = smul.addr %s347, 8
      %s349 = scalar_lea.vmem %s3, %s348
      // Predicated region
      $region33: #{_lambda_.29} parent=31 // pred_check
        %p350 = pneg %p100
      $region34: #{_lambda_.29} parent=31 // pred_check_branch
        %352 = sbr.rel (%p350) target = $region36
      $region35: #{_lambda_.29} parent=31 // pred_region
        %s353 = smul.u32 16, %s14
      $region36: #{_lambda_.29} parent=31 // pred_fallthru
        _
    $region32: #{_lambda_.29} parent=5 // pred_fallthru
      _
    %p354 = scmp.le.s32.totalorder 2, %s9
    // Predicated region
    $region37: #{_lambda_.29} parent=5 // pred_check
      %p355 = pneg %p354
    $region38: #{_lambda_.29} parent=5 // pred_check_branch
      %357 = sbr.rel (%p355) target = $region40
    $region39: #{_lambda_.29} parent=5 // pred_region
      %s358 = ssub.s32 %s9, 2
      // Predicated region
      $region41: #{_lambda_.29} parent=39 // pred_check
        %p359 = pneg %p106
      $region42: #{_lambda_.29} parent=39 // pred_check_branch
        %361 = sbr.rel (%p359) target = $region44
      $region43: #{_lambda_.29} parent=39 // pred_region
        %s362 = smul.u32 16, %s15
        %p363 = scmp.lt.s32.totalorder %s362, 31
        %s364 = scalar_select %p363, %s362, 31
        %s365 = smul.addr %s364, 8
        %s366 = scalar_lea.vmem %s3, %s365
      $region44: #{_lambda_.29} parent=39 // pred_fallthru
        _
    $region40: #{_lambda_.29} parent=5 // pred_fallthru
      _
  $region6: #{_lambda_.29} parent=0 // loop_footer
    %s13 = sadd.s32 1, %s9
  $region7: #{_lambda_.29} parent=0 // loop_footer_branch
    %8 = sbr.rel target = $region3
  $region8: #{_lambda_.29} parent=0 // loop_exit
    _

// kernel: _lambda_.28
$region0: #{_lambda_.28}
  #allocation0 [shape = 'u32[]', space=smem, size = 0x4, offset = 0x4, fixed_abs, tag = 'smem constant byte address 0x4 - core index']
  #allocation1 [shape = 'u32[72,128]{1,0:T(1,128)}', space=vmem, size = 0x9000, scoped, tag = 'internal scratch']
  %s0 = inlined_call_operand.vmem [shape: bf16[256,48], index: 0, kind: input, shape index: {}]
  %s1 = inlined_call_operand.vmem [shape: bf16[48,30], index: 1, kind: input, shape index: {}]
  %s2 = inlined_call_operand.vmem [shape: f32[1,30], index: 2, kind: input, shape index: {}]
  %s3 = inlined_call_operand.vmem [shape: f32[256,30], index: 3, kind: output, shape index: {}]
  %s4 = sld [smem:[#allocation0]]
  $region45: #{_lambda_.28} parent=0
    _
  %s6 = ssub.s32 1, %s4
  %s7 = scalar_select 0, %s6, %s4
  loop: start=0, step=1, limit=4
  $region2: #{_lambda_.28} parent=0 // loop_pre_header
    _
  $region3: #{_lambda_.28} parent=0 // loop_header
    %s9 = sphi 0, %s13
    %p10 = scmp.ge.s32.totalorder %s9, 4
    %s19 = sphi 0, %s21
    %s22 = sphi 0, %s19
    %s23 = sphi 0, %s22
    %s39 = sphi 0, %s23
    %s43 = sphi 0, %s43
    %s45 = sphi 0, %s43
    %s46 = sphi 0, %s45
    %s60 = sphi 0, %s46
    %s64 = sphi 0, %s64
    %s66 = sphi 0, %s64
    %s67 = sphi 0, %s66
    %s81 = sphi 0, %s67
    %s87 = sphi 0, %s89
    %s90 = sphi 0, %s87
    %s91 = sphi 0, %s90
    %s107 = sphi 0, %s91
  $region4: #{_lambda_.28} parent=0 // loop_header_branch
    %12 = sbr.rel (%p10) target = $region8
  $region5: #{_lambda_.28} parent=0 // loop_body
    %s14 = ssub.s32 %s9, 1
    %s15 = ssub.s32 %s9, 2
    %s16 = sadd.s32 %s9, 1
    %s17 = ssub.s32 %s9, %s16
    %p18 = scmp.eq.s32.totalorder %s17, 0
    %s20 = sadd.s32 %s19, 1
    %s21 = scalar_select %p18, %s19, %s20
    %p24 = pneg %p18
    %p25 = scmp.eq.s32.totalorder %s9, 1
    %p26 = por %p24, %p25
    %p27 = scmp.ne.s32.totalorder %s19, %s22
    %p28 = scmp.eq.s32.totalorder %s9, 0
    %p29 = por %p27, %p28
    %p30 = scmp.ne.s32.totalorder %s19, %s22
    %p31 = scmp.eq.s32.totalorder %s14, 1
    %p32 = por %p30, %p31
    %p33 = scmp.ne.s32.totalorder %s22, %s23
    %p34 = scmp.eq.s32.totalorder %s14, 0
    %p35 = por %p33, %p34
    %p36 = scmp.ne.s32.totalorder %s22, %s23
    %p37 = scmp.eq.s32.totalorder %s15, 1
    %p38 = por %p36, %p37
    %p40 = scmp.ne.s32.totalorder %s23, %s39
    %p41 = scmp.eq.s32.totalorder %s15, 0
    %p42 = por %p40, %p41
    %s44 = sadd.s32 %s43, 1
    %p47 = scmp.eq.s32.totalorder %s9, 1
    %p48 = scmp.ne.s32.totalorder %s43, %s45
    %p49 = scmp.eq.s32.totalorder %s9, 0
    %p50 = por %p48, %p49
    %p51 = scmp.ne.s32.totalorder %s43, %s45
    %p52 = scmp.eq.s32.totalorder %s14, 1
    %p53 = por %p51, %p52
    %p54 = scmp.ne.s32.totalorder %s45, %s46
    %p55 = scmp.eq.s32.totalorder %s14, 0
    %p56 = por %p54, %p55
    %p57 = scmp.ne.s32.totalorder %s45, %s46
    %p58 = scmp.eq.s32.totalorder %s15, 1
    %p59 = por %p57, %p58
    %p61 = scmp.ne.s32.totalorder %s46, %s60
    %p62 = scmp.eq.s32.totalorder %s15, 0
    %p63 = por %p61, %p62
    %s65 = sadd.s32 %s64, 1
    %p68 = scmp.eq.s32.totalorder %s9, 1
    %p69 = scmp.ne.s32.totalorder %s64, %s66
    %p70 = scmp.eq.s32.totalorder %s9, 0
    %p71 = por %p69, %p70
    %p72 = scmp.ne.s32.totalorder %s64, %s66
    %p73 = scmp.eq.s32.totalorder %s14, 1
    %p74 = por %p72, %p73
    %p75 = scmp.ne.s32.totalorder %s66, %s67
    %p76 = scmp.eq.s32.totalorder %s14, 0
    %p77 = por %p75, %p76
    %p78 = scmp.ne.s32.totalorder %s66, %s67
    %p79 = scmp.eq.s32.totalorder %s15, 1
    %p80 = por %p78, %p79
    %p82 = scmp.ne.s32.totalorder %s67, %s81
    %p83 = scmp.eq.s32.totalorder %s15, 0
    %p84 = por %p82, %p83
    %s85 = ssub.s32 %s9, %s16
    %p86 = scmp.eq.s32.totalorder %s85, 0
    %s88 = sadd.s32 %s87, 1
    %s89 = scalar_select %p86, %s87, %s88
    %p92 = pneg %p86
    %p93 = scmp.eq.s32.totalorder %s9, 1
    %p94 = por %p92, %p93
    %p95 = scmp.ne.s32.totalorder %s87, %s90
    %p96 = scmp.eq.s32.totalorder %s9, 0
    %p97 = por %p95, %p96
    %p98 = scmp.ne.s32.totalorder %s87, %s90
    %p99 = scmp.eq.s32.totalorder %s14, 1
    %p100 = por %p98, %p99
    %p101 = scmp.ne.s32.totalorder %s90, %s91
    %p102 = scmp.eq.s32.totalorder %s14, 0
    %p103 = por %p101, %p102
    %p104 = scmp.ne.s32.totalorder %s90, %s91
    %p105 = scmp.eq.s32.totalorder %s15, 1
    %p106 = por %p104, %p105
    %p108 = scmp.ne.s32.totalorder %s91, %s107
    %p109 = scmp.eq.s32.totalorder %s15, 0
    %p110 = por %p108, %p109
    %p111 = scmp.le.s32.totalorder 1, %s9
    %p112 = scmp.lt.s32.totalorder %s9, 3
    %p113 = pnand %p111, %p112
    %p114 = pneg %p113
    // Predicated region
    $region9: #{_lambda_.28} parent=5 // pred_check
      _
    $region10: #{_lambda_.28} parent=5 // pred_check_branch
      %116 = sbr.rel (%p113) target = $region12
    $region11: #{_lambda_.28} parent=5 // pred_region
      %s117 = ssub.s32 %s9, 1
      // Predicated region
      $region13: #{_lambda_.28} parent=11 // pred_check
        %p118 = pneg %p56
      $region14: #{_lambda_.28} parent=11 // pred_check_branch
        %120 = sbr.rel (%p118) target = $region16
      $region15: #{_lambda_.28} parent=11 // pred_region
        _
      $region16: #{_lambda_.28} parent=11 // pred_fallthru
        _
      // Predicated region
      $region17: #{_lambda_.28} parent=11 // pred_check
        %p121 = pneg %p77
      $region18: #{_lambda_.28} parent=11 // pred_check_branch
        %123 = sbr.rel (%p121) target = $region20
      $region19: #{_lambda_.28} parent=11 // pred_region
        _
      $region20: #{_lambda_.28} parent=11 // pred_fallthru
        _
    $region12: #{_lambda_.28} parent=5 // pred_fallthru
      _
    %p124 = scmp.lt.s32.totalorder %s9, 2
    // Predicated region
    $region21: #{_lambda_.28} parent=5 // pred_check
      %p125 = pneg %p124
    $region22: #{_lambda_.28} parent=5 // pred_check_branch
      %127 = sbr.rel (%p125) target = $region24
    $region23: #{_lambda_.28} parent=5 // pred_region
      // Predicated region
      $region25: #{_lambda_.28} parent=23 // pred_check
        %p128 = pneg %p29
      $region26: #{_lambda_.28} parent=23 // pred_check_branch
        %130 = sbr.rel (%p128) target = $region28
      $region27: #{_lambda_.28} parent=23 // pred_region
        %s131 = smul.u32 16, %s9
        %p132 = scmp.lt.s32.totalorder %s131, 31
        %s133 = scalar_select %p132, %s131, 31
        %s134 = smul.addr %s133, 4
        %s135 = scalar_lea.vmem %s0, %s134
        %s136 = smul.u32 16, %s9
      $region28: #{_lambda_.28} parent=23 // pred_fallthru
        _
    $region24: #{_lambda_.28} parent=5 // pred_fallthru
      _
    %p137 = scmp.le.s32.totalorder 1, %s9
    %p138 = scmp.lt.s32.totalorder %s9, 3
    %p139 = pnand %p137, %p138
    %p140 = pneg %p139
    // Predicated region
    $region29: #{_lambda_.28} parent=5 // pred_check
      _
    $region30: #{_lambda_.28} parent=5 // pred_check_branch
      %142 = sbr.rel (%p139) target = $region32
    $region31: #{_lambda_.28} parent=5 // pred_region
      %s143 = ssub.s32 %s9, 1
      %s144 = smul.u32 16, %s14
      %p145 = scmp.lt.s32.totalorder %s144, 31
      %s146 = scalar_select %p145, %s144, 31
      %s147 = smul.addr %s146, 4
      %s148 = scalar_lea.vmem %s0, %s147
      %p149 = pneg %p35
      %p150 = pneg %p32
      %p151 = pneg %p56
      %p152 = pneg %p53
      %p153 = pneg %p77
      %p154 = pneg %p74
      %p155 = pneg %p103
      %p156 = pneg %p100
      %s157 = smul.u32 16, %s14
      %p158 = scmp.lt.s32.totalorder %s157, 31
      %s159 = scalar_select %p158, %s157, 31
      %s160 = smul.addr %s159, 8
      %s161 = scalar_lea.vmem %s3, %s160
      %s162 = smul.u32 16, %s14
      %p163 = scmp.lt.s32.totalorder %s162, 31
      %s164 = scalar_select %p163, %s162, 31
      %s165 = smul.addr %s164, 4
      %s166 = scalar_lea.vmem %s0, %s165
      %s167 = smul.u32 16, %s14
      %s168 = smul.u32 16, %s14
      %p169 = scmp.lt.s32.totalorder %s168, 31
      %s170 = scalar_select %p169, %s168, 31
      %s171 = smul.addr %s170, 8
      %s172 = scalar_lea.vmem %s3, %s171
      %s173 = smul.u32 16, %s14
      %v175 = vld [vmem:[%s166] sm:$0xf]
      %v176 = vld [vmem:[%s166 + $0x4] sm:$0xf]
      %v177 = vld [vmem:[%s166 + $0x8] sm:$0xf]
      %v178 = vld [vmem:[%s166 + $0xc] sm:$0xf]
      %v179 = vld [vmem:[%s166 + $0x10] sm:$0xf]
      %v180 = vld [vmem:[%s166 + $0x14] sm:$0xf]
      %v181 = vld [vmem:[%s166 + $0x18] sm:$0xf]
      %v182 = vld [vmem:[%s166 + $0x1c] sm:$0xf]
      %v183 = vld [vmem:[%s166 + $0x20] sm:$0xf]
      %v184 = vld [vmem:[%s166 + $0x24] sm:$0xf]
      %v185 = vld [vmem:[%s166 + $0x28] sm:$0xf]
      %v186 = vld [vmem:[%s166 + $0x2c] sm:$0xf]
      %v187 = vld [vmem:[%s166 + $0x30] sm:$0xf]
      %v188 = vld [vmem:[%s166 + $0x34] sm:$0xf]
      %v189 = vld [vmem:[%s166 + $0x38] sm:$0xf]
      %v190 = vld [vmem:[%s166 + $0x3c] sm:$0xf]
      %v191 = vld [vmem:[%s1] sm:$0xf]
      %v192 = vld [vmem:[%s1 + $0x4] sm:$0xf]
      %v193 = vld [vmem:[%s1 + $0x8] sm:$0xf]
      %v194 = vld [vmem:[%s1 + $0xc] sm:$0xf]
      %v195 = vld [vmem:[%s1 + $0x10] sm:$0xf]
      %v196 = vld [vmem:[%s1 + $0x14] sm:$0xf]
      %v197 = vld [vmem:[%s2] sm:$0x1]
      %v199 = vperm.slane %v197, 0
      %v217 = vunpack.c.l.b16 %v175
      %v218 = vunpack.c.l.b16 %v176
      %v219 = vunpack.c.l.b16 %v177
      %v220 = vunpack.c.l.b16 %v178
      %v221 = vunpack.c.l.b16 %v179
      %v222 = vunpack.c.l.b16 %v180
      %v223 = vunpack.c.l.b16 %v181
      %v224 = vunpack.c.l.b16 %v182
      %v225 = vunpack.c.l.b16 %v183
      %v226 = vunpack.c.l.b16 %v184
      %v227 = vunpack.c.l.b16 %v185
      %v228 = vunpack.c.l.b16 %v186
      %v229 = vunpack.c.l.b16 %v187
      %v230 = vunpack.c.l.b16 %v188
      %v231 = vunpack.c.l.b16 %v189
      %v232 = vunpack.c.l.b16 %v190
      %v233 = vpack.c.b16 %v218, %v217
      %v234 = vpack.c.b16 %v220, %v219
      %v235 = vpack.c.b16 %v222, %v221
      %v236 = vpack.c.b16 %v224, %v223
      %v237 = vpack.c.b16 %v226, %v225
      %v238 = vpack.c.b16 %v228, %v227
      %v239 = vpack.c.b16 %v230, %v229
      %v240 = vpack.c.b16 %v232, %v231
      %v247 = vunpack.c.l.b16 %v191
      %v248 = vunpack.c.l.b16 %v192
      %v249 = vunpack.c.l.b16 %v193
      %v250 = vunpack.c.l.b16 %v194
      %v251 = vunpack.c.l.b16 %v195
      %v252 = vunpack.c.l.b16 %v196
      %v253 = vpack.c.b16 %v248, %v247
      %v254 = vpack.c.b16 %v250, %v249
      %v255 = vpack.c.b16 %v252, %v251
      %vm259 = vcmask 392192
      %v261 = vsel %vm259, %v233, 0
      %v264 = vsel %vm259, %v234, 0
      %v267 = vsel %vm259, %v235, 0
      %v270 = vsel %vm259, %v236, 0
      %v273 = vsel %vm259, %v237, 0
      %v276 = vsel %vm259, %v238, 0
      %v279 = vsel %vm259, %v239, 0
      %v282 = vsel %vm259, %v240, 0
      %284 = vmatpush.bf16.msra.mxu0 0
      %285 = vmatpush.bf16.msra.mxu0 0
      %286 = vmatpush.bf16.msra.mxu0 0
      %287 = vmatpush.bf16.msra.mxu0 0
      %288 = vmatpush.bf16.msra.mxu0 0
      %289 = vmatpush.bf16.msra.mxu0 %v255
      %290 = vmatpush.bf16.msra.mxu0 %v254
      %291 = vmatpush.bf16.msra.mxu0 %v253
      %292 = vmatmul.bf16.gmra.mxu0 %v261
      %v293 = vpop.f32.mrf.mxu0
      %v294 = vadd.f32 %v199, %v293
      %v295 = vpop.f32.mrf.mxu0
      %v296 = vadd.f32 %v199, %v295
      %297 = vmatmul.bf16.gmra.mxu0 %v264
      %v298 = vpop.f32.mrf.mxu0
      %v299 = vadd.f32 %v199, %v298
      %v300 = vpop.f32.mrf.mxu0
      %v301 = vadd.f32 %v199, %v300
      %302 = vmatmul.bf16.gmra.mxu0 %v267
      %v303 = vpop.f32.mrf.mxu0
      %v304 = vadd.f32 %v199, %v303
      %v305 = vpop.f32.mrf.mxu0
      %v306 = vadd.f32 %v199, %v305
      %307 = vmatmul.bf16.gmra.mxu0 %v270
      %v308 = vpop.f32.mrf.mxu0
      %v309 = vadd.f32 %v199, %v308
      %v310 = vpop.f32.mrf.mxu0
      %v311 = vadd.f32 %v199, %v310
      %312 = vmatmul.bf16.gmra.mxu0 %v273
      %v313 = vpop.f32.mrf.mxu0
      %v314 = vadd.f32 %v199, %v313
      %v315 = vpop.f32.mrf.mxu0
      %v316 = vadd.f32 %v199, %v315
      %317 = vmatmul.bf16.gmra.mxu0 %v276
      %v318 = vpop.f32.mrf.mxu0
      %v319 = vadd.f32 %v199, %v318
      %v320 = vpop.f32.mrf.mxu0
      %v321 = vadd.f32 %v199, %v320
      %322 = vmatmul.bf16.gmra.mxu0 %v279
      %v323 = vpop.f32.mrf.mxu0
      %v324 = vadd.f32 %v199, %v323
      %v325 = vpop.f32.mrf.mxu0
      %v326 = vadd.f32 %v199, %v325
      %327 = vmatmul.bf16.gmra.mxu0 %v282
      %v328 = vpop.f32.mrf.mxu0
      %v329 = vadd.f32 %v199, %v328
      %v330 = vpop.f32.mrf.mxu0
      %v331 = vadd.f32 %v199, %v330
      %332 = vdwg.mxu0
      %vm333 = vcmask 244736
      %334 = vst.msk [vmem:[%s172] sm:$0xff] %vm333, %v294
      %335 = vst.msk [vmem:[%s172 + $0x8] sm:$0xff] %vm333, %v296
      %336 = vst.msk [vmem:[%s172 + $0x10] sm:$0xff] %vm333, %v299
      %337 = vst.msk [vmem:[%s172 + $0x18] sm:$0xff] %vm333, %v301
      %338 = vst.msk [vmem:[%s172 + $0x20] sm:$0xff] %vm333, %v304
      %339 = vst.msk [vmem:[%s172 + $0x28] sm:$0xff] %vm333, %v306
      %340 = vst.msk [vmem:[%s172 + $0x30] sm:$0xff] %vm333, %v309
      %341 = vst.msk [vmem:[%s172 + $0x38] sm:$0xff] %vm333, %v311
      %342 = vst.msk [vmem:[%s172 + $0x40] sm:$0xff] %vm333, %v314
      %343 = vst.msk [vmem:[%s172 + $0x48] sm:$0xff] %vm333, %v316
      %344 = vst.msk [vmem:[%s172 + $0x50] sm:$0xff] %vm333, %v319
      %345 = vst.msk [vmem:[%s172 + $0x58] sm:$0xff] %vm333, %v321
      %346 = vst.msk [vmem:[%s172 + $0x60] sm:$0xff] %vm333, %v324
      %347 = vst.msk [vmem:[%s172 + $0x68] sm:$0xff] %vm333, %v326
      %348 = vst.msk [vmem:[%s172 + $0x70] sm:$0xff] %vm333, %v329
      %349 = vst.msk [vmem:[%s172 + $0x78] sm:$0xff] %vm333, %v331
      %s350 = smul.u32 16, %s14
      %p351 = scmp.lt.s32.totalorder %s350, 31
      %s352 = scalar_select %p351, %s350, 31
      %s353 = smul.addr %s352, 8
      %s354 = scalar_lea.vmem %s3, %s353
      // Predicated region
      $region33: #{_lambda_.28} parent=31 // pred_check
        %p355 = pneg %p100
      $region34: #{_lambda_.28} parent=31 // pred_check_branch
        %357 = sbr.rel (%p355) target = $region36
      $region35: #{_lambda_.28} parent=31 // pred_region
        %s358 = smul.u32 16, %s14
      $region36: #{_lambda_.28} parent=31 // pred_fallthru
        _
    $region32: #{_lambda_.28} parent=5 // pred_fallthru
      _
    %p359 = scmp.le.s32.totalorder 2, %s9
    // Predicated region
    $region37: #{_lambda_.28} parent=5 // pred_check
      %p360 = pneg %p359
    $region38: #{_lambda_.28} parent=5 // pred_check_branch
      %362 = sbr.rel (%p360) target = $region40
    $region39: #{_lambda_.28} parent=5 // pred_region
      %s363 = ssub.s32 %s9, 2
      // Predicated region
      $region41: #{_lambda_.28} parent=39 // pred_check
        %p364 = pneg %p106
      $region42: #{_lambda_.28} parent=39 // pred_check_branch
        %366 = sbr.rel (%p364) target = $region44
      $region43: #{_lambda_.28} parent=39 // pred_region
        %s367 = smul.u32 16, %s15
        %p368 = scmp.lt.s32.totalorder %s367, 31
        %s369 = scalar_select %p368, %s367, 31
        %s370 = smul.addr %s369, 8
        %s371 = scalar_lea.vmem %s3, %s370
      $region44: #{_lambda_.28} parent=39 // pred_fallthru
        _
    $region40: #{_lambda_.28} parent=5 // pred_fallthru
      _
  $region6: #{_lambda_.28} parent=0 // loop_footer
    %s13 = sadd.s32 1, %s9
  $region7: #{_lambda_.28} parent=0 // loop_footer_branch
    %8 = sbr.rel target = $region3
  $region8: #{_lambda_.28} parent=0 // loop_exit
    _

// kernel: _lambda_.30
$region0: #{_lambda_.30}
  #allocation0 [shape = 'u32[]', space=smem, size = 0x4, offset = 0x4, fixed_abs, tag = 'smem constant byte address 0x4 - core index']
  #allocation1 [shape = 'u32[72,128]{1,0:T(1,128)}', space=vmem, size = 0x9000, scoped, tag = 'internal scratch']
  %s0 = inlined_call_operand.vmem [shape: bf16[256,38], index: 0, kind: input, shape index: {}]
  %s1 = inlined_call_operand.vmem [shape: bf16[38,24], index: 1, kind: input, shape index: {}]
  %s2 = inlined_call_operand.vmem [shape: f32[1,24], index: 2, kind: input, shape index: {}]
  %s3 = inlined_call_operand.vmem [shape: f32[256,24], index: 3, kind: output, shape index: {}]
  %s4 = sld [smem:[#allocation0]]
  $region45: #{_lambda_.30} parent=0
    _
  %s6 = ssub.s32 1, %s4
  %s7 = scalar_select 0, %s6, %s4
  loop: start=0, step=1, limit=4
  $region2: #{_lambda_.30} parent=0 // loop_pre_header
    _
  $region3: #{_lambda_.30} parent=0 // loop_header
    %s9 = sphi 0, %s13
    %p10 = scmp.ge.s32.totalorder %s9, 4
    %s19 = sphi 0, %s21
    %s22 = sphi 0, %s19
    %s23 = sphi 0, %s22
    %s39 = sphi 0, %s23
    %s43 = sphi 0, %s43
    %s45 = sphi 0, %s43
    %s46 = sphi 0, %s45
    %s60 = sphi 0, %s46
    %s64 = sphi 0, %s64
    %s66 = sphi 0, %s64
    %s67 = sphi 0, %s66
    %s81 = sphi 0, %s67
    %s87 = sphi 0, %s89
    %s90 = sphi 0, %s87
    %s91 = sphi 0, %s90
    %s107 = sphi 0, %s91
  $region4: #{_lambda_.30} parent=0 // loop_header_branch
    %12 = sbr.rel (%p10) target = $region8
  $region5: #{_lambda_.30} parent=0 // loop_body
    %s14 = ssub.s32 %s9, 1
    %s15 = ssub.s32 %s9, 2
    %s16 = sadd.s32 %s9, 1
    %s17 = ssub.s32 %s9, %s16
    %p18 = scmp.eq.s32.totalorder %s17, 0
    %s20 = sadd.s32 %s19, 1
    %s21 = scalar_select %p18, %s19, %s20
    %p24 = pneg %p18
    %p25 = scmp.eq.s32.totalorder %s9, 1
    %p26 = por %p24, %p25
    %p27 = scmp.ne.s32.totalorder %s19, %s22
    %p28 = scmp.eq.s32.totalorder %s9, 0
    %p29 = por %p27, %p28
    %p30 = scmp.ne.s32.totalorder %s19, %s22
    %p31 = scmp.eq.s32.totalorder %s14, 1
    %p32 = por %p30, %p31
    %p33 = scmp.ne.s32.totalorder %s22, %s23
    %p34 = scmp.eq.s32.totalorder %s14, 0
    %p35 = por %p33, %p34
    %p36 = scmp.ne.s32.totalorder %s22, %s23
    %p37 = scmp.eq.s32.totalorder %s15, 1
    %p38 = por %p36, %p37
    %p40 = scmp.ne.s32.totalorder %s23, %s39
    %p41 = scmp.eq.s32.totalorder %s15, 0
    %p42 = por %p40, %p41
    %s44 = sadd.s32 %s43, 1
    %p47 = scmp.eq.s32.totalorder %s9, 1
    %p48 = scmp.ne.s32.totalorder %s43, %s45
    %p49 = scmp.eq.s32.totalorder %s9, 0
    %p50 = por %p48, %p49
    %p51 = scmp.ne.s32.totalorder %s43, %s45
    %p52 = scmp.eq.s32.totalorder %s14, 1
    %p53 = por %p51, %p52
    %p54 = scmp.ne.s32.totalorder %s45, %s46
    %p55 = scmp.eq.s32.totalorder %s14, 0
    %p56 = por %p54, %p55
    %p57 = scmp.ne.s32.totalorder %s45, %s46
    %p58 = scmp.eq.s32.totalorder %s15, 1
    %p59 = por %p57, %p58
    %p61 = scmp.ne.s32.totalorder %s46, %s60
    %p62 = scmp.eq.s32.totalorder %s15, 0
    %p63 = por %p61, %p62
    %s65 = sadd.s32 %s64, 1
    %p68 = scmp.eq.s32.totalorder %s9, 1
    %p69 = scmp.ne.s32.totalorder %s64, %s66
    %p70 = scmp.eq.s32.totalorder %s9, 0
    %p71 = por %p69, %p70
    %p72 = scmp.ne.s32.totalorder %s64, %s66
    %p73 = scmp.eq.s32.totalorder %s14, 1
    %p74 = por %p72, %p73
    %p75 = scmp.ne.s32.totalorder %s66, %s67
    %p76 = scmp.eq.s32.totalorder %s14, 0
    %p77 = por %p75, %p76
    %p78 = scmp.ne.s32.totalorder %s66, %s67
    %p79 = scmp.eq.s32.totalorder %s15, 1
    %p80 = por %p78, %p79
    %p82 = scmp.ne.s32.totalorder %s67, %s81
    %p83 = scmp.eq.s32.totalorder %s15, 0
    %p84 = por %p82, %p83
    %s85 = ssub.s32 %s9, %s16
    %p86 = scmp.eq.s32.totalorder %s85, 0
    %s88 = sadd.s32 %s87, 1
    %s89 = scalar_select %p86, %s87, %s88
    %p92 = pneg %p86
    %p93 = scmp.eq.s32.totalorder %s9, 1
    %p94 = por %p92, %p93
    %p95 = scmp.ne.s32.totalorder %s87, %s90
    %p96 = scmp.eq.s32.totalorder %s9, 0
    %p97 = por %p95, %p96
    %p98 = scmp.ne.s32.totalorder %s87, %s90
    %p99 = scmp.eq.s32.totalorder %s14, 1
    %p100 = por %p98, %p99
    %p101 = scmp.ne.s32.totalorder %s90, %s91
    %p102 = scmp.eq.s32.totalorder %s14, 0
    %p103 = por %p101, %p102
    %p104 = scmp.ne.s32.totalorder %s90, %s91
    %p105 = scmp.eq.s32.totalorder %s15, 1
    %p106 = por %p104, %p105
    %p108 = scmp.ne.s32.totalorder %s91, %s107
    %p109 = scmp.eq.s32.totalorder %s15, 0
    %p110 = por %p108, %p109
    %p111 = scmp.le.s32.totalorder 1, %s9
    %p112 = scmp.lt.s32.totalorder %s9, 3
    %p113 = pnand %p111, %p112
    %p114 = pneg %p113
    // Predicated region
    $region9: #{_lambda_.30} parent=5 // pred_check
      _
    $region10: #{_lambda_.30} parent=5 // pred_check_branch
      %116 = sbr.rel (%p113) target = $region12
    $region11: #{_lambda_.30} parent=5 // pred_region
      %s117 = ssub.s32 %s9, 1
      // Predicated region
      $region13: #{_lambda_.30} parent=11 // pred_check
        %p118 = pneg %p56
      $region14: #{_lambda_.30} parent=11 // pred_check_branch
        %120 = sbr.rel (%p118) target = $region16
      $region15: #{_lambda_.30} parent=11 // pred_region
        _
      $region16: #{_lambda_.30} parent=11 // pred_fallthru
        _
      // Predicated region
      $region17: #{_lambda_.30} parent=11 // pred_check
        %p121 = pneg %p77
      $region18: #{_lambda_.30} parent=11 // pred_check_branch
        %123 = sbr.rel (%p121) target = $region20
      $region19: #{_lambda_.30} parent=11 // pred_region
        _
      $region20: #{_lambda_.30} parent=11 // pred_fallthru
        _
    $region12: #{_lambda_.30} parent=5 // pred_fallthru
      _
    %p124 = scmp.lt.s32.totalorder %s9, 2
    // Predicated region
    $region21: #{_lambda_.30} parent=5 // pred_check
      %p125 = pneg %p124
    $region22: #{_lambda_.30} parent=5 // pred_check_branch
      %127 = sbr.rel (%p125) target = $region24
    $region23: #{_lambda_.30} parent=5 // pred_region
      // Predicated region
      $region25: #{_lambda_.30} parent=23 // pred_check
        %p128 = pneg %p29
      $region26: #{_lambda_.30} parent=23 // pred_check_branch
        %130 = sbr.rel (%p128) target = $region28
      $region27: #{_lambda_.30} parent=23 // pred_region
        %s131 = smul.u32 16, %s9
        %p132 = scmp.lt.s32.totalorder %s131, 31
        %s133 = scalar_select %p132, %s131, 31
        %s134 = smul.addr %s133, 4
        %s135 = scalar_lea.vmem %s0, %s134
        %s136 = smul.u32 16, %s9
      $region28: #{_lambda_.30} parent=23 // pred_fallthru
        _
    $region24: #{_lambda_.30} parent=5 // pred_fallthru
      _
    %p137 = scmp.le.s32.totalorder 1, %s9
    %p138 = scmp.lt.s32.totalorder %s9, 3
    %p139 = pnand %p137, %p138
    %p140 = pneg %p139
    // Predicated region
    $region29: #{_lambda_.30} parent=5 // pred_check
      _
    $region30: #{_lambda_.30} parent=5 // pred_check_branch
      %142 = sbr.rel (%p139) target = $region32
    $region31: #{_lambda_.30} parent=5 // pred_region
      %s143 = ssub.s32 %s9, 1
      %s144 = smul.u32 16, %s14
      %p145 = scmp.lt.s32.totalorder %s144, 31
      %s146 = scalar_select %p145, %s144, 31
      %s147 = smul.addr %s146, 4
      %s148 = scalar_lea.vmem %s0, %s147
      %p149 = pneg %p35
      %p150 = pneg %p32
      %p151 = pneg %p56
      %p152 = pneg %p53
      %p153 = pneg %p77
      %p154 = pneg %p74
      %p155 = pneg %p103
      %p156 = pneg %p100
      %s157 = smul.u32 16, %s14
      %p158 = scmp.lt.s32.totalorder %s157, 31
      %s159 = scalar_select %p158, %s157, 31
      %s160 = smul.addr %s159, 8
      %s161 = scalar_lea.vmem %s3, %s160
      %s162 = smul.u32 16, %s14
      %p163 = scmp.lt.s32.totalorder %s162, 31
      %s164 = scalar_select %p163, %s162, 31
      %s165 = smul.addr %s164, 4
      %s166 = scalar_lea.vmem %s0, %s165
      %s167 = smul.u32 16, %s14
      %s168 = smul.u32 16, %s14
      %p169 = scmp.lt.s32.totalorder %s168, 31
      %s170 = scalar_select %p169, %s168, 31
      %s171 = smul.addr %s170, 8
      %s172 = scalar_lea.vmem %s3, %s171
      %s173 = smul.u32 16, %s14
      %v175 = vld [vmem:[%s166] sm:$0xf]
      %v176 = vld [vmem:[%s166 + $0x4] sm:$0xf]
      %v177 = vld [vmem:[%s166 + $0x8] sm:$0xf]
      %v178 = vld [vmem:[%s166 + $0xc] sm:$0xf]
      %v179 = vld [vmem:[%s166 + $0x10] sm:$0xf]
      %v180 = vld [vmem:[%s166 + $0x14] sm:$0xf]
      %v181 = vld [vmem:[%s166 + $0x18] sm:$0xf]
      %v182 = vld [vmem:[%s166 + $0x1c] sm:$0xf]
      %v183 = vld [vmem:[%s166 + $0x20] sm:$0xf]
      %v184 = vld [vmem:[%s166 + $0x24] sm:$0xf]
      %v185 = vld [vmem:[%s166 + $0x28] sm:$0xf]
      %v186 = vld [vmem:[%s166 + $0x2c] sm:$0xf]
      %v187 = vld [vmem:[%s166 + $0x30] sm:$0xf]
      %v188 = vld [vmem:[%s166 + $0x34] sm:$0xf]
      %v189 = vld [vmem:[%s166 + $0x38] sm:$0xf]
      %v190 = vld [vmem:[%s166 + $0x3c] sm:$0xf]
      %v191 = vld [vmem:[%s1] sm:$0xf]
      %v192 = vld [vmem:[%s1 + $0x4] sm:$0xf]
      %v193 = vld [vmem:[%s1 + $0x8] sm:$0xf]
      %v194 = vld [vmem:[%s1 + $0xc] sm:$0xf]
      %v195 = vld [vmem:[%s1 + $0x10] sm:$0x7]
      %v196 = vld [vmem:[%s2] sm:$0x1]
      %v198 = vperm.slane %v196, 0
      %v216 = vunpack.c.l.b16 %v175
      %v217 = vunpack.c.l.b16 %v176
      %v218 = vunpack.c.l.b16 %v177
      %v219 = vunpack.c.l.b16 %v178
      %v220 = vunpack.c.l.b16 %v179
      %v221 = vunpack.c.l.b16 %v180
      %v222 = vunpack.c.l.b16 %v181
      %v223 = vunpack.c.l.b16 %v182
      %v224 = vunpack.c.l.b16 %v183
      %v225 = vunpack.c.l.b16 %v184
      %v226 = vunpack.c.l.b16 %v185
      %v227 = vunpack.c.l.b16 %v186
      %v228 = vunpack.c.l.b16 %v187
      %v229 = vunpack.c.l.b16 %v188
      %v230 = vunpack.c.l.b16 %v189
      %v231 = vunpack.c.l.b16 %v190
      %v232 = vpack.c.b16 %v217, %v216
      %v233 = vpack.c.b16 %v219, %v218
      %v234 = vpack.c.b16 %v221, %v220
      %v235 = vpack.c.b16 %v223, %v222
      %v236 = vpack.c.b16 %v225, %v224
      %v237 = vpack.c.b16 %v227, %v226
      %v238 = vpack.c.b16 %v229, %v228
      %v239 = vpack.c.b16 %v231, %v230
      %v245 = vunpack.c.l.b16 %v191
      %v246 = vunpack.c.l.b16 %v192
      %v247 = vunpack.c.l.b16 %v193
      %v248 = vunpack.c.l.b16 %v194
      %v249 = vunpack.c.l.b16 %v195
      %v250 = vpack.c.b16 %v246, %v245
      %v251 = vpack.c.b16 %v248, %v247
      %v252 = vpack.c.b16 %v249, %v249
      %vm255 = vcmask 310272
      %v257 = vsel %vm255, %v232, 0
      %v260 = vsel %vm255, %v233, 0
      %v263 = vsel %vm255, %v234, 0
      %v266 = vsel %vm255, %v235, 0
      %v269 = vsel %vm255, %v236, 0
      %v272 = vsel %vm255, %v237, 0
      %v275 = vsel %vm255, %v238, 0
      %v278 = vsel %vm255, %v239, 0
      %vm280 = vcmask 1042432
      %v282 = vsel %vm280, %v252, 0
      %284 = vmatpush.bf16.msra.mxu0 0
      %285 = vmatpush.bf16.msra.mxu0 0
      %286 = vmatpush.bf16.msra.mxu0 0
      %287 = vmatpush.bf16.msra.mxu0 0
      %288 = vmatpush.bf16.msra.mxu0 0
      %289 = vmatpush.bf16.msra.mxu0 %v282
      %290 = vmatpush.bf16.msra.mxu0 %v251
      %291 = vmatpush.bf16.msra.mxu0 %v250
      %292 = vmatmul.bf16.gmra.mxu0 %v257
      %v293 = vpop.f32.mrf.mxu0
      %v294 = vadd.f32 %v198, %v293
      %v295 = vpop.f32.mrf.mxu0
      %v296 = vadd.f32 %v198, %v295
      %297 = vmatmul.bf16.gmra.mxu0 %v260
      %v298 = vpop.f32.mrf.mxu0
      %v299 = vadd.f32 %v198, %v298
      %v300 = vpop.f32.mrf.mxu0
      %v301 = vadd.f32 %v198, %v300
      %302 = vmatmul.bf16.gmra.mxu0 %v263
      %v303 = vpop.f32.mrf.mxu0
      %v304 = vadd.f32 %v198, %v303
      %v305 = vpop.f32.mrf.mxu0
      %v306 = vadd.f32 %v198, %v305
      %307 = vmatmul.bf16.gmra.mxu0 %v266
      %v308 = vpop.f32.mrf.mxu0
      %v309 = vadd.f32 %v198, %v308
      %v310 = vpop.f32.mrf.mxu0
      %v311 = vadd.f32 %v198, %v310
      %312 = vmatmul.bf16.gmra.mxu0 %v269
      %v313 = vpop.f32.mrf.mxu0
      %v314 = vadd.f32 %v198, %v313
      %v315 = vpop.f32.mrf.mxu0
      %v316 = vadd.f32 %v198, %v315
      %317 = vmatmul.bf16.gmra.mxu0 %v272
      %v318 = vpop.f32.mrf.mxu0
      %v319 = vadd.f32 %v198, %v318
      %v320 = vpop.f32.mrf.mxu0
      %v321 = vadd.f32 %v198, %v320
      %322 = vmatmul.bf16.gmra.mxu0 %v275
      %v323 = vpop.f32.mrf.mxu0
      %v324 = vadd.f32 %v198, %v323
      %v325 = vpop.f32.mrf.mxu0
      %v326 = vadd.f32 %v198, %v325
      %327 = vmatmul.bf16.gmra.mxu0 %v278
      %v328 = vpop.f32.mrf.mxu0
      %v329 = vadd.f32 %v198, %v328
      %v330 = vpop.f32.mrf.mxu0
      %v331 = vadd.f32 %v198, %v330
      %332 = vdwg.mxu0
      %vm333 = vcmask 195584
      %334 = vst.msk [vmem:[%s172] sm:$0xff] %vm333, %v294
      %335 = vst.msk [vmem:[%s172 + $0x8] sm:$0xff] %vm333, %v296
      %336 = vst.msk [vmem:[%s172 + $0x10] sm:$0xff] %vm333, %v299
      %337 = vst.msk [vmem:[%s172 + $0x18] sm:$0xff] %vm333, %v301
      %338 = vst.msk [vmem:[%s172 + $0x20] sm:$0xff] %vm333, %v304
      %339 = vst.msk [vmem:[%s172 + $0x28] sm:$0xff] %vm333, %v306
      %340 = vst.msk [vmem:[%s172 + $0x30] sm:$0xff] %vm333, %v309
      %341 = vst.msk [vmem:[%s172 + $0x38] sm:$0xff] %vm333, %v311
      %342 = vst.msk [vmem:[%s172 + $0x40] sm:$0xff] %vm333, %v314
      %343 = vst.msk [vmem:[%s172 + $0x48] sm:$0xff] %vm333, %v316
      %344 = vst.msk [vmem:[%s172 + $0x50] sm:$0xff] %vm333, %v319
      %345 = vst.msk [vmem:[%s172 + $0x58] sm:$0xff] %vm333, %v321
      %346 = vst.msk [vmem:[%s172 + $0x60] sm:$0xff] %vm333, %v324
      %347 = vst.msk [vmem:[%s172 + $0x68] sm:$0xff] %vm333, %v326
      %348 = vst.msk [vmem:[%s172 + $0x70] sm:$0xff] %vm333, %v329
      %349 = vst.msk [vmem:[%s172 + $0x78] sm:$0xff] %vm333, %v331
      %s350 = smul.u32 16, %s14
      %p351 = scmp.lt.s32.totalorder %s350, 31
      %s352 = scalar_select %p351, %s350, 31
      %s353 = smul.addr %s352, 8
      %s354 = scalar_lea.vmem %s3, %s353
      // Predicated region
      $region33: #{_lambda_.30} parent=31 // pred_check
        %p355 = pneg %p100
      $region34: #{_lambda_.30} parent=31 // pred_check_branch
        %357 = sbr.rel (%p355) target = $region36
      $region35: #{_lambda_.30} parent=31 // pred_region
        %s358 = smul.u32 16, %s14
      $region36: #{_lambda_.30} parent=31 // pred_fallthru
        _
    $region32: #{_lambda_.30} parent=5 // pred_fallthru
      _
    %p359 = scmp.le.s32.totalorder 2, %s9
    // Predicated region
    $region37: #{_lambda_.30} parent=5 // pred_check
      %p360 = pneg %p359
    $region38: #{_lambda_.30} parent=5 // pred_check_branch
      %362 = sbr.rel (%p360) target = $region40
    $region39: #{_lambda_.30} parent=5 // pred_region
      %s363 = ssub.s32 %s9, 2
      // Predicated region
      $region41: #{_lambda_.30} parent=39 // pred_check
        %p364 = pneg %p106
      $region42: #{_lambda_.30} parent=39 // pred_check_branch
        %366 = sbr.rel (%p364) target = $region44
      $region43: #{_lambda_.30} parent=39 // pred_region
        %s367 = smul.u32 16, %s15
        %p368 = scmp.lt.s32.totalorder %s367, 31
        %s369 = scalar_select %p368, %s367, 31
        %s370 = smul.addr %s369, 8
        %s371 = scalar_lea.vmem %s3, %s370
      $region44: #{_lambda_.30} parent=39 // pred_fallthru
        _
    $region40: #{_lambda_.30} parent=5 // pred_fallthru
      _
  $region6: #{_lambda_.30} parent=0 // loop_footer
    %s13 = sadd.s32 1, %s9
  $region7: #{_lambda_.30} parent=0 // loop_footer_branch
    %8 = sbr.rel target = $region3
  $region8: #{_lambda_.30} parent=0 // loop_exit
    _

// kernel: _lambda_.31
$region0: #{_lambda_.31}
  #allocation0 [shape = 'u32[]', space=smem, size = 0x4, offset = 0x4, fixed_abs, tag = 'smem constant byte address 0x4 - core index']
  #allocation1 [shape = 'u32[72,128]{1,0:T(1,128)}', space=vmem, size = 0x9000, scoped, tag = 'internal scratch']
  %s0 = inlined_call_operand.vmem [shape: bf16[256,24], index: 0, kind: input, shape index: {}]
  %s1 = inlined_call_operand.vmem [shape: bf16[24,16], index: 1, kind: input, shape index: {}]
  %s2 = inlined_call_operand.vmem [shape: f32[1,16], index: 2, kind: input, shape index: {}]
  %s3 = inlined_call_operand.vmem [shape: f32[256,16], index: 3, kind: output, shape index: {}]
  %s4 = sld [smem:[#allocation0]]
  $region45: #{_lambda_.31} parent=0
    _
  %s6 = ssub.s32 1, %s4
  %s7 = scalar_select 0, %s6, %s4
  loop: start=0, step=1, limit=4
  $region2: #{_lambda_.31} parent=0 // loop_pre_header
    _
  $region3: #{_lambda_.31} parent=0 // loop_header
    %s9 = sphi 0, %s13
    %p10 = scmp.ge.s32.totalorder %s9, 4
    %s19 = sphi 0, %s21
    %s22 = sphi 0, %s19
    %s23 = sphi 0, %s22
    %s39 = sphi 0, %s23
    %s43 = sphi 0, %s43
    %s45 = sphi 0, %s43
    %s46 = sphi 0, %s45
    %s60 = sphi 0, %s46
    %s64 = sphi 0, %s64
    %s66 = sphi 0, %s64
    %s67 = sphi 0, %s66
    %s81 = sphi 0, %s67
    %s87 = sphi 0, %s89
    %s90 = sphi 0, %s87
    %s91 = sphi 0, %s90
    %s107 = sphi 0, %s91
  $region4: #{_lambda_.31} parent=0 // loop_header_branch
    %12 = sbr.rel (%p10) target = $region8
  $region5: #{_lambda_.31} parent=0 // loop_body
    %s14 = ssub.s32 %s9, 1
    %s15 = ssub.s32 %s9, 2
    %s16 = sadd.s32 %s9, 1
    %s17 = ssub.s32 %s9, %s16
    %p18 = scmp.eq.s32.totalorder %s17, 0
    %s20 = sadd.s32 %s19, 1
    %s21 = scalar_select %p18, %s19, %s20
    %p24 = pneg %p18
    %p25 = scmp.eq.s32.totalorder %s9, 1
    %p26 = por %p24, %p25
    %p27 = scmp.ne.s32.totalorder %s19, %s22
    %p28 = scmp.eq.s32.totalorder %s9, 0
    %p29 = por %p27, %p28
    %p30 = scmp.ne.s32.totalorder %s19, %s22
    %p31 = scmp.eq.s32.totalorder %s14, 1
    %p32 = por %p30, %p31
    %p33 = scmp.ne.s32.totalorder %s22, %s23
    %p34 = scmp.eq.s32.totalorder %s14, 0
    %p35 = por %p33, %p34
    %p36 = scmp.ne.s32.totalorder %s22, %s23
    %p37 = scmp.eq.s32.totalorder %s15, 1
    %p38 = por %p36, %p37
    %p40 = scmp.ne.s32.totalorder %s23, %s39
    %p41 = scmp.eq.s32.totalorder %s15, 0
    %p42 = por %p40, %p41
    %s44 = sadd.s32 %s43, 1
    %p47 = scmp.eq.s32.totalorder %s9, 1
    %p48 = scmp.ne.s32.totalorder %s43, %s45
    %p49 = scmp.eq.s32.totalorder %s9, 0
    %p50 = por %p48, %p49
    %p51 = scmp.ne.s32.totalorder %s43, %s45
    %p52 = scmp.eq.s32.totalorder %s14, 1
    %p53 = por %p51, %p52
    %p54 = scmp.ne.s32.totalorder %s45, %s46
    %p55 = scmp.eq.s32.totalorder %s14, 0
    %p56 = por %p54, %p55
    %p57 = scmp.ne.s32.totalorder %s45, %s46
    %p58 = scmp.eq.s32.totalorder %s15, 1
    %p59 = por %p57, %p58
    %p61 = scmp.ne.s32.totalorder %s46, %s60
    %p62 = scmp.eq.s32.totalorder %s15, 0
    %p63 = por %p61, %p62
    %s65 = sadd.s32 %s64, 1
    %p68 = scmp.eq.s32.totalorder %s9, 1
    %p69 = scmp.ne.s32.totalorder %s64, %s66
    %p70 = scmp.eq.s32.totalorder %s9, 0
    %p71 = por %p69, %p70
    %p72 = scmp.ne.s32.totalorder %s64, %s66
    %p73 = scmp.eq.s32.totalorder %s14, 1
    %p74 = por %p72, %p73
    %p75 = scmp.ne.s32.totalorder %s66, %s67
    %p76 = scmp.eq.s32.totalorder %s14, 0
    %p77 = por %p75, %p76
    %p78 = scmp.ne.s32.totalorder %s66, %s67
    %p79 = scmp.eq.s32.totalorder %s15, 1
    %p80 = por %p78, %p79
    %p82 = scmp.ne.s32.totalorder %s67, %s81
    %p83 = scmp.eq.s32.totalorder %s15, 0
    %p84 = por %p82, %p83
    %s85 = ssub.s32 %s9, %s16
    %p86 = scmp.eq.s32.totalorder %s85, 0
    %s88 = sadd.s32 %s87, 1
    %s89 = scalar_select %p86, %s87, %s88
    %p92 = pneg %p86
    %p93 = scmp.eq.s32.totalorder %s9, 1
    %p94 = por %p92, %p93
    %p95 = scmp.ne.s32.totalorder %s87, %s90
    %p96 = scmp.eq.s32.totalorder %s9, 0
    %p97 = por %p95, %p96
    %p98 = scmp.ne.s32.totalorder %s87, %s90
    %p99 = scmp.eq.s32.totalorder %s14, 1
    %p100 = por %p98, %p99
    %p101 = scmp.ne.s32.totalorder %s90, %s91
    %p102 = scmp.eq.s32.totalorder %s14, 0
    %p103 = por %p101, %p102
    %p104 = scmp.ne.s32.totalorder %s90, %s91
    %p105 = scmp.eq.s32.totalorder %s15, 1
    %p106 = por %p104, %p105
    %p108 = scmp.ne.s32.totalorder %s91, %s107
    %p109 = scmp.eq.s32.totalorder %s15, 0
    %p110 = por %p108, %p109
    %p111 = scmp.le.s32.totalorder 1, %s9
    %p112 = scmp.lt.s32.totalorder %s9, 3
    %p113 = pnand %p111, %p112
    %p114 = pneg %p113
    // Predicated region
    $region9: #{_lambda_.31} parent=5 // pred_check
      _
    $region10: #{_lambda_.31} parent=5 // pred_check_branch
      %116 = sbr.rel (%p113) target = $region12
    $region11: #{_lambda_.31} parent=5 // pred_region
      %s117 = ssub.s32 %s9, 1
      // Predicated region
      $region13: #{_lambda_.31} parent=11 // pred_check
        %p118 = pneg %p56
      $region14: #{_lambda_.31} parent=11 // pred_check_branch
        %120 = sbr.rel (%p118) target = $region16
      $region15: #{_lambda_.31} parent=11 // pred_region
        _
      $region16: #{_lambda_.31} parent=11 // pred_fallthru
        _
      // Predicated region
      $region17: #{_lambda_.31} parent=11 // pred_check
        %p121 = pneg %p77
      $region18: #{_lambda_.31} parent=11 // pred_check_branch
        %123 = sbr.rel (%p121) target = $region20
      $region19: #{_lambda_.31} parent=11 // pred_region
        _
      $region20: #{_lambda_.31} parent=11 // pred_fallthru
        _
    $region12: #{_lambda_.31} parent=5 // pred_fallthru
      _
    %p124 = scmp.lt.s32.totalorder %s9, 2
    // Predicated region
    $region21: #{_lambda_.31} parent=5 // pred_check
      %p125 = pneg %p124
    $region22: #{_lambda_.31} parent=5 // pred_check_branch
      %127 = sbr.rel (%p125) target = $region24
    $region23: #{_lambda_.31} parent=5 // pred_region
      // Predicated region
      $region25: #{_lambda_.31} parent=23 // pred_check
        %p128 = pneg %p29
      $region26: #{_lambda_.31} parent=23 // pred_check_branch
        %130 = sbr.rel (%p128) target = $region28
      $region27: #{_lambda_.31} parent=23 // pred_region
        %s131 = smul.u32 16, %s9
        %p132 = scmp.lt.s32.totalorder %s131, 31
        %s133 = scalar_select %p132, %s131, 31
        %s134 = smul.addr %s133, 4
        %s135 = scalar_lea.vmem %s0, %s134
        %s136 = smul.u32 16, %s9
      $region28: #{_lambda_.31} parent=23 // pred_fallthru
        _
    $region24: #{_lambda_.31} parent=5 // pred_fallthru
      _
    %p137 = scmp.le.s32.totalorder 1, %s9
    %p138 = scmp.lt.s32.totalorder %s9, 3
    %p139 = pnand %p137, %p138
    %p140 = pneg %p139
    // Predicated region
    $region29: #{_lambda_.31} parent=5 // pred_check
      _
    $region30: #{_lambda_.31} parent=5 // pred_check_branch
      %142 = sbr.rel (%p139) target = $region32
    $region31: #{_lambda_.31} parent=5 // pred_region
      %s143 = ssub.s32 %s9, 1
      %s144 = smul.u32 16, %s14
      %p145 = scmp.lt.s32.totalorder %s144, 31
      %s146 = scalar_select %p145, %s144, 31
      %s147 = smul.addr %s146, 4
      %s148 = scalar_lea.vmem %s0, %s147
      %p149 = pneg %p35
      %p150 = pneg %p32
      %p151 = pneg %p56
      %p152 = pneg %p53
      %p153 = pneg %p77
      %p154 = pneg %p74
      %p155 = pneg %p103
      %p156 = pneg %p100
      %s157 = smul.u32 16, %s14
      %p158 = scmp.lt.s32.totalorder %s157, 31
      %s159 = scalar_select %p158, %s157, 31
      %s160 = smul.addr %s159, 8
      %s161 = scalar_lea.vmem %s3, %s160
      %s162 = smul.u32 16, %s14
      %p163 = scmp.lt.s32.totalorder %s162, 31
      %s164 = scalar_select %p163, %s162, 31
      %s165 = smul.addr %s164, 4
      %s166 = scalar_lea.vmem %s0, %s165
      %s167 = smul.u32 16, %s14
      %s168 = smul.u32 16, %s14
      %p169 = scmp.lt.s32.totalorder %s168, 31
      %s170 = scalar_select %p169, %s168, 31
      %s171 = smul.addr %s170, 8
      %s172 = scalar_lea.vmem %s3, %s171
      %s173 = smul.u32 16, %s14
      %v175 = vld [vmem:[%s166] sm:$0xf]
      %v176 = vld [vmem:[%s166 + $0x4] sm:$0xf]
      %v177 = vld [vmem:[%s166 + $0x8] sm:$0xf]
      %v178 = vld [vmem:[%s166 + $0xc] sm:$0xf]
      %v179 = vld [vmem:[%s166 + $0x10] sm:$0xf]
      %v180 = vld [vmem:[%s166 + $0x14] sm:$0xf]
      %v181 = vld [vmem:[%s166 + $0x18] sm:$0xf]
      %v182 = vld [vmem:[%s166 + $0x1c] sm:$0xf]
      %v183 = vld [vmem:[%s166 + $0x20] sm:$0xf]
      %v184 = vld [vmem:[%s166 + $0x24] sm:$0xf]
      %v185 = vld [vmem:[%s166 + $0x28] sm:$0xf]
      %v186 = vld [vmem:[%s166 + $0x2c] sm:$0xf]
      %v187 = vld [vmem:[%s166 + $0x30] sm:$0xf]
      %v188 = vld [vmem:[%s166 + $0x34] sm:$0xf]
      %v189 = vld [vmem:[%s166 + $0x38] sm:$0xf]
      %v190 = vld [vmem:[%s166 + $0x3c] sm:$0xf]
      %v191 = vld [vmem:[%s1] sm:$0xf]
      %v192 = vld [vmem:[%s1 + $0x4] sm:$0xf]
      %v193 = vld [vmem:[%s1 + $0x8] sm:$0xf]
      %v194 = vld [vmem:[%s2] sm:$0x1]
      %v196 = vperm.slane %v194, 0
      %v214 = vunpack.c.l.b16 %v175
      %v215 = vunpack.c.l.b16 %v176
      %v216 = vunpack.c.l.b16 %v177
      %v217 = vunpack.c.l.b16 %v178
      %v218 = vunpack.c.l.b16 %v179
      %v219 = vunpack.c.l.b16 %v180
      %v220 = vunpack.c.l.b16 %v181
      %v221 = vunpack.c.l.b16 %v182
      %v222 = vunpack.c.l.b16 %v183
      %v223 = vunpack.c.l.b16 %v184
      %v224 = vunpack.c.l.b16 %v185
      %v225 = vunpack.c.l.b16 %v186
      %v226 = vunpack.c.l.b16 %v187
      %v227 = vunpack.c.l.b16 %v188
      %v228 = vunpack.c.l.b16 %v189
      %v229 = vunpack.c.l.b16 %v190
      %v230 = vpack.c.b16 %v215, %v214
      %v231 = vpack.c.b16 %v217, %v216
      %v232 = vpack.c.b16 %v219, %v218
      %v233 = vpack.c.b16 %v221, %v220
      %v234 = vpack.c.b16 %v223, %v222
      %v235 = vpack.c.b16 %v225, %v224
      %v236 = vpack.c.b16 %v227, %v226
      %v237 = vpack.c.b16 %v229, %v228
      %v241 = vunpack.c.l.b16 %v191
      %v242 = vunpack.c.l.b16 %v192
      %v243 = vunpack.c.l.b16 %v193
      %v244 = vpack.c.b16 %v242, %v241
      %v245 = vpack.c.b16 %v243, %v243
      %vm247 = vcmask 195584
      %v249 = vsel %vm247, %v230, 0
      %v252 = vsel %vm247, %v231, 0
      %v255 = vsel %vm247, %v232, 0
      %v258 = vsel %vm247, %v233, 0
      %v261 = vsel %vm247, %v234, 0
      %v264 = vsel %vm247, %v235, 0
      %v267 = vsel %vm247, %v236, 0
      %v270 = vsel %vm247, %v237, 0
      %vm272 = vcmask 1043456
      %v274 = vsel %vm272, %v245, 0
      %276 = vmatpush.bf16.msra.mxu0 0
      %277 = vmatpush.bf16.msra.mxu0 0
      %278 = vmatpush.bf16.msra.mxu0 0
      %279 = vmatpush.bf16.msra.mxu0 0
      %280 = vmatpush.bf16.msra.mxu0 0
      %281 = vmatpush.bf16.msra.mxu0 0
      %282 = vmatpush.bf16.msra.mxu0 %v274
      %283 = vmatpush.bf16.msra.mxu0 %v244
      %284 = vmatmul.bf16.gmra.mxu0 %v249
      %v285 = vpop.f32.mrf.mxu0
      %v286 = vadd.f32 %v196, %v285
      %v287 = vpop.f32.mrf.mxu0
      %v288 = vadd.f32 %v196, %v287
      %289 = vmatmul.bf16.gmra.mxu0 %v252
      %v290 = vpop.f32.mrf.mxu0
      %v291 = vadd.f32 %v196, %v290
      %v292 = vpop.f32.mrf.mxu0
      %v293 = vadd.f32 %v196, %v292
      %294 = vmatmul.bf16.gmra.mxu0 %v255
      %v295 = vpop.f32.mrf.mxu0
      %v296 = vadd.f32 %v196, %v295
      %v297 = vpop.f32.mrf.mxu0
      %v298 = vadd.f32 %v196, %v297
      %299 = vmatmul.bf16.gmra.mxu0 %v258
      %v300 = vpop.f32.mrf.mxu0
      %v301 = vadd.f32 %v196, %v300
      %v302 = vpop.f32.mrf.mxu0
      %v303 = vadd.f32 %v196, %v302
      %304 = vmatmul.bf16.gmra.mxu0 %v261
      %v305 = vpop.f32.mrf.mxu0
      %v306 = vadd.f32 %v196, %v305
      %v307 = vpop.f32.mrf.mxu0
      %v308 = vadd.f32 %v196, %v307
      %309 = vmatmul.bf16.gmra.mxu0 %v264
      %v310 = vpop.f32.mrf.mxu0
      %v311 = vadd.f32 %v196, %v310
      %v312 = vpop.f32.mrf.mxu0
      %v313 = vadd.f32 %v196, %v312
      %314 = vmatmul.bf16.gmra.mxu0 %v267
      %v315 = vpop.f32.mrf.mxu0
      %v316 = vadd.f32 %v196, %v315
      %v317 = vpop.f32.mrf.mxu0
      %v318 = vadd.f32 %v196, %v317
      %319 = vmatmul.bf16.gmra.mxu0 %v270
      %v320 = vpop.f32.mrf.mxu0
      %v321 = vadd.f32 %v196, %v320
      %v322 = vpop.f32.mrf.mxu0
      %v323 = vadd.f32 %v196, %v322
      %324 = vdwg.mxu0
      %vm325 = vcmask 130048
      %326 = vst.msk [vmem:[%s172] sm:$0xff] %vm325, %v286
      %327 = vst.msk [vmem:[%s172 + $0x8] sm:$0xff] %vm325, %v288
      %328 = vst.msk [vmem:[%s172 + $0x10] sm:$0xff] %vm325, %v291
      %329 = vst.msk [vmem:[%s172 + $0x18] sm:$0xff] %vm325, %v293
      %330 = vst.msk [vmem:[%s172 + $0x20] sm:$0xff] %vm325, %v296
      %331 = vst.msk [vmem:[%s172 + $0x28] sm:$0xff] %vm325, %v298
      %332 = vst.msk [vmem:[%s172 + $0x30] sm:$0xff] %vm325, %v301
      %333 = vst.msk [vmem:[%s172 + $0x38] sm:$0xff] %vm325, %v303
      %334 = vst.msk [vmem:[%s172 + $0x40] sm:$0xff] %vm325, %v306
      %335 = vst.msk [vmem:[%s172 + $0x48] sm:$0xff] %vm325, %v308
      %336 = vst.msk [vmem:[%s172 + $0x50] sm:$0xff] %vm325, %v311
      %337 = vst.msk [vmem:[%s172 + $0x58] sm:$0xff] %vm325, %v313
      %338 = vst.msk [vmem:[%s172 + $0x60] sm:$0xff] %vm325, %v316
      %339 = vst.msk [vmem:[%s172 + $0x68] sm:$0xff] %vm325, %v318
      %340 = vst.msk [vmem:[%s172 + $0x70] sm:$0xff] %vm325, %v321
      %341 = vst.msk [vmem:[%s172 + $0x78] sm:$0xff] %vm325, %v323
      %s342 = smul.u32 16, %s14
      %p343 = scmp.lt.s32.totalorder %s342, 31
      %s344 = scalar_select %p343, %s342, 31
      %s345 = smul.addr %s344, 8
      %s346 = scalar_lea.vmem %s3, %s345
      // Predicated region
      $region33: #{_lambda_.31} parent=31 // pred_check
        %p347 = pneg %p100
      $region34: #{_lambda_.31} parent=31 // pred_check_branch
        %349 = sbr.rel (%p347) target = $region36
      $region35: #{_lambda_.31} parent=31 // pred_region
        %s350 = smul.u32 16, %s14
      $region36: #{_lambda_.31} parent=31 // pred_fallthru
        _
    $region32: #{_lambda_.31} parent=5 // pred_fallthru
      _
    %p351 = scmp.le.s32.totalorder 2, %s9
    // Predicated region
    $region37: #{_lambda_.31} parent=5 // pred_check
      %p352 = pneg %p351
    $region38: #{_lambda_.31} parent=5 // pred_check_branch
      %354 = sbr.rel (%p352) target = $region40
    $region39: #{_lambda_.31} parent=5 // pred_region
      %s355 = ssub.s32 %s9, 2
      // Predicated region
      $region41: #{_lambda_.31} parent=39 // pred_check
        %p356 = pneg %p106
      $region42: #{_lambda_.31} parent=39 // pred_check_branch
        %358 = sbr.rel (%p356) target = $region44
      $region43: #{_lambda_.31} parent=39 // pred_region
        %s359 = smul.u32 16, %s15
        %p360 = scmp.lt.s32.totalorder %s359, 31
        %s361 = scalar_select %p360, %s359, 31
        %s362 = smul.addr %s361, 8
        %s363 = scalar_lea.vmem %s3, %s362
      $region44: #{_lambda_.31} parent=39 // pred_fallthru
        _
    $region40: #{_lambda_.31} parent=5 // pred_fallthru
      _
  $region6: #{_lambda_.31} parent=0 // loop_footer
    %s13 = sadd.s32 1, %s9
  $region7: #{_lambda_.31} parent=0 // loop_footer_branch
    %8 = sbr.rel target = $region3
  $region8: #{_lambda_.31} parent=0 // loop_exit
    _

// kernel: sub.1225
$region0: #{sub.1225}
  %s0 = inlined_call_operand.vmem [shape: f32[2,4,2], index: 0, kind: input, shape index: {}]
  %s1 = inlined_call_operand.vmem [shape: f32[2,8], index: 1, kind: output, shape index: {}]
  $region1: #{sub.1225} parent=0
    #allocation0 [shape = 'u8[4096]{0}', space=vmem, size = 0x1000, scoped, tag = 'scoped mem for output reshape']
    #allocation1 [shape = 'u8[8192]{0}', space=vmem, size = 0x2000, scoped, tag = 'scoped mem for input reshape']
    %s3 = ssub.s32 16, 1
    %s4 = scalar_lea.vmem %s0, 4
    %v5 = vld [vmem:[%s4] sm:%s3]
    %s6 = scalar_lea.vmem [#allocation1], 8
    %7 = vst [vmem:[%s6] sm:%s3] %v5
    %v8 = vld [vmem:[%s0] sm:%s3]
    %9 = vst [vmem:[#allocation1] sm:%s3] %v8
    %s10 = smov 3
    %v11 = vld [vmem:[#allocation1] ss:$8 sm:%s10]
    %vm12 = vcmask 15360
    %13 = vst.msk [vmem:[#allocation0] sm:$0x3] %vm12, %v11
    %s14 = scalar_lea.vmem [#allocation1], 3
    %s15 = smov 3
    %v16 = vld [vmem:[%s14] ss:$8 sm:%s15]
    %17 = vrot.lane.b32.xlu0 %v16, 6
    %v18 = vpop.permute.xlu0 %17
    %vm19 = vcmask 64560
    %20 = vst.msk [vmem:[#allocation0] sm:$0x3] %vm19, %v18
    %s21 = scalar_lea.vmem [#allocation1], 2
    %s22 = smov 3
    %v23 = vld [vmem:[%s21] ss:$8 sm:%s22]
    %24 = vrot.lane.b32.xlu0 %v23, 4
    %v25 = vpop.permute.xlu0 %24
    %vm26 = vcmask 48160
    %27 = vst.msk [vmem:[#allocation0] sm:$0x3] %vm26, %v25
    %s28 = scalar_lea.vmem [#allocation1], 1
    %s29 = smov 3
    %v30 = vld [vmem:[%s28] ss:$8 sm:%s29]
    %31 = vrot.lane.b32.xlu0 %v30, 2
    %v32 = vpop.permute.xlu0 %31
    %vm33 = vcmask 31760
    %34 = vst.msk [vmem:[#allocation0] sm:$0x3] %vm33, %v32
    %s36 = ssub.s32 4, 1
    %v37 = vld [vmem:[#allocation0] sm:%s36]
    %s39 = ssub.s32 4, 1
    %40 = vst [vmem:[%s1] sm:%s39] %v37

// kernel: _lambda_.32
$region0: #{_lambda_.32}
  #allocation0 [shape = 'u32[]', space=smem, size = 0x4, offset = 0x4, fixed_abs, tag = 'smem constant byte address 0x4 - core index']
  #allocation1 [shape = 'u32[72,128]{1,0:T(1,128)}', space=vmem, size = 0x9000, scoped, tag = 'internal scratch']
  %s0 = inlined_call_operand.vmem [shape: bf16[128,144], index: 0, kind: input, shape index: {}]
  %s1 = inlined_call_operand.vmem [shape: bf16[144,58], index: 1, kind: input, shape index: {}]
  %s2 = inlined_call_operand.vmem [shape: f32[1,58], index: 2, kind: input, shape index: {}]
  %s3 = inlined_call_operand.vmem [shape: f32[128,58], index: 3, kind: output, shape index: {}]
  %s4 = sld [smem:[#allocation0]]
  $region22: #{_lambda_.32} parent=0
    _
  %s6 = ssub.s32 1, %s4
  %s7 = scalar_select 0, %s6, %s4
  // Predicated region
  $region2: #{_lambda_.32} parent=0 // pred_check
    _
  $region3: #{_lambda_.32} parent=0 // pred_check_branch
    %9 = sbr.rel (0) target = $region5
  $region4: #{_lambda_.32} parent=0 // pred_region
    _
  $region5: #{_lambda_.32} parent=0 // pred_fallthru
    _
  // Predicated region
  $region6: #{_lambda_.32} parent=0 // pred_check
    _
  $region7: #{_lambda_.32} parent=0 // pred_check_branch
    %11 = sbr.rel (0) target = $region9
  $region8: #{_lambda_.32} parent=0 // pred_region
    _
  $region9: #{_lambda_.32} parent=0 // pred_fallthru
    _
  // Predicated region
  $region10: #{_lambda_.32} parent=0 // pred_check
    _
  $region11: #{_lambda_.32} parent=0 // pred_check_branch
    %13 = sbr.rel (0) target = $region13
  $region12: #{_lambda_.32} parent=0 // pred_region
    _
  $region13: #{_lambda_.32} parent=0 // pred_fallthru
    _
  %v15 = vld [vmem:[%s0] sm:$0xff]
  %v16 = vld [vmem:[%s0 + $0x8] sm:$0xff]
  %v17 = vld [vmem:[%s0 + $0x10] sm:$0xff]
  %v18 = vld [vmem:[%s0 + $0x18] sm:$0xff]
  %v19 = vld [vmem:[%s0 + $0x20] sm:$0xff]
  %v20 = vld [vmem:[%s0 + $0x28] sm:$0xff]
  %v21 = vld [vmem:[%s0 + $0x30] sm:$0xff]
  %v22 = vld [vmem:[%s0 + $0x38] sm:$0xff]
  %v23 = vld [vmem:[%s0 + $0x40] sm:$0xff]
  %v24 = vld [vmem:[%s0 + $0x48] sm:$0xff]
  %v25 = vld [vmem:[%s0 + $0x50] sm:$0xff]
  %v26 = vld [vmem:[%s0 + $0x58] sm:$0xff]
  %v27 = vld [vmem:[%s0 + $0x60] sm:$0xff]
  %v28 = vld [vmem:[%s0 + $0x68] sm:$0xff]
  %v29 = vld [vmem:[%s0 + $0x70] sm:$0xff]
  %v30 = vld [vmem:[%s0 + $0x78] sm:$0xff]
  %v31 = vld [vmem:[%s1] sm:$0xf]
  %v32 = vld [vmem:[%s1 + $0x4] sm:$0xf]
  %v33 = vld [vmem:[%s1 + $0x8] sm:$0xf]
  %v34 = vld [vmem:[%s1 + $0xc] sm:$0xf]
  %v35 = vld [vmem:[%s1 + $0x10] sm:$0xf]
  %v36 = vld [vmem:[%s1 + $0x14] sm:$0xf]
  %v37 = vld [vmem:[%s1 + $0x18] sm:$0xf]
  %v38 = vld [vmem:[%s1 + $0x1c] sm:$0xf]
  %v39 = vld [vmem:[%s1 + $0x20] sm:$0xf]
  %v40 = vld [vmem:[%s1 + $0x24] sm:$0xf]
  %v41 = vld [vmem:[%s1 + $0x28] sm:$0xf]
  %v42 = vld [vmem:[%s1 + $0x2c] sm:$0xf]
  %v43 = vld [vmem:[%s1 + $0x30] sm:$0xf]
  %v44 = vld [vmem:[%s1 + $0x34] sm:$0xf]
  %v45 = vld [vmem:[%s1 + $0x38] sm:$0xf]
  %v46 = vld [vmem:[%s1 + $0x3c] sm:$0xf]
  %v47 = vld [vmem:[%s1 + $0x40] sm:$0xf]
  %v48 = vld [vmem:[%s1 + $0x44] sm:$0xf]
  %v49 = vld [vmem:[%s2] sm:$0x1]
  %v51 = vperm.slane %v49, 0
  %v69 = vunpack.c.l.b16 %v15
  %v70 = vunpack.c.h.b16 %v15
  %v71 = vunpack.c.l.b16 %v16
  %v72 = vunpack.c.h.b16 %v16
  %v73 = vunpack.c.l.b16 %v17
  %v74 = vunpack.c.h.b16 %v17
  %v75 = vunpack.c.l.b16 %v18
  %v76 = vunpack.c.h.b16 %v18
  %v77 = vunpack.c.l.b16 %v19
  %v78 = vunpack.c.h.b16 %v19
  %v79 = vunpack.c.l.b16 %v20
  %v80 = vunpack.c.h.b16 %v20
  %v81 = vunpack.c.l.b16 %v21
  %v82 = vunpack.c.h.b16 %v21
  %v83 = vunpack.c.l.b16 %v22
  %v84 = vunpack.c.h.b16 %v22
  %v85 = vunpack.c.l.b16 %v23
  %v86 = vunpack.c.h.b16 %v23
  %v87 = vunpack.c.l.b16 %v24
  %v88 = vunpack.c.h.b16 %v24
  %v89 = vunpack.c.l.b16 %v25
  %v90 = vunpack.c.h.b16 %v25
  %v91 = vunpack.c.l.b16 %v26
  %v92 = vunpack.c.h.b16 %v26
  %v93 = vunpack.c.l.b16 %v27
  %v94 = vunpack.c.h.b16 %v27
  %v95 = vunpack.c.l.b16 %v28
  %v96 = vunpack.c.h.b16 %v28
  %v97 = vunpack.c.l.b16 %v29
  %v98 = vunpack.c.h.b16 %v29
  %v99 = vunpack.c.l.b16 %v30
  %v100 = vunpack.c.h.b16 %v30
  %v101 = vpack.c.b16 %v71, %v69
  %v102 = vpack.c.b16 %v72, %v70
  %v103 = vpack.c.b16 %v75, %v73
  %v104 = vpack.c.b16 %v76, %v74
  %v105 = vpack.c.b16 %v79, %v77
  %v106 = vpack.c.b16 %v80, %v78
  %v107 = vpack.c.b16 %v83, %v81
  %v108 = vpack.c.b16 %v84, %v82
  %v109 = vpack.c.b16 %v87, %v85
  %v110 = vpack.c.b16 %v88, %v86
  %v111 = vpack.c.b16 %v91, %v89
  %v112 = vpack.c.b16 %v92, %v90
  %v113 = vpack.c.b16 %v95, %v93
  %v114 = vpack.c.b16 %v96, %v94
  %v115 = vpack.c.b16 %v99, %v97
  %v116 = vpack.c.b16 %v100, %v98
  %v143 = vunpack.c.l.b16 %v31
  %v144 = vunpack.c.l.b16 %v32
  %v145 = vunpack.c.l.b16 %v33
  %v146 = vunpack.c.l.b16 %v34
  %v147 = vunpack.c.l.b16 %v35
  %v148 = vunpack.c.l.b16 %v36
  %v149 = vunpack.c.l.b16 %v37
  %v150 = vunpack.c.l.b16 %v38
  %v151 = vunpack.c.l.b16 %v39
  %v152 = vunpack.c.l.b16 %v40
  %v153 = vunpack.c.l.b16 %v41
  %v154 = vunpack.c.l.b16 %v42
  %v155 = vunpack.c.l.b16 %v43
  %v156 = vunpack.c.l.b16 %v44
  %v157 = vunpack.c.l.b16 %v45
  %v158 = vunpack.c.l.b16 %v46
  %v159 = vunpack.c.l.b16 %v47
  %v160 = vunpack.c.l.b16 %v48
  %v161 = vpack.c.b16 %v144, %v143
  %v162 = vpack.c.b16 %v146, %v145
  %v163 = vpack.c.b16 %v148, %v147
  %v164 = vpack.c.b16 %v150, %v149
  %v165 = vpack.c.b16 %v152, %v151
  %v166 = vpack.c.b16 %v154, %v153
  %v167 = vpack.c.b16 %v156, %v155
  %v168 = vpack.c.b16 %v158, %v157
  %v169 = vpack.c.b16 %v160, %v159
  %vm179 = vcmask 130048
  %v181 = vsel %vm179, %v102, 0
  %v184 = vsel %vm179, %v104, 0
  %v187 = vsel %vm179, %v106, 0
  %v190 = vsel %vm179, %v108, 0
  %v193 = vsel %vm179, %v110, 0
  %v196 = vsel %vm179, %v112, 0
  %v199 = vsel %vm179, %v114, 0
  %v202 = vsel %vm179, %v116, 0
  %204 = vmatpush.bf16.msra.mxu0 %v168
  %205 = vmatpush.bf16.msra.mxu0 %v167
  %206 = vmatpush.bf16.msra.mxu0 %v166
  %207 = vmatpush.bf16.msra.mxu0 %v165
  %208 = vmatpush.bf16.msra.mxu0 %v164
  %209 = vmatpush.bf16.msra.mxu0 %v163
  %210 = vmatpush.bf16.msra.mxu0 %v162
  %211 = vmatpush.bf16.msra.mxu0 %v161
  %212 = vmatmul.bf16.gmra.mxu0 %v101
  %v213 = vpop.f32.mrf.mxu0
  %v214 = vadd.f32 %v51, %v213
  %v215 = vpop.f32.mrf.mxu0
  %v216 = vadd.f32 %v51, %v215
  %217 = vmatmul.bf16.gmra.mxu0 %v103
  %v218 = vpop.f32.mrf.mxu0
  %v219 = vadd.f32 %v51, %v218
  %v220 = vpop.f32.mrf.mxu0
  %v221 = vadd.f32 %v51, %v220
  %222 = vmatmul.bf16.gmra.mxu0 %v105
  %v223 = vpop.f32.mrf.mxu0
  %v224 = vadd.f32 %v51, %v223
  %v225 = vpop.f32.mrf.mxu0
  %v226 = vadd.f32 %v51, %v225
  %227 = vmatmul.bf16.gmra.mxu0 %v107
  %v228 = vpop.f32.mrf.mxu0
  %v229 = vadd.f32 %v51, %v228
  %v230 = vpop.f32.mrf.mxu0
  %v231 = vadd.f32 %v51, %v230
  %232 = vmatmul.bf16.gmra.mxu0 %v109
  %v233 = vpop.f32.mrf.mxu0
  %v234 = vadd.f32 %v51, %v233
  %v235 = vpop.f32.mrf.mxu0
  %v236 = vadd.f32 %v51, %v235
  %237 = vmatmul.bf16.gmra.mxu0 %v111
  %v238 = vpop.f32.mrf.mxu0
  %v239 = vadd.f32 %v51, %v238
  %v240 = vpop.f32.mrf.mxu0
  %v241 = vadd.f32 %v51, %v240
  %242 = vmatmul.bf16.gmra.mxu0 %v113
  %v243 = vpop.f32.mrf.mxu0
  %v244 = vadd.f32 %v51, %v243
  %v245 = vpop.f32.mrf.mxu0
  %v246 = vadd.f32 %v51, %v245
  %247 = vmatmul.bf16.gmra.mxu0 %v115
  %v248 = vpop.f32.mrf.mxu0
  %v249 = vadd.f32 %v51, %v248
  %v250 = vpop.f32.mrf.mxu0
  %v251 = vadd.f32 %v51, %v250
  %252 = vdwg.mxu0
  %253 = vmatpush.bf16.msra.mxu0 0
  %254 = vmatpush.bf16.msra.mxu0 0
  %255 = vmatpush.bf16.msra.mxu0 0
  %256 = vmatpush.bf16.msra.mxu0 0
  %257 = vmatpush.bf16.msra.mxu0 0
  %258 = vmatpush.bf16.msra.mxu0 0
  %259 = vmatpush.bf16.msra.mxu0 0
  %260 = vmatpush.bf16.msra.mxu0 %v169
  %261 = vmatmul.bf16.gmra.mxu0 %v181
  %v262 = vpop.f32.mrf.mxu0
  %v263 = vadd.f32 %v214, %v262
  %v264 = vpop.f32.mrf.mxu0
  %v265 = vadd.f32 %v216, %v264
  %266 = vmatmul.bf16.gmra.mxu0 %v184
  %v267 = vpop.f32.mrf.mxu0
  %v268 = vadd.f32 %v219, %v267
  %v269 = vpop.f32.mrf.mxu0
  %v270 = vadd.f32 %v221, %v269
  %271 = vmatmul.bf16.gmra.mxu0 %v187
  %v272 = vpop.f32.mrf.mxu0
  %v273 = vadd.f32 %v224, %v272
  %v274 = vpop.f32.mrf.mxu0
  %v275 = vadd.f32 %v226, %v274
  %276 = vmatmul.bf16.gmra.mxu0 %v190
  %v277 = vpop.f32.mrf.mxu0
  %v278 = vadd.f32 %v229, %v277
  %v279 = vpop.f32.mrf.mxu0
  %v280 = vadd.f32 %v231, %v279
  %281 = vmatmul.bf16.gmra.mxu0 %v193
  %v282 = vpop.f32.mrf.mxu0
  %v283 = vadd.f32 %v234, %v282
  %v284 = vpop.f32.mrf.mxu0
  %v285 = vadd.f32 %v236, %v284
  %286 = vmatmul.bf16.gmra.mxu0 %v196
  %v287 = vpop.f32.mrf.mxu0
  %v288 = vadd.f32 %v239, %v287
  %v289 = vpop.f32.mrf.mxu0
  %v290 = vadd.f32 %v241, %v289
  %291 = vmatmul.bf16.gmra.mxu0 %v199
  %v292 = vpop.f32.mrf.mxu0
  %v293 = vadd.f32 %v244, %v292
  %v294 = vpop.f32.mrf.mxu0
  %v295 = vadd.f32 %v246, %v294
  %296 = vmatmul.bf16.gmra.mxu0 %v202
  %v297 = vpop.f32.mrf.mxu0
  %v298 = vadd.f32 %v249, %v297
  %v299 = vpop.f32.mrf.mxu0
  %v300 = vadd.f32 %v251, %v299
  %301 = vdwg.mxu0
  %vm302 = vcmask 474112
  %303 = vst.msk [vmem:[%s3] sm:$0xff] %vm302, %v263
  %304 = vst.msk [vmem:[%s3 + $0x8] sm:$0xff] %vm302, %v265
  %305 = vst.msk [vmem:[%s3 + $0x10] sm:$0xff] %vm302, %v268
  %306 = vst.msk [vmem:[%s3 + $0x18] sm:$0xff] %vm302, %v270
  %307 = vst.msk [vmem:[%s3 + $0x20] sm:$0xff] %vm302, %v273
  %308 = vst.msk [vmem:[%s3 + $0x28] sm:$0xff] %vm302, %v275
  %309 = vst.msk [vmem:[%s3 + $0x30] sm:$0xff] %vm302, %v278
  %310 = vst.msk [vmem:[%s3 + $0x38] sm:$0xff] %vm302, %v280
  %311 = vst.msk [vmem:[%s3 + $0x40] sm:$0xff] %vm302, %v283
  %312 = vst.msk [vmem:[%s3 + $0x48] sm:$0xff] %vm302, %v285
  %313 = vst.msk [vmem:[%s3 + $0x50] sm:$0xff] %vm302, %v288
  %314 = vst.msk [vmem:[%s3 + $0x58] sm:$0xff] %vm302, %v290
  %315 = vst.msk [vmem:[%s3 + $0x60] sm:$0xff] %vm302, %v293
  %316 = vst.msk [vmem:[%s3 + $0x68] sm:$0xff] %vm302, %v295
  %317 = vst.msk [vmem:[%s3 + $0x70] sm:$0xff] %vm302, %v298
  %318 = vst.msk [vmem:[%s3 + $0x78] sm:$0xff] %vm302, %v300
  // Predicated region
  $region14: #{_lambda_.32} parent=0 // pred_check
    _
  $region15: #{_lambda_.32} parent=0 // pred_check_branch
    %320 = sbr.rel (0) target = $region17
  $region16: #{_lambda_.32} parent=0 // pred_region
    _
  $region17: #{_lambda_.32} parent=0 // pred_fallthru
    _
  // Predicated region
  $region18: #{_lambda_.32} parent=0 // pred_check
    _
  $region19: #{_lambda_.32} parent=0 // pred_check_branch
    %322 = sbr.rel (0) target = $region21
  $region20: #{_lambda_.32} parent=0 // pred_region
    _
  $region21: #{_lambda_.32} parent=0 // pred_fallthru
    _

// kernel: _lambda_.33
$region0: #{_lambda_.33}
  #allocation0 [shape = 'u32[]', space=smem, size = 0x4, offset = 0x4, fixed_abs, tag = 'smem constant byte address 0x4 - core index']
  #allocation1 [shape = 'u32[72,128]{1,0:T(1,128)}', space=vmem, size = 0x9000, scoped, tag = 'internal scratch']
  %s0 = inlined_call_operand.vmem [shape: bf16[128,58], index: 0, kind: input, shape index: {}]
  %s1 = inlined_call_operand.vmem [shape: bf16[58,24], index: 1, kind: input, shape index: {}]
  %s2 = inlined_call_operand.vmem [shape: f32[1,24], index: 2, kind: input, shape index: {}]
  %s3 = inlined_call_operand.vmem [shape: f32[128,24], index: 3, kind: output, shape index: {}]
  %s4 = sld [smem:[#allocation0]]
  $region22: #{_lambda_.33} parent=0
    _
  %s6 = ssub.s32 1, %s4
  %s7 = scalar_select 0, %s6, %s4
  // Predicated region
  $region2: #{_lambda_.33} parent=0 // pred_check
    _
  $region3: #{_lambda_.33} parent=0 // pred_check_branch
    %9 = sbr.rel (0) target = $region5
  $region4: #{_lambda_.33} parent=0 // pred_region
    _
  $region5: #{_lambda_.33} parent=0 // pred_fallthru
    _
  // Predicated region
  $region6: #{_lambda_.33} parent=0 // pred_check
    _
  $region7: #{_lambda_.33} parent=0 // pred_check_branch
    %11 = sbr.rel (0) target = $region9
  $region8: #{_lambda_.33} parent=0 // pred_region
    _
  $region9: #{_lambda_.33} parent=0 // pred_fallthru
    _
  // Predicated region
  $region10: #{_lambda_.33} parent=0 // pred_check
    _
  $region11: #{_lambda_.33} parent=0 // pred_check_branch
    %13 = sbr.rel (0) target = $region13
  $region12: #{_lambda_.33} parent=0 // pred_region
    _
  $region13: #{_lambda_.33} parent=0 // pred_fallthru
    _
  %v15 = vld [vmem:[%s0] sm:$0xf]
  %v16 = vld [vmem:[%s0 + $0x4] sm:$0xf]
  %v17 = vld [vmem:[%s0 + $0x8] sm:$0xf]
  %v18 = vld [vmem:[%s0 + $0xc] sm:$0xf]
  %v19 = vld [vmem:[%s0 + $0x10] sm:$0xf]
  %v20 = vld [vmem:[%s0 + $0x14] sm:$0xf]
  %v21 = vld [vmem:[%s0 + $0x18] sm:$0xf]
  %v22 = vld [vmem:[%s0 + $0x1c] sm:$0xf]
  %v23 = vld [vmem:[%s0 + $0x20] sm:$0xf]
  %v24 = vld [vmem:[%s0 + $0x24] sm:$0xf]
  %v25 = vld [vmem:[%s0 + $0x28] sm:$0xf]
  %v26 = vld [vmem:[%s0 + $0x2c] sm:$0xf]
  %v27 = vld [vmem:[%s0 + $0x30] sm:$0xf]
  %v28 = vld [vmem:[%s0 + $0x34] sm:$0xf]
  %v29 = vld [vmem:[%s0 + $0x38] sm:$0xf]
  %v30 = vld [vmem:[%s0 + $0x3c] sm:$0xf]
  %v31 = vld [vmem:[%s1] sm:$0xf]
  %v32 = vld [vmem:[%s1 + $0x4] sm:$0xf]
  %v33 = vld [vmem:[%s1 + $0x8] sm:$0xf]
  %v34 = vld [vmem:[%s1 + $0xc] sm:$0xf]
  %v35 = vld [vmem:[%s1 + $0x10] sm:$0xf]
  %v36 = vld [vmem:[%s1 + $0x14] sm:$0xf]
  %v37 = vld [vmem:[%s1 + $0x18] sm:$0xf]
  %v38 = vld [vmem:[%s1 + $0x1c] sm:$0x1]
  %v39 = vld [vmem:[%s2] sm:$0x1]
  %v41 = vperm.slane %v39, 0
  %v59 = vunpack.c.l.b16 %v15
  %v60 = vunpack.c.l.b16 %v16
  %v61 = vunpack.c.l.b16 %v17
  %v62 = vunpack.c.l.b16 %v18
  %v63 = vunpack.c.l.b16 %v19
  %v64 = vunpack.c.l.b16 %v20
  %v65 = vunpack.c.l.b16 %v21
  %v66 = vunpack.c.l.b16 %v22
  %v67 = vunpack.c.l.b16 %v23
  %v68 = vunpack.c.l.b16 %v24
  %v69 = vunpack.c.l.b16 %v25
  %v70 = vunpack.c.l.b16 %v26
  %v71 = vunpack.c.l.b16 %v27
  %v72 = vunpack.c.l.b16 %v28
  %v73 = vunpack.c.l.b16 %v29
  %v74 = vunpack.c.l.b16 %v30
  %v75 = vpack.c.b16 %v60, %v59
  %v76 = vpack.c.b16 %v62, %v61
  %v77 = vpack.c.b16 %v64, %v63
  %v78 = vpack.c.b16 %v66, %v65
  %v79 = vpack.c.b16 %v68, %v67
  %v80 = vpack.c.b16 %v70, %v69
  %v81 = vpack.c.b16 %v72, %v71
  %v82 = vpack.c.b16 %v74, %v73
  %v91 = vunpack.c.l.b16 %v31
  %v92 = vunpack.c.l.b16 %v32
  %v93 = vunpack.c.l.b16 %v33
  %v94 = vunpack.c.l.b16 %v34
  %v95 = vunpack.c.l.b16 %v35
  %v96 = vunpack.c.l.b16 %v36
  %v97 = vunpack.c.l.b16 %v37
  %v98 = vunpack.c.l.b16 %v38
  %v99 = vpack.c.b16 %v92, %v91
  %v100 = vpack.c.b16 %v94, %v93
  %v101 = vpack.c.b16 %v96, %v95
  %v102 = vpack.c.b16 %v98, %v97
  %vm106 = vcmask 474112
  %v108 = vsel %vm106, %v75, 0
  %v111 = vsel %vm106, %v76, 0
  %v114 = vsel %vm106, %v77, 0
  %v117 = vsel %vm106, %v78, 0
  %v120 = vsel %vm106, %v79, 0
  %v123 = vsel %vm106, %v80, 0
  %v126 = vsel %vm106, %v81, 0
  %v129 = vsel %vm106, %v82, 0
  %vm131 = vcmask 1044480
  %v133 = vsel %vm131, %v102, 0
  %135 = vmatpush.bf16.msra.mxu0 0
  %136 = vmatpush.bf16.msra.mxu0 0
  %137 = vmatpush.bf16.msra.mxu0 0
  %138 = vmatpush.bf16.msra.mxu0 0
  %139 = vmatpush.bf16.msra.mxu0 %v133
  %140 = vmatpush.bf16.msra.mxu0 %v101
  %141 = vmatpush.bf16.msra.mxu0 %v100
  %142 = vmatpush.bf16.msra.mxu0 %v99
  %143 = vmatmul.bf16.gmra.mxu0 %v108
  %v144 = vpop.f32.mrf.mxu0
  %v145 = vadd.f32 %v41, %v144
  %v146 = vpop.f32.mrf.mxu0
  %v147 = vadd.f32 %v41, %v146
  %148 = vmatmul.bf16.gmra.mxu0 %v111
  %v149 = vpop.f32.mrf.mxu0
  %v150 = vadd.f32 %v41, %v149
  %v151 = vpop.f32.mrf.mxu0
  %v152 = vadd.f32 %v41, %v151
  %153 = vmatmul.bf16.gmra.mxu0 %v114
  %v154 = vpop.f32.mrf.mxu0
  %v155 = vadd.f32 %v41, %v154
  %v156 = vpop.f32.mrf.mxu0
  %v157 = vadd.f32 %v41, %v156
  %158 = vmatmul.bf16.gmra.mxu0 %v117
  %v159 = vpop.f32.mrf.mxu0
  %v160 = vadd.f32 %v41, %v159
  %v161 = vpop.f32.mrf.mxu0
  %v162 = vadd.f32 %v41, %v161
  %163 = vmatmul.bf16.gmra.mxu0 %v120
  %v164 = vpop.f32.mrf.mxu0
  %v165 = vadd.f32 %v41, %v164
  %v166 = vpop.f32.mrf.mxu0
  %v167 = vadd.f32 %v41, %v166
  %168 = vmatmul.bf16.gmra.mxu0 %v123
  %v169 = vpop.f32.mrf.mxu0
  %v170 = vadd.f32 %v41, %v169
  %v171 = vpop.f32.mrf.mxu0
  %v172 = vadd.f32 %v41, %v171
  %173 = vmatmul.bf16.gmra.mxu0 %v126
  %v174 = vpop.f32.mrf.mxu0
  %v175 = vadd.f32 %v41, %v174
  %v176 = vpop.f32.mrf.mxu0
  %v177 = vadd.f32 %v41, %v176
  %178 = vmatmul.bf16.gmra.mxu0 %v129
  %v179 = vpop.f32.mrf.mxu0
  %v180 = vadd.f32 %v41, %v179
  %v181 = vpop.f32.mrf.mxu0
  %v182 = vadd.f32 %v41, %v181
  %183 = vdwg.mxu0
  %vm184 = vcmask 195584
  %185 = vst.msk [vmem:[%s3] sm:$0xff] %vm184, %v145
  %186 = vst.msk [vmem:[%s3 + $0x8] sm:$0xff] %vm184, %v147
  %187 = vst.msk [vmem:[%s3 + $0x10] sm:$0xff] %vm184, %v150
  %188 = vst.msk [vmem:[%s3 + $0x18] sm:$0xff] %vm184, %v152
  %189 = vst.msk [vmem:[%s3 + $0x20] sm:$0xff] %vm184, %v155
  %190 = vst.msk [vmem:[%s3 + $0x28] sm:$0xff] %vm184, %v157
  %191 = vst.msk [vmem:[%s3 + $0x30] sm:$0xff] %vm184, %v160
  %192 = vst.msk [vmem:[%s3 + $0x38] sm:$0xff] %vm184, %v162
  %193 = vst.msk [vmem:[%s3 + $0x40] sm:$0xff] %vm184, %v165
  %194 = vst.msk [vmem:[%s3 + $0x48] sm:$0xff] %vm184, %v167
  %195 = vst.msk [vmem:[%s3 + $0x50] sm:$0xff] %vm184, %v170
  %196 = vst.msk [vmem:[%s3 + $0x58] sm:$0xff] %vm184, %v172
  %197 = vst.msk [vmem:[%s3 + $0x60] sm:$0xff] %vm184, %v175
  %198 = vst.msk [vmem:[%s3 + $0x68] sm:$0xff] %vm184, %v177
  %199 = vst.msk [vmem:[%s3 + $0x70] sm:$0xff] %vm184, %v180
  %200 = vst.msk [vmem:[%s3 + $0x78] sm:$0xff] %vm184, %v182
  // Predicated region
  $region14: #{_lambda_.33} parent=0 // pred_check
    _
  $region15: #{_lambda_.33} parent=0 // pred_check_branch
    %202 = sbr.rel (0) target = $region17
  $region16: #{_lambda_.33} parent=0 // pred_region
    _
  $region17: #{_lambda_.33} parent=0 // pred_fallthru
    _
  // Predicated region
  $region18: #{_lambda_.33} parent=0 // pred_check
    _
  $region19: #{_lambda_.33} parent=0 // pred_check_branch
    %204 = sbr.rel (0) target = $region21
  $region20: #{_lambda_.33} parent=0 // pred_region
    _
  $region21: #{_lambda_.33} parent=0 // pred_fallthru
    _

// kernel: _lambda_.34
$region0: #{_lambda_.34}
  #allocation0 [shape = 'u32[]', space=smem, size = 0x4, offset = 0x4, fixed_abs, tag = 'smem constant byte address 0x4 - core index']
  #allocation1 [shape = 'u32[72,128]{1,0:T(1,128)}', space=vmem, size = 0x9000, scoped, tag = 'internal scratch']
  %s0 = inlined_call_operand.vmem [shape: bf16[128,48], index: 0, kind: input, shape index: {}]
  %s1 = inlined_call_operand.vmem [shape: bf16[48,19], index: 1, kind: input, shape index: {}]
  %s2 = inlined_call_operand.vmem [shape: f32[1,19], index: 2, kind: input, shape index: {}]
  %s3 = inlined_call_operand.vmem [shape: f32[128,19], index: 3, kind: output, shape index: {}]
  %s4 = sld [smem:[#allocation0]]
  $region22: #{_lambda_.34} parent=0
    _
  %s6 = ssub.s32 1, %s4
  %s7 = scalar_select 0, %s6, %s4
  // Predicated region
  $region2: #{_lambda_.34} parent=0 // pred_check
    _
  $region3: #{_lambda_.34} parent=0 // pred_check_branch
    %9 = sbr.rel (0) target = $region5
  $region4: #{_lambda_.34} parent=0 // pred_region
    _
  $region5: #{_lambda_.34} parent=0 // pred_fallthru
    _
  // Predicated region
  $region6: #{_lambda_.34} parent=0 // pred_check
    _
  $region7: #{_lambda_.34} parent=0 // pred_check_branch
    %11 = sbr.rel (0) target = $region9
  $region8: #{_lambda_.34} parent=0 // pred_region
    _
  $region9: #{_lambda_.34} parent=0 // pred_fallthru
    _
  // Predicated region
  $region10: #{_lambda_.34} parent=0 // pred_check
    _
  $region11: #{_lambda_.34} parent=0 // pred_check_branch
    %13 = sbr.rel (0) target = $region13
  $region12: #{_lambda_.34} parent=0 // pred_region
    _
  $region13: #{_lambda_.34} parent=0 // pred_fallthru
    _
  %v15 = vld [vmem:[%s0] sm:$0xf]
  %v16 = vld [vmem:[%s0 + $0x4] sm:$0xf]
  %v17 = vld [vmem:[%s0 + $0x8] sm:$0xf]
  %v18 = vld [vmem:[%s0 + $0xc] sm:$0xf]
  %v19 = vld [vmem:[%s0 + $0x10] sm:$0xf]
  %v20 = vld [vmem:[%s0 + $0x14] sm:$0xf]
  %v21 = vld [vmem:[%s0 + $0x18] sm:$0xf]
  %v22 = vld [vmem:[%s0 + $0x1c] sm:$0xf]
  %v23 = vld [vmem:[%s0 + $0x20] sm:$0xf]
  %v24 = vld [vmem:[%s0 + $0x24] sm:$0xf]
  %v25 = vld [vmem:[%s0 + $0x28] sm:$0xf]
  %v26 = vld [vmem:[%s0 + $0x2c] sm:$0xf]
  %v27 = vld [vmem:[%s0 + $0x30] sm:$0xf]
  %v28 = vld [vmem:[%s0 + $0x34] sm:$0xf]
  %v29 = vld [vmem:[%s0 + $0x38] sm:$0xf]
  %v30 = vld [vmem:[%s0 + $0x3c] sm:$0xf]
  %v31 = vld [vmem:[%s1] sm:$0xf]
  %v32 = vld [vmem:[%s1 + $0x4] sm:$0xf]
  %v33 = vld [vmem:[%s1 + $0x8] sm:$0xf]
  %v34 = vld [vmem:[%s1 + $0xc] sm:$0xf]
  %v35 = vld [vmem:[%s1 + $0x10] sm:$0xf]
  %v36 = vld [vmem:[%s1 + $0x14] sm:$0xf]
  %v37 = vld [vmem:[%s2] sm:$0x1]
  %v39 = vperm.slane %v37, 0
  %v57 = vunpack.c.l.b16 %v15
  %v58 = vunpack.c.l.b16 %v16
  %v59 = vunpack.c.l.b16 %v17
  %v60 = vunpack.c.l.b16 %v18
  %v61 = vunpack.c.l.b16 %v19
  %v62 = vunpack.c.l.b16 %v20
  %v63 = vunpack.c.l.b16 %v21
  %v64 = vunpack.c.l.b16 %v22
  %v65 = vunpack.c.l.b16 %v23
  %v66 = vunpack.c.l.b16 %v24
  %v67 = vunpack.c.l.b16 %v25
  %v68 = vunpack.c.l.b16 %v26
  %v69 = vunpack.c.l.b16 %v27
  %v70 = vunpack.c.l.b16 %v28
  %v71 = vunpack.c.l.b16 %v29
  %v72 = vunpack.c.l.b16 %v30
  %v73 = vpack.c.b16 %v58, %v57
  %v74 = vpack.c.b16 %v60, %v59
  %v75 = vpack.c.b16 %v62, %v61
  %v76 = vpack.c.b16 %v64, %v63
  %v77 = vpack.c.b16 %v66, %v65
  %v78 = vpack.c.b16 %v68, %v67
  %v79 = vpack.c.b16 %v70, %v69
  %v80 = vpack.c.b16 %v72, %v71
  %v87 = vunpack.c.l.b16 %v31
  %v88 = vunpack.c.l.b16 %v32
  %v89 = vunpack.c.l.b16 %v33
  %v90 = vunpack.c.l.b16 %v34
  %v91 = vunpack.c.l.b16 %v35
  %v92 = vunpack.c.l.b16 %v36
  %v93 = vpack.c.b16 %v88, %v87
  %v94 = vpack.c.b16 %v90, %v89
  %v95 = vpack.c.b16 %v92, %v91
  %vm99 = vcmask 392192
  %v101 = vsel %vm99, %v73, 0
  %v104 = vsel %vm99, %v74, 0
  %v107 = vsel %vm99, %v75, 0
  %v110 = vsel %vm99, %v76, 0
  %v113 = vsel %vm99, %v77, 0
  %v116 = vsel %vm99, %v78, 0
  %v119 = vsel %vm99, %v79, 0
  %v122 = vsel %vm99, %v80, 0
  %124 = vmatpush.bf16.msra.mxu0 0
  %125 = vmatpush.bf16.msra.mxu0 0
  %126 = vmatpush.bf16.msra.mxu0 0
  %127 = vmatpush.bf16.msra.mxu0 0
  %128 = vmatpush.bf16.msra.mxu0 0
  %129 = vmatpush.bf16.msra.mxu0 %v95
  %130 = vmatpush.bf16.msra.mxu0 %v94
  %131 = vmatpush.bf16.msra.mxu0 %v93
  %132 = vmatmul.bf16.gmra.mxu0 %v101
  %v133 = vpop.f32.mrf.mxu0
  %v134 = vadd.f32 %v39, %v133
  %v135 = vpop.f32.mrf.mxu0
  %v136 = vadd.f32 %v39, %v135
  %137 = vmatmul.bf16.gmra.mxu0 %v104
  %v138 = vpop.f32.mrf.mxu0
  %v139 = vadd.f32 %v39, %v138
  %v140 = vpop.f32.mrf.mxu0
  %v141 = vadd.f32 %v39, %v140
  %142 = vmatmul.bf16.gmra.mxu0 %v107
  %v143 = vpop.f32.mrf.mxu0
  %v144 = vadd.f32 %v39, %v143
  %v145 = vpop.f32.mrf.mxu0
  %v146 = vadd.f32 %v39, %v145
  %147 = vmatmul.bf16.gmra.mxu0 %v110
  %v148 = vpop.f32.mrf.mxu0
  %v149 = vadd.f32 %v39, %v148
  %v150 = vpop.f32.mrf.mxu0
  %v151 = vadd.f32 %v39, %v150
  %152 = vmatmul.bf16.gmra.mxu0 %v113
  %v153 = vpop.f32.mrf.mxu0
  %v154 = vadd.f32 %v39, %v153
  %v155 = vpop.f32.mrf.mxu0
  %v156 = vadd.f32 %v39, %v155
  %157 = vmatmul.bf16.gmra.mxu0 %v116
  %v158 = vpop.f32.mrf.mxu0
  %v159 = vadd.f32 %v39, %v158
  %v160 = vpop.f32.mrf.mxu0
  %v161 = vadd.f32 %v39, %v160
  %162 = vmatmul.bf16.gmra.mxu0 %v119
  %v163 = vpop.f32.mrf.mxu0
  %v164 = vadd.f32 %v39, %v163
  %v165 = vpop.f32.mrf.mxu0
  %v166 = vadd.f32 %v39, %v165
  %167 = vmatmul.bf16.gmra.mxu0 %v122
  %v168 = vpop.f32.mrf.mxu0
  %v169 = vadd.f32 %v39, %v168
  %v170 = vpop.f32.mrf.mxu0
  %v171 = vadd.f32 %v39, %v170
  %172 = vdwg.mxu0
  %vm173 = vcmask 154624
  %174 = vst.msk [vmem:[%s3] sm:$0xff] %vm173, %v134
  %175 = vst.msk [vmem:[%s3 + $0x8] sm:$0xff] %vm173, %v136
  %176 = vst.msk [vmem:[%s3 + $0x10] sm:$0xff] %vm173, %v139
  %177 = vst.msk [vmem:[%s3 + $0x18] sm:$0xff] %vm173, %v141
  %178 = vst.msk [vmem:[%s3 + $0x20] sm:$0xff] %vm173, %v144
  %179 = vst.msk [vmem:[%s3 + $0x28] sm:$0xff] %vm173, %v146
  %180 = vst.msk [vmem:[%s3 + $0x30] sm:$0xff] %vm173, %v149
  %181 = vst.msk [vmem:[%s3 + $0x38] sm:$0xff] %vm173, %v151
  %182 = vst.msk [vmem:[%s3 + $0x40] sm:$0xff] %vm173, %v154
  %183 = vst.msk [vmem:[%s3 + $0x48] sm:$0xff] %vm173, %v156
  %184 = vst.msk [vmem:[%s3 + $0x50] sm:$0xff] %vm173, %v159
  %185 = vst.msk [vmem:[%s3 + $0x58] sm:$0xff] %vm173, %v161
  %186 = vst.msk [vmem:[%s3 + $0x60] sm:$0xff] %vm173, %v164
  %187 = vst.msk [vmem:[%s3 + $0x68] sm:$0xff] %vm173, %v166
  %188 = vst.msk [vmem:[%s3 + $0x70] sm:$0xff] %vm173, %v169
  %189 = vst.msk [vmem:[%s3 + $0x78] sm:$0xff] %vm173, %v171
  // Predicated region
  $region14: #{_lambda_.34} parent=0 // pred_check
    _
  $region15: #{_lambda_.34} parent=0 // pred_check_branch
    %191 = sbr.rel (0) target = $region17
  $region16: #{_lambda_.34} parent=0 // pred_region
    _
  $region17: #{_lambda_.34} parent=0 // pred_fallthru
    _
  // Predicated region
  $region18: #{_lambda_.34} parent=0 // pred_check
    _
  $region19: #{_lambda_.34} parent=0 // pred_check_branch
    %193 = sbr.rel (0) target = $region21
  $region20: #{_lambda_.34} parent=0 // pred_region
    _
  $region21: #{_lambda_.34} parent=0 // pred_fallthru
    _

// kernel: _lambda_.35
$region0: #{_lambda_.35}
  #allocation0 [shape = 'u32[]', space=smem, size = 0x4, offset = 0x4, fixed_abs, tag = 'smem constant byte address 0x4 - core index']
  #allocation1 [shape = 'u32[72,128]{1,0:T(1,128)}', space=vmem, size = 0x9000, scoped, tag = 'internal scratch']
  %s0 = inlined_call_operand.vmem [shape: bf16[128,19], index: 0, kind: input, shape index: {}]
  %s1 = inlined_call_operand.vmem [shape: bf16[19,8], index: 1, kind: input, shape index: {}]
  %s2 = inlined_call_operand.vmem [shape: f32[1,8], index: 2, kind: input, shape index: {}]
  %s3 = inlined_call_operand.vmem [shape: f32[128,8], index: 3, kind: output, shape index: {}]
  %s4 = sld [smem:[#allocation0]]
  $region22: #{_lambda_.35} parent=0
    _
  %s6 = ssub.s32 1, %s4
  %s7 = scalar_select 0, %s6, %s4
  // Predicated region
  $region2: #{_lambda_.35} parent=0 // pred_check
    _
  $region3: #{_lambda_.35} parent=0 // pred_check_branch
    %9 = sbr.rel (0) target = $region5
  $region4: #{_lambda_.35} parent=0 // pred_region
    _
  $region5: #{_lambda_.35} parent=0 // pred_fallthru
    _
  // Predicated region
  $region6: #{_lambda_.35} parent=0 // pred_check
    _
  $region7: #{_lambda_.35} parent=0 // pred_check_branch
    %11 = sbr.rel (0) target = $region9
  $region8: #{_lambda_.35} parent=0 // pred_region
    _
  $region9: #{_lambda_.35} parent=0 // pred_fallthru
    _
  // Predicated region
  $region10: #{_lambda_.35} parent=0 // pred_check
    _
  $region11: #{_lambda_.35} parent=0 // pred_check_branch
    %13 = sbr.rel (0) target = $region13
  $region12: #{_lambda_.35} parent=0 // pred_region
    _
  $region13: #{_lambda_.35} parent=0 // pred_fallthru
    _
  %v15 = vld [vmem:[%s0] sm:$0xf]
  %v16 = vld [vmem:[%s0 + $0x4] sm:$0xf]
  %v17 = vld [vmem:[%s0 + $0x8] sm:$0xf]
  %v18 = vld [vmem:[%s0 + $0xc] sm:$0xf]
  %v19 = vld [vmem:[%s0 + $0x10] sm:$0xf]
  %v20 = vld [vmem:[%s0 + $0x14] sm:$0xf]
  %v21 = vld [vmem:[%s0 + $0x18] sm:$0xf]
  %v22 = vld [vmem:[%s0 + $0x1c] sm:$0xf]
  %v23 = vld [vmem:[%s0 + $0x20] sm:$0xf]
  %v24 = vld [vmem:[%s0 + $0x24] sm:$0xf]
  %v25 = vld [vmem:[%s0 + $0x28] sm:$0xf]
  %v26 = vld [vmem:[%s0 + $0x2c] sm:$0xf]
  %v27 = vld [vmem:[%s0 + $0x30] sm:$0xf]
  %v28 = vld [vmem:[%s0 + $0x34] sm:$0xf]
  %v29 = vld [vmem:[%s0 + $0x38] sm:$0xf]
  %v30 = vld [vmem:[%s0 + $0x3c] sm:$0xf]
  %v31 = vld [vmem:[%s1] sm:$0xf]
  %v32 = vld [vmem:[%s1 + $0x4] sm:$0xf]
  %v33 = vld [vmem:[%s1 + $0x8] sm:$0x3]
  %v34 = vld [vmem:[%s2] sm:$0x1]
  %v36 = vperm.slane %v34, 0
  %v54 = vunpack.c.l.b16 %v15
  %v55 = vunpack.c.l.b16 %v16
  %v56 = vunpack.c.l.b16 %v17
  %v57 = vunpack.c.l.b16 %v18
  %v58 = vunpack.c.l.b16 %v19
  %v59 = vunpack.c.l.b16 %v20
  %v60 = vunpack.c.l.b16 %v21
  %v61 = vunpack.c.l.b16 %v22
  %v62 = vunpack.c.l.b16 %v23
  %v63 = vunpack.c.l.b16 %v24
  %v64 = vunpack.c.l.b16 %v25
  %v65 = vunpack.c.l.b16 %v26
  %v66 = vunpack.c.l.b16 %v27
  %v67 = vunpack.c.l.b16 %v28
  %v68 = vunpack.c.l.b16 %v29
  %v69 = vunpack.c.l.b16 %v30
  %v70 = vpack.c.b16 %v55, %v54
  %v71 = vpack.c.b16 %v57, %v56
  %v72 = vpack.c.b16 %v59, %v58
  %v73 = vpack.c.b16 %v61, %v60
  %v74 = vpack.c.b16 %v63, %v62
  %v75 = vpack.c.b16 %v65, %v64
  %v76 = vpack.c.b16 %v67, %v66
  %v77 = vpack.c.b16 %v69, %v68
  %v81 = vunpack.c.l.b16 %v31
  %v82 = vunpack.c.l.b16 %v32
  %v83 = vunpack.c.l.b16 %v33
  %v84 = vpack.c.b16 %v82, %v81
  %v85 = vpack.c.b16 %v83, %v83
  %vm87 = vcmask 154624
  %v89 = vsel %vm87, %v70, 0
  %v92 = vsel %vm87, %v71, 0
  %v95 = vsel %vm87, %v72, 0
  %v98 = vsel %vm87, %v73, 0
  %v101 = vsel %vm87, %v74, 0
  %v104 = vsel %vm87, %v75, 0
  %v107 = vsel %vm87, %v76, 0
  %v110 = vsel %vm87, %v77, 0
  %vm112 = vcmask 1040384
  %vm113 = vcmask 1041408
  %v114 = vsel %vm112, 4294967295, 65535
  %v115 = vsel %vm113, %v114, 0
  %v117 = vand.u32 %v85, %v115
  %119 = vmatpush.bf16.msra.mxu0 0
  %120 = vmatpush.bf16.msra.mxu0 0
  %121 = vmatpush.bf16.msra.mxu0 0
  %122 = vmatpush.bf16.msra.mxu0 0
  %123 = vmatpush.bf16.msra.mxu0 0
  %124 = vmatpush.bf16.msra.mxu0 0
  %125 = vmatpush.bf16.msra.mxu0 %v117
  %126 = vmatpush.bf16.msra.mxu0 %v84
  %127 = vmatmul.bf16.gmra.mxu0 %v89
  %v128 = vpop.f32.mrf.mxu0
  %v129 = vadd.f32 %v36, %v128
  %v130 = vpop.f32.mrf.mxu0
  %v131 = vadd.f32 %v36, %v130
  %132 = vmatmul.bf16.gmra.mxu0 %v92
  %v133 = vpop.f32.mrf.mxu0
  %v134 = vadd.f32 %v36, %v133
  %v135 = vpop.f32.mrf.mxu0
  %v136 = vadd.f32 %v36, %v135
  %137 = vmatmul.bf16.gmra.mxu0 %v95
  %v138 = vpop.f32.mrf.mxu0
  %v139 = vadd.f32 %v36, %v138
  %v140 = vpop.f32.mrf.mxu0
  %v141 = vadd.f32 %v36, %v140
  %142 = vmatmul.bf16.gmra.mxu0 %v98
  %v143 = vpop.f32.mrf.mxu0
  %v144 = vadd.f32 %v36, %v143
  %v145 = vpop.f32.mrf.mxu0
  %v146 = vadd.f32 %v36, %v145
  %147 = vmatmul.bf16.gmra.mxu0 %v101
  %v148 = vpop.f32.mrf.mxu0
  %v149 = vadd.f32 %v36, %v148
  %v150 = vpop.f32.mrf.mxu0
  %v151 = vadd.f32 %v36, %v150
  %152 = vmatmul.bf16.gmra.mxu0 %v104
  %v153 = vpop.f32.mrf.mxu0
  %v154 = vadd.f32 %v36, %v153
  %v155 = vpop.f32.mrf.mxu0
  %v156 = vadd.f32 %v36, %v155
  %157 = vmatmul.bf16.gmra.mxu0 %v107
  %v158 = vpop.f32.mrf.mxu0
  %v159 = vadd.f32 %v36, %v158
  %v160 = vpop.f32.mrf.mxu0
  %v161 = vadd.f32 %v36, %v160
  %162 = vmatmul.bf16.gmra.mxu0 %v110
  %v163 = vpop.f32.mrf.mxu0
  %v164 = vadd.f32 %v36, %v163
  %v165 = vpop.f32.mrf.mxu0
  %v166 = vadd.f32 %v36, %v165
  %167 = vdwg.mxu0
  %vm168 = vcmask 64512
  %169 = vst.msk [vmem:[%s3] sm:$0xff] %vm168, %v129
  %170 = vst.msk [vmem:[%s3 + $0x8] sm:$0xff] %vm168, %v131
  %171 = vst.msk [vmem:[%s3 + $0x10] sm:$0xff] %vm168, %v134
  %172 = vst.msk [vmem:[%s3 + $0x18] sm:$0xff] %vm168, %v136
  %173 = vst.msk [vmem:[%s3 + $0x20] sm:$0xff] %vm168, %v139
  %174 = vst.msk [vmem:[%s3 + $0x28] sm:$0xff] %vm168, %v141
  %175 = vst.msk [vmem:[%s3 + $0x30] sm:$0xff] %vm168, %v144
  %176 = vst.msk [vmem:[%s3 + $0x38] sm:$0xff] %vm168, %v146
  %177 = vst.msk [vmem:[%s3 + $0x40] sm:$0xff] %vm168, %v149
  %178 = vst.msk [vmem:[%s3 + $0x48] sm:$0xff] %vm168, %v151
  %179 = vst.msk [vmem:[%s3 + $0x50] sm:$0xff] %vm168, %v154
  %180 = vst.msk [vmem:[%s3 + $0x58] sm:$0xff] %vm168, %v156
  %181 = vst.msk [vmem:[%s3 + $0x60] sm:$0xff] %vm168, %v159
  %182 = vst.msk [vmem:[%s3 + $0x68] sm:$0xff] %vm168, %v161
  %183 = vst.msk [vmem:[%s3 + $0x70] sm:$0xff] %vm168, %v164
  %184 = vst.msk [vmem:[%s3 + $0x78] sm:$0xff] %vm168, %v166
  // Predicated region
  $region14: #{_lambda_.35} parent=0 // pred_check
    _
  $region15: #{_lambda_.35} parent=0 // pred_check_branch
    %186 = sbr.rel (0) target = $region17
  $region16: #{_lambda_.35} parent=0 // pred_region
    _
  $region17: #{_lambda_.35} parent=0 // pred_fallthru
    _
  // Predicated region
  $region18: #{_lambda_.35} parent=0 // pred_check
    _
  $region19: #{_lambda_.35} parent=0 // pred_check_branch
    %188 = sbr.rel (0) target = $region21
  $region20: #{_lambda_.35} parent=0 // pred_region
    _
  $region21: #{_lambda_.35} parent=0 // pred_fallthru
    _

</llo_original>
